<compile_context>
chip_gen: v6e
topology: v6e:2x2x1
jax: 0.10.0
libtpu: 0.0.40
codegen_flags: <defaults>
</compile_context>

<pallas_src>
import jax
import jax.numpy as jnp
from jax.experimental import pallas as pl
from jax.experimental.pallas import tpu as pltpu


def _round_up(v: int, m: int) -> int:
    return ((v + m - 1) // m) * m


def _pick_group(H: int, W: int) -> int:
    """Row-fold factor G (divides H) making the lane axis dense.

    Prefers G with both G*W and G*4W multiples of 128 (dense input and output
    lanes), then dense output only, then G = 1 (correct but lane-padded).
    Among equally good choices the smallest G wins (finer row tiling).
    """
    best, best_key = 1, (-1, -1, 0)
    for g in range(1, min(H, 64) + 1):
        if H % g:
            continue
        out_dense = 1 if (g * 4 * W) % 128 == 0 else 0
        in_dense = 1 if (g * W) % 128 == 0 else 0
        key = (out_dense, in_dense, -g)
        if key > best_key:
            best, best_key = g, key
    return best


def _upsample_kernel(x_ref, p_ref, wv_ref, b_ref, o_ref):
    """One (batch n, folded-row-tile r) grid step.

    x_ref : (1, C_in, THg, Win)     VMEM  input tile (activation dtype)
    p_ref : (Win, Wout)             VMEM  0/1 spread matrix (grid-constant)
    wv_ref: (C_in, C_out, 1, Wout)  VMEM  f32 per-lane tap weights (grid-constant)
    b_ref : (C_out,)                SMEM  f32 bias
    o_ref : (1, C_out, THg, Wout)   VMEM  output tile; lane = g*4W + i*2W + 2w + j
    """
    c_in = x_ref.shape[1]
    c_out = o_ref.shape[1]
    f32 = jnp.float32

    # P has exactly one 1 per column, so a HIGHEST-precision pass reproduces the
    # f32 activations exactly; bf16 activations hit native MXU rate directly.
    prec = jax.lax.Precision.HIGHEST if x_ref.dtype == jnp.float32 else None
    p = p_ref[...]

    # Spread each input-channel plane into the interleaved output lane layout
    # once (shared across all output channels): C_in matmuls on the otherwise
    # idle MXU, f32 results.
    x_sp = [
        jnp.dot(x_ref[0, ci], p, preferred_element_type=f32, precision=prec)
        for ci in range(c_in)
    ]

    # Channel mix + 2x2 tap weights: minimal-MAC VPU pass, one dense store per co.
    for co in range(c_out):
        acc = x_sp[0] * wv_ref[0, co] + b_ref[co]
        for ci in range(1, c_in):
            acc = acc + x_sp[ci] * wv_ref[ci, co]
        o_ref[0, co, :, :] = acc.astype(o_ref.dtype)


def upsampling_forward(x, weight, bias, *, row_tile=None):
    """ConvTranspose2d(kernel_size=2, stride=2, padding=0) forward.

    x:      (N, C_in, H, W)       NCHW (float32 or bfloat16)
    weight: (C_in, C_out, 2, 2)   PyTorch ConvTranspose2d weight layout
    bias:   (C_out,)
    returns (N, C_out, 2H, 2W)    NCHW, dtype of x
    """
    N, C_in, H, W = x.shape
    C_out = weight.shape[1]
    assert weight.shape == (C_in, C_out, 2, 2), weight.shape
    assert bias.shape == (C_out,), bias.shape

    itemsize = jnp.dtype(x.dtype).itemsize

    # ---- fold rows into lanes (metadata-only reshapes of row-major NCHW) -----
    G = _pick_group(H, W)
    Hg, Win, Wout = H // G, G * W, 4 * G * W
    x_f = x.reshape(N, C_in, Hg, Win)
    win_pad, wout_pad = _round_up(Win, 128), _round_up(Wout, 128)

    # ---- grid-constant operands precomputed in the wrapper -------------------
    # spread matrix: P[g*W + w, g*4W + i*2W + 2w + j] = 1
    rows = jnp.arange(Win)
    g_r, w_r = rows // W, rows % W
    cols = jnp.arange(Wout)
    g_c = cols // (4 * W)
    rem = cols % (4 * W)
    i_c, w_c, j_c = rem // (2 * W), (rem % (2 * W)) // 2, rem % 2
    p_mat = ((g_r[:, None] == g_c[None, :])
             & (w_r[:, None] == w_c[None, :])).astype(x.dtype)
    # per-lane tap weights: wvec[ci, co, 0, L] = weight[ci, co, i(L), j(L)]
    wvec = weight.astype(jnp.float32)[:, :, i_c, j_c][:, :, None, :]
    b_vec = bias.astype(jnp.float32)

    # ---- generation-aware row-tile (THg) selection ----------------------------
    try:
        vmem_cap = int(getattr(pltpu.get_tpu_info(), "vmem_capacity_bytes",
                               64 * 1024 * 1024))
    except Exception:
        vmem_cap = 64 * 1024 * 1024
    block_budget = min(24 * 1024 * 1024, int(0.35 * vmem_cap))

    # grid-constant VMEM residents (pessimistically assume double buffers)
    const_bytes = (2 * win_pad * wout_pad * itemsize
                   + 2 * C_in * C_out * 8 * wout_pad * 4)
    # per folded-row bytes: double-buffered in/out blocks + in-kernel f32 temps
    per_row = (2 * C_in * win_pad * itemsize
               + 2 * C_out * wout_pad * itemsize
               + (C_in + 2) * wout_pad * 4)

    if row_tile is not None:
        th = row_tile
    else:
        th = max(block_budget - const_bytes, 8 * per_row) // per_row // 8 * 8
        th = max(8, th)
        if N == 1 and Hg > 8:
            # keep >= 2 programs on a parallel axis (v7x has two TensorCores)
            th = min(th, _round_up(pl.cdiv(Hg, 2), 8))
    th = min(th, _round_up(Hg, 8))
    if th >= Hg:
        th = Hg                                  # full-dim block is always legal
    num_h = pl.cdiv(Hg, th)                      # ragged tail handled by masking

    need = const_bytes + per_row * max(th, 8) + 4 * 1024 * 1024
    vmem_limit = max(min(need + 2 * 1024 * 1024, int(0.7 * vmem_cap)), need)
    vmem_limit = int(max(vmem_limit, 16 * 1024 * 1024))

    out_packed = pl.pallas_call(
        _upsample_kernel,
        # (N, C_out, Hg, 4*G*W) is bit-identical (row-major) to (N, C_out, 2H, 2W)
        out_shape=jax.ShapeDtypeStruct((N, C_out, Hg, Wout), x.dtype),
        grid_spec=pltpu.PrefetchScalarGridSpec(
            num_scalar_prefetch=0,
            grid=(N, num_h),
            in_specs=[
                pl.BlockSpec((1, C_in, th, Win), lambda n, r: (n, 0, r, 0)),
                pl.BlockSpec((Win, Wout), lambda n, r: (0, 0)),
                pl.BlockSpec((C_in, C_out, 1, Wout),
                             lambda n, r: (0, 0, 0, 0)),
                pl.BlockSpec(memory_space=pltpu.MemorySpace.SMEM),
            ],
            out_specs=pl.BlockSpec((1, C_out, th, Wout),
                                   lambda n, r: (n, 0, r, 0)),
        ),
        compiler_params=pltpu.CompilerParams(
            dimension_semantics=("parallel", "parallel"),
            vmem_limit_bytes=vmem_limit,
        ),
    )(x_f, p_mat, wvec, b_vec)

    # metadata-only reshape back to NCHW
    return out_packed.reshape(N, C_out, 2 * H, 2 * W)


def _reference_forward(x, weight, bias):
    # pure-JAX reference of ConvTranspose2d(k=2, s=2, p=0)
    N, C_in, H, W = x.shape
    C_out = weight.shape[1]
    y = jnp.einsum("nchw,cdij->ndhiwj", x, weight)
    y = y.reshape(N, C_out, 2 * H, 2 * W) + bias[None, :, None, None]
    return y


if __name__ == "__main__":
    key = jax.random.PRNGKey(0)
    k_x, k_w, k_b = jax.random.split(key, 3)

    # small shapes consistent with the module: batch=2, in_channels=4,
    # out_channels=8, spatial=16
    N, C_in, C_out, H, W = 2, 4, 8, 16, 16

    x = jax.random.normal(k_x, (N, C_in, H, W), dtype=jnp.float32)
    weight = 0.1 * jax.random.normal(k_w, (C_in, C_out, 2, 2), dtype=jnp.float32)
    bias = 0.1 * jax.random.normal(k_b, (C_out,), dtype=jnp.float32)

    # f32 path (matches the PyTorch module's numerics)
    y = jax.block_until_ready(upsampling_forward(x, weight, bias))
    y_ref = _reference_forward(x, weight, bias)
    assert y.shape == (N, C_out, 2 * H, 2 * W), y.shape
    assert jnp.allclose(y, y_ref, atol=1e-5, rtol=1e-5), "f32 mismatch vs reference"

    # bf16 activation path (halves HBM traffic; channel mix stays f32)
    y_bf16 = jax.block_until_ready(
        upsampling_forward(x.astype(jnp.bfloat16), weight, bias))
    assert y_bf16.dtype == jnp.bfloat16
    assert jnp.allclose(y_bf16.astype(jnp.float32), y_ref,
                        atol=5e-2, rtol=5e-2), "bf16 mismatch vs reference"

    print("KERNEL_OK")
</pallas_src>

<mosaic_0001>
module attributes {stable_mosaic.version = 11 : i64} {
  func.func @_upsample_kernel(%arg0: i32, %arg1: i32, %arg2: memref<1x4x2x128xf32, #tpu.memory_space<vmem>>, %arg3: memref<128x512xf32, #tpu.memory_space<vmem>>, %arg4: memref<4x8x1x512xf32, #tpu.memory_space<vmem>>, %arg5: memref<8xf32, #tpu.memory_space<smem>>, %arg6: memref<1x8x2x512xf32, #tpu.memory_space<vmem>>) attributes {dimension_semantics = [#tpu.dimension_semantics<parallel>, #tpu.dimension_semantics<parallel>], iteration_bounds = array<i64: 2, 1>, scalar_prefetch = 0 : i64, scratch_operands = 0 : i64, tpu.core_type = #tpu.core_type<tc>, window_params = [{transform_indices = @transform_0, window_bounds = array<i64: 1, 4, 2, 128>}, {pipeline_mode = #tpu.pipeline_mode<synchronous>, transform_indices = @transform_1, window_bounds = array<i64: 128, 512>}, {pipeline_mode = #tpu.pipeline_mode<synchronous>, transform_indices = @transform_2, window_bounds = array<i64: 4, 8, 1, 512>}, {transform_indices = @transform_3, window_bounds = array<i64: 8>}, {transform_indices = @transform_4, window_bounds = array<i64: 1, 8, 2, 512>}]} {
    %c0 = arith.constant 0 : index
    %c0_0 = arith.constant 0 : index
    %0 = vector.load %arg3[%c0, %c0_0] : memref<128x512xf32, #tpu.memory_space<vmem>>, vector<128x512xf32>
    %c0_1 = arith.constant 0 : index
    %c0_2 = arith.constant 0 : index
    %c0_3 = arith.constant 0 : index
    %c0_4 = arith.constant 0 : index
    %1 = vector.load %arg2[%c0_1, %c0_2, %c0_3, %c0_4] : memref<1x4x2x128xf32, #tpu.memory_space<vmem>>, vector<1x1x2x128xf32>
    %2 = vector.shape_cast %1 : vector<1x1x2x128xf32> to vector<2x128xf32>
    %cst = arith.constant dense<0.000000e+00> : vector<2x512xf32>
    %3 = tpu.matmul %2, %0, %cst {dimension_numbers = #tpu.dot_dimension_numbers<[1], [0], [0], [1], [0, 0, 1, 1], [], []>, precision = #tpu.contract_precision<fp32>} : vector<2x128xf32>, vector<128x512xf32>, vector<2x512xf32> -> vector<2x512xf32>
    %c0_5 = arith.constant 0 : index
    %c1 = arith.constant 1 : index
    %c0_6 = arith.constant 0 : index
    %c0_7 = arith.constant 0 : index
    %4 = vector.load %arg2[%c0_5, %c1, %c0_6, %c0_7] : memref<1x4x2x128xf32, #tpu.memory_space<vmem>>, vector<1x1x2x128xf32>
    %5 = vector.shape_cast %4 : vector<1x1x2x128xf32> to vector<2x128xf32>
    %cst_8 = arith.constant dense<0.000000e+00> : vector<2x512xf32>
    %6 = tpu.matmul %5, %0, %cst_8 {dimension_numbers = #tpu.dot_dimension_numbers<[1], [0], [0], [1], [0, 0, 1, 1], [], []>, precision = #tpu.contract_precision<fp32>} : vector<2x128xf32>, vector<128x512xf32>, vector<2x512xf32> -> vector<2x512xf32>
    %c0_9 = arith.constant 0 : index
    %c2 = arith.constant 2 : index
    %c0_10 = arith.constant 0 : index
    %c0_11 = arith.constant 0 : index
    %7 = vector.load %arg2[%c0_9, %c2, %c0_10, %c0_11] : memref<1x4x2x128xf32, #tpu.memory_space<vmem>>, vector<1x1x2x128xf32>
    %8 = vector.shape_cast %7 : vector<1x1x2x128xf32> to vector<2x128xf32>
    %cst_12 = arith.constant dense<0.000000e+00> : vector<2x512xf32>
    %9 = tpu.matmul %8, %0, %cst_12 {dimension_numbers = #tpu.dot_dimension_numbers<[1], [0], [0], [1], [0, 0, 1, 1], [], []>, precision = #tpu.contract_precision<fp32>} : vector<2x128xf32>, vector<128x512xf32>, vector<2x512xf32> -> vector<2x512xf32>
    %c0_13 = arith.constant 0 : index
    %c3 = arith.constant 3 : index
    %c0_14 = arith.constant 0 : index
    %c0_15 = arith.constant 0 : index
    %10 = vector.load %arg2[%c0_13, %c3, %c0_14, %c0_15] : memref<1x4x2x128xf32, #tpu.memory_space<vmem>>, vector<1x1x2x128xf32>
    %11 = vector.shape_cast %10 : vector<1x1x2x128xf32> to vector<2x128xf32>
    %cst_16 = arith.constant dense<0.000000e+00> : vector<2x512xf32>
    %12 = tpu.matmul %11, %0, %cst_16 {dimension_numbers = #tpu.dot_dimension_numbers<[1], [0], [0], [1], [0, 0, 1, 1], [], []>, precision = #tpu.contract_precision<fp32>} : vector<2x128xf32>, vector<128x512xf32>, vector<2x512xf32> -> vector<2x512xf32>
    %c0_17 = arith.constant 0 : index
    %c0_18 = arith.constant 0 : index
    %c0_19 = arith.constant 0 : index
    %c0_20 = arith.constant 0 : index
    %13 = vector.load %arg4[%c0_17, %c0_18, %c0_19, %c0_20] : memref<4x8x1x512xf32, #tpu.memory_space<vmem>>, vector<1x1x1x512xf32>
    %14 = vector.shape_cast %13 : vector<1x1x1x512xf32> to vector<1x512xf32>
    %15 = vector.broadcast %14 : vector<1x512xf32> to vector<2x512xf32>
    %16 = arith.mulf %3, %15 : vector<2x512xf32>
    %c0_21 = arith.constant 0 : index
    %17 = memref.load %arg5[%c0_21] : memref<8xf32, #tpu.memory_space<smem>>
    %18 = vector.broadcast %17 : f32 to vector<2x512xf32>
    %19 = arith.addf %16, %18 : vector<2x512xf32>
    %c1_22 = arith.constant 1 : index
    %c0_23 = arith.constant 0 : index
    %c0_24 = arith.constant 0 : index
    %c0_25 = arith.constant 0 : index
    %20 = vector.load %arg4[%c1_22, %c0_23, %c0_24, %c0_25] : memref<4x8x1x512xf32, #tpu.memory_space<vmem>>, vector<1x1x1x512xf32>
    %21 = vector.shape_cast %20 : vector<1x1x1x512xf32> to vector<1x512xf32>
    %22 = vector.broadcast %21 : vector<1x512xf32> to vector<2x512xf32>
    %23 = arith.mulf %6, %22 : vector<2x512xf32>
    %24 = arith.addf %19, %23 : vector<2x512xf32>
    %c2_26 = arith.constant 2 : index
    %c0_27 = arith.constant 0 : index
    %c0_28 = arith.constant 0 : index
    %c0_29 = arith.constant 0 : index
    %25 = vector.load %arg4[%c2_26, %c0_27, %c0_28, %c0_29] : memref<4x8x1x512xf32, #tpu.memory_space<vmem>>, vector<1x1x1x512xf32>
    %26 = vector.shape_cast %25 : vector<1x1x1x512xf32> to vector<1x512xf32>
    %27 = vector.broadcast %26 : vector<1x512xf32> to vector<2x512xf32>
    %28 = arith.mulf %9, %27 : vector<2x512xf32>
    %29 = arith.addf %24, %28 : vector<2x512xf32>
    %c3_30 = arith.constant 3 : index
    %c0_31 = arith.constant 0 : index
    %c0_32 = arith.constant 0 : index
    %c0_33 = arith.constant 0 : index
    %30 = vector.load %arg4[%c3_30, %c0_31, %c0_32, %c0_33] : memref<4x8x1x512xf32, #tpu.memory_space<vmem>>, vector<1x1x1x512xf32>
    %31 = vector.shape_cast %30 : vector<1x1x1x512xf32> to vector<1x512xf32>
    %32 = vector.broadcast %31 : vector<1x512xf32> to vector<2x512xf32>
    %33 = arith.mulf %12, %32 : vector<2x512xf32>
    %34 = arith.addf %29, %33 : vector<2x512xf32>
    %c0_34 = arith.constant 0 : index
    %c0_35 = arith.constant 0 : index
    %c0_36 = arith.constant 0 : index
    %c0_37 = arith.constant 0 : index
    %35 = vector.load %arg6[%c0_34, %c0_35, %c0_36, %c0_37] : memref<1x8x2x512xf32, #tpu.memory_space<vmem>>, vector<1x1x2x512xf32>
    %36 = vector.shape_cast %35 : vector<1x1x2x512xf32> to vector<2x512xf32>
    %37 = vector.shape_cast %34 : vector<2x512xf32> to vector<1x1x2x512xf32>
    tpu.vector_store %arg6[%c0_34, %c0_35, %c0_36, %c0_37], %37 {strides = array<i32>} : memref<1x8x2x512xf32, #tpu.memory_space<vmem>>, vector<1x1x2x512xf32>,
    %c0_38 = arith.constant 0 : index
    %c1_39 = arith.constant 1 : index
    %c0_40 = arith.constant 0 : index
    %c0_41 = arith.constant 0 : index
    %38 = vector.load %arg4[%c0_38, %c1_39, %c0_40, %c0_41] : memref<4x8x1x512xf32, #tpu.memory_space<vmem>>, vector<1x1x1x512xf32>
    %39 = vector.shape_cast %38 : vector<1x1x1x512xf32> to vector<1x512xf32>
    %40 = vector.broadcast %39 : vector<1x512xf32> to vector<2x512xf32>
    %41 = arith.mulf %3, %40 : vector<2x512xf32>
    %c1_42 = arith.constant 1 : index
    %42 = memref.load %arg5[%c1_42] : memref<8xf32, #tpu.memory_space<smem>>
    %43 = vector.broadcast %42 : f32 to vector<2x512xf32>
    %44 = arith.addf %41, %43 : vector<2x512xf32>
    %c1_43 = arith.constant 1 : index
    %c1_44 = arith.constant 1 : index
    %c0_45 = arith.constant 0 : index
    %c0_46 = arith.constant 0 : index
    %45 = vector.load %arg4[%c1_43, %c1_44, %c0_45, %c0_46] : memref<4x8x1x512xf32, #tpu.memory_space<vmem>>, vector<1x1x1x512xf32>
    %46 = vector.shape_cast %45 : vector<1x1x1x512xf32> to vector<1x512xf32>
    %47 = vector.broadcast %46 : vector<1x512xf32> to vector<2x512xf32>
    %48 = arith.mulf %6, %47 : vector<2x512xf32>
    %49 = arith.addf %44, %48 : vector<2x512xf32>
    %c2_47 = arith.constant 2 : index
    %c1_48 = arith.constant 1 : index
    %c0_49 = arith.constant 0 : index
    %c0_50 = arith.constant 0 : index
    %50 = vector.load %arg4[%c2_47, %c1_48, %c0_49, %c0_50] : memref<4x8x1x512xf32, #tpu.memory_space<vmem>>, vector<1x1x1x512xf32>
    %51 = vector.shape_cast %50 : vector<1x1x1x512xf32> to vector<1x512xf32>
    %52 = vector.broadcast %51 : vector<1x512xf32> to vector<2x512xf32>
    %53 = arith.mulf %9, %52 : vector<2x512xf32>
    %54 = arith.addf %49, %53 : vector<2x512xf32>
    %c3_51 = arith.constant 3 : index
    %c1_52 = arith.constant 1 : index
    %c0_53 = arith.constant 0 : index
    %c0_54 = arith.constant 0 : index
    %55 = vector.load %arg4[%c3_51, %c1_52, %c0_53, %c0_54] : memref<4x8x1x512xf32, #tpu.memory_space<vmem>>, vector<1x1x1x512xf32>
    %56 = vector.shape_cast %55 : vector<1x1x1x512xf32> to vector<1x512xf32>
    %57 = vector.broadcast %56 : vector<1x512xf32> to vector<2x512xf32>
    %58 = arith.mulf %12, %57 : vector<2x512xf32>
    %59 = arith.addf %54, %58 : vector<2x512xf32>
    %c0_55 = arith.constant 0 : index
    %c1_56 = arith.constant 1 : index
    %c0_57 = arith.constant 0 : index
    %c0_58 = arith.constant 0 : index
    %60 = vector.load %arg6[%c0_55, %c1_56, %c0_57, %c0_58] : memref<1x8x2x512xf32, #tpu.memory_space<vmem>>, vector<1x1x2x512xf32>
    %61 = vector.shape_cast %60 : vector<1x1x2x512xf32> to vector<2x512xf32>
    %62 = vector.shape_cast %59 : vector<2x512xf32> to vector<1x1x2x512xf32>
    tpu.vector_store %arg6[%c0_55, %c1_56, %c0_57, %c0_58], %62 {strides = array<i32>} : memref<1x8x2x512xf32, #tpu.memory_space<vmem>>, vector<1x1x2x512xf32>,
    %c0_59 = arith.constant 0 : index
    %c2_60 = arith.constant 2 : index
    %c0_61 = arith.constant 0 : index
    %c0_62 = arith.constant 0 : index
    %63 = vector.load %arg4[%c0_59, %c2_60, %c0_61, %c0_62] : memref<4x8x1x512xf32, #tpu.memory_space<vmem>>, vector<1x1x1x512xf32>
    %64 = vector.shape_cast %63 : vector<1x1x1x512xf32> to vector<1x512xf32>
    %65 = vector.broadcast %64 : vector<1x512xf32> to vector<2x512xf32>
    %66 = arith.mulf %3, %65 : vector<2x512xf32>
    %c2_63 = arith.constant 2 : index
    %67 = memref.load %arg5[%c2_63] : memref<8xf32, #tpu.memory_space<smem>>
    %68 = vector.broadcast %67 : f32 to vector<2x512xf32>
    %69 = arith.addf %66, %68 : vector<2x512xf32>
    %c1_64 = arith.constant 1 : index
    %c2_65 = arith.constant 2 : index
    %c0_66 = arith.constant 0 : index
    %c0_67 = arith.constant 0 : index
    %70 = vector.load %arg4[%c1_64, %c2_65, %c0_66, %c0_67] : memref<4x8x1x512xf32, #tpu.memory_space<vmem>>, vector<1x1x1x512xf32>
    %71 = vector.shape_cast %70 : vector<1x1x1x512xf32> to vector<1x512xf32>
    %72 = vector.broadcast %71 : vector<1x512xf32> to vector<2x512xf32>
    %73 = arith.mulf %6, %72 : vector<2x512xf32>
    %74 = arith.addf %69, %73 : vector<2x512xf32>
    %c2_68 = arith.constant 2 : index
    %c2_69 = arith.constant 2 : index
    %c0_70 = arith.constant 0 : index
    %c0_71 = arith.constant 0 : index
    %75 = vector.load %arg4[%c2_68, %c2_69, %c0_70, %c0_71] : memref<4x8x1x512xf32, #tpu.memory_space<vmem>>, vector<1x1x1x512xf32>
    %76 = vector.shape_cast %75 : vector<1x1x1x512xf32> to vector<1x512xf32>
    %77 = vector.broadcast %76 : vector<1x512xf32> to vector<2x512xf32>
    %78 = arith.mulf %9, %77 : vector<2x512xf32>
    %79 = arith.addf %74, %78 : vector<2x512xf32>
    %c3_72 = arith.constant 3 : index
    %c2_73 = arith.constant 2 : index
    %c0_74 = arith.constant 0 : index
    %c0_75 = arith.constant 0 : index
    %80 = vector.load %arg4[%c3_72, %c2_73, %c0_74, %c0_75] : memref<4x8x1x512xf32, #tpu.memory_space<vmem>>, vector<1x1x1x512xf32>
    %81 = vector.shape_cast %80 : vector<1x1x1x512xf32> to vector<1x512xf32>
    %82 = vector.broadcast %81 : vector<1x512xf32> to vector<2x512xf32>
    %83 = arith.mulf %12, %82 : vector<2x512xf32>
    %84 = arith.addf %79, %83 : vector<2x512xf32>
    %c0_76 = arith.constant 0 : index
    %c2_77 = arith.constant 2 : index
    %c0_78 = arith.constant 0 : index
    %c0_79 = arith.constant 0 : index
    %85 = vector.load %arg6[%c0_76, %c2_77, %c0_78, %c0_79] : memref<1x8x2x512xf32, #tpu.memory_space<vmem>>, vector<1x1x2x512xf32>
    %86 = vector.shape_cast %85 : vector<1x1x2x512xf32> to vector<2x512xf32>
    %87 = vector.shape_cast %84 : vector<2x512xf32> to vector<1x1x2x512xf32>
    tpu.vector_store %arg6[%c0_76, %c2_77, %c0_78, %c0_79], %87 {strides = array<i32>} : memref<1x8x2x512xf32, #tpu.memory_space<vmem>>, vector<1x1x2x512xf32>,
    %c0_80 = arith.constant 0 : index
    %c3_81 = arith.constant 3 : index
    %c0_82 = arith.constant 0 : index
    %c0_83 = arith.constant 0 : index
    %88 = vector.load %arg4[%c0_80, %c3_81, %c0_82, %c0_83] : memref<4x8x1x512xf32, #tpu.memory_space<vmem>>, vector<1x1x1x512xf32>
    %89 = vector.shape_cast %88 : vector<1x1x1x512xf32> to vector<1x512xf32>
    %90 = vector.broadcast %89 : vector<1x512xf32> to vector<2x512xf32>
    %91 = arith.mulf %3, %90 : vector<2x512xf32>
    %c3_84 = arith.constant 3 : index
    %92 = memref.load %arg5[%c3_84] : memref<8xf32, #tpu.memory_space<smem>>
    %93 = vector.broadcast %92 : f32 to vector<2x512xf32>
    %94 = arith.addf %91, %93 : vector<2x512xf32>
    %c1_85 = arith.constant 1 : index
    %c3_86 = arith.constant 3 : index
    %c0_87 = arith.constant 0 : index
    %c0_88 = arith.constant 0 : index
    %95 = vector.load %arg4[%c1_85, %c3_86, %c0_87, %c0_88] : memref<4x8x1x512xf32, #tpu.memory_space<vmem>>, vector<1x1x1x512xf32>
    %96 = vector.shape_cast %95 : vector<1x1x1x512xf32> to vector<1x512xf32>
    %97 = vector.broadcast %96 : vector<1x512xf32> to vector<2x512xf32>
    %98 = arith.mulf %6, %97 : vector<2x512xf32>
    %99 = arith.addf %94, %98 : vector<2x512xf32>
    %c2_89 = arith.constant 2 : index
    %c3_90 = arith.constant 3 : index
    %c0_91 = arith.constant 0 : index
    %c0_92 = arith.constant 0 : index
    %100 = vector.load %arg4[%c2_89, %c3_90, %c0_91, %c0_92] : memref<4x8x1x512xf32, #tpu.memory_space<vmem>>, vector<1x1x1x512xf32>
    %101 = vector.shape_cast %100 : vector<1x1x1x512xf32> to vector<1x512xf32>
    %102 = vector.broadcast %101 : vector<1x512xf32> to vector<2x512xf32>
    %103 = arith.mulf %9, %102 : vector<2x512xf32>
    %104 = arith.addf %99, %103 : vector<2x512xf32>
    %c3_93 = arith.constant 3 : index
    %c3_94 = arith.constant 3 : index
    %c0_95 = arith.constant 0 : index
    %c0_96 = arith.constant 0 : index
    %105 = vector.load %arg4[%c3_93, %c3_94, %c0_95, %c0_96] : memref<4x8x1x512xf32, #tpu.memory_space<vmem>>, vector<1x1x1x512xf32>
    %106 = vector.shape_cast %105 : vector<1x1x1x512xf32> to vector<1x512xf32>
    %107 = vector.broadcast %106 : vector<1x512xf32> to vector<2x512xf32>
    %108 = arith.mulf %12, %107 : vector<2x512xf32>
    %109 = arith.addf %104, %108 : vector<2x512xf32>
    %c0_97 = arith.constant 0 : index
    %c3_98 = arith.constant 3 : index
    %c0_99 = arith.constant 0 : index
    %c0_100 = arith.constant 0 : index
    %110 = vector.load %arg6[%c0_97, %c3_98, %c0_99, %c0_100] : memref<1x8x2x512xf32, #tpu.memory_space<vmem>>, vector<1x1x2x512xf32>
    %111 = vector.shape_cast %110 : vector<1x1x2x512xf32> to vector<2x512xf32>
    %112 = vector.shape_cast %109 : vector<2x512xf32> to vector<1x1x2x512xf32>
    tpu.vector_store %arg6[%c0_97, %c3_98, %c0_99, %c0_100], %112 {strides = array<i32>} : memref<1x8x2x512xf32, #tpu.memory_space<vmem>>, vector<1x1x2x512xf32>,
    %c0_101 = arith.constant 0 : index
    %c4 = arith.constant 4 : index
    %c0_102 = arith.constant 0 : index
    %c0_103 = arith.constant 0 : index
    %113 = vector.load %arg4[%c0_101, %c4, %c0_102, %c0_103] : memref<4x8x1x512xf32, #tpu.memory_space<vmem>>, vector<1x1x1x512xf32>
    %114 = vector.shape_cast %113 : vector<1x1x1x512xf32> to vector<1x512xf32>
    %115 = vector.broadcast %114 : vector<1x512xf32> to vector<2x512xf32>
    %116 = arith.mulf %3, %115 : vector<2x512xf32>
    %c4_104 = arith.constant 4 : index
    %117 = memref.load %arg5[%c4_104] : memref<8xf32, #tpu.memory_space<smem>>
    %118 = vector.broadcast %117 : f32 to vector<2x512xf32>
    %119 = arith.addf %116, %118 : vector<2x512xf32>
    %c1_105 = arith.constant 1 : index
    %c4_106 = arith.constant 4 : index
    %c0_107 = arith.constant 0 : index
    %c0_108 = arith.constant 0 : index
    %120 = vector.load %arg4[%c1_105, %c4_106, %c0_107, %c0_108] : memref<4x8x1x512xf32, #tpu.memory_space<vmem>>, vector<1x1x1x512xf32>
    %121 = vector.shape_cast %120 : vector<1x1x1x512xf32> to vector<1x512xf32>
    %122 = vector.broadcast %121 : vector<1x512xf32> to vector<2x512xf32>
    %123 = arith.mulf %6, %122 : vector<2x512xf32>
    %124 = arith.addf %119, %123 : vector<2x512xf32>
    %c2_109 = arith.constant 2 : index
    %c4_110 = arith.constant 4 : index
    %c0_111 = arith.constant 0 : index
    %c0_112 = arith.constant 0 : index
    %125 = vector.load %arg4[%c2_109, %c4_110, %c0_111, %c0_112] : memref<4x8x1x512xf32, #tpu.memory_space<vmem>>, vector<1x1x1x512xf32>
    %126 = vector.shape_cast %125 : vector<1x1x1x512xf32> to vector<1x512xf32>
    %127 = vector.broadcast %126 : vector<1x512xf32> to vector<2x512xf32>
    %128 = arith.mulf %9, %127 : vector<2x512xf32>
    %129 = arith.addf %124, %128 : vector<2x512xf32>
    %c3_113 = arith.constant 3 : index
    %c4_114 = arith.constant 4 : index
    %c0_115 = arith.constant 0 : index
    %c0_116 = arith.constant 0 : index
    %130 = vector.load %arg4[%c3_113, %c4_114, %c0_115, %c0_116] : memref<4x8x1x512xf32, #tpu.memory_space<vmem>>, vector<1x1x1x512xf32>
    %131 = vector.shape_cast %130 : vector<1x1x1x512xf32> to vector<1x512xf32>
    %132 = vector.broadcast %131 : vector<1x512xf32> to vector<2x512xf32>
    %133 = arith.mulf %12, %132 : vector<2x512xf32>
    %134 = arith.addf %129, %133 : vector<2x512xf32>
    %c0_117 = arith.constant 0 : index
    %c4_118 = arith.constant 4 : index
    %c0_119 = arith.constant 0 : index
    %c0_120 = arith.constant 0 : index
    %135 = vector.load %arg6[%c0_117, %c4_118, %c0_119, %c0_120] : memref<1x8x2x512xf32, #tpu.memory_space<vmem>>, vector<1x1x2x512xf32>
    %136 = vector.shape_cast %135 : vector<1x1x2x512xf32> to vector<2x512xf32>
    %137 = vector.shape_cast %134 : vector<2x512xf32> to vector<1x1x2x512xf32>
    tpu.vector_store %arg6[%c0_117, %c4_118, %c0_119, %c0_120], %137 {strides = array<i32>} : memref<1x8x2x512xf32, #tpu.memory_space<vmem>>, vector<1x1x2x512xf32>,
    %c0_121 = arith.constant 0 : index
    %c5 = arith.constant 5 : index
    %c0_122 = arith.constant 0 : index
    %c0_123 = arith.constant 0 : index
    %138 = vector.load %arg4[%c0_121, %c5, %c0_122, %c0_123] : memref<4x8x1x512xf32, #tpu.memory_space<vmem>>, vector<1x1x1x512xf32>
    %139 = vector.shape_cast %138 : vector<1x1x1x512xf32> to vector<1x512xf32>
    %140 = vector.broadcast %139 : vector<1x512xf32> to vector<2x512xf32>
    %141 = arith.mulf %3, %140 : vector<2x512xf32>
    %c5_124 = arith.constant 5 : index
    %142 = memref.load %arg5[%c5_124] : memref<8xf32, #tpu.memory_space<smem>>
    %143 = vector.broadcast %142 : f32 to vector<2x512xf32>
    %144 = arith.addf %141, %143 : vector<2x512xf32>
    %c1_125 = arith.constant 1 : index
    %c5_126 = arith.constant 5 : index
    %c0_127 = arith.constant 0 : index
    %c0_128 = arith.constant 0 : index
    %145 = vector.load %arg4[%c1_125, %c5_126, %c0_127, %c0_128] : memref<4x8x1x512xf32, #tpu.memory_space<vmem>>, vector<1x1x1x512xf32>
    %146 = vector.shape_cast %145 : vector<1x1x1x512xf32> to vector<1x512xf32>
    %147 = vector.broadcast %146 : vector<1x512xf32> to vector<2x512xf32>
    %148 = arith.mulf %6, %147 : vector<2x512xf32>
    %149 = arith.addf %144, %148 : vector<2x512xf32>
    %c2_129 = arith.constant 2 : index
    %c5_130 = arith.constant 5 : index
    %c0_131 = arith.constant 0 : index
    %c0_132 = arith.constant 0 : index
    %150 = vector.load %arg4[%c2_129, %c5_130, %c0_131, %c0_132] : memref<4x8x1x512xf32, #tpu.memory_space<vmem>>, vector<1x1x1x512xf32>
    %151 = vector.shape_cast %150 : vector<1x1x1x512xf32> to vector<1x512xf32>
    %152 = vector.broadcast %151 : vector<1x512xf32> to vector<2x512xf32>
    %153 = arith.mulf %9, %152 : vector<2x512xf32>
    %154 = arith.addf %149, %153 : vector<2x512xf32>
    %c3_133 = arith.constant 3 : index
    %c5_134 = arith.constant 5 : index
    %c0_135 = arith.constant 0 : index
    %c0_136 = arith.constant 0 : index
    %155 = vector.load %arg4[%c3_133, %c5_134, %c0_135, %c0_136] : memref<4x8x1x512xf32, #tpu.memory_space<vmem>>, vector<1x1x1x512xf32>
    %156 = vector.shape_cast %155 : vector<1x1x1x512xf32> to vector<1x512xf32>
    %157 = vector.broadcast %156 : vector<1x512xf32> to vector<2x512xf32>
    %158 = arith.mulf %12, %157 : vector<2x512xf32>
    %159 = arith.addf %154, %158 : vector<2x512xf32>
    %c0_137 = arith.constant 0 : index
    %c5_138 = arith.constant 5 : index
    %c0_139 = arith.constant 0 : index
    %c0_140 = arith.constant 0 : index
    %160 = vector.load %arg6[%c0_137, %c5_138, %c0_139, %c0_140] : memref<1x8x2x512xf32, #tpu.memory_space<vmem>>, vector<1x1x2x512xf32>
    %161 = vector.shape_cast %160 : vector<1x1x2x512xf32> to vector<2x512xf32>
    %162 = vector.shape_cast %159 : vector<2x512xf32> to vector<1x1x2x512xf32>
    tpu.vector_store %arg6[%c0_137, %c5_138, %c0_139, %c0_140], %162 {strides = array<i32>} : memref<1x8x2x512xf32, #tpu.memory_space<vmem>>, vector<1x1x2x512xf32>,
    %c0_141 = arith.constant 0 : index
    %c6 = arith.constant 6 : index
    %c0_142 = arith.constant 0 : index
    %c0_143 = arith.constant 0 : index
    %163 = vector.load %arg4[%c0_141, %c6, %c0_142, %c0_143] : memref<4x8x1x512xf32, #tpu.memory_space<vmem>>, vector<1x1x1x512xf32>
    %164 = vector.shape_cast %163 : vector<1x1x1x512xf32> to vector<1x512xf32>
    %165 = vector.broadcast %164 : vector<1x512xf32> to vector<2x512xf32>
    %166 = arith.mulf %3, %165 : vector<2x512xf32>
    %c6_144 = arith.constant 6 : index
    %167 = memref.load %arg5[%c6_144] : memref<8xf32, #tpu.memory_space<smem>>
    %168 = vector.broadcast %167 : f32 to vector<2x512xf32>
    %169 = arith.addf %166, %168 : vector<2x512xf32>
    %c1_145 = arith.constant 1 : index
    %c6_146 = arith.constant 6 : index
    %c0_147 = arith.constant 0 : index
    %c0_148 = arith.constant 0 : index
    %170 = vector.load %arg4[%c1_145, %c6_146, %c0_147, %c0_148] : memref<4x8x1x512xf32, #tpu.memory_space<vmem>>, vector<1x1x1x512xf32>
    %171 = vector.shape_cast %170 : vector<1x1x1x512xf32> to vector<1x512xf32>
    %172 = vector.broadcast %171 : vector<1x512xf32> to vector<2x512xf32>
    %173 = arith.mulf %6, %172 : vector<2x512xf32>
    %174 = arith.addf %169, %173 : vector<2x512xf32>
    %c2_149 = arith.constant 2 : index
    %c6_150 = arith.constant 6 : index
    %c0_151 = arith.constant 0 : index
    %c0_152 = arith.constant 0 : index
    %175 = vector.load %arg4[%c2_149, %c6_150, %c0_151, %c0_152] : memref<4x8x1x512xf32, #tpu.memory_space<vmem>>, vector<1x1x1x512xf32>
    %176 = vector.shape_cast %175 : vector<1x1x1x512xf32> to vector<1x512xf32>
    %177 = vector.broadcast %176 : vector<1x512xf32> to vector<2x512xf32>
    %178 = arith.mulf %9, %177 : vector<2x512xf32>
    %179 = arith.addf %174, %178 : vector<2x512xf32>
    %c3_153 = arith.constant 3 : index
    %c6_154 = arith.constant 6 : index
    %c0_155 = arith.constant 0 : index
    %c0_156 = arith.constant 0 : index
    %180 = vector.load %arg4[%c3_153, %c6_154, %c0_155, %c0_156] : memref<4x8x1x512xf32, #tpu.memory_space<vmem>>, vector<1x1x1x512xf32>
    %181 = vector.shape_cast %180 : vector<1x1x1x512xf32> to vector<1x512xf32>
    %182 = vector.broadcast %181 : vector<1x512xf32> to vector<2x512xf32>
    %183 = arith.mulf %12, %182 : vector<2x512xf32>
    %184 = arith.addf %179, %183 : vector<2x512xf32>
    %c0_157 = arith.constant 0 : index
    %c6_158 = arith.constant 6 : index
    %c0_159 = arith.constant 0 : index
    %c0_160 = arith.constant 0 : index
    %185 = vector.load %arg6[%c0_157, %c6_158, %c0_159, %c0_160] : memref<1x8x2x512xf32, #tpu.memory_space<vmem>>, vector<1x1x2x512xf32>
    %186 = vector.shape_cast %185 : vector<1x1x2x512xf32> to vector<2x512xf32>
    %187 = vector.shape_cast %184 : vector<2x512xf32> to vector<1x1x2x512xf32>
    tpu.vector_store %arg6[%c0_157, %c6_158, %c0_159, %c0_160], %187 {strides = array<i32>} : memref<1x8x2x512xf32, #tpu.memory_space<vmem>>, vector<1x1x2x512xf32>,
    %c0_161 = arith.constant 0 : index
    %c7 = arith.constant 7 : index
    %c0_162 = arith.constant 0 : index
    %c0_163 = arith.constant 0 : index
    %188 = vector.load %arg4[%c0_161, %c7, %c0_162, %c0_163] : memref<4x8x1x512xf32, #tpu.memory_space<vmem>>, vector<1x1x1x512xf32>
    %189 = vector.shape_cast %188 : vector<1x1x1x512xf32> to vector<1x512xf32>
    %190 = vector.broadcast %189 : vector<1x512xf32> to vector<2x512xf32>
    %191 = arith.mulf %3, %190 : vector<2x512xf32>
    %c7_164 = arith.constant 7 : index
    %192 = memref.load %arg5[%c7_164] : memref<8xf32, #tpu.memory_space<smem>>
    %193 = vector.broadcast %192 : f32 to vector<2x512xf32>
    %194 = arith.addf %191, %193 : vector<2x512xf32>
    %c1_165 = arith.constant 1 : index
    %c7_166 = arith.constant 7 : index
    %c0_167 = arith.constant 0 : index
    %c0_168 = arith.constant 0 : index
    %195 = vector.load %arg4[%c1_165, %c7_166, %c0_167, %c0_168] : memref<4x8x1x512xf32, #tpu.memory_space<vmem>>, vector<1x1x1x512xf32>
    %196 = vector.shape_cast %195 : vector<1x1x1x512xf32> to vector<1x512xf32>
    %197 = vector.broadcast %196 : vector<1x512xf32> to vector<2x512xf32>
    %198 = arith.mulf %6, %197 : vector<2x512xf32>
    %199 = arith.addf %194, %198 : vector<2x512xf32>
    %c2_169 = arith.constant 2 : index
    %c7_170 = arith.constant 7 : index
    %c0_171 = arith.constant 0 : index
    %c0_172 = arith.constant 0 : index
    %200 = vector.load %arg4[%c2_169, %c7_170, %c0_171, %c0_172] : memref<4x8x1x512xf32, #tpu.memory_space<vmem>>, vector<1x1x1x512xf32>
    %201 = vector.shape_cast %200 : vector<1x1x1x512xf32> to vector<1x512xf32>
    %202 = vector.broadcast %201 : vector<1x512xf32> to vector<2x512xf32>
    %203 = arith.mulf %9, %202 : vector<2x512xf32>
    %204 = arith.addf %199, %203 : vector<2x512xf32>
    %c3_173 = arith.constant 3 : index
    %c7_174 = arith.constant 7 : index
    %c0_175 = arith.constant 0 : index
    %c0_176 = arith.constant 0 : index
    %205 = vector.load %arg4[%c3_173, %c7_174, %c0_175, %c0_176] : memref<4x8x1x512xf32, #tpu.memory_space<vmem>>, vector<1x1x1x512xf32>
    %206 = vector.shape_cast %205 : vector<1x1x1x512xf32> to vector<1x512xf32>
    %207 = vector.broadcast %206 : vector<1x512xf32> to vector<2x512xf32>
    %208 = arith.mulf %12, %207 : vector<2x512xf32>
    %209 = arith.addf %204, %208 : vector<2x512xf32>
    %c0_177 = arith.constant 0 : index
    %c7_178 = arith.constant 7 : index
    %c0_179 = arith.constant 0 : index
    %c0_180 = arith.constant 0 : index
    %210 = vector.load %arg6[%c0_177, %c7_178, %c0_179, %c0_180] : memref<1x8x2x512xf32, #tpu.memory_space<vmem>>, vector<1x1x2x512xf32>
    %211 = vector.shape_cast %210 : vector<1x1x2x512xf32> to vector<2x512xf32>
    %212 = vector.shape_cast %209 : vector<2x512xf32> to vector<1x1x2x512xf32>
    tpu.vector_store %arg6[%c0_177, %c7_178, %c0_179, %c0_180], %212 {strides = array<i32>} : memref<1x8x2x512xf32, #tpu.memory_space<vmem>>, vector<1x1x2x512xf32>,
    return
  }
  func.func @transform_0(%arg0: i32, %arg1: i32) -> (i32, i32, i32, i32) {
    %c0_i32 = arith.constant 0 : i32
    %c0_i32_0 = arith.constant 0 : i32
    %c0_i32_1 = arith.constant 0 : i32
    return %arg0, %c0_i32, %arg1, %c0_i32_0 : i32, i32, i32, i32
  }
  func.func @transform_1(%arg0: i32, %arg1: i32) -> (i32, i32) {
    %c0_i32 = arith.constant 0 : i32
    %c0_i32_0 = arith.constant 0 : i32
    %c0_i32_1 = arith.constant 0 : i32
    return %c0_i32, %c0_i32_0 : i32, i32
  }
  func.func @transform_2(%arg0: i32, %arg1: i32) -> (i32, i32, i32, i32) {
    %c0_i32 = arith.constant 0 : i32
    %c0_i32_0 = arith.constant 0 : i32
    %c0_i32_1 = arith.constant 0 : i32
    %c0_i32_2 = arith.constant 0 : i32
    %c0_i32_3 = arith.constant 0 : i32
    return %c0_i32, %c0_i32_0, %c0_i32_1, %c0_i32_2 : i32, i32, i32, i32
  }
  func.func @transform_3(%arg0: i32, %arg1: i32) -> i32 {
    %c0_i32 = arith.constant 0 : i32
    %c0_i32_0 = arith.constant 0 : i32
    return %c0_i32 : i32
  }
  func.func @transform_4(%arg0: i32, %arg1: i32) -> (i32, i32, i32, i32) {
    %c0_i32 = arith.constant 0 : i32
    %c0_i32_0 = arith.constant 0 : i32
    %c0_i32_1 = arith.constant 0 : i32
    return %arg0, %c0_i32, %arg1, %c0_i32_0 : i32, i32, i32, i32
  }
}

</mosaic_0001>

<llo_original>
// kernel: tpu_custom_call.1
$region0: #{tpu_custom_call.1}
  #allocation0 [shape = 'u32[]', space=smem, size = 0x4, offset = 0x4, fixed_abs, tag = 'smem constant byte address 0x4 - core index']
  #allocation1 [shape = 'u32[144,128]{1,0:T(1,128)}', space=vmem, size = 0x12000, scoped, tag = 'internal scratch']
  %s0 = inlined_call_operand.hbm [shape: f32[2,4,2,128], index: 0, kind: input, shape index: {}]
  %s1 = inlined_call_operand.hbm [shape: f32[128,512], index: 1, kind: input, shape index: {}]
  %s2 = inlined_call_operand.hbm [shape: f32[4,8,1,512], index: 2, kind: input, shape index: {}]
  %s3 = inlined_call_operand.vmem [shape: f32[8], index: 3, kind: input, shape index: {}]
  %s4 = inlined_call_operand.hbm [shape: f32[2,8,2,512], index: 4, kind: output, shape index: {}]
  %s5 = sld [smem:[#allocation0]]
  $region65: #{tpu_custom_call.1} parent=0
    _
  %s7 = ssub.s32 1, %s5
  %s8 = scalar_select 0, %s7, %s5
  $region1: #{tpu_custom_call.1} parent=0
    #allocation2 [shape = 'u8[8192]{0}', space=vmem, size = 0x2000, scoped, tag = 'input window, operand 0']
    #allocation3 [shape = 's32[2]{0}', space=sflag, size = 0x8, scoped, tag = 'scoped memory for tpu_custom_call.1']
    #allocation4 [shape = 's32[2]{0}', space=sflag, size = 0x8, scoped, tag = 'scoped memory for tpu_custom_call.1']
    #allocation5 [shape = 's32[2]{0}', space=sflag, size = 0x8, scoped, tag = 'scoped memory for tpu_custom_call.1']
    #allocation6 [shape = 'u8[262144]{0}', space=vmem, size = 0x40000, scoped, tag = 'input window, operand 1, single buffered']
    #allocation7 [shape = 's32[1]{0}', space=sflag, size = 0x4, scoped, tag = 'scoped memory for tpu_custom_call.1']
    #allocation8 [shape = 'u8[65536]{0}', space=vmem, size = 0x10000, scoped, tag = 'input window, operand 2, single buffered']
    #allocation9 [shape = 'u8[512]{0}', space=smem, size = 0x200, scoped, tag = 'input window, operand 3, single buffered']
    #allocation10 [shape = 'u8[65536]{0}', space=vmem, size = 0x10000, scoped, tag = 'output window, operand 0']
    %9 = vsyncpa [#allocation3], 0
    %s10 = scalar_lea.sflag [#allocation3], 1
    %11 = vsyncpa %s10, 0
    %12 = vsyncpa [#allocation7], 0
    %13 = vsyncpa [#allocation5], 0
    %14 = vsyncpa [#allocation4], 0
    %s15 = scalar_lea.sflag [#allocation4], 1
    %16 = vsyncpa %s15, 0
    loop: start=0, step=1, limit=4
    $region2: #{tpu_custom_call.1} parent=1 // loop_pre_header
      _
    $region3: #{tpu_custom_call.1} parent=1 // loop_header
      %s18 = sphi 0, %s22
      %p19 = scmp.ge.s32.totalorder %s18, 4
      %s25 = sphi 0, %s37
      %s26 = sphi 0, %s33
      %s27 = sphi 0, %s25
      %s28 = sphi 0, %s26
      %s29 = sphi 0, %s27
      %s30 = sphi 0, %s28
      %s42 = sphi 0, %s44
      %s45 = sphi 0, %s42
      %s46 = sphi 0, %s45
      %s62 = sphi 0, %s46
      %s66 = sphi 0, %s66
      %s68 = sphi 0, %s66
      %s69 = sphi 0, %s68
      %s83 = sphi 0, %s69
      %s87 = sphi 0, %s87
      %s89 = sphi 0, %s87
      %s90 = sphi 0, %s89
      %s104 = sphi 0, %s90
      %s108 = sphi 0, %s108
      %s110 = sphi 0, %s108
      %s111 = sphi 0, %s110
      %s125 = sphi 0, %s111
      %s133 = sphi 0, %s135
      %s136 = sphi 0, %s133
      %s137 = sphi 0, %s136
      %s153 = sphi 0, %s137
    $region4: #{tpu_custom_call.1} parent=1 // loop_header_branch
      %21 = sbr.rel (%p19) target = $region8
    $region5: #{tpu_custom_call.1} parent=1 // loop_body
      %s23 = ssub.s32 %s18, 1
      %s24 = ssub.s32 %s18, 2
      %s31 = sadd.s32 1, %s26
      %p32 = scmp.ge.s32.totalorder %s31, 1
      %s33 = scalar_select %p32, 0, %s31
      %s34 = sadd.s32 1, %s25
      %s35 = scalar_select %p32, %s34, %s25
      %p36 = scmp.ge.s32.totalorder %s35, 2
      %s37 = scalar_select %p36, 0, %s35
      %s38 = ssub.s32 %s25, %s37
      %s39 = ssub.s32 %s26, %s33
      %s40 = sor.u32 %s38, %s39
      %p41 = scmp.eq.s32.totalorder %s40, 0
      %s43 = sadd.s32 %s42, 1
      %s44 = scalar_select %p41, %s42, %s43
      %p47 = pneg %p41
      %p48 = scmp.eq.s32.totalorder %s18, 1
      %p49 = por %p47, %p48
      %p50 = scmp.ne.s32.totalorder %s42, %s45
      %p51 = scmp.eq.s32.totalorder %s18, 0
      %p52 = por %p50, %p51
      %p53 = scmp.ne.s32.totalorder %s42, %s45
      %p54 = scmp.eq.s32.totalorder %s23, 1
      %p55 = por %p53, %p54
      %p56 = scmp.ne.s32.totalorder %s45, %s46
      %p57 = scmp.eq.s32.totalorder %s23, 0
      %p58 = por %p56, %p57
      %p59 = scmp.ne.s32.totalorder %s45, %s46
      %p60 = scmp.eq.s32.totalorder %s24, 1
      %p61 = por %p59, %p60
      %p63 = scmp.ne.s32.totalorder %s46, %s62
      %p64 = scmp.eq.s32.totalorder %s24, 0
      %p65 = por %p63, %p64
      %s67 = sadd.s32 %s66, 1
      %p70 = scmp.eq.s32.totalorder %s18, 1
      %p71 = scmp.ne.s32.totalorder %s66, %s68
      %p72 = scmp.eq.s32.totalorder %s18, 0
      %p73 = por %p71, %p72
      %p74 = scmp.ne.s32.totalorder %s66, %s68
      %p75 = scmp.eq.s32.totalorder %s23, 1
      %p76 = por %p74, %p75
      %p77 = scmp.ne.s32.totalorder %s68, %s69
      %p78 = scmp.eq.s32.totalorder %s23, 0
      %p79 = por %p77, %p78
      %p80 = scmp.ne.s32.totalorder %s68, %s69
      %p81 = scmp.eq.s32.totalorder %s24, 1
      %p82 = por %p80, %p81
      %p84 = scmp.ne.s32.totalorder %s69, %s83
      %p85 = scmp.eq.s32.totalorder %s24, 0
      %p86 = por %p84, %p85
      %s88 = sadd.s32 %s87, 1
      %p91 = scmp.eq.s32.totalorder %s18, 1
      %p92 = scmp.ne.s32.totalorder %s87, %s89
      %p93 = scmp.eq.s32.totalorder %s18, 0
      %p94 = por %p92, %p93
      %p95 = scmp.ne.s32.totalorder %s87, %s89
      %p96 = scmp.eq.s32.totalorder %s23, 1
      %p97 = por %p95, %p96
      %p98 = scmp.ne.s32.totalorder %s89, %s90
      %p99 = scmp.eq.s32.totalorder %s23, 0
      %p100 = por %p98, %p99
      %p101 = scmp.ne.s32.totalorder %s89, %s90
      %p102 = scmp.eq.s32.totalorder %s24, 1
      %p103 = por %p101, %p102
      %p105 = scmp.ne.s32.totalorder %s90, %s104
      %p106 = scmp.eq.s32.totalorder %s24, 0
      %p107 = por %p105, %p106
      %s109 = sadd.s32 %s108, 1
      %p112 = scmp.eq.s32.totalorder %s18, 1
      %p113 = scmp.ne.s32.totalorder %s108, %s110
      %p114 = scmp.eq.s32.totalorder %s18, 0
      %p115 = por %p113, %p114
      %p116 = scmp.ne.s32.totalorder %s108, %s110
      %p117 = scmp.eq.s32.totalorder %s23, 1
      %p118 = por %p116, %p117
      %p119 = scmp.ne.s32.totalorder %s110, %s111
      %p120 = scmp.eq.s32.totalorder %s23, 0
      %p121 = por %p119, %p120
      %p122 = scmp.ne.s32.totalorder %s110, %s111
      %p123 = scmp.eq.s32.totalorder %s24, 1
      %p124 = por %p122, %p123
      %p126 = scmp.ne.s32.totalorder %s111, %s125
      %p127 = scmp.eq.s32.totalorder %s24, 0
      %p128 = por %p126, %p127
      %s129 = ssub.s32 %s25, %s37
      %s130 = ssub.s32 %s26, %s33
      %s131 = sor.u32 %s129, %s130
      %p132 = scmp.eq.s32.totalorder %s131, 0
      %s134 = sadd.s32 %s133, 1
      %s135 = scalar_select %p132, %s133, %s134
      %p138 = pneg %p132
      %p139 = scmp.eq.s32.totalorder %s18, 1
      %p140 = por %p138, %p139
      %p141 = scmp.ne.s32.totalorder %s133, %s136
      %p142 = scmp.eq.s32.totalorder %s18, 0
      %p143 = por %p141, %p142
      %p144 = scmp.ne.s32.totalorder %s133, %s136
      %p145 = scmp.eq.s32.totalorder %s23, 1
      %p146 = por %p144, %p145
      %p147 = scmp.ne.s32.totalorder %s136, %s137
      %p148 = scmp.eq.s32.totalorder %s23, 0
      %p149 = por %p147, %p148
      %p150 = scmp.ne.s32.totalorder %s136, %s137
      %p151 = scmp.eq.s32.totalorder %s24, 1
      %p152 = por %p150, %p151
      %p154 = scmp.ne.s32.totalorder %s137, %s153
      %p155 = scmp.eq.s32.totalorder %s24, 0
      %p156 = por %p154, %p155
      %p157 = scmp.le.s32.totalorder 1, %s18
      %p158 = scmp.lt.s32.totalorder %s18, 3
      %p159 = pnand %p157, %p158
      %p160 = pneg %p159
      // Predicated region
      $region9: #{tpu_custom_call.1} parent=5 // pred_check
        _
      $region10: #{tpu_custom_call.1} parent=5 // pred_check_branch
        %162 = sbr.rel (%p159) target = $region12
      $region11: #{tpu_custom_call.1} parent=5 // pred_region
        %s163 = ssub.s32 %s18, 1
        // Predicated region
        $region13: #{tpu_custom_call.1} parent=11 // pred_check
          %p164 = pneg %p79
        $region14: #{tpu_custom_call.1} parent=11 // pred_check_branch
          %166 = sbr.rel (%p164) target = $region16
        $region15: #{tpu_custom_call.1} parent=11 // pred_region
          %s168 = ssub.s32 8192, 8192
          %169 = vsyncadd [#allocation7], %s168
          %s170 = sshll.u32 [#allocation6], 4
          %s171 = int_to_ptr.vmem [resolvable:$true] %s170
          %176 = dma.hbm_to_vmem [thread:$0]  %s1, 8192, %s171, [#allocation7], 512, 512, 32
        $region16: #{tpu_custom_call.1} parent=11 // pred_fallthru
          _
        // Predicated region
        $region17: #{tpu_custom_call.1} parent=11 // pred_check
          %p177 = pneg %p100
        $region18: #{tpu_custom_call.1} parent=11 // pred_check_branch
          %179 = sbr.rel (%p177) target = $region20
        $region19: #{tpu_custom_call.1} parent=11 // pred_region
          %s181 = ssub.s32 2048, 2048
          %182 = vsyncadd [#allocation7], %s181
          %s183 = sshll.u32 [#allocation8], 4
          %s184 = int_to_ptr.vmem [resolvable:$true] %s183
          %189 = dma.hbm_to_vmem [thread:$0]  %s2, 2048, %s184, [#allocation7], 64, 64, 4
        $region20: #{tpu_custom_call.1} parent=11 // pred_fallthru
          _
        // Predicated region
        $region21: #{tpu_custom_call.1} parent=11 // pred_check
          %p190 = pneg %p121
        $region22: #{tpu_custom_call.1} parent=11 // pred_check_branch
          %192 = sbr.rel (%p190) target = $region24
        $region23: #{tpu_custom_call.1} parent=11 // pred_region
          %s194 = ssub.s32 16, 16
          %195 = vsyncadd [#allocation5], %s194
          %s197 = sshll.u32 %s3, 4
          %s198 = int_to_ptr.vmem [resolvable:$true] %s197
          %200 = dma.vmem_to_smem %s198, 16, [#allocation9], [#allocation5]
        $region24: #{tpu_custom_call.1} parent=11 // pred_fallthru
          _
      $region12: #{tpu_custom_call.1} parent=5 // pred_fallthru
        _
      %p201 = scmp.lt.s32.totalorder %s18, 2
      // Predicated region
      $region25: #{tpu_custom_call.1} parent=5 // pred_check
        %p202 = pneg %p201
      $region26: #{tpu_custom_call.1} parent=5 // pred_check_branch
        %204 = sbr.rel (%p202) target = $region28
      $region27: #{tpu_custom_call.1} parent=5 // pred_region
        // Predicated region
        $region29: #{tpu_custom_call.1} parent=27 // pred_check
          %p205 = pneg %p52
        $region30: #{tpu_custom_call.1} parent=27 // pred_check_branch
          %207 = sbr.rel (%p205) target = $region32
        $region31: #{tpu_custom_call.1} parent=27 // pred_region
          %s208 = sand.u32 %s42, 1
          %s209 = scalar_lea.sflag [#allocation3], %s208
          %s210 = sand.u32 %s42, 1
          %s211 = smul.addr %s210, 8
          %s212 = scalar_lea.vmem [#allocation2], %s211
          %s214 = ssub.s32 128, 128
          %215 = vsyncadd %s209, %s214
          %s216 = smul.addr %s25, 4
          %s217 = sadd.s32 %s26, %s216
          %s218 = smul.addr %s217, 32
          %s219 = scalar_lea.hbm %s0, %s218
          %s220 = sshll.u32 %s212, 4
          %s221 = int_to_ptr.vmem [resolvable:$true] %s220
          %226 = dma.hbm_to_vmem [thread:$0]  %s219, 128, %s221, %s209, 32, 32, 2
        $region32: #{tpu_custom_call.1} parent=27 // pred_fallthru
          _
      $region28: #{tpu_custom_call.1} parent=5 // pred_fallthru
        _
      %p227 = scmp.le.s32.totalorder 1, %s18
      %p228 = scmp.lt.s32.totalorder %s18, 3
      %p229 = pnand %p227, %p228
      %p230 = pneg %p229
      // Predicated region
      $region33: #{tpu_custom_call.1} parent=5 // pred_check
        _
      $region34: #{tpu_custom_call.1} parent=5 // pred_check_branch
        %232 = sbr.rel (%p229) target = $region36
      $region35: #{tpu_custom_call.1} parent=5 // pred_region
        %s233 = ssub.s32 %s18, 1
        %s234 = sand.u32 %s45, 1
        %s235 = scalar_lea.sflag [#allocation3], %s234
        %s236 = sand.u32 %s45, 1
        %s237 = smul.addr %s236, 8
        %s238 = scalar_lea.vmem [#allocation2], %s237
        // Predicated region
        $region37: #{tpu_custom_call.1} parent=35 // pred_check
          %p239 = pneg %p58
        $region38: #{tpu_custom_call.1} parent=35 // pred_check_branch
          %241 = sbr.rel (%p239) target = $region40
        $region39: #{tpu_custom_call.1} parent=35 // pred_region
          %242 = dma.done %s235, 128
        $region40: #{tpu_custom_call.1} parent=35 // pred_fallthru
          _
        // Predicated region
        $region41: #{tpu_custom_call.1} parent=35 // pred_check
          %p243 = pneg %p79
        $region42: #{tpu_custom_call.1} parent=35 // pred_check_branch
          %245 = sbr.rel (%p243) target = $region44
        $region43: #{tpu_custom_call.1} parent=35 // pred_region
          %246 = dma.done [#allocation7], 8192
        $region44: #{tpu_custom_call.1} parent=35 // pred_fallthru
          _
        // Predicated region
        $region45: #{tpu_custom_call.1} parent=35 // pred_check
          %p247 = pneg %p100
        $region46: #{tpu_custom_call.1} parent=35 // pred_check_branch
          %249 = sbr.rel (%p247) target = $region48
        $region47: #{tpu_custom_call.1} parent=35 // pred_region
          %250 = dma.done [#allocation7], 2048
        $region48: #{tpu_custom_call.1} parent=35 // pred_fallthru
          _
        // Predicated region
        $region49: #{tpu_custom_call.1} parent=35 // pred_check
          %p251 = pneg %p121
        $region50: #{tpu_custom_call.1} parent=35 // pred_check_branch
          %253 = sbr.rel (%p251) target = $region52
        $region51: #{tpu_custom_call.1} parent=35 // pred_region
          %254 = dma.done [#allocation5], 16
        $region52: #{tpu_custom_call.1} parent=35 // pred_fallthru
          _
        %255 = sfence
        %s256 = sand.u32 %s45, 1
        %s257 = scalar_lea.sflag [#allocation3], %s256
        %s258 = sand.u32 %s45, 1
        %s259 = smul.addr %s258, 8
        %s260 = scalar_lea.vmem [#allocation2], %s259
        %p261 = pneg %p58
        %p262 = pneg %p55
        %p263 = pneg %p79
        %p264 = pneg %p76
        %p265 = pneg %p100
        %p266 = pneg %p97
        %p267 = pneg %p121
        %p268 = pneg %p118
        %p269 = pneg %p149
        %p270 = pneg %p146
        %s271 = sand.u32 %s136, 1
        %s272 = scalar_lea.sflag [#allocation4], %s271
        %s273 = sand.u32 %s136, 1
        %s274 = smul.addr %s273, 64
        %s275 = scalar_lea.vmem [#allocation10], %s274
        %v276 = vld [vmem:[#allocation6] sm:$0xff]
        %v277 = vld [vmem:[#allocation6 + $0x8] sm:$0xff]
        %v278 = vld [vmem:[#allocation6 + $0x10] sm:$0xff]
        %v279 = vld [vmem:[#allocation6 + $0x18] sm:$0xff]
        %v280 = vld [vmem:[#allocation6 + $0x20] sm:$0xff]
        %v281 = vld [vmem:[#allocation6 + $0x28] sm:$0xff]
        %v282 = vld [vmem:[#allocation6 + $0x30] sm:$0xff]
        %v283 = vld [vmem:[#allocation6 + $0x38] sm:$0xff]
        %v284 = vld [vmem:[#allocation6 + $0x40] sm:$0xff]
        %v285 = vld [vmem:[#allocation6 + $0x48] sm:$0xff]
        %v286 = vld [vmem:[#allocation6 + $0x50] sm:$0xff]
        %v287 = vld [vmem:[#allocation6 + $0x58] sm:$0xff]
        %v288 = vld [vmem:[#allocation6 + $0x60] sm:$0xff]
        %v289 = vld [vmem:[#allocation6 + $0x68] sm:$0xff]
        %v290 = vld [vmem:[#allocation6 + $0x70] sm:$0xff]
        %v291 = vld [vmem:[#allocation6 + $0x78] sm:$0xff]
        %v292 = vld [vmem:[#allocation6 + $0x80] sm:$0xff]
        %v293 = vld [vmem:[#allocation6 + $0x88] sm:$0xff]
        %v294 = vld [vmem:[#allocation6 + $0x90] sm:$0xff]
        %v295 = vld [vmem:[#allocation6 + $0x98] sm:$0xff]
        %v296 = vld [vmem:[#allocation6 + $0xa0] sm:$0xff]
        %v297 = vld [vmem:[#allocation6 + $0xa8] sm:$0xff]
        %v298 = vld [vmem:[#allocation6 + $0xb0] sm:$0xff]
        %v299 = vld [vmem:[#allocation6 + $0xb8] sm:$0xff]
        %v300 = vld [vmem:[#allocation6 + $0xc0] sm:$0xff]
        %v301 = vld [vmem:[#allocation6 + $0xc8] sm:$0xff]
        %v302 = vld [vmem:[#allocation6 + $0xd0] sm:$0xff]
        %v303 = vld [vmem:[#allocation6 + $0xd8] sm:$0xff]
        %v304 = vld [vmem:[#allocation6 + $0xe0] sm:$0xff]
        %v305 = vld [vmem:[#allocation6 + $0xe8] sm:$0xff]
        %v306 = vld [vmem:[#allocation6 + $0xf0] sm:$0xff]
        %v307 = vld [vmem:[#allocation6 + $0xf8] sm:$0xff]
        %v308 = vld [vmem:[#allocation6 + $0x100] sm:$0xff]
        %v309 = vld [vmem:[#allocation6 + $0x108] sm:$0xff]
        %v310 = vld [vmem:[#allocation6 + $0x110] sm:$0xff]
        %v311 = vld [vmem:[#allocation6 + $0x118] sm:$0xff]
        %v312 = vld [vmem:[#allocation6 + $0x120] sm:$0xff]
        %v313 = vld [vmem:[#allocation6 + $0x128] sm:$0xff]
        %v314 = vld [vmem:[#allocation6 + $0x130] sm:$0xff]
        %v315 = vld [vmem:[#allocation6 + $0x138] sm:$0xff]
        %v316 = vld [vmem:[#allocation6 + $0x140] sm:$0xff]
        %v317 = vld [vmem:[#allocation6 + $0x148] sm:$0xff]
        %v318 = vld [vmem:[#allocation6 + $0x150] sm:$0xff]
        %v319 = vld [vmem:[#allocation6 + $0x158] sm:$0xff]
        %v320 = vld [vmem:[#allocation6 + $0x160] sm:$0xff]
        %v321 = vld [vmem:[#allocation6 + $0x168] sm:$0xff]
        %v322 = vld [vmem:[#allocation6 + $0x170] sm:$0xff]
        %v323 = vld [vmem:[#allocation6 + $0x178] sm:$0xff]
        %v324 = vld [vmem:[#allocation6 + $0x180] sm:$0xff]
        %v325 = vld [vmem:[#allocation6 + $0x188] sm:$0xff]
        %v326 = vld [vmem:[#allocation6 + $0x190] sm:$0xff]
        %v327 = vld [vmem:[#allocation6 + $0x198] sm:$0xff]
        %v328 = vld [vmem:[#allocation6 + $0x1a0] sm:$0xff]
        %v329 = vld [vmem:[#allocation6 + $0x1a8] sm:$0xff]
        %v330 = vld [vmem:[#allocation6 + $0x1b0] sm:$0xff]
        %v331 = vld [vmem:[#allocation6 + $0x1b8] sm:$0xff]
        %v332 = vld [vmem:[#allocation6 + $0x1c0] sm:$0xff]
        %v333 = vld [vmem:[#allocation6 + $0x1c8] sm:$0xff]
        %v334 = vld [vmem:[#allocation6 + $0x1d0] sm:$0xff]
        %v335 = vld [vmem:[#allocation6 + $0x1d8] sm:$0xff]
        %v336 = vld [vmem:[#allocation6 + $0x1e0] sm:$0xff]
        %v337 = vld [vmem:[#allocation6 + $0x1e8] sm:$0xff]
        %v338 = vld [vmem:[#allocation6 + $0x1f0] sm:$0xff]
        %v339 = vld [vmem:[#allocation6 + $0x1f8] sm:$0xff]
        %v340 = vld [vmem:[%s238] sm:$0x3]
        %v341 = vand.u32 %v337, 4294901760
        %342 = vmatprep.subr.mxu0 %v341
        %v343 = vand.u32 %v336, 4294901760
        %344 = vmatpush1.msra.mxu0 %v343
        %v345 = vand.u32 %v333, 4294901760
        %346 = vmatprep.subr.mxu0 %v345
        %v347 = vand.u32 %v332, 4294901760
        %348 = vmatpush1.msra.mxu0 %v347
        %v349 = vand.u32 %v329, 4294901760
        %350 = vmatprep.subr.mxu0 %v349
        %v351 = vand.u32 %v328, 4294901760
        %352 = vmatpush1.msra.mxu0 %v351
        %v353 = vand.u32 %v325, 4294901760
        %354 = vmatprep.subr.mxu0 %v353
        %v355 = vand.u32 %v324, 4294901760
        %356 = vmatpush1.msra.mxu0 %v355
        %v357 = vand.u32 %v321, 4294901760
        %358 = vmatprep.subr.mxu0 %v357
        %v359 = vand.u32 %v320, 4294901760
        %360 = vmatpush1.msra.mxu0 %v359
        %v361 = vand.u32 %v317, 4294901760
        %362 = vmatprep.subr.mxu0 %v361
        %v363 = vand.u32 %v316, 4294901760
        %364 = vmatpush1.msra.mxu0 %v363
        %v365 = vand.u32 %v313, 4294901760
        %366 = vmatprep.subr.mxu0 %v365
        %v367 = vand.u32 %v312, 4294901760
        %368 = vmatpush1.msra.mxu0 %v367
        %v369 = vand.u32 %v309, 4294901760
        %370 = vmatprep.subr.mxu0 %v369
        %v371 = vand.u32 %v308, 4294901760
        %372 = vmatpush1.msra.mxu0 %v371
        %v373 = vand.u32 %v305, 4294901760
        %374 = vmatprep.subr.mxu0 %v373
        %v375 = vand.u32 %v304, 4294901760
        %376 = vmatpush1.msra.mxu0 %v375
        %v377 = vand.u32 %v301, 4294901760
        %378 = vmatprep.subr.mxu0 %v377
        %v379 = vand.u32 %v300, 4294901760
        %380 = vmatpush1.msra.mxu0 %v379
        %v381 = vand.u32 %v297, 4294901760
        %382 = vmatprep.subr.mxu0 %v381
        %v383 = vand.u32 %v296, 4294901760
        %384 = vmatpush1.msra.mxu0 %v383
        %v385 = vand.u32 %v293, 4294901760
        %386 = vmatprep.subr.mxu0 %v385
        %v387 = vand.u32 %v292, 4294901760
        %388 = vmatpush1.msra.mxu0 %v387
        %v389 = vand.u32 %v289, 4294901760
        %390 = vmatprep.subr.mxu0 %v389
        %v391 = vand.u32 %v288, 4294901760
        %392 = vmatpush1.msra.mxu0 %v391
        %v393 = vand.u32 %v285, 4294901760
        %394 = vmatprep.subr.mxu0 %v393
        %v395 = vand.u32 %v284, 4294901760
        %396 = vmatpush1.msra.mxu0 %v395
        %v397 = vand.u32 %v281, 4294901760
        %398 = vmatprep.subr.mxu0 %v397
        %v399 = vand.u32 %v280, 4294901760
        %400 = vmatpush1.msra.mxu0 %v399
        %v401 = vand.u32 %v277, 4294901760
        %402 = vmatprep.subr.mxu0 %v401
        %v403 = vand.u32 %v276, 4294901760
        %404 = vmatpush1.msra.mxu0 %v403
        %405 = vmatprep.subr.mxu0 0.0
        %406 = vmatpush2.msra.mxu0 0.0
        %407 = vmatprep.subr.mxu0 0.0
        %408 = vmatpush2.msra.mxu0 0.0
        %409 = vmatprep.subr.mxu0 0.0
        %410 = vmatpush2.msra.mxu0 0.0
        %411 = vmatprep.subr.mxu0 0.0
        %412 = vmatpush2.msra.mxu0 0.0
        %413 = vmatprep.subr.mxu0 0.0
        %414 = vmatpush2.msra.mxu0 0.0
        %415 = vmatprep.subr.mxu0 0.0
        %416 = vmatpush2.msra.mxu0 0.0
        %417 = vmatprep.subr.mxu0 0.0
        %418 = vmatpush2.msra.mxu0 0.0
        %419 = vmatprep.subr.mxu0 0.0
        %420 = vmatpush2.msra.mxu0 0.0
        %421 = vmatprep.subr.mxu0 0.0
        %422 = vmatpush2.msra.mxu0 0.0
        %423 = vmatprep.subr.mxu0 0.0
        %424 = vmatpush2.msra.mxu0 0.0
        %425 = vmatprep.subr.mxu0 0.0
        %426 = vmatpush2.msra.mxu0 0.0
        %427 = vmatprep.subr.mxu0 0.0
        %428 = vmatpush2.msra.mxu0 0.0
        %429 = vmatprep.subr.mxu0 0.0
        %430 = vmatpush2.msra.mxu0 0.0
        %431 = vmatprep.subr.mxu0 0.0
        %432 = vmatpush2.msra.mxu0 0.0
        %433 = vmatprep.subr.mxu0 0.0
        %434 = vmatpush2.msra.mxu0 0.0
        %435 = vmatprep.subr.mxu0 0.0
        %436 = vmatpush2.msra.mxu0 0.0
        %437 = vmatprep.mubr.f32.mxu0 0.0
        %v438 = vand.u32 %v340, 4294901760
        %v439 = vsub.f32 %v340, %v438
        %v440 = vand.u32 %v439, 4294901760
        %v441 = vsub.f32 %v439, %v440
        %v442 = vand.u32 %v441, 4294901760
        %443 = vmatmul.mubr.f32.gmra.mxu0 %v442
        %v444 = vpop.f32.mrf.mxu0
        %v445 = vadd.f32 0.0, %v444
        %v446 = vpop.f32.mrf.mxu0
        %v447 = vadd.f32 0.0, %v446
        %448 = vdwg.mxu0
        %v449 = vand.u32 %v337, 4294901760
        %v450 = vsub.f32 %v337, %v449
        %v451 = vand.u32 %v450, 4294901760
        %v452 = vsub.f32 %v450, %v451
        %v453 = vand.u32 %v452, 4294901760
        %454 = vmatprep.subr.mxu0 %v453
        %v455 = vand.u32 %v336, 4294901760
        %v456 = vsub.f32 %v336, %v455
        %v457 = vand.u32 %v456, 4294901760
        %v458 = vsub.f32 %v456, %v457
        %v459 = vand.u32 %v458, 4294901760
        %460 = vmatpush1.msra.mxu0 %v459
        %v461 = vand.u32 %v333, 4294901760
        %v462 = vsub.f32 %v333, %v461
        %v463 = vand.u32 %v462, 4294901760
        %v464 = vsub.f32 %v462, %v463
        %v465 = vand.u32 %v464, 4294901760
        %466 = vmatprep.subr.mxu0 %v465
        %v467 = vand.u32 %v332, 4294901760
        %v468 = vsub.f32 %v332, %v467
        %v469 = vand.u32 %v468, 4294901760
        %v470 = vsub.f32 %v468, %v469
        %v471 = vand.u32 %v470, 4294901760
        %472 = vmatpush1.msra.mxu0 %v471
        %v473 = vand.u32 %v329, 4294901760
        %v474 = vsub.f32 %v329, %v473
        %v475 = vand.u32 %v474, 4294901760
        %v476 = vsub.f32 %v474, %v475
        %v477 = vand.u32 %v476, 4294901760
        %478 = vmatprep.subr.mxu0 %v477
        %v479 = vand.u32 %v328, 4294901760
        %v480 = vsub.f32 %v328, %v479
        %v481 = vand.u32 %v480, 4294901760
        %v482 = vsub.f32 %v480, %v481
        %v483 = vand.u32 %v482, 4294901760
        %484 = vmatpush1.msra.mxu0 %v483
        %v485 = vand.u32 %v325, 4294901760
        %v486 = vsub.f32 %v325, %v485
        %v487 = vand.u32 %v486, 4294901760
        %v488 = vsub.f32 %v486, %v487
        %v489 = vand.u32 %v488, 4294901760
        %490 = vmatprep.subr.mxu0 %v489
        %v491 = vand.u32 %v324, 4294901760
        %v492 = vsub.f32 %v324, %v491
        %v493 = vand.u32 %v492, 4294901760
        %v494 = vsub.f32 %v492, %v493
        %v495 = vand.u32 %v494, 4294901760
        %496 = vmatpush1.msra.mxu0 %v495
        %v497 = vand.u32 %v321, 4294901760
        %v498 = vsub.f32 %v321, %v497
        %v499 = vand.u32 %v498, 4294901760
        %v500 = vsub.f32 %v498, %v499
        %v501 = vand.u32 %v500, 4294901760
        %502 = vmatprep.subr.mxu0 %v501
        %v503 = vand.u32 %v320, 4294901760
        %v504 = vsub.f32 %v320, %v503
        %v505 = vand.u32 %v504, 4294901760
        %v506 = vsub.f32 %v504, %v505
        %v507 = vand.u32 %v506, 4294901760
        %508 = vmatpush1.msra.mxu0 %v507
        %v509 = vand.u32 %v317, 4294901760
        %v510 = vsub.f32 %v317, %v509
        %v511 = vand.u32 %v510, 4294901760
        %v512 = vsub.f32 %v510, %v511
        %v513 = vand.u32 %v512, 4294901760
        %514 = vmatprep.subr.mxu0 %v513
        %v515 = vand.u32 %v316, 4294901760
        %v516 = vsub.f32 %v316, %v515
        %v517 = vand.u32 %v516, 4294901760
        %v518 = vsub.f32 %v516, %v517
        %v519 = vand.u32 %v518, 4294901760
        %520 = vmatpush1.msra.mxu0 %v519
        %v521 = vand.u32 %v313, 4294901760
        %v522 = vsub.f32 %v313, %v521
        %v523 = vand.u32 %v522, 4294901760
        %v524 = vsub.f32 %v522, %v523
        %v525 = vand.u32 %v524, 4294901760
        %526 = vmatprep.subr.mxu0 %v525
        %v527 = vand.u32 %v312, 4294901760
        %v528 = vsub.f32 %v312, %v527
        %v529 = vand.u32 %v528, 4294901760
        %v530 = vsub.f32 %v528, %v529
        %v531 = vand.u32 %v530, 4294901760
        %532 = vmatpush1.msra.mxu0 %v531
        %v533 = vand.u32 %v309, 4294901760
        %v534 = vsub.f32 %v309, %v533
        %v535 = vand.u32 %v534, 4294901760
        %v536 = vsub.f32 %v534, %v535
        %v537 = vand.u32 %v536, 4294901760
        %538 = vmatprep.subr.mxu0 %v537
        %v539 = vand.u32 %v308, 4294901760
        %v540 = vsub.f32 %v308, %v539
        %v541 = vand.u32 %v540, 4294901760
        %v542 = vsub.f32 %v540, %v541
        %v543 = vand.u32 %v542, 4294901760
        %544 = vmatpush1.msra.mxu0 %v543
        %v545 = vand.u32 %v305, 4294901760
        %v546 = vsub.f32 %v305, %v545
        %v547 = vand.u32 %v546, 4294901760
        %v548 = vsub.f32 %v546, %v547
        %v549 = vand.u32 %v548, 4294901760
        %550 = vmatprep.subr.mxu0 %v549
        %v551 = vand.u32 %v304, 4294901760
        %v552 = vsub.f32 %v304, %v551
        %v553 = vand.u32 %v552, 4294901760
        %v554 = vsub.f32 %v552, %v553
        %v555 = vand.u32 %v554, 4294901760
        %556 = vmatpush1.msra.mxu0 %v555
        %v557 = vand.u32 %v301, 4294901760
        %v558 = vsub.f32 %v301, %v557
        %v559 = vand.u32 %v558, 4294901760
        %v560 = vsub.f32 %v558, %v559
        %v561 = vand.u32 %v560, 4294901760
        %562 = vmatprep.subr.mxu0 %v561
        %v563 = vand.u32 %v300, 4294901760
        %v564 = vsub.f32 %v300, %v563
        %v565 = vand.u32 %v564, 4294901760
        %v566 = vsub.f32 %v564, %v565
        %v567 = vand.u32 %v566, 4294901760
        %568 = vmatpush1.msra.mxu0 %v567
        %v569 = vand.u32 %v297, 4294901760
        %v570 = vsub.f32 %v297, %v569
        %v571 = vand.u32 %v570, 4294901760
        %v572 = vsub.f32 %v570, %v571
        %v573 = vand.u32 %v572, 4294901760
        %574 = vmatprep.subr.mxu0 %v573
        %v575 = vand.u32 %v296, 4294901760
        %v576 = vsub.f32 %v296, %v575
        %v577 = vand.u32 %v576, 4294901760
        %v578 = vsub.f32 %v576, %v577
        %v579 = vand.u32 %v578, 4294901760
        %580 = vmatpush1.msra.mxu0 %v579
        %v581 = vand.u32 %v293, 4294901760
        %v582 = vsub.f32 %v293, %v581
        %v583 = vand.u32 %v582, 4294901760
        %v584 = vsub.f32 %v582, %v583
        %v585 = vand.u32 %v584, 4294901760
        %586 = vmatprep.subr.mxu0 %v585
        %v587 = vand.u32 %v292, 4294901760
        %v588 = vsub.f32 %v292, %v587
        %v589 = vand.u32 %v588, 4294901760
        %v590 = vsub.f32 %v588, %v589
        %v591 = vand.u32 %v590, 4294901760
        %592 = vmatpush1.msra.mxu0 %v591
        %v593 = vand.u32 %v289, 4294901760
        %v594 = vsub.f32 %v289, %v593
        %v595 = vand.u32 %v594, 4294901760
        %v596 = vsub.f32 %v594, %v595
        %v597 = vand.u32 %v596, 4294901760
        %598 = vmatprep.subr.mxu0 %v597
        %v599 = vand.u32 %v288, 4294901760
        %v600 = vsub.f32 %v288, %v599
        %v601 = vand.u32 %v600, 4294901760
        %v602 = vsub.f32 %v600, %v601
        %v603 = vand.u32 %v602, 4294901760
        %604 = vmatpush1.msra.mxu0 %v603
        %v605 = vand.u32 %v285, 4294901760
        %v606 = vsub.f32 %v285, %v605
        %v607 = vand.u32 %v606, 4294901760
        %v608 = vsub.f32 %v606, %v607
        %v609 = vand.u32 %v608, 4294901760
        %610 = vmatprep.subr.mxu0 %v609
        %v611 = vand.u32 %v284, 4294901760
        %v612 = vsub.f32 %v284, %v611
        %v613 = vand.u32 %v612, 4294901760
        %v614 = vsub.f32 %v612, %v613
        %v615 = vand.u32 %v614, 4294901760
        %616 = vmatpush1.msra.mxu0 %v615
        %v617 = vand.u32 %v281, 4294901760
        %v618 = vsub.f32 %v281, %v617
        %v619 = vand.u32 %v618, 4294901760
        %v620 = vsub.f32 %v618, %v619
        %v621 = vand.u32 %v620, 4294901760
        %622 = vmatprep.subr.mxu0 %v621
        %v623 = vand.u32 %v280, 4294901760
        %v624 = vsub.f32 %v280, %v623
        %v625 = vand.u32 %v624, 4294901760
        %v626 = vsub.f32 %v624, %v625
        %v627 = vand.u32 %v626, 4294901760
        %628 = vmatpush1.msra.mxu0 %v627
        %v629 = vand.u32 %v277, 4294901760
        %v630 = vsub.f32 %v277, %v629
        %v631 = vand.u32 %v630, 4294901760
        %v632 = vsub.f32 %v630, %v631
        %v633 = vand.u32 %v632, 4294901760
        %634 = vmatprep.subr.mxu0 %v633
        %v635 = vand.u32 %v276, 4294901760
        %v636 = vsub.f32 %v276, %v635
        %v637 = vand.u32 %v636, 4294901760
        %v638 = vsub.f32 %v636, %v637
        %v639 = vand.u32 %v638, 4294901760
        %640 = vmatpush1.msra.mxu0 %v639
        %641 = vmatprep.subr.mxu0 0.0
        %642 = vmatpush2.msra.mxu0 0.0
        %643 = vmatprep.subr.mxu0 0.0
        %644 = vmatpush2.msra.mxu0 0.0
        %645 = vmatprep.subr.mxu0 0.0
        %646 = vmatpush2.msra.mxu0 0.0
        %647 = vmatprep.subr.mxu0 0.0
        %648 = vmatpush2.msra.mxu0 0.0
        %649 = vmatprep.subr.mxu0 0.0
        %650 = vmatpush2.msra.mxu0 0.0
        %651 = vmatprep.subr.mxu0 0.0
        %652 = vmatpush2.msra.mxu0 0.0
        %653 = vmatprep.subr.mxu0 0.0
        %654 = vmatpush2.msra.mxu0 0.0
        %655 = vmatprep.subr.mxu0 0.0
        %656 = vmatpush2.msra.mxu0 0.0
        %657 = vmatprep.subr.mxu0 0.0
        %658 = vmatpush2.msra.mxu0 0.0
        %659 = vmatprep.subr.mxu0 0.0
        %660 = vmatpush2.msra.mxu0 0.0
        %661 = vmatprep.subr.mxu0 0.0
        %662 = vmatpush2.msra.mxu0 0.0
        %663 = vmatprep.subr.mxu0 0.0
        %664 = vmatpush2.msra.mxu0 0.0
        %665 = vmatprep.subr.mxu0 0.0
        %666 = vmatpush2.msra.mxu0 0.0
        %667 = vmatprep.subr.mxu0 0.0
        %668 = vmatpush2.msra.mxu0 0.0
        %669 = vmatprep.subr.mxu0 0.0
        %670 = vmatpush2.msra.mxu0 0.0
        %671 = vmatprep.subr.mxu0 0.0
        %672 = vmatpush2.msra.mxu0 0.0
        %673 = vmatprep.mubr.f32.mxu0 0.0
        %v674 = vand.u32 %v340, 4294901760
        %675 = vmatmul.mubr.f32.gmra.mxu0 %v674
        %v676 = vpop.f32.mrf.mxu0
        %v677 = vadd.f32 %v445, %v676
        %v678 = vpop.f32.mrf.mxu0
        %v679 = vadd.f32 %v447, %v678
        %680 = vdwg.mxu0
        %v681 = vand.u32 %v337, 4294901760
        %v682 = vsub.f32 %v337, %v681
        %683 = vmatprep.subr.mxu0 %v682
        %v684 = vand.u32 %v336, 4294901760
        %v685 = vsub.f32 %v336, %v684
        %686 = vmatpush1.msra.mxu0 %v685
        %v687 = vand.u32 %v333, 4294901760
        %v688 = vsub.f32 %v333, %v687
        %689 = vmatprep.subr.mxu0 %v688
        %v690 = vand.u32 %v332, 4294901760
        %v691 = vsub.f32 %v332, %v690
        %692 = vmatpush1.msra.mxu0 %v691
        %v693 = vand.u32 %v329, 4294901760
        %v694 = vsub.f32 %v329, %v693
        %695 = vmatprep.subr.mxu0 %v694
        %v696 = vand.u32 %v328, 4294901760
        %v697 = vsub.f32 %v328, %v696
        %698 = vmatpush1.msra.mxu0 %v697
        %v699 = vand.u32 %v325, 4294901760
        %v700 = vsub.f32 %v325, %v699
        %701 = vmatprep.subr.mxu0 %v700
        %v702 = vand.u32 %v324, 4294901760
        %v703 = vsub.f32 %v324, %v702
        %704 = vmatpush1.msra.mxu0 %v703
        %v705 = vand.u32 %v321, 4294901760
        %v706 = vsub.f32 %v321, %v705
        %707 = vmatprep.subr.mxu0 %v706
        %v708 = vand.u32 %v320, 4294901760
        %v709 = vsub.f32 %v320, %v708
        %710 = vmatpush1.msra.mxu0 %v709
        %v711 = vand.u32 %v317, 4294901760
        %v712 = vsub.f32 %v317, %v711
        %713 = vmatprep.subr.mxu0 %v712
        %v714 = vand.u32 %v316, 4294901760
        %v715 = vsub.f32 %v316, %v714
        %716 = vmatpush1.msra.mxu0 %v715
        %v717 = vand.u32 %v313, 4294901760
        %v718 = vsub.f32 %v313, %v717
        %719 = vmatprep.subr.mxu0 %v718
        %v720 = vand.u32 %v312, 4294901760
        %v721 = vsub.f32 %v312, %v720
        %722 = vmatpush1.msra.mxu0 %v721
        %v723 = vand.u32 %v309, 4294901760
        %v724 = vsub.f32 %v309, %v723
        %725 = vmatprep.subr.mxu0 %v724
        %v726 = vand.u32 %v308, 4294901760
        %v727 = vsub.f32 %v308, %v726
        %728 = vmatpush1.msra.mxu0 %v727
        %v729 = vand.u32 %v305, 4294901760
        %v730 = vsub.f32 %v305, %v729
        %731 = vmatprep.subr.mxu0 %v730
        %v732 = vand.u32 %v304, 4294901760
        %v733 = vsub.f32 %v304, %v732
        %734 = vmatpush1.msra.mxu0 %v733
        %v735 = vand.u32 %v301, 4294901760
        %v736 = vsub.f32 %v301, %v735
        %737 = vmatprep.subr.mxu0 %v736
        %v738 = vand.u32 %v300, 4294901760
        %v739 = vsub.f32 %v300, %v738
        %740 = vmatpush1.msra.mxu0 %v739
        %v741 = vand.u32 %v297, 4294901760
        %v742 = vsub.f32 %v297, %v741
        %743 = vmatprep.subr.mxu0 %v742
        %v744 = vand.u32 %v296, 4294901760
        %v745 = vsub.f32 %v296, %v744
        %746 = vmatpush1.msra.mxu0 %v745
        %v747 = vand.u32 %v293, 4294901760
        %v748 = vsub.f32 %v293, %v747
        %749 = vmatprep.subr.mxu0 %v748
        %v750 = vand.u32 %v292, 4294901760
        %v751 = vsub.f32 %v292, %v750
        %752 = vmatpush1.msra.mxu0 %v751
        %v753 = vand.u32 %v289, 4294901760
        %v754 = vsub.f32 %v289, %v753
        %755 = vmatprep.subr.mxu0 %v754
        %v756 = vand.u32 %v288, 4294901760
        %v757 = vsub.f32 %v288, %v756
        %758 = vmatpush1.msra.mxu0 %v757
        %v759 = vand.u32 %v285, 4294901760
        %v760 = vsub.f32 %v285, %v759
        %761 = vmatprep.subr.mxu0 %v760
        %v762 = vand.u32 %v284, 4294901760
        %v763 = vsub.f32 %v284, %v762
        %764 = vmatpush1.msra.mxu0 %v763
        %v765 = vand.u32 %v281, 4294901760
        %v766 = vsub.f32 %v281, %v765
        %767 = vmatprep.subr.mxu0 %v766
        %v768 = vand.u32 %v280, 4294901760
        %v769 = vsub.f32 %v280, %v768
        %770 = vmatpush1.msra.mxu0 %v769
        %v771 = vand.u32 %v277, 4294901760
        %v772 = vsub.f32 %v277, %v771
        %773 = vmatprep.subr.mxu0 %v772
        %v774 = vand.u32 %v276, 4294901760
        %v775 = vsub.f32 %v276, %v774
        %776 = vmatpush1.msra.mxu0 %v775
        %777 = vmatprep.subr.mxu0 0.0
        %778 = vmatpush2.msra.mxu0 0.0
        %779 = vmatprep.subr.mxu0 0.0
        %780 = vmatpush2.msra.mxu0 0.0
        %781 = vmatprep.subr.mxu0 0.0
        %782 = vmatpush2.msra.mxu0 0.0
        %783 = vmatprep.subr.mxu0 0.0
        %784 = vmatpush2.msra.mxu0 0.0
        %785 = vmatprep.subr.mxu0 0.0
        %786 = vmatpush2.msra.mxu0 0.0
        %787 = vmatprep.subr.mxu0 0.0
        %788 = vmatpush2.msra.mxu0 0.0
        %789 = vmatprep.subr.mxu0 0.0
        %790 = vmatpush2.msra.mxu0 0.0
        %791 = vmatprep.subr.mxu0 0.0
        %792 = vmatpush2.msra.mxu0 0.0
        %793 = vmatprep.subr.mxu0 0.0
        %794 = vmatpush2.msra.mxu0 0.0
        %795 = vmatprep.subr.mxu0 0.0
        %796 = vmatpush2.msra.mxu0 0.0
        %797 = vmatprep.subr.mxu0 0.0
        %798 = vmatpush2.msra.mxu0 0.0
        %799 = vmatprep.subr.mxu0 0.0
        %800 = vmatpush2.msra.mxu0 0.0
        %801 = vmatprep.subr.mxu0 0.0
        %802 = vmatpush2.msra.mxu0 0.0
        %803 = vmatprep.subr.mxu0 0.0
        %804 = vmatpush2.msra.mxu0 0.0
        %805 = vmatprep.subr.mxu0 0.0
        %806 = vmatpush2.msra.mxu0 0.0
        %807 = vmatprep.subr.mxu0 0.0
        %808 = vmatpush2.msra.mxu0 0.0
        %809 = vmatprep.mubr.f32.mxu0 0.0
        %v810 = vand.u32 %v340, 4294901760
        %v811 = vsub.f32 %v340, %v810
        %812 = vmatmul.mubr.f32.gmra.mxu0 %v811
        %v813 = vpop.f32.mrf.mxu0
        %v814 = vadd.f32 %v677, %v813
        %v815 = vpop.f32.mrf.mxu0
        %v816 = vadd.f32 %v679, %v815
        %817 = vdwg.mxu0
        %v818 = vand.u32 %v337, 4294901760
        %819 = vmatprep.subr.mxu0 %v818
        %v820 = vand.u32 %v336, 4294901760
        %821 = vmatpush1.msra.mxu0 %v820
        %v822 = vand.u32 %v333, 4294901760
        %823 = vmatprep.subr.mxu0 %v822
        %v824 = vand.u32 %v332, 4294901760
        %825 = vmatpush1.msra.mxu0 %v824
        %v826 = vand.u32 %v329, 4294901760
        %827 = vmatprep.subr.mxu0 %v826
        %v828 = vand.u32 %v328, 4294901760
        %829 = vmatpush1.msra.mxu0 %v828
        %v830 = vand.u32 %v325, 4294901760
        %831 = vmatprep.subr.mxu0 %v830
        %v832 = vand.u32 %v324, 4294901760
        %833 = vmatpush1.msra.mxu0 %v832
        %v834 = vand.u32 %v321, 4294901760
        %835 = vmatprep.subr.mxu0 %v834
        %v836 = vand.u32 %v320, 4294901760
        %837 = vmatpush1.msra.mxu0 %v836
        %v838 = vand.u32 %v317, 4294901760
        %839 = vmatprep.subr.mxu0 %v838
        %v840 = vand.u32 %v316, 4294901760
        %841 = vmatpush1.msra.mxu0 %v840
        %v842 = vand.u32 %v313, 4294901760
        %843 = vmatprep.subr.mxu0 %v842
        %v844 = vand.u32 %v312, 4294901760
        %845 = vmatpush1.msra.mxu0 %v844
        %v846 = vand.u32 %v309, 4294901760
        %847 = vmatprep.subr.mxu0 %v846
        %v848 = vand.u32 %v308, 4294901760
        %849 = vmatpush1.msra.mxu0 %v848
        %v850 = vand.u32 %v305, 4294901760
        %851 = vmatprep.subr.mxu0 %v850
        %v852 = vand.u32 %v304, 4294901760
        %853 = vmatpush1.msra.mxu0 %v852
        %v854 = vand.u32 %v301, 4294901760
        %855 = vmatprep.subr.mxu0 %v854
        %v856 = vand.u32 %v300, 4294901760
        %857 = vmatpush1.msra.mxu0 %v856
        %v858 = vand.u32 %v297, 4294901760
        %859 = vmatprep.subr.mxu0 %v858
        %v860 = vand.u32 %v296, 4294901760
        %861 = vmatpush1.msra.mxu0 %v860
        %v862 = vand.u32 %v293, 4294901760
        %863 = vmatprep.subr.mxu0 %v862
        %v864 = vand.u32 %v292, 4294901760
        %865 = vmatpush1.msra.mxu0 %v864
        %v866 = vand.u32 %v289, 4294901760
        %867 = vmatprep.subr.mxu0 %v866
        %v868 = vand.u32 %v288, 4294901760
        %869 = vmatpush1.msra.mxu0 %v868
        %v870 = vand.u32 %v285, 4294901760
        %871 = vmatprep.subr.mxu0 %v870
        %v872 = vand.u32 %v284, 4294901760
        %873 = vmatpush1.msra.mxu0 %v872
        %v874 = vand.u32 %v281, 4294901760
        %875 = vmatprep.subr.mxu0 %v874
        %v876 = vand.u32 %v280, 4294901760
        %877 = vmatpush1.msra.mxu0 %v876
        %v878 = vand.u32 %v277, 4294901760
        %879 = vmatprep.subr.mxu0 %v878
        %v880 = vand.u32 %v276, 4294901760
        %881 = vmatpush1.msra.mxu0 %v880
        %882 = vmatprep.subr.mxu0 0.0
        %883 = vmatpush2.msra.mxu0 0.0
        %884 = vmatprep.subr.mxu0 0.0
        %885 = vmatpush2.msra.mxu0 0.0
        %886 = vmatprep.subr.mxu0 0.0
        %887 = vmatpush2.msra.mxu0 0.0
        %888 = vmatprep.subr.mxu0 0.0
        %889 = vmatpush2.msra.mxu0 0.0
        %890 = vmatprep.subr.mxu0 0.0
        %891 = vmatpush2.msra.mxu0 0.0
        %892 = vmatprep.subr.mxu0 0.0
        %893 = vmatpush2.msra.mxu0 0.0
        %894 = vmatprep.subr.mxu0 0.0
        %895 = vmatpush2.msra.mxu0 0.0
        %896 = vmatprep.subr.mxu0 0.0
        %897 = vmatpush2.msra.mxu0 0.0
        %898 = vmatprep.subr.mxu0 0.0
        %899 = vmatpush2.msra.mxu0 0.0
        %900 = vmatprep.subr.mxu0 0.0
        %901 = vmatpush2.msra.mxu0 0.0
        %902 = vmatprep.subr.mxu0 0.0
        %903 = vmatpush2.msra.mxu0 0.0
        %904 = vmatprep.subr.mxu0 0.0
        %905 = vmatpush2.msra.mxu0 0.0
        %906 = vmatprep.subr.mxu0 0.0
        %907 = vmatpush2.msra.mxu0 0.0
        %908 = vmatprep.subr.mxu0 0.0
        %909 = vmatpush2.msra.mxu0 0.0
        %910 = vmatprep.subr.mxu0 0.0
        %911 = vmatpush2.msra.mxu0 0.0
        %912 = vmatprep.subr.mxu0 0.0
        %913 = vmatpush2.msra.mxu0 0.0
        %914 = vmatprep.mubr.f32.mxu0 0.0
        %v915 = vand.u32 %v340, 4294901760
        %v916 = vsub.f32 %v340, %v915
        %v917 = vand.u32 %v916, 4294901760
        %918 = vmatmul.mubr.f32.gmra.mxu0 %v917
        %v919 = vpop.f32.mrf.mxu0
        %v920 = vadd.f32 %v814, %v919
        %v921 = vpop.f32.mrf.mxu0
        %v922 = vadd.f32 %v816, %v921
        %923 = vdwg.mxu0
        %v924 = vand.u32 %v337, 4294901760
        %v925 = vsub.f32 %v337, %v924
        %v926 = vand.u32 %v925, 4294901760
        %927 = vmatprep.subr.mxu0 %v926
        %v928 = vand.u32 %v336, 4294901760
        %v929 = vsub.f32 %v336, %v928
        %v930 = vand.u32 %v929, 4294901760
        %931 = vmatpush1.msra.mxu0 %v930
        %v932 = vand.u32 %v333, 4294901760
        %v933 = vsub.f32 %v333, %v932
        %v934 = vand.u32 %v933, 4294901760
        %935 = vmatprep.subr.mxu0 %v934
        %v936 = vand.u32 %v332, 4294901760
        %v937 = vsub.f32 %v332, %v936
        %v938 = vand.u32 %v937, 4294901760
        %939 = vmatpush1.msra.mxu0 %v938
        %v940 = vand.u32 %v329, 4294901760
        %v941 = vsub.f32 %v329, %v940
        %v942 = vand.u32 %v941, 4294901760
        %943 = vmatprep.subr.mxu0 %v942
        %v944 = vand.u32 %v328, 4294901760
        %v945 = vsub.f32 %v328, %v944
        %v946 = vand.u32 %v945, 4294901760
        %947 = vmatpush1.msra.mxu0 %v946
        %v948 = vand.u32 %v325, 4294901760
        %v949 = vsub.f32 %v325, %v948
        %v950 = vand.u32 %v949, 4294901760
        %951 = vmatprep.subr.mxu0 %v950
        %v952 = vand.u32 %v324, 4294901760
        %v953 = vsub.f32 %v324, %v952
        %v954 = vand.u32 %v953, 4294901760
        %955 = vmatpush1.msra.mxu0 %v954
        %v956 = vand.u32 %v321, 4294901760
        %v957 = vsub.f32 %v321, %v956
        %v958 = vand.u32 %v957, 4294901760
        %959 = vmatprep.subr.mxu0 %v958
        %v960 = vand.u32 %v320, 4294901760
        %v961 = vsub.f32 %v320, %v960
        %v962 = vand.u32 %v961, 4294901760
        %963 = vmatpush1.msra.mxu0 %v962
        %v964 = vand.u32 %v317, 4294901760
        %v965 = vsub.f32 %v317, %v964
        %v966 = vand.u32 %v965, 4294901760
        %967 = vmatprep.subr.mxu0 %v966
        %v968 = vand.u32 %v316, 4294901760
        %v969 = vsub.f32 %v316, %v968
        %v970 = vand.u32 %v969, 4294901760
        %971 = vmatpush1.msra.mxu0 %v970
        %v972 = vand.u32 %v313, 4294901760
        %v973 = vsub.f32 %v313, %v972
        %v974 = vand.u32 %v973, 4294901760
        %975 = vmatprep.subr.mxu0 %v974
        %v976 = vand.u32 %v312, 4294901760
        %v977 = vsub.f32 %v312, %v976
        %v978 = vand.u32 %v977, 4294901760
        %979 = vmatpush1.msra.mxu0 %v978
        %v980 = vand.u32 %v309, 4294901760
        %v981 = vsub.f32 %v309, %v980
        %v982 = vand.u32 %v981, 4294901760
        %983 = vmatprep.subr.mxu0 %v982
        %v984 = vand.u32 %v308, 4294901760
        %v985 = vsub.f32 %v308, %v984
        %v986 = vand.u32 %v985, 4294901760
        %987 = vmatpush1.msra.mxu0 %v986
        %v988 = vand.u32 %v305, 4294901760
        %v989 = vsub.f32 %v305, %v988
        %v990 = vand.u32 %v989, 4294901760
        %991 = vmatprep.subr.mxu0 %v990
        %v992 = vand.u32 %v304, 4294901760
        %v993 = vsub.f32 %v304, %v992
        %v994 = vand.u32 %v993, 4294901760
        %995 = vmatpush1.msra.mxu0 %v994
        %v996 = vand.u32 %v301, 4294901760
        %v997 = vsub.f32 %v301, %v996
        %v998 = vand.u32 %v997, 4294901760
        %999 = vmatprep.subr.mxu0 %v998
        %v1000 = vand.u32 %v300, 4294901760
        %v1001 = vsub.f32 %v300, %v1000
        %v1002 = vand.u32 %v1001, 4294901760
        %1003 = vmatpush1.msra.mxu0 %v1002
        %v1004 = vand.u32 %v297, 4294901760
        %v1005 = vsub.f32 %v297, %v1004
        %v1006 = vand.u32 %v1005, 4294901760
        %1007 = vmatprep.subr.mxu0 %v1006
        %v1008 = vand.u32 %v296, 4294901760
        %v1009 = vsub.f32 %v296, %v1008
        %v1010 = vand.u32 %v1009, 4294901760
        %1011 = vmatpush1.msra.mxu0 %v1010
        %v1012 = vand.u32 %v293, 4294901760
        %v1013 = vsub.f32 %v293, %v1012
        %v1014 = vand.u32 %v1013, 4294901760
        %1015 = vmatprep.subr.mxu0 %v1014
        %v1016 = vand.u32 %v292, 4294901760
        %v1017 = vsub.f32 %v292, %v1016
        %v1018 = vand.u32 %v1017, 4294901760
        %1019 = vmatpush1.msra.mxu0 %v1018
        %v1020 = vand.u32 %v289, 4294901760
        %v1021 = vsub.f32 %v289, %v1020
        %v1022 = vand.u32 %v1021, 4294901760
        %1023 = vmatprep.subr.mxu0 %v1022
        %v1024 = vand.u32 %v288, 4294901760
        %v1025 = vsub.f32 %v288, %v1024
        %v1026 = vand.u32 %v1025, 4294901760
        %1027 = vmatpush1.msra.mxu0 %v1026
        %v1028 = vand.u32 %v285, 4294901760
        %v1029 = vsub.f32 %v285, %v1028
        %v1030 = vand.u32 %v1029, 4294901760
        %1031 = vmatprep.subr.mxu0 %v1030
        %v1032 = vand.u32 %v284, 4294901760
        %v1033 = vsub.f32 %v284, %v1032
        %v1034 = vand.u32 %v1033, 4294901760
        %1035 = vmatpush1.msra.mxu0 %v1034
        %v1036 = vand.u32 %v281, 4294901760
        %v1037 = vsub.f32 %v281, %v1036
        %v1038 = vand.u32 %v1037, 4294901760
        %1039 = vmatprep.subr.mxu0 %v1038
        %v1040 = vand.u32 %v280, 4294901760
        %v1041 = vsub.f32 %v280, %v1040
        %v1042 = vand.u32 %v1041, 4294901760
        %1043 = vmatpush1.msra.mxu0 %v1042
        %v1044 = vand.u32 %v277, 4294901760
        %v1045 = vsub.f32 %v277, %v1044
        %v1046 = vand.u32 %v1045, 4294901760
        %1047 = vmatprep.subr.mxu0 %v1046
        %v1048 = vand.u32 %v276, 4294901760
        %v1049 = vsub.f32 %v276, %v1048
        %v1050 = vand.u32 %v1049, 4294901760
        %1051 = vmatpush1.msra.mxu0 %v1050
        %1052 = vmatprep.subr.mxu0 0.0
        %1053 = vmatpush2.msra.mxu0 0.0
        %1054 = vmatprep.subr.mxu0 0.0
        %1055 = vmatpush2.msra.mxu0 0.0
        %1056 = vmatprep.subr.mxu0 0.0
        %1057 = vmatpush2.msra.mxu0 0.0
        %1058 = vmatprep.subr.mxu0 0.0
        %1059 = vmatpush2.msra.mxu0 0.0
        %1060 = vmatprep.subr.mxu0 0.0
        %1061 = vmatpush2.msra.mxu0 0.0
        %1062 = vmatprep.subr.mxu0 0.0
        %1063 = vmatpush2.msra.mxu0 0.0
        %1064 = vmatprep.subr.mxu0 0.0
        %1065 = vmatpush2.msra.mxu0 0.0
        %1066 = vmatprep.subr.mxu0 0.0
        %1067 = vmatpush2.msra.mxu0 0.0
        %1068 = vmatprep.subr.mxu0 0.0
        %1069 = vmatpush2.msra.mxu0 0.0
        %1070 = vmatprep.subr.mxu0 0.0
        %1071 = vmatpush2.msra.mxu0 0.0
        %1072 = vmatprep.subr.mxu0 0.0
        %1073 = vmatpush2.msra.mxu0 0.0
        %1074 = vmatprep.subr.mxu0 0.0
        %1075 = vmatpush2.msra.mxu0 0.0
        %1076 = vmatprep.subr.mxu0 0.0
        %1077 = vmatpush2.msra.mxu0 0.0
        %1078 = vmatprep.subr.mxu0 0.0
        %1079 = vmatpush2.msra.mxu0 0.0
        %1080 = vmatprep.subr.mxu0 0.0
        %1081 = vmatpush2.msra.mxu0 0.0
        %1082 = vmatprep.subr.mxu0 0.0
        %1083 = vmatpush2.msra.mxu0 0.0
        %1084 = vmatprep.mubr.f32.mxu0 0.0
        %v1085 = vand.u32 %v340, 4294901760
        %1086 = vmatmul.mubr.f32.gmra.mxu0 %v1085
        %v1087 = vpop.f32.mrf.mxu0
        %v1088 = vadd.f32 %v920, %v1087
        %v1089 = vpop.f32.mrf.mxu0
        %v1090 = vadd.f32 %v922, %v1089
        %1091 = vdwg.mxu0
        %v1092 = vand.u32 %v337, 4294901760
        %1093 = vmatprep.subr.mxu0 %v1092
        %v1094 = vand.u32 %v336, 4294901760
        %1095 = vmatpush1.msra.mxu0 %v1094
        %v1096 = vand.u32 %v333, 4294901760
        %1097 = vmatprep.subr.mxu0 %v1096
        %v1098 = vand.u32 %v332, 4294901760
        %1099 = vmatpush1.msra.mxu0 %v1098
        %v1100 = vand.u32 %v329, 4294901760
        %1101 = vmatprep.subr.mxu0 %v1100
        %v1102 = vand.u32 %v328, 4294901760
        %1103 = vmatpush1.msra.mxu0 %v1102
        %v1104 = vand.u32 %v325, 4294901760
        %1105 = vmatprep.subr.mxu0 %v1104
        %v1106 = vand.u32 %v324, 4294901760
        %1107 = vmatpush1.msra.mxu0 %v1106
        %v1108 = vand.u32 %v321, 4294901760
        %1109 = vmatprep.subr.mxu0 %v1108
        %v1110 = vand.u32 %v320, 4294901760
        %1111 = vmatpush1.msra.mxu0 %v1110
        %v1112 = vand.u32 %v317, 4294901760
        %1113 = vmatprep.subr.mxu0 %v1112
        %v1114 = vand.u32 %v316, 4294901760
        %1115 = vmatpush1.msra.mxu0 %v1114
        %v1116 = vand.u32 %v313, 4294901760
        %1117 = vmatprep.subr.mxu0 %v1116
        %v1118 = vand.u32 %v312, 4294901760
        %1119 = vmatpush1.msra.mxu0 %v1118
        %v1120 = vand.u32 %v309, 4294901760
        %1121 = vmatprep.subr.mxu0 %v1120
        %v1122 = vand.u32 %v308, 4294901760
        %1123 = vmatpush1.msra.mxu0 %v1122
        %v1124 = vand.u32 %v305, 4294901760
        %1125 = vmatprep.subr.mxu0 %v1124
        %v1126 = vand.u32 %v304, 4294901760
        %1127 = vmatpush1.msra.mxu0 %v1126
        %v1128 = vand.u32 %v301, 4294901760
        %1129 = vmatprep.subr.mxu0 %v1128
        %v1130 = vand.u32 %v300, 4294901760
        %1131 = vmatpush1.msra.mxu0 %v1130
        %v1132 = vand.u32 %v297, 4294901760
        %1133 = vmatprep.subr.mxu0 %v1132
        %v1134 = vand.u32 %v296, 4294901760
        %1135 = vmatpush1.msra.mxu0 %v1134
        %v1136 = vand.u32 %v293, 4294901760
        %1137 = vmatprep.subr.mxu0 %v1136
        %v1138 = vand.u32 %v292, 4294901760
        %1139 = vmatpush1.msra.mxu0 %v1138
        %v1140 = vand.u32 %v289, 4294901760
        %1141 = vmatprep.subr.mxu0 %v1140
        %v1142 = vand.u32 %v288, 4294901760
        %1143 = vmatpush1.msra.mxu0 %v1142
        %v1144 = vand.u32 %v285, 4294901760
        %1145 = vmatprep.subr.mxu0 %v1144
        %v1146 = vand.u32 %v284, 4294901760
        %1147 = vmatpush1.msra.mxu0 %v1146
        %v1148 = vand.u32 %v281, 4294901760
        %1149 = vmatprep.subr.mxu0 %v1148
        %v1150 = vand.u32 %v280, 4294901760
        %1151 = vmatpush1.msra.mxu0 %v1150
        %v1152 = vand.u32 %v277, 4294901760
        %1153 = vmatprep.subr.mxu0 %v1152
        %v1154 = vand.u32 %v276, 4294901760
        %1155 = vmatpush1.msra.mxu0 %v1154
        %1156 = vmatprep.subr.mxu0 0.0
        %1157 = vmatpush2.msra.mxu0 0.0
        %1158 = vmatprep.subr.mxu0 0.0
        %1159 = vmatpush2.msra.mxu0 0.0
        %1160 = vmatprep.subr.mxu0 0.0
        %1161 = vmatpush2.msra.mxu0 0.0
        %1162 = vmatprep.subr.mxu0 0.0
        %1163 = vmatpush2.msra.mxu0 0.0
        %1164 = vmatprep.subr.mxu0 0.0
        %1165 = vmatpush2.msra.mxu0 0.0
        %1166 = vmatprep.subr.mxu0 0.0
        %1167 = vmatpush2.msra.mxu0 0.0
        %1168 = vmatprep.subr.mxu0 0.0
        %1169 = vmatpush2.msra.mxu0 0.0
        %1170 = vmatprep.subr.mxu0 0.0
        %1171 = vmatpush2.msra.mxu0 0.0
        %1172 = vmatprep.subr.mxu0 0.0
        %1173 = vmatpush2.msra.mxu0 0.0
        %1174 = vmatprep.subr.mxu0 0.0
        %1175 = vmatpush2.msra.mxu0 0.0
        %1176 = vmatprep.subr.mxu0 0.0
        %1177 = vmatpush2.msra.mxu0 0.0
        %1178 = vmatprep.subr.mxu0 0.0
        %1179 = vmatpush2.msra.mxu0 0.0
        %1180 = vmatprep.subr.mxu0 0.0
        %1181 = vmatpush2.msra.mxu0 0.0
        %1182 = vmatprep.subr.mxu0 0.0
        %1183 = vmatpush2.msra.mxu0 0.0
        %1184 = vmatprep.subr.mxu0 0.0
        %1185 = vmatpush2.msra.mxu0 0.0
        %1186 = vmatprep.subr.mxu0 0.0
        %1187 = vmatpush2.msra.mxu0 0.0
        %1188 = vmatprep.mubr.f32.mxu0 0.0
        %v1189 = vand.u32 %v340, 4294901760
        %1190 = vmatmul.mubr.f32.gmra.mxu0 %v1189
        %v1191 = vpop.f32.mrf.mxu0
        %v1192 = vadd.f32 %v1088, %v1191
        %v1193 = vpop.f32.mrf.mxu0
        %v1194 = vadd.f32 %v1090, %v1193
        %1195 = vdwg.mxu0
        %v1196 = vand.u32 %v339, 4294901760
        %1197 = vmatprep.subr.mxu0 %v1196
        %v1198 = vand.u32 %v338, 4294901760
        %1199 = vmatpush1.msra.mxu0 %v1198
        %v1200 = vand.u32 %v335, 4294901760
        %1201 = vmatprep.subr.mxu0 %v1200
        %v1202 = vand.u32 %v334, 4294901760
        %1203 = vmatpush1.msra.mxu0 %v1202
        %v1204 = vand.u32 %v331, 4294901760
        %1205 = vmatprep.subr.mxu0 %v1204
        %v1206 = vand.u32 %v330, 4294901760
        %1207 = vmatpush1.msra.mxu0 %v1206
        %v1208 = vand.u32 %v327, 4294901760
        %1209 = vmatprep.subr.mxu0 %v1208
        %v1210 = vand.u32 %v326, 4294901760
        %1211 = vmatpush1.msra.mxu0 %v1210
        %v1212 = vand.u32 %v323, 4294901760
        %1213 = vmatprep.subr.mxu0 %v1212
        %v1214 = vand.u32 %v322, 4294901760
        %1215 = vmatpush1.msra.mxu0 %v1214
        %v1216 = vand.u32 %v319, 4294901760
        %1217 = vmatprep.subr.mxu0 %v1216
        %v1218 = vand.u32 %v318, 4294901760
        %1219 = vmatpush1.msra.mxu0 %v1218
        %v1220 = vand.u32 %v315, 4294901760
        %1221 = vmatprep.subr.mxu0 %v1220
        %v1222 = vand.u32 %v314, 4294901760
        %1223 = vmatpush1.msra.mxu0 %v1222
        %v1224 = vand.u32 %v311, 4294901760
        %1225 = vmatprep.subr.mxu0 %v1224
        %v1226 = vand.u32 %v310, 4294901760
        %1227 = vmatpush1.msra.mxu0 %v1226
        %v1228 = vand.u32 %v307, 4294901760
        %1229 = vmatprep.subr.mxu0 %v1228
        %v1230 = vand.u32 %v306, 4294901760
        %1231 = vmatpush1.msra.mxu0 %v1230
        %v1232 = vand.u32 %v303, 4294901760
        %1233 = vmatprep.subr.mxu0 %v1232
        %v1234 = vand.u32 %v302, 4294901760
        %1235 = vmatpush1.msra.mxu0 %v1234
        %v1236 = vand.u32 %v299, 4294901760
        %1237 = vmatprep.subr.mxu0 %v1236
        %v1238 = vand.u32 %v298, 4294901760
        %1239 = vmatpush1.msra.mxu0 %v1238
        %v1240 = vand.u32 %v295, 4294901760
        %1241 = vmatprep.subr.mxu0 %v1240
        %v1242 = vand.u32 %v294, 4294901760
        %1243 = vmatpush1.msra.mxu0 %v1242
        %v1244 = vand.u32 %v291, 4294901760
        %1245 = vmatprep.subr.mxu0 %v1244
        %v1246 = vand.u32 %v290, 4294901760
        %1247 = vmatpush1.msra.mxu0 %v1246
        %v1248 = vand.u32 %v287, 4294901760
        %1249 = vmatprep.subr.mxu0 %v1248
        %v1250 = vand.u32 %v286, 4294901760
        %1251 = vmatpush1.msra.mxu0 %v1250
        %v1252 = vand.u32 %v283, 4294901760
        %1253 = vmatprep.subr.mxu0 %v1252
        %v1254 = vand.u32 %v282, 4294901760
        %1255 = vmatpush1.msra.mxu0 %v1254
        %v1256 = vand.u32 %v279, 4294901760
        %1257 = vmatprep.subr.mxu0 %v1256
        %v1258 = vand.u32 %v278, 4294901760
        %1259 = vmatpush1.msra.mxu0 %v1258
        %1260 = vmatprep.subr.mxu0 0.0
        %1261 = vmatpush2.msra.mxu0 0.0
        %1262 = vmatprep.subr.mxu0 0.0
        %1263 = vmatpush2.msra.mxu0 0.0
        %1264 = vmatprep.subr.mxu0 0.0
        %1265 = vmatpush2.msra.mxu0 0.0
        %1266 = vmatprep.subr.mxu0 0.0
        %1267 = vmatpush2.msra.mxu0 0.0
        %1268 = vmatprep.subr.mxu0 0.0
        %1269 = vmatpush2.msra.mxu0 0.0
        %1270 = vmatprep.subr.mxu0 0.0
        %1271 = vmatpush2.msra.mxu0 0.0
        %1272 = vmatprep.subr.mxu0 0.0
        %1273 = vmatpush2.msra.mxu0 0.0
        %1274 = vmatprep.subr.mxu0 0.0
        %1275 = vmatpush2.msra.mxu0 0.0
        %1276 = vmatprep.subr.mxu0 0.0
        %1277 = vmatpush2.msra.mxu0 0.0
        %1278 = vmatprep.subr.mxu0 0.0
        %1279 = vmatpush2.msra.mxu0 0.0
        %1280 = vmatprep.subr.mxu0 0.0
        %1281 = vmatpush2.msra.mxu0 0.0
        %1282 = vmatprep.subr.mxu0 0.0
        %1283 = vmatpush2.msra.mxu0 0.0
        %1284 = vmatprep.subr.mxu0 0.0
        %1285 = vmatpush2.msra.mxu0 0.0
        %1286 = vmatprep.subr.mxu0 0.0
        %1287 = vmatpush2.msra.mxu0 0.0
        %1288 = vmatprep.subr.mxu0 0.0
        %1289 = vmatpush2.msra.mxu0 0.0
        %1290 = vmatprep.subr.mxu0 0.0
        %1291 = vmatpush2.msra.mxu0 0.0
        %1292 = vmatprep.mubr.f32.mxu0 0.0
        %v1293 = vand.u32 %v340, 4294901760
        %v1294 = vsub.f32 %v340, %v1293
        %v1295 = vand.u32 %v1294, 4294901760
        %v1296 = vsub.f32 %v1294, %v1295
        %v1297 = vand.u32 %v1296, 4294901760
        %1298 = vmatmul.mubr.f32.gmra.mxu0 %v1297
        %v1299 = vpop.f32.mrf.mxu0
        %v1300 = vadd.f32 0.0, %v1299
        %v1301 = vpop.f32.mrf.mxu0
        %v1302 = vadd.f32 0.0, %v1301
        %1303 = vdwg.mxu0
        %v1304 = vand.u32 %v339, 4294901760
        %v1305 = vsub.f32 %v339, %v1304
        %v1306 = vand.u32 %v1305, 4294901760
        %v1307 = vsub.f32 %v1305, %v1306
        %v1308 = vand.u32 %v1307, 4294901760
        %1309 = vmatprep.subr.mxu0 %v1308
        %v1310 = vand.u32 %v338, 4294901760
        %v1311 = vsub.f32 %v338, %v1310
        %v1312 = vand.u32 %v1311, 4294901760
        %v1313 = vsub.f32 %v1311, %v1312
        %v1314 = vand.u32 %v1313, 4294901760
        %1315 = vmatpush1.msra.mxu0 %v1314
        %v1316 = vand.u32 %v335, 4294901760
        %v1317 = vsub.f32 %v335, %v1316
        %v1318 = vand.u32 %v1317, 4294901760
        %v1319 = vsub.f32 %v1317, %v1318
        %v1320 = vand.u32 %v1319, 4294901760
        %1321 = vmatprep.subr.mxu0 %v1320
        %v1322 = vand.u32 %v334, 4294901760
        %v1323 = vsub.f32 %v334, %v1322
        %v1324 = vand.u32 %v1323, 4294901760
        %v1325 = vsub.f32 %v1323, %v1324
        %v1326 = vand.u32 %v1325, 4294901760
        %1327 = vmatpush1.msra.mxu0 %v1326
        %v1328 = vand.u32 %v331, 4294901760
        %v1329 = vsub.f32 %v331, %v1328
        %v1330 = vand.u32 %v1329, 4294901760
        %v1331 = vsub.f32 %v1329, %v1330
        %v1332 = vand.u32 %v1331, 4294901760
        %1333 = vmatprep.subr.mxu0 %v1332
        %v1334 = vand.u32 %v330, 4294901760
        %v1335 = vsub.f32 %v330, %v1334
        %v1336 = vand.u32 %v1335, 4294901760
        %v1337 = vsub.f32 %v1335, %v1336
        %v1338 = vand.u32 %v1337, 4294901760
        %1339 = vmatpush1.msra.mxu0 %v1338
        %v1340 = vand.u32 %v327, 4294901760
        %v1341 = vsub.f32 %v327, %v1340
        %v1342 = vand.u32 %v1341, 4294901760
        %v1343 = vsub.f32 %v1341, %v1342
        %v1344 = vand.u32 %v1343, 4294901760
        %1345 = vmatprep.subr.mxu0 %v1344
        %v1346 = vand.u32 %v326, 4294901760
        %v1347 = vsub.f32 %v326, %v1346
        %v1348 = vand.u32 %v1347, 4294901760
        %v1349 = vsub.f32 %v1347, %v1348
        %v1350 = vand.u32 %v1349, 4294901760
        %1351 = vmatpush1.msra.mxu0 %v1350
        %v1352 = vand.u32 %v323, 4294901760
        %v1353 = vsub.f32 %v323, %v1352
        %v1354 = vand.u32 %v1353, 4294901760
        %v1355 = vsub.f32 %v1353, %v1354
        %v1356 = vand.u32 %v1355, 4294901760
        %1357 = vmatprep.subr.mxu0 %v1356
        %v1358 = vand.u32 %v322, 4294901760
        %v1359 = vsub.f32 %v322, %v1358
        %v1360 = vand.u32 %v1359, 4294901760
        %v1361 = vsub.f32 %v1359, %v1360
        %v1362 = vand.u32 %v1361, 4294901760
        %1363 = vmatpush1.msra.mxu0 %v1362
        %v1364 = vand.u32 %v319, 4294901760
        %v1365 = vsub.f32 %v319, %v1364
        %v1366 = vand.u32 %v1365, 4294901760
        %v1367 = vsub.f32 %v1365, %v1366
        %v1368 = vand.u32 %v1367, 4294901760
        %1369 = vmatprep.subr.mxu0 %v1368
        %v1370 = vand.u32 %v318, 4294901760
        %v1371 = vsub.f32 %v318, %v1370
        %v1372 = vand.u32 %v1371, 4294901760
        %v1373 = vsub.f32 %v1371, %v1372
        %v1374 = vand.u32 %v1373, 4294901760
        %1375 = vmatpush1.msra.mxu0 %v1374
        %v1376 = vand.u32 %v315, 4294901760
        %v1377 = vsub.f32 %v315, %v1376
        %v1378 = vand.u32 %v1377, 4294901760
        %v1379 = vsub.f32 %v1377, %v1378
        %v1380 = vand.u32 %v1379, 4294901760
        %1381 = vmatprep.subr.mxu0 %v1380
        %v1382 = vand.u32 %v314, 4294901760
        %v1383 = vsub.f32 %v314, %v1382
        %v1384 = vand.u32 %v1383, 4294901760
        %v1385 = vsub.f32 %v1383, %v1384
        %v1386 = vand.u32 %v1385, 4294901760
        %1387 = vmatpush1.msra.mxu0 %v1386
        %v1388 = vand.u32 %v311, 4294901760
        %v1389 = vsub.f32 %v311, %v1388
        %v1390 = vand.u32 %v1389, 4294901760
        %v1391 = vsub.f32 %v1389, %v1390
        %v1392 = vand.u32 %v1391, 4294901760
        %1393 = vmatprep.subr.mxu0 %v1392
        %v1394 = vand.u32 %v310, 4294901760
        %v1395 = vsub.f32 %v310, %v1394
        %v1396 = vand.u32 %v1395, 4294901760
        %v1397 = vsub.f32 %v1395, %v1396
        %v1398 = vand.u32 %v1397, 4294901760
        %1399 = vmatpush1.msra.mxu0 %v1398
        %v1400 = vand.u32 %v307, 4294901760
        %v1401 = vsub.f32 %v307, %v1400
        %v1402 = vand.u32 %v1401, 4294901760
        %v1403 = vsub.f32 %v1401, %v1402
        %v1404 = vand.u32 %v1403, 4294901760
        %1405 = vmatprep.subr.mxu0 %v1404
        %v1406 = vand.u32 %v306, 4294901760
        %v1407 = vsub.f32 %v306, %v1406
        %v1408 = vand.u32 %v1407, 4294901760
        %v1409 = vsub.f32 %v1407, %v1408
        %v1410 = vand.u32 %v1409, 4294901760
        %1411 = vmatpush1.msra.mxu0 %v1410
        %v1412 = vand.u32 %v303, 4294901760
        %v1413 = vsub.f32 %v303, %v1412
        %v1414 = vand.u32 %v1413, 4294901760
        %v1415 = vsub.f32 %v1413, %v1414
        %v1416 = vand.u32 %v1415, 4294901760
        %1417 = vmatprep.subr.mxu0 %v1416
        %v1418 = vand.u32 %v302, 4294901760
        %v1419 = vsub.f32 %v302, %v1418
        %v1420 = vand.u32 %v1419, 4294901760
        %v1421 = vsub.f32 %v1419, %v1420
        %v1422 = vand.u32 %v1421, 4294901760
        %1423 = vmatpush1.msra.mxu0 %v1422
        %v1424 = vand.u32 %v299, 4294901760
        %v1425 = vsub.f32 %v299, %v1424
        %v1426 = vand.u32 %v1425, 4294901760
        %v1427 = vsub.f32 %v1425, %v1426
        %v1428 = vand.u32 %v1427, 4294901760
        %1429 = vmatprep.subr.mxu0 %v1428
        %v1430 = vand.u32 %v298, 4294901760
        %v1431 = vsub.f32 %v298, %v1430
        %v1432 = vand.u32 %v1431, 4294901760
        %v1433 = vsub.f32 %v1431, %v1432
        %v1434 = vand.u32 %v1433, 4294901760
        %1435 = vmatpush1.msra.mxu0 %v1434
        %v1436 = vand.u32 %v295, 4294901760
        %v1437 = vsub.f32 %v295, %v1436
        %v1438 = vand.u32 %v1437, 4294901760
        %v1439 = vsub.f32 %v1437, %v1438
        %v1440 = vand.u32 %v1439, 4294901760
        %1441 = vmatprep.subr.mxu0 %v1440
        %v1442 = vand.u32 %v294, 4294901760
        %v1443 = vsub.f32 %v294, %v1442
        %v1444 = vand.u32 %v1443, 4294901760
        %v1445 = vsub.f32 %v1443, %v1444
        %v1446 = vand.u32 %v1445, 4294901760
        %1447 = vmatpush1.msra.mxu0 %v1446
        %v1448 = vand.u32 %v291, 4294901760
        %v1449 = vsub.f32 %v291, %v1448
        %v1450 = vand.u32 %v1449, 4294901760
        %v1451 = vsub.f32 %v1449, %v1450
        %v1452 = vand.u32 %v1451, 4294901760
        %1453 = vmatprep.subr.mxu0 %v1452
        %v1454 = vand.u32 %v290, 4294901760
        %v1455 = vsub.f32 %v290, %v1454
        %v1456 = vand.u32 %v1455, 4294901760
        %v1457 = vsub.f32 %v1455, %v1456
        %v1458 = vand.u32 %v1457, 4294901760
        %1459 = vmatpush1.msra.mxu0 %v1458
        %v1460 = vand.u32 %v287, 4294901760
        %v1461 = vsub.f32 %v287, %v1460
        %v1462 = vand.u32 %v1461, 4294901760
        %v1463 = vsub.f32 %v1461, %v1462
        %v1464 = vand.u32 %v1463, 4294901760
        %1465 = vmatprep.subr.mxu0 %v1464
        %v1466 = vand.u32 %v286, 4294901760
        %v1467 = vsub.f32 %v286, %v1466
        %v1468 = vand.u32 %v1467, 4294901760
        %v1469 = vsub.f32 %v1467, %v1468
        %v1470 = vand.u32 %v1469, 4294901760
        %1471 = vmatpush1.msra.mxu0 %v1470
        %v1472 = vand.u32 %v283, 4294901760
        %v1473 = vsub.f32 %v283, %v1472
        %v1474 = vand.u32 %v1473, 4294901760
        %v1475 = vsub.f32 %v1473, %v1474
        %v1476 = vand.u32 %v1475, 4294901760
        %1477 = vmatprep.subr.mxu0 %v1476
        %v1478 = vand.u32 %v282, 4294901760
        %v1479 = vsub.f32 %v282, %v1478
        %v1480 = vand.u32 %v1479, 4294901760
        %v1481 = vsub.f32 %v1479, %v1480
        %v1482 = vand.u32 %v1481, 4294901760
        %1483 = vmatpush1.msra.mxu0 %v1482
        %v1484 = vand.u32 %v279, 4294901760
        %v1485 = vsub.f32 %v279, %v1484
        %v1486 = vand.u32 %v1485, 4294901760
        %v1487 = vsub.f32 %v1485, %v1486
        %v1488 = vand.u32 %v1487, 4294901760
        %1489 = vmatprep.subr.mxu0 %v1488
        %v1490 = vand.u32 %v278, 4294901760
        %v1491 = vsub.f32 %v278, %v1490
        %v1492 = vand.u32 %v1491, 4294901760
        %v1493 = vsub.f32 %v1491, %v1492
        %v1494 = vand.u32 %v1493, 4294901760
        %1495 = vmatpush1.msra.mxu0 %v1494
        %1496 = vmatprep.subr.mxu0 0.0
        %1497 = vmatpush2.msra.mxu0 0.0
        %1498 = vmatprep.subr.mxu0 0.0
        %1499 = vmatpush2.msra.mxu0 0.0
        %1500 = vmatprep.subr.mxu0 0.0
        %1501 = vmatpush2.msra.mxu0 0.0
        %1502 = vmatprep.subr.mxu0 0.0
        %1503 = vmatpush2.msra.mxu0 0.0
        %1504 = vmatprep.subr.mxu0 0.0
        %1505 = vmatpush2.msra.mxu0 0.0
        %1506 = vmatprep.subr.mxu0 0.0
        %1507 = vmatpush2.msra.mxu0 0.0
        %1508 = vmatprep.subr.mxu0 0.0
        %1509 = vmatpush2.msra.mxu0 0.0
        %1510 = vmatprep.subr.mxu0 0.0
        %1511 = vmatpush2.msra.mxu0 0.0
        %1512 = vmatprep.subr.mxu0 0.0
        %1513 = vmatpush2.msra.mxu0 0.0
        %1514 = vmatprep.subr.mxu0 0.0
        %1515 = vmatpush2.msra.mxu0 0.0
        %1516 = vmatprep.subr.mxu0 0.0
        %1517 = vmatpush2.msra.mxu0 0.0
        %1518 = vmatprep.subr.mxu0 0.0
        %1519 = vmatpush2.msra.mxu0 0.0
        %1520 = vmatprep.subr.mxu0 0.0
        %1521 = vmatpush2.msra.mxu0 0.0
        %1522 = vmatprep.subr.mxu0 0.0
        %1523 = vmatpush2.msra.mxu0 0.0
        %1524 = vmatprep.subr.mxu0 0.0
        %1525 = vmatpush2.msra.mxu0 0.0
        %1526 = vmatprep.subr.mxu0 0.0
        %1527 = vmatpush2.msra.mxu0 0.0
        %1528 = vmatprep.mubr.f32.mxu0 0.0
        %v1529 = vand.u32 %v340, 4294901760
        %1530 = vmatmul.mubr.f32.gmra.mxu0 %v1529
        %v1531 = vpop.f32.mrf.mxu0
        %v1532 = vadd.f32 %v1300, %v1531
        %v1533 = vpop.f32.mrf.mxu0
        %v1534 = vadd.f32 %v1302, %v1533
        %1535 = vdwg.mxu0
        %v1536 = vand.u32 %v339, 4294901760
        %v1537 = vsub.f32 %v339, %v1536
        %1538 = vmatprep.subr.mxu0 %v1537
        %v1539 = vand.u32 %v338, 4294901760
        %v1540 = vsub.f32 %v338, %v1539
        %1541 = vmatpush1.msra.mxu0 %v1540
        %v1542 = vand.u32 %v335, 4294901760
        %v1543 = vsub.f32 %v335, %v1542
        %1544 = vmatprep.subr.mxu0 %v1543
        %v1545 = vand.u32 %v334, 4294901760
        %v1546 = vsub.f32 %v334, %v1545
        %1547 = vmatpush1.msra.mxu0 %v1546
        %v1548 = vand.u32 %v331, 4294901760
        %v1549 = vsub.f32 %v331, %v1548
        %1550 = vmatprep.subr.mxu0 %v1549
        %v1551 = vand.u32 %v330, 4294901760
        %v1552 = vsub.f32 %v330, %v1551
        %1553 = vmatpush1.msra.mxu0 %v1552
        %v1554 = vand.u32 %v327, 4294901760
        %v1555 = vsub.f32 %v327, %v1554
        %1556 = vmatprep.subr.mxu0 %v1555
        %v1557 = vand.u32 %v326, 4294901760
        %v1558 = vsub.f32 %v326, %v1557
        %1559 = vmatpush1.msra.mxu0 %v1558
        %v1560 = vand.u32 %v323, 4294901760
        %v1561 = vsub.f32 %v323, %v1560
        %1562 = vmatprep.subr.mxu0 %v1561
        %v1563 = vand.u32 %v322, 4294901760
        %v1564 = vsub.f32 %v322, %v1563
        %1565 = vmatpush1.msra.mxu0 %v1564
        %v1566 = vand.u32 %v319, 4294901760
        %v1567 = vsub.f32 %v319, %v1566
        %1568 = vmatprep.subr.mxu0 %v1567
        %v1569 = vand.u32 %v318, 4294901760
        %v1570 = vsub.f32 %v318, %v1569
        %1571 = vmatpush1.msra.mxu0 %v1570
        %v1572 = vand.u32 %v315, 4294901760
        %v1573 = vsub.f32 %v315, %v1572
        %1574 = vmatprep.subr.mxu0 %v1573
        %v1575 = vand.u32 %v314, 4294901760
        %v1576 = vsub.f32 %v314, %v1575
        %1577 = vmatpush1.msra.mxu0 %v1576
        %v1578 = vand.u32 %v311, 4294901760
        %v1579 = vsub.f32 %v311, %v1578
        %1580 = vmatprep.subr.mxu0 %v1579
        %v1581 = vand.u32 %v310, 4294901760
        %v1582 = vsub.f32 %v310, %v1581
        %1583 = vmatpush1.msra.mxu0 %v1582
        %v1584 = vand.u32 %v307, 4294901760
        %v1585 = vsub.f32 %v307, %v1584
        %1586 = vmatprep.subr.mxu0 %v1585
        %v1587 = vand.u32 %v306, 4294901760
        %v1588 = vsub.f32 %v306, %v1587
        %1589 = vmatpush1.msra.mxu0 %v1588
        %v1590 = vand.u32 %v303, 4294901760
        %v1591 = vsub.f32 %v303, %v1590
        %1592 = vmatprep.subr.mxu0 %v1591
        %v1593 = vand.u32 %v302, 4294901760
        %v1594 = vsub.f32 %v302, %v1593
        %1595 = vmatpush1.msra.mxu0 %v1594
        %v1596 = vand.u32 %v299, 4294901760
        %v1597 = vsub.f32 %v299, %v1596
        %1598 = vmatprep.subr.mxu0 %v1597
        %v1599 = vand.u32 %v298, 4294901760
        %v1600 = vsub.f32 %v298, %v1599
        %1601 = vmatpush1.msra.mxu0 %v1600
        %v1602 = vand.u32 %v295, 4294901760
        %v1603 = vsub.f32 %v295, %v1602
        %1604 = vmatprep.subr.mxu0 %v1603
        %v1605 = vand.u32 %v294, 4294901760
        %v1606 = vsub.f32 %v294, %v1605
        %1607 = vmatpush1.msra.mxu0 %v1606
        %v1608 = vand.u32 %v291, 4294901760
        %v1609 = vsub.f32 %v291, %v1608
        %1610 = vmatprep.subr.mxu0 %v1609
        %v1611 = vand.u32 %v290, 4294901760
        %v1612 = vsub.f32 %v290, %v1611
        %1613 = vmatpush1.msra.mxu0 %v1612
        %v1614 = vand.u32 %v287, 4294901760
        %v1615 = vsub.f32 %v287, %v1614
        %1616 = vmatprep.subr.mxu0 %v1615
        %v1617 = vand.u32 %v286, 4294901760
        %v1618 = vsub.f32 %v286, %v1617
        %1619 = vmatpush1.msra.mxu0 %v1618
        %v1620 = vand.u32 %v283, 4294901760
        %v1621 = vsub.f32 %v283, %v1620
        %1622 = vmatprep.subr.mxu0 %v1621
        %v1623 = vand.u32 %v282, 4294901760
        %v1624 = vsub.f32 %v282, %v1623
        %1625 = vmatpush1.msra.mxu0 %v1624
        %v1626 = vand.u32 %v279, 4294901760
        %v1627 = vsub.f32 %v279, %v1626
        %1628 = vmatprep.subr.mxu0 %v1627
        %v1629 = vand.u32 %v278, 4294901760
        %v1630 = vsub.f32 %v278, %v1629
        %1631 = vmatpush1.msra.mxu0 %v1630
        %1632 = vmatprep.subr.mxu0 0.0
        %1633 = vmatpush2.msra.mxu0 0.0
        %1634 = vmatprep.subr.mxu0 0.0
        %1635 = vmatpush2.msra.mxu0 0.0
        %1636 = vmatprep.subr.mxu0 0.0
        %1637 = vmatpush2.msra.mxu0 0.0
        %1638 = vmatprep.subr.mxu0 0.0
        %1639 = vmatpush2.msra.mxu0 0.0
        %1640 = vmatprep.subr.mxu0 0.0
        %1641 = vmatpush2.msra.mxu0 0.0
        %1642 = vmatprep.subr.mxu0 0.0
        %1643 = vmatpush2.msra.mxu0 0.0
        %1644 = vmatprep.subr.mxu0 0.0
        %1645 = vmatpush2.msra.mxu0 0.0
        %1646 = vmatprep.subr.mxu0 0.0
        %1647 = vmatpush2.msra.mxu0 0.0
        %1648 = vmatprep.subr.mxu0 0.0
        %1649 = vmatpush2.msra.mxu0 0.0
        %1650 = vmatprep.subr.mxu0 0.0
        %1651 = vmatpush2.msra.mxu0 0.0
        %1652 = vmatprep.subr.mxu0 0.0
        %1653 = vmatpush2.msra.mxu0 0.0
        %1654 = vmatprep.subr.mxu0 0.0
        %1655 = vmatpush2.msra.mxu0 0.0
        %1656 = vmatprep.subr.mxu0 0.0
        %1657 = vmatpush2.msra.mxu0 0.0
        %1658 = vmatprep.subr.mxu0 0.0
        %1659 = vmatpush2.msra.mxu0 0.0
        %1660 = vmatprep.subr.mxu0 0.0
        %1661 = vmatpush2.msra.mxu0 0.0
        %1662 = vmatprep.subr.mxu0 0.0
        %1663 = vmatpush2.msra.mxu0 0.0
        %1664 = vmatprep.mubr.f32.mxu0 0.0
        %v1665 = vand.u32 %v340, 4294901760
        %v1666 = vsub.f32 %v340, %v1665
        %1667 = vmatmul.mubr.f32.gmra.mxu0 %v1666
        %v1668 = vpop.f32.mrf.mxu0
        %v1669 = vadd.f32 %v1532, %v1668
        %v1670 = vpop.f32.mrf.mxu0
        %v1671 = vadd.f32 %v1534, %v1670
        %1672 = vdwg.mxu0
        %v1673 = vand.u32 %v339, 4294901760
        %1674 = vmatprep.subr.mxu0 %v1673
        %v1675 = vand.u32 %v338, 4294901760
        %1676 = vmatpush1.msra.mxu0 %v1675
        %v1677 = vand.u32 %v335, 4294901760
        %1678 = vmatprep.subr.mxu0 %v1677
        %v1679 = vand.u32 %v334, 4294901760
        %1680 = vmatpush1.msra.mxu0 %v1679
        %v1681 = vand.u32 %v331, 4294901760
        %1682 = vmatprep.subr.mxu0 %v1681
        %v1683 = vand.u32 %v330, 4294901760
        %1684 = vmatpush1.msra.mxu0 %v1683
        %v1685 = vand.u32 %v327, 4294901760
        %1686 = vmatprep.subr.mxu0 %v1685
        %v1687 = vand.u32 %v326, 4294901760
        %1688 = vmatpush1.msra.mxu0 %v1687
        %v1689 = vand.u32 %v323, 4294901760
        %1690 = vmatprep.subr.mxu0 %v1689
        %v1691 = vand.u32 %v322, 4294901760
        %1692 = vmatpush1.msra.mxu0 %v1691
        %v1693 = vand.u32 %v319, 4294901760
        %1694 = vmatprep.subr.mxu0 %v1693
        %v1695 = vand.u32 %v318, 4294901760
        %1696 = vmatpush1.msra.mxu0 %v1695
        %v1697 = vand.u32 %v315, 4294901760
        %1698 = vmatprep.subr.mxu0 %v1697
        %v1699 = vand.u32 %v314, 4294901760
        %1700 = vmatpush1.msra.mxu0 %v1699
        %v1701 = vand.u32 %v311, 4294901760
        %1702 = vmatprep.subr.mxu0 %v1701
        %v1703 = vand.u32 %v310, 4294901760
        %1704 = vmatpush1.msra.mxu0 %v1703
        %v1705 = vand.u32 %v307, 4294901760
        %1706 = vmatprep.subr.mxu0 %v1705
        %v1707 = vand.u32 %v306, 4294901760
        %1708 = vmatpush1.msra.mxu0 %v1707
        %v1709 = vand.u32 %v303, 4294901760
        %1710 = vmatprep.subr.mxu0 %v1709
        %v1711 = vand.u32 %v302, 4294901760
        %1712 = vmatpush1.msra.mxu0 %v1711
        %v1713 = vand.u32 %v299, 4294901760
        %1714 = vmatprep.subr.mxu0 %v1713
        %v1715 = vand.u32 %v298, 4294901760
        %1716 = vmatpush1.msra.mxu0 %v1715
        %v1717 = vand.u32 %v295, 4294901760
        %1718 = vmatprep.subr.mxu0 %v1717
        %v1719 = vand.u32 %v294, 4294901760
        %1720 = vmatpush1.msra.mxu0 %v1719
        %v1721 = vand.u32 %v291, 4294901760
        %1722 = vmatprep.subr.mxu0 %v1721
        %v1723 = vand.u32 %v290, 4294901760
        %1724 = vmatpush1.msra.mxu0 %v1723
        %v1725 = vand.u32 %v287, 4294901760
        %1726 = vmatprep.subr.mxu0 %v1725
        %v1727 = vand.u32 %v286, 4294901760
        %1728 = vmatpush1.msra.mxu0 %v1727
        %v1729 = vand.u32 %v283, 4294901760
        %1730 = vmatprep.subr.mxu0 %v1729
        %v1731 = vand.u32 %v282, 4294901760
        %1732 = vmatpush1.msra.mxu0 %v1731
        %v1733 = vand.u32 %v279, 4294901760
        %1734 = vmatprep.subr.mxu0 %v1733
        %v1735 = vand.u32 %v278, 4294901760
        %1736 = vmatpush1.msra.mxu0 %v1735
        %1737 = vmatprep.subr.mxu0 0.0
        %1738 = vmatpush2.msra.mxu0 0.0
        %1739 = vmatprep.subr.mxu0 0.0
        %1740 = vmatpush2.msra.mxu0 0.0
        %1741 = vmatprep.subr.mxu0 0.0
        %1742 = vmatpush2.msra.mxu0 0.0
        %1743 = vmatprep.subr.mxu0 0.0
        %1744 = vmatpush2.msra.mxu0 0.0
        %1745 = vmatprep.subr.mxu0 0.0
        %1746 = vmatpush2.msra.mxu0 0.0
        %1747 = vmatprep.subr.mxu0 0.0
        %1748 = vmatpush2.msra.mxu0 0.0
        %1749 = vmatprep.subr.mxu0 0.0
        %1750 = vmatpush2.msra.mxu0 0.0
        %1751 = vmatprep.subr.mxu0 0.0
        %1752 = vmatpush2.msra.mxu0 0.0
        %1753 = vmatprep.subr.mxu0 0.0
        %1754 = vmatpush2.msra.mxu0 0.0
        %1755 = vmatprep.subr.mxu0 0.0
        %1756 = vmatpush2.msra.mxu0 0.0
        %1757 = vmatprep.subr.mxu0 0.0
        %1758 = vmatpush2.msra.mxu0 0.0
        %1759 = vmatprep.subr.mxu0 0.0
        %1760 = vmatpush2.msra.mxu0 0.0
        %1761 = vmatprep.subr.mxu0 0.0
        %1762 = vmatpush2.msra.mxu0 0.0
        %1763 = vmatprep.subr.mxu0 0.0
        %1764 = vmatpush2.msra.mxu0 0.0
        %1765 = vmatprep.subr.mxu0 0.0
        %1766 = vmatpush2.msra.mxu0 0.0
        %1767 = vmatprep.subr.mxu0 0.0
        %1768 = vmatpush2.msra.mxu0 0.0
        %1769 = vmatprep.mubr.f32.mxu0 0.0
        %v1770 = vand.u32 %v340, 4294901760
        %v1771 = vsub.f32 %v340, %v1770
        %v1772 = vand.u32 %v1771, 4294901760
        %1773 = vmatmul.mubr.f32.gmra.mxu0 %v1772
        %v1774 = vpop.f32.mrf.mxu0
        %v1775 = vadd.f32 %v1669, %v1774
        %v1776 = vpop.f32.mrf.mxu0
        %v1777 = vadd.f32 %v1671, %v1776
        %1778 = vdwg.mxu0
        %v1779 = vand.u32 %v339, 4294901760
        %v1780 = vsub.f32 %v339, %v1779
        %v1781 = vand.u32 %v1780, 4294901760
        %1782 = vmatprep.subr.mxu0 %v1781
        %v1783 = vand.u32 %v338, 4294901760
        %v1784 = vsub.f32 %v338, %v1783
        %v1785 = vand.u32 %v1784, 4294901760
        %1786 = vmatpush1.msra.mxu0 %v1785
        %v1787 = vand.u32 %v335, 4294901760
        %v1788 = vsub.f32 %v335, %v1787
        %v1789 = vand.u32 %v1788, 4294901760
        %1790 = vmatprep.subr.mxu0 %v1789
        %v1791 = vand.u32 %v334, 4294901760
        %v1792 = vsub.f32 %v334, %v1791
        %v1793 = vand.u32 %v1792, 4294901760
        %1794 = vmatpush1.msra.mxu0 %v1793
        %v1795 = vand.u32 %v331, 4294901760
        %v1796 = vsub.f32 %v331, %v1795
        %v1797 = vand.u32 %v1796, 4294901760
        %1798 = vmatprep.subr.mxu0 %v1797
        %v1799 = vand.u32 %v330, 4294901760
        %v1800 = vsub.f32 %v330, %v1799
        %v1801 = vand.u32 %v1800, 4294901760
        %1802 = vmatpush1.msra.mxu0 %v1801
        %v1803 = vand.u32 %v327, 4294901760
        %v1804 = vsub.f32 %v327, %v1803
        %v1805 = vand.u32 %v1804, 4294901760
        %1806 = vmatprep.subr.mxu0 %v1805
        %v1807 = vand.u32 %v326, 4294901760
        %v1808 = vsub.f32 %v326, %v1807
        %v1809 = vand.u32 %v1808, 4294901760
        %1810 = vmatpush1.msra.mxu0 %v1809
        %v1811 = vand.u32 %v323, 4294901760
        %v1812 = vsub.f32 %v323, %v1811
        %v1813 = vand.u32 %v1812, 4294901760
        %1814 = vmatprep.subr.mxu0 %v1813
        %v1815 = vand.u32 %v322, 4294901760
        %v1816 = vsub.f32 %v322, %v1815
        %v1817 = vand.u32 %v1816, 4294901760
        %1818 = vmatpush1.msra.mxu0 %v1817
        %v1819 = vand.u32 %v319, 4294901760
        %v1820 = vsub.f32 %v319, %v1819
        %v1821 = vand.u32 %v1820, 4294901760
        %1822 = vmatprep.subr.mxu0 %v1821
        %v1823 = vand.u32 %v318, 4294901760
        %v1824 = vsub.f32 %v318, %v1823
        %v1825 = vand.u32 %v1824, 4294901760
        %1826 = vmatpush1.msra.mxu0 %v1825
        %v1827 = vand.u32 %v315, 4294901760
        %v1828 = vsub.f32 %v315, %v1827
        %v1829 = vand.u32 %v1828, 4294901760
        %1830 = vmatprep.subr.mxu0 %v1829
        %v1831 = vand.u32 %v314, 4294901760
        %v1832 = vsub.f32 %v314, %v1831
        %v1833 = vand.u32 %v1832, 4294901760
        %1834 = vmatpush1.msra.mxu0 %v1833
        %v1835 = vand.u32 %v311, 4294901760
        %v1836 = vsub.f32 %v311, %v1835
        %v1837 = vand.u32 %v1836, 4294901760
        %1838 = vmatprep.subr.mxu0 %v1837
        %v1839 = vand.u32 %v310, 4294901760
        %v1840 = vsub.f32 %v310, %v1839
        %v1841 = vand.u32 %v1840, 4294901760
        %1842 = vmatpush1.msra.mxu0 %v1841
        %v1843 = vand.u32 %v307, 4294901760
        %v1844 = vsub.f32 %v307, %v1843
        %v1845 = vand.u32 %v1844, 4294901760
        %1846 = vmatprep.subr.mxu0 %v1845
        %v1847 = vand.u32 %v306, 4294901760
        %v1848 = vsub.f32 %v306, %v1847
        %v1849 = vand.u32 %v1848, 4294901760
        %1850 = vmatpush1.msra.mxu0 %v1849
        %v1851 = vand.u32 %v303, 4294901760
        %v1852 = vsub.f32 %v303, %v1851
        %v1853 = vand.u32 %v1852, 4294901760
        %1854 = vmatprep.subr.mxu0 %v1853
        %v1855 = vand.u32 %v302, 4294901760
        %v1856 = vsub.f32 %v302, %v1855
        %v1857 = vand.u32 %v1856, 4294901760
        %1858 = vmatpush1.msra.mxu0 %v1857
        %v1859 = vand.u32 %v299, 4294901760
        %v1860 = vsub.f32 %v299, %v1859
        %v1861 = vand.u32 %v1860, 4294901760
        %1862 = vmatprep.subr.mxu0 %v1861
        %v1863 = vand.u32 %v298, 4294901760
        %v1864 = vsub.f32 %v298, %v1863
        %v1865 = vand.u32 %v1864, 4294901760
        %1866 = vmatpush1.msra.mxu0 %v1865
        %v1867 = vand.u32 %v295, 4294901760
        %v1868 = vsub.f32 %v295, %v1867
        %v1869 = vand.u32 %v1868, 4294901760
        %1870 = vmatprep.subr.mxu0 %v1869
        %v1871 = vand.u32 %v294, 4294901760
        %v1872 = vsub.f32 %v294, %v1871
        %v1873 = vand.u32 %v1872, 4294901760
        %1874 = vmatpush1.msra.mxu0 %v1873
        %v1875 = vand.u32 %v291, 4294901760
        %v1876 = vsub.f32 %v291, %v1875
        %v1877 = vand.u32 %v1876, 4294901760
        %1878 = vmatprep.subr.mxu0 %v1877
        %v1879 = vand.u32 %v290, 4294901760
        %v1880 = vsub.f32 %v290, %v1879
        %v1881 = vand.u32 %v1880, 4294901760
        %1882 = vmatpush1.msra.mxu0 %v1881
        %v1883 = vand.u32 %v287, 4294901760
        %v1884 = vsub.f32 %v287, %v1883
        %v1885 = vand.u32 %v1884, 4294901760
        %1886 = vmatprep.subr.mxu0 %v1885
        %v1887 = vand.u32 %v286, 4294901760
        %v1888 = vsub.f32 %v286, %v1887
        %v1889 = vand.u32 %v1888, 4294901760
        %1890 = vmatpush1.msra.mxu0 %v1889
        %v1891 = vand.u32 %v283, 4294901760
        %v1892 = vsub.f32 %v283, %v1891
        %v1893 = vand.u32 %v1892, 4294901760
        %1894 = vmatprep.subr.mxu0 %v1893
        %v1895 = vand.u32 %v282, 4294901760
        %v1896 = vsub.f32 %v282, %v1895
        %v1897 = vand.u32 %v1896, 4294901760
        %1898 = vmatpush1.msra.mxu0 %v1897
        %v1899 = vand.u32 %v279, 4294901760
        %v1900 = vsub.f32 %v279, %v1899
        %v1901 = vand.u32 %v1900, 4294901760
        %1902 = vmatprep.subr.mxu0 %v1901
        %v1903 = vand.u32 %v278, 4294901760
        %v1904 = vsub.f32 %v278, %v1903
        %v1905 = vand.u32 %v1904, 4294901760
        %1906 = vmatpush1.msra.mxu0 %v1905
        %1907 = vmatprep.subr.mxu0 0.0
        %1908 = vmatpush2.msra.mxu0 0.0
        %1909 = vmatprep.subr.mxu0 0.0
        %1910 = vmatpush2.msra.mxu0 0.0
        %1911 = vmatprep.subr.mxu0 0.0
        %1912 = vmatpush2.msra.mxu0 0.0
        %1913 = vmatprep.subr.mxu0 0.0
        %1914 = vmatpush2.msra.mxu0 0.0
        %1915 = vmatprep.subr.mxu0 0.0
        %1916 = vmatpush2.msra.mxu0 0.0
        %1917 = vmatprep.subr.mxu0 0.0
        %1918 = vmatpush2.msra.mxu0 0.0
        %1919 = vmatprep.subr.mxu0 0.0
        %1920 = vmatpush2.msra.mxu0 0.0
        %1921 = vmatprep.subr.mxu0 0.0
        %1922 = vmatpush2.msra.mxu0 0.0
        %1923 = vmatprep.subr.mxu0 0.0
        %1924 = vmatpush2.msra.mxu0 0.0
        %1925 = vmatprep.subr.mxu0 0.0
        %1926 = vmatpush2.msra.mxu0 0.0
        %1927 = vmatprep.subr.mxu0 0.0
        %1928 = vmatpush2.msra.mxu0 0.0
        %1929 = vmatprep.subr.mxu0 0.0
        %1930 = vmatpush2.msra.mxu0 0.0
        %1931 = vmatprep.subr.mxu0 0.0
        %1932 = vmatpush2.msra.mxu0 0.0
        %1933 = vmatprep.subr.mxu0 0.0
        %1934 = vmatpush2.msra.mxu0 0.0
        %1935 = vmatprep.subr.mxu0 0.0
        %1936 = vmatpush2.msra.mxu0 0.0
        %1937 = vmatprep.subr.mxu0 0.0
        %1938 = vmatpush2.msra.mxu0 0.0
        %1939 = vmatprep.mubr.f32.mxu0 0.0
        %v1940 = vand.u32 %v340, 4294901760
        %1941 = vmatmul.mubr.f32.gmra.mxu0 %v1940
        %v1942 = vpop.f32.mrf.mxu0
        %v1943 = vadd.f32 %v1775, %v1942
        %v1944 = vpop.f32.mrf.mxu0
        %v1945 = vadd.f32 %v1777, %v1944
        %1946 = vdwg.mxu0
        %v1947 = vand.u32 %v339, 4294901760
        %1948 = vmatprep.subr.mxu0 %v1947
        %v1949 = vand.u32 %v338, 4294901760
        %1950 = vmatpush1.msra.mxu0 %v1949
        %v1951 = vand.u32 %v335, 4294901760
        %1952 = vmatprep.subr.mxu0 %v1951
        %v1953 = vand.u32 %v334, 4294901760
        %1954 = vmatpush1.msra.mxu0 %v1953
        %v1955 = vand.u32 %v331, 4294901760
        %1956 = vmatprep.subr.mxu0 %v1955
        %v1957 = vand.u32 %v330, 4294901760
        %1958 = vmatpush1.msra.mxu0 %v1957
        %v1959 = vand.u32 %v327, 4294901760
        %1960 = vmatprep.subr.mxu0 %v1959
        %v1961 = vand.u32 %v326, 4294901760
        %1962 = vmatpush1.msra.mxu0 %v1961
        %v1963 = vand.u32 %v323, 4294901760
        %1964 = vmatprep.subr.mxu0 %v1963
        %v1965 = vand.u32 %v322, 4294901760
        %1966 = vmatpush1.msra.mxu0 %v1965
        %v1967 = vand.u32 %v319, 4294901760
        %1968 = vmatprep.subr.mxu0 %v1967
        %v1969 = vand.u32 %v318, 4294901760
        %1970 = vmatpush1.msra.mxu0 %v1969
        %v1971 = vand.u32 %v315, 4294901760
        %1972 = vmatprep.subr.mxu0 %v1971
        %v1973 = vand.u32 %v314, 4294901760
        %1974 = vmatpush1.msra.mxu0 %v1973
        %v1975 = vand.u32 %v311, 4294901760
        %1976 = vmatprep.subr.mxu0 %v1975
        %v1977 = vand.u32 %v310, 4294901760
        %1978 = vmatpush1.msra.mxu0 %v1977
        %v1979 = vand.u32 %v307, 4294901760
        %1980 = vmatprep.subr.mxu0 %v1979
        %v1981 = vand.u32 %v306, 4294901760
        %1982 = vmatpush1.msra.mxu0 %v1981
        %v1983 = vand.u32 %v303, 4294901760
        %1984 = vmatprep.subr.mxu0 %v1983
        %v1985 = vand.u32 %v302, 4294901760
        %1986 = vmatpush1.msra.mxu0 %v1985
        %v1987 = vand.u32 %v299, 4294901760
        %1988 = vmatprep.subr.mxu0 %v1987
        %v1989 = vand.u32 %v298, 4294901760
        %1990 = vmatpush1.msra.mxu0 %v1989
        %v1991 = vand.u32 %v295, 4294901760
        %1992 = vmatprep.subr.mxu0 %v1991
        %v1993 = vand.u32 %v294, 4294901760
        %1994 = vmatpush1.msra.mxu0 %v1993
        %v1995 = vand.u32 %v291, 4294901760
        %1996 = vmatprep.subr.mxu0 %v1995
        %v1997 = vand.u32 %v290, 4294901760
        %1998 = vmatpush1.msra.mxu0 %v1997
        %v1999 = vand.u32 %v287, 4294901760
        %2000 = vmatprep.subr.mxu0 %v1999
        %v2001 = vand.u32 %v286, 4294901760
        %2002 = vmatpush1.msra.mxu0 %v2001
        %v2003 = vand.u32 %v283, 4294901760
        %2004 = vmatprep.subr.mxu0 %v2003
        %v2005 = vand.u32 %v282, 4294901760
        %2006 = vmatpush1.msra.mxu0 %v2005
        %v2007 = vand.u32 %v279, 4294901760
        %2008 = vmatprep.subr.mxu0 %v2007
        %v2009 = vand.u32 %v278, 4294901760
        %2010 = vmatpush1.msra.mxu0 %v2009
        %2011 = vmatprep.subr.mxu0 0.0
        %2012 = vmatpush2.msra.mxu0 0.0
        %2013 = vmatprep.subr.mxu0 0.0
        %2014 = vmatpush2.msra.mxu0 0.0
        %2015 = vmatprep.subr.mxu0 0.0
        %2016 = vmatpush2.msra.mxu0 0.0
        %2017 = vmatprep.subr.mxu0 0.0
        %2018 = vmatpush2.msra.mxu0 0.0
        %2019 = vmatprep.subr.mxu0 0.0
        %2020 = vmatpush2.msra.mxu0 0.0
        %2021 = vmatprep.subr.mxu0 0.0
        %2022 = vmatpush2.msra.mxu0 0.0
        %2023 = vmatprep.subr.mxu0 0.0
        %2024 = vmatpush2.msra.mxu0 0.0
        %2025 = vmatprep.subr.mxu0 0.0
        %2026 = vmatpush2.msra.mxu0 0.0
        %2027 = vmatprep.subr.mxu0 0.0
        %2028 = vmatpush2.msra.mxu0 0.0
        %2029 = vmatprep.subr.mxu0 0.0
        %2030 = vmatpush2.msra.mxu0 0.0
        %2031 = vmatprep.subr.mxu0 0.0
        %2032 = vmatpush2.msra.mxu0 0.0
        %2033 = vmatprep.subr.mxu0 0.0
        %2034 = vmatpush2.msra.mxu0 0.0
        %2035 = vmatprep.subr.mxu0 0.0
        %2036 = vmatpush2.msra.mxu0 0.0
        %2037 = vmatprep.subr.mxu0 0.0
        %2038 = vmatpush2.msra.mxu0 0.0
        %2039 = vmatprep.subr.mxu0 0.0
        %2040 = vmatpush2.msra.mxu0 0.0
        %2041 = vmatprep.subr.mxu0 0.0
        %2042 = vmatpush2.msra.mxu0 0.0
        %2043 = vmatprep.mubr.f32.mxu0 0.0
        %v2044 = vand.u32 %v340, 4294901760
        %2045 = vmatmul.mubr.f32.gmra.mxu0 %v2044
        %v2046 = vpop.f32.mrf.mxu0
        %v2047 = vadd.f32 %v1943, %v2046
        %v2048 = vpop.f32.mrf.mxu0
        %v2049 = vadd.f32 %v1945, %v2048
        %2050 = vdwg.mxu0
        %s2051 = scalar_lea.vmem %s238, 2 [#allocation2]
        %v2052 = vld [vmem:[%s2051] sm:$0x3]
        %v2053 = vand.u32 %v337, 4294901760
        %2054 = vmatprep.subr.mxu0 %v2053
        %v2055 = vand.u32 %v336, 4294901760
        %2056 = vmatpush1.msra.mxu0 %v2055
        %v2057 = vand.u32 %v333, 4294901760
        %2058 = vmatprep.subr.mxu0 %v2057
        %v2059 = vand.u32 %v332, 4294901760
        %2060 = vmatpush1.msra.mxu0 %v2059
        %v2061 = vand.u32 %v329, 4294901760
        %2062 = vmatprep.subr.mxu0 %v2061
        %v2063 = vand.u32 %v328, 4294901760
        %2064 = vmatpush1.msra.mxu0 %v2063
        %v2065 = vand.u32 %v325, 4294901760
        %2066 = vmatprep.subr.mxu0 %v2065
        %v2067 = vand.u32 %v324, 4294901760
        %2068 = vmatpush1.msra.mxu0 %v2067
        %v2069 = vand.u32 %v321, 4294901760
        %2070 = vmatprep.subr.mxu0 %v2069
        %v2071 = vand.u32 %v320, 4294901760
        %2072 = vmatpush1.msra.mxu0 %v2071
        %v2073 = vand.u32 %v317, 4294901760
        %2074 = vmatprep.subr.mxu0 %v2073
        %v2075 = vand.u32 %v316, 4294901760
        %2076 = vmatpush1.msra.mxu0 %v2075
        %v2077 = vand.u32 %v313, 4294901760
        %2078 = vmatprep.subr.mxu0 %v2077
        %v2079 = vand.u32 %v312, 4294901760
        %2080 = vmatpush1.msra.mxu0 %v2079
        %v2081 = vand.u32 %v309, 4294901760
        %2082 = vmatprep.subr.mxu0 %v2081
        %v2083 = vand.u32 %v308, 4294901760
        %2084 = vmatpush1.msra.mxu0 %v2083
        %v2085 = vand.u32 %v305, 4294901760
        %2086 = vmatprep.subr.mxu0 %v2085
        %v2087 = vand.u32 %v304, 4294901760
        %2088 = vmatpush1.msra.mxu0 %v2087
        %v2089 = vand.u32 %v301, 4294901760
        %2090 = vmatprep.subr.mxu0 %v2089
        %v2091 = vand.u32 %v300, 4294901760
        %2092 = vmatpush1.msra.mxu0 %v2091
        %v2093 = vand.u32 %v297, 4294901760
        %2094 = vmatprep.subr.mxu0 %v2093
        %v2095 = vand.u32 %v296, 4294901760
        %2096 = vmatpush1.msra.mxu0 %v2095
        %v2097 = vand.u32 %v293, 4294901760
        %2098 = vmatprep.subr.mxu0 %v2097
        %v2099 = vand.u32 %v292, 4294901760
        %2100 = vmatpush1.msra.mxu0 %v2099
        %v2101 = vand.u32 %v289, 4294901760
        %2102 = vmatprep.subr.mxu0 %v2101
        %v2103 = vand.u32 %v288, 4294901760
        %2104 = vmatpush1.msra.mxu0 %v2103
        %v2105 = vand.u32 %v285, 4294901760
        %2106 = vmatprep.subr.mxu0 %v2105
        %v2107 = vand.u32 %v284, 4294901760
        %2108 = vmatpush1.msra.mxu0 %v2107
        %v2109 = vand.u32 %v281, 4294901760
        %2110 = vmatprep.subr.mxu0 %v2109
        %v2111 = vand.u32 %v280, 4294901760
        %2112 = vmatpush1.msra.mxu0 %v2111
        %v2113 = vand.u32 %v277, 4294901760
        %2114 = vmatprep.subr.mxu0 %v2113
        %v2115 = vand.u32 %v276, 4294901760
        %2116 = vmatpush1.msra.mxu0 %v2115
        %2117 = vmatprep.subr.mxu0 0.0
        %2118 = vmatpush2.msra.mxu0 0.0
        %2119 = vmatprep.subr.mxu0 0.0
        %2120 = vmatpush2.msra.mxu0 0.0
        %2121 = vmatprep.subr.mxu0 0.0
        %2122 = vmatpush2.msra.mxu0 0.0
        %2123 = vmatprep.subr.mxu0 0.0
        %2124 = vmatpush2.msra.mxu0 0.0
        %2125 = vmatprep.subr.mxu0 0.0
        %2126 = vmatpush2.msra.mxu0 0.0
        %2127 = vmatprep.subr.mxu0 0.0
        %2128 = vmatpush2.msra.mxu0 0.0
        %2129 = vmatprep.subr.mxu0 0.0
        %2130 = vmatpush2.msra.mxu0 0.0
        %2131 = vmatprep.subr.mxu0 0.0
        %2132 = vmatpush2.msra.mxu0 0.0
        %2133 = vmatprep.subr.mxu0 0.0
        %2134 = vmatpush2.msra.mxu0 0.0
        %2135 = vmatprep.subr.mxu0 0.0
        %2136 = vmatpush2.msra.mxu0 0.0
        %2137 = vmatprep.subr.mxu0 0.0
        %2138 = vmatpush2.msra.mxu0 0.0
        %2139 = vmatprep.subr.mxu0 0.0
        %2140 = vmatpush2.msra.mxu0 0.0
        %2141 = vmatprep.subr.mxu0 0.0
        %2142 = vmatpush2.msra.mxu0 0.0
        %2143 = vmatprep.subr.mxu0 0.0
        %2144 = vmatpush2.msra.mxu0 0.0
        %2145 = vmatprep.subr.mxu0 0.0
        %2146 = vmatpush2.msra.mxu0 0.0
        %2147 = vmatprep.subr.mxu0 0.0
        %2148 = vmatpush2.msra.mxu0 0.0
        %2149 = vmatprep.mubr.f32.mxu0 0.0
        %v2150 = vand.u32 %v2052, 4294901760
        %v2151 = vsub.f32 %v2052, %v2150
        %v2152 = vand.u32 %v2151, 4294901760
        %v2153 = vsub.f32 %v2151, %v2152
        %v2154 = vand.u32 %v2153, 4294901760
        %2155 = vmatmul.mubr.f32.gmra.mxu0 %v2154
        %v2156 = vpop.f32.mrf.mxu0
        %v2157 = vadd.f32 0.0, %v2156
        %v2158 = vpop.f32.mrf.mxu0
        %v2159 = vadd.f32 0.0, %v2158
        %2160 = vdwg.mxu0
        %v2161 = vand.u32 %v337, 4294901760
        %v2162 = vsub.f32 %v337, %v2161
        %v2163 = vand.u32 %v2162, 4294901760
        %v2164 = vsub.f32 %v2162, %v2163
        %v2165 = vand.u32 %v2164, 4294901760
        %2166 = vmatprep.subr.mxu0 %v2165
        %v2167 = vand.u32 %v336, 4294901760
        %v2168 = vsub.f32 %v336, %v2167
        %v2169 = vand.u32 %v2168, 4294901760
        %v2170 = vsub.f32 %v2168, %v2169
        %v2171 = vand.u32 %v2170, 4294901760
        %2172 = vmatpush1.msra.mxu0 %v2171
        %v2173 = vand.u32 %v333, 4294901760
        %v2174 = vsub.f32 %v333, %v2173
        %v2175 = vand.u32 %v2174, 4294901760
        %v2176 = vsub.f32 %v2174, %v2175
        %v2177 = vand.u32 %v2176, 4294901760
        %2178 = vmatprep.subr.mxu0 %v2177
        %v2179 = vand.u32 %v332, 4294901760
        %v2180 = vsub.f32 %v332, %v2179
        %v2181 = vand.u32 %v2180, 4294901760
        %v2182 = vsub.f32 %v2180, %v2181
        %v2183 = vand.u32 %v2182, 4294901760
        %2184 = vmatpush1.msra.mxu0 %v2183
        %v2185 = vand.u32 %v329, 4294901760
        %v2186 = vsub.f32 %v329, %v2185
        %v2187 = vand.u32 %v2186, 4294901760
        %v2188 = vsub.f32 %v2186, %v2187
        %v2189 = vand.u32 %v2188, 4294901760
        %2190 = vmatprep.subr.mxu0 %v2189
        %v2191 = vand.u32 %v328, 4294901760
        %v2192 = vsub.f32 %v328, %v2191
        %v2193 = vand.u32 %v2192, 4294901760
        %v2194 = vsub.f32 %v2192, %v2193
        %v2195 = vand.u32 %v2194, 4294901760
        %2196 = vmatpush1.msra.mxu0 %v2195
        %v2197 = vand.u32 %v325, 4294901760
        %v2198 = vsub.f32 %v325, %v2197
        %v2199 = vand.u32 %v2198, 4294901760
        %v2200 = vsub.f32 %v2198, %v2199
        %v2201 = vand.u32 %v2200, 4294901760
        %2202 = vmatprep.subr.mxu0 %v2201
        %v2203 = vand.u32 %v324, 4294901760
        %v2204 = vsub.f32 %v324, %v2203
        %v2205 = vand.u32 %v2204, 4294901760
        %v2206 = vsub.f32 %v2204, %v2205
        %v2207 = vand.u32 %v2206, 4294901760
        %2208 = vmatpush1.msra.mxu0 %v2207
        %v2209 = vand.u32 %v321, 4294901760
        %v2210 = vsub.f32 %v321, %v2209
        %v2211 = vand.u32 %v2210, 4294901760
        %v2212 = vsub.f32 %v2210, %v2211
        %v2213 = vand.u32 %v2212, 4294901760
        %2214 = vmatprep.subr.mxu0 %v2213
        %v2215 = vand.u32 %v320, 4294901760
        %v2216 = vsub.f32 %v320, %v2215
        %v2217 = vand.u32 %v2216, 4294901760
        %v2218 = vsub.f32 %v2216, %v2217
        %v2219 = vand.u32 %v2218, 4294901760
        %2220 = vmatpush1.msra.mxu0 %v2219
        %v2221 = vand.u32 %v317, 4294901760
        %v2222 = vsub.f32 %v317, %v2221
        %v2223 = vand.u32 %v2222, 4294901760
        %v2224 = vsub.f32 %v2222, %v2223
        %v2225 = vand.u32 %v2224, 4294901760
        %2226 = vmatprep.subr.mxu0 %v2225
        %v2227 = vand.u32 %v316, 4294901760
        %v2228 = vsub.f32 %v316, %v2227
        %v2229 = vand.u32 %v2228, 4294901760
        %v2230 = vsub.f32 %v2228, %v2229
        %v2231 = vand.u32 %v2230, 4294901760
        %2232 = vmatpush1.msra.mxu0 %v2231
        %v2233 = vand.u32 %v313, 4294901760
        %v2234 = vsub.f32 %v313, %v2233
        %v2235 = vand.u32 %v2234, 4294901760
        %v2236 = vsub.f32 %v2234, %v2235
        %v2237 = vand.u32 %v2236, 4294901760
        %2238 = vmatprep.subr.mxu0 %v2237
        %v2239 = vand.u32 %v312, 4294901760
        %v2240 = vsub.f32 %v312, %v2239
        %v2241 = vand.u32 %v2240, 4294901760
        %v2242 = vsub.f32 %v2240, %v2241
        %v2243 = vand.u32 %v2242, 4294901760
        %2244 = vmatpush1.msra.mxu0 %v2243
        %v2245 = vand.u32 %v309, 4294901760
        %v2246 = vsub.f32 %v309, %v2245
        %v2247 = vand.u32 %v2246, 4294901760
        %v2248 = vsub.f32 %v2246, %v2247
        %v2249 = vand.u32 %v2248, 4294901760
        %2250 = vmatprep.subr.mxu0 %v2249
        %v2251 = vand.u32 %v308, 4294901760
        %v2252 = vsub.f32 %v308, %v2251
        %v2253 = vand.u32 %v2252, 4294901760
        %v2254 = vsub.f32 %v2252, %v2253
        %v2255 = vand.u32 %v2254, 4294901760
        %2256 = vmatpush1.msra.mxu0 %v2255
        %v2257 = vand.u32 %v305, 4294901760
        %v2258 = vsub.f32 %v305, %v2257
        %v2259 = vand.u32 %v2258, 4294901760
        %v2260 = vsub.f32 %v2258, %v2259
        %v2261 = vand.u32 %v2260, 4294901760
        %2262 = vmatprep.subr.mxu0 %v2261
        %v2263 = vand.u32 %v304, 4294901760
        %v2264 = vsub.f32 %v304, %v2263
        %v2265 = vand.u32 %v2264, 4294901760
        %v2266 = vsub.f32 %v2264, %v2265
        %v2267 = vand.u32 %v2266, 4294901760
        %2268 = vmatpush1.msra.mxu0 %v2267
        %v2269 = vand.u32 %v301, 4294901760
        %v2270 = vsub.f32 %v301, %v2269
        %v2271 = vand.u32 %v2270, 4294901760
        %v2272 = vsub.f32 %v2270, %v2271
        %v2273 = vand.u32 %v2272, 4294901760
        %2274 = vmatprep.subr.mxu0 %v2273
        %v2275 = vand.u32 %v300, 4294901760
        %v2276 = vsub.f32 %v300, %v2275
        %v2277 = vand.u32 %v2276, 4294901760
        %v2278 = vsub.f32 %v2276, %v2277
        %v2279 = vand.u32 %v2278, 4294901760
        %2280 = vmatpush1.msra.mxu0 %v2279
        %v2281 = vand.u32 %v297, 4294901760
        %v2282 = vsub.f32 %v297, %v2281
        %v2283 = vand.u32 %v2282, 4294901760
        %v2284 = vsub.f32 %v2282, %v2283
        %v2285 = vand.u32 %v2284, 4294901760
        %2286 = vmatprep.subr.mxu0 %v2285
        %v2287 = vand.u32 %v296, 4294901760
        %v2288 = vsub.f32 %v296, %v2287
        %v2289 = vand.u32 %v2288, 4294901760
        %v2290 = vsub.f32 %v2288, %v2289
        %v2291 = vand.u32 %v2290, 4294901760
        %2292 = vmatpush1.msra.mxu0 %v2291
        %v2293 = vand.u32 %v293, 4294901760
        %v2294 = vsub.f32 %v293, %v2293
        %v2295 = vand.u32 %v2294, 4294901760
        %v2296 = vsub.f32 %v2294, %v2295
        %v2297 = vand.u32 %v2296, 4294901760
        %2298 = vmatprep.subr.mxu0 %v2297
        %v2299 = vand.u32 %v292, 4294901760
        %v2300 = vsub.f32 %v292, %v2299
        %v2301 = vand.u32 %v2300, 4294901760
        %v2302 = vsub.f32 %v2300, %v2301
        %v2303 = vand.u32 %v2302, 4294901760
        %2304 = vmatpush1.msra.mxu0 %v2303
        %v2305 = vand.u32 %v289, 4294901760
        %v2306 = vsub.f32 %v289, %v2305
        %v2307 = vand.u32 %v2306, 4294901760
        %v2308 = vsub.f32 %v2306, %v2307
        %v2309 = vand.u32 %v2308, 4294901760
        %2310 = vmatprep.subr.mxu0 %v2309
        %v2311 = vand.u32 %v288, 4294901760
        %v2312 = vsub.f32 %v288, %v2311
        %v2313 = vand.u32 %v2312, 4294901760
        %v2314 = vsub.f32 %v2312, %v2313
        %v2315 = vand.u32 %v2314, 4294901760
        %2316 = vmatpush1.msra.mxu0 %v2315
        %v2317 = vand.u32 %v285, 4294901760
        %v2318 = vsub.f32 %v285, %v2317
        %v2319 = vand.u32 %v2318, 4294901760
        %v2320 = vsub.f32 %v2318, %v2319
        %v2321 = vand.u32 %v2320, 4294901760
        %2322 = vmatprep.subr.mxu0 %v2321
        %v2323 = vand.u32 %v284, 4294901760
        %v2324 = vsub.f32 %v284, %v2323
        %v2325 = vand.u32 %v2324, 4294901760
        %v2326 = vsub.f32 %v2324, %v2325
        %v2327 = vand.u32 %v2326, 4294901760
        %2328 = vmatpush1.msra.mxu0 %v2327
        %v2329 = vand.u32 %v281, 4294901760
        %v2330 = vsub.f32 %v281, %v2329
        %v2331 = vand.u32 %v2330, 4294901760
        %v2332 = vsub.f32 %v2330, %v2331
        %v2333 = vand.u32 %v2332, 4294901760
        %2334 = vmatprep.subr.mxu0 %v2333
        %v2335 = vand.u32 %v280, 4294901760
        %v2336 = vsub.f32 %v280, %v2335
        %v2337 = vand.u32 %v2336, 4294901760
        %v2338 = vsub.f32 %v2336, %v2337
        %v2339 = vand.u32 %v2338, 4294901760
        %2340 = vmatpush1.msra.mxu0 %v2339
        %v2341 = vand.u32 %v277, 4294901760
        %v2342 = vsub.f32 %v277, %v2341
        %v2343 = vand.u32 %v2342, 4294901760
        %v2344 = vsub.f32 %v2342, %v2343
        %v2345 = vand.u32 %v2344, 4294901760
        %2346 = vmatprep.subr.mxu0 %v2345
        %v2347 = vand.u32 %v276, 4294901760
        %v2348 = vsub.f32 %v276, %v2347
        %v2349 = vand.u32 %v2348, 4294901760
        %v2350 = vsub.f32 %v2348, %v2349
        %v2351 = vand.u32 %v2350, 4294901760
        %2352 = vmatpush1.msra.mxu0 %v2351
        %2353 = vmatprep.subr.mxu0 0.0
        %2354 = vmatpush2.msra.mxu0 0.0
        %2355 = vmatprep.subr.mxu0 0.0
        %2356 = vmatpush2.msra.mxu0 0.0
        %2357 = vmatprep.subr.mxu0 0.0
        %2358 = vmatpush2.msra.mxu0 0.0
        %2359 = vmatprep.subr.mxu0 0.0
        %2360 = vmatpush2.msra.mxu0 0.0
        %2361 = vmatprep.subr.mxu0 0.0
        %2362 = vmatpush2.msra.mxu0 0.0
        %2363 = vmatprep.subr.mxu0 0.0
        %2364 = vmatpush2.msra.mxu0 0.0
        %2365 = vmatprep.subr.mxu0 0.0
        %2366 = vmatpush2.msra.mxu0 0.0
        %2367 = vmatprep.subr.mxu0 0.0
        %2368 = vmatpush2.msra.mxu0 0.0
        %2369 = vmatprep.subr.mxu0 0.0
        %2370 = vmatpush2.msra.mxu0 0.0
        %2371 = vmatprep.subr.mxu0 0.0
        %2372 = vmatpush2.msra.mxu0 0.0
        %2373 = vmatprep.subr.mxu0 0.0
        %2374 = vmatpush2.msra.mxu0 0.0
        %2375 = vmatprep.subr.mxu0 0.0
        %2376 = vmatpush2.msra.mxu0 0.0
        %2377 = vmatprep.subr.mxu0 0.0
        %2378 = vmatpush2.msra.mxu0 0.0
        %2379 = vmatprep.subr.mxu0 0.0
        %2380 = vmatpush2.msra.mxu0 0.0
        %2381 = vmatprep.subr.mxu0 0.0
        %2382 = vmatpush2.msra.mxu0 0.0
        %2383 = vmatprep.subr.mxu0 0.0
        %2384 = vmatpush2.msra.mxu0 0.0
        %2385 = vmatprep.mubr.f32.mxu0 0.0
        %v2386 = vand.u32 %v2052, 4294901760
        %2387 = vmatmul.mubr.f32.gmra.mxu0 %v2386
        %v2388 = vpop.f32.mrf.mxu0
        %v2389 = vadd.f32 %v2157, %v2388
        %v2390 = vpop.f32.mrf.mxu0
        %v2391 = vadd.f32 %v2159, %v2390
        %2392 = vdwg.mxu0
        %v2393 = vand.u32 %v337, 4294901760
        %v2394 = vsub.f32 %v337, %v2393
        %2395 = vmatprep.subr.mxu0 %v2394
        %v2396 = vand.u32 %v336, 4294901760
        %v2397 = vsub.f32 %v336, %v2396
        %2398 = vmatpush1.msra.mxu0 %v2397
        %v2399 = vand.u32 %v333, 4294901760
        %v2400 = vsub.f32 %v333, %v2399
        %2401 = vmatprep.subr.mxu0 %v2400
        %v2402 = vand.u32 %v332, 4294901760
        %v2403 = vsub.f32 %v332, %v2402
        %2404 = vmatpush1.msra.mxu0 %v2403
        %v2405 = vand.u32 %v329, 4294901760
        %v2406 = vsub.f32 %v329, %v2405
        %2407 = vmatprep.subr.mxu0 %v2406
        %v2408 = vand.u32 %v328, 4294901760
        %v2409 = vsub.f32 %v328, %v2408
        %2410 = vmatpush1.msra.mxu0 %v2409
        %v2411 = vand.u32 %v325, 4294901760
        %v2412 = vsub.f32 %v325, %v2411
        %2413 = vmatprep.subr.mxu0 %v2412
        %v2414 = vand.u32 %v324, 4294901760
        %v2415 = vsub.f32 %v324, %v2414
        %2416 = vmatpush1.msra.mxu0 %v2415
        %v2417 = vand.u32 %v321, 4294901760
        %v2418 = vsub.f32 %v321, %v2417
        %2419 = vmatprep.subr.mxu0 %v2418
        %v2420 = vand.u32 %v320, 4294901760
        %v2421 = vsub.f32 %v320, %v2420
        %2422 = vmatpush1.msra.mxu0 %v2421
        %v2423 = vand.u32 %v317, 4294901760
        %v2424 = vsub.f32 %v317, %v2423
        %2425 = vmatprep.subr.mxu0 %v2424
        %v2426 = vand.u32 %v316, 4294901760
        %v2427 = vsub.f32 %v316, %v2426
        %2428 = vmatpush1.msra.mxu0 %v2427
        %v2429 = vand.u32 %v313, 4294901760
        %v2430 = vsub.f32 %v313, %v2429
        %2431 = vmatprep.subr.mxu0 %v2430
        %v2432 = vand.u32 %v312, 4294901760
        %v2433 = vsub.f32 %v312, %v2432
        %2434 = vmatpush1.msra.mxu0 %v2433
        %v2435 = vand.u32 %v309, 4294901760
        %v2436 = vsub.f32 %v309, %v2435
        %2437 = vmatprep.subr.mxu0 %v2436
        %v2438 = vand.u32 %v308, 4294901760
        %v2439 = vsub.f32 %v308, %v2438
        %2440 = vmatpush1.msra.mxu0 %v2439
        %v2441 = vand.u32 %v305, 4294901760
        %v2442 = vsub.f32 %v305, %v2441
        %2443 = vmatprep.subr.mxu0 %v2442
        %v2444 = vand.u32 %v304, 4294901760
        %v2445 = vsub.f32 %v304, %v2444
        %2446 = vmatpush1.msra.mxu0 %v2445
        %v2447 = vand.u32 %v301, 4294901760
        %v2448 = vsub.f32 %v301, %v2447
        %2449 = vmatprep.subr.mxu0 %v2448
        %v2450 = vand.u32 %v300, 4294901760
        %v2451 = vsub.f32 %v300, %v2450
        %2452 = vmatpush1.msra.mxu0 %v2451
        %v2453 = vand.u32 %v297, 4294901760
        %v2454 = vsub.f32 %v297, %v2453
        %2455 = vmatprep.subr.mxu0 %v2454
        %v2456 = vand.u32 %v296, 4294901760
        %v2457 = vsub.f32 %v296, %v2456
        %2458 = vmatpush1.msra.mxu0 %v2457
        %v2459 = vand.u32 %v293, 4294901760
        %v2460 = vsub.f32 %v293, %v2459
        %2461 = vmatprep.subr.mxu0 %v2460
        %v2462 = vand.u32 %v292, 4294901760
        %v2463 = vsub.f32 %v292, %v2462
        %2464 = vmatpush1.msra.mxu0 %v2463
        %v2465 = vand.u32 %v289, 4294901760
        %v2466 = vsub.f32 %v289, %v2465
        %2467 = vmatprep.subr.mxu0 %v2466
        %v2468 = vand.u32 %v288, 4294901760
        %v2469 = vsub.f32 %v288, %v2468
        %2470 = vmatpush1.msra.mxu0 %v2469
        %v2471 = vand.u32 %v285, 4294901760
        %v2472 = vsub.f32 %v285, %v2471
        %2473 = vmatprep.subr.mxu0 %v2472
        %v2474 = vand.u32 %v284, 4294901760
        %v2475 = vsub.f32 %v284, %v2474
        %2476 = vmatpush1.msra.mxu0 %v2475
        %v2477 = vand.u32 %v281, 4294901760
        %v2478 = vsub.f32 %v281, %v2477
        %2479 = vmatprep.subr.mxu0 %v2478
        %v2480 = vand.u32 %v280, 4294901760
        %v2481 = vsub.f32 %v280, %v2480
        %2482 = vmatpush1.msra.mxu0 %v2481
        %v2483 = vand.u32 %v277, 4294901760
        %v2484 = vsub.f32 %v277, %v2483
        %2485 = vmatprep.subr.mxu0 %v2484
        %v2486 = vand.u32 %v276, 4294901760
        %v2487 = vsub.f32 %v276, %v2486
        %2488 = vmatpush1.msra.mxu0 %v2487
        %2489 = vmatprep.subr.mxu0 0.0
        %2490 = vmatpush2.msra.mxu0 0.0
        %2491 = vmatprep.subr.mxu0 0.0
        %2492 = vmatpush2.msra.mxu0 0.0
        %2493 = vmatprep.subr.mxu0 0.0
        %2494 = vmatpush2.msra.mxu0 0.0
        %2495 = vmatprep.subr.mxu0 0.0
        %2496 = vmatpush2.msra.mxu0 0.0
        %2497 = vmatprep.subr.mxu0 0.0
        %2498 = vmatpush2.msra.mxu0 0.0
        %2499 = vmatprep.subr.mxu0 0.0
        %2500 = vmatpush2.msra.mxu0 0.0
        %2501 = vmatprep.subr.mxu0 0.0
        %2502 = vmatpush2.msra.mxu0 0.0
        %2503 = vmatprep.subr.mxu0 0.0
        %2504 = vmatpush2.msra.mxu0 0.0
        %2505 = vmatprep.subr.mxu0 0.0
        %2506 = vmatpush2.msra.mxu0 0.0
        %2507 = vmatprep.subr.mxu0 0.0
        %2508 = vmatpush2.msra.mxu0 0.0
        %2509 = vmatprep.subr.mxu0 0.0
        %2510 = vmatpush2.msra.mxu0 0.0
        %2511 = vmatprep.subr.mxu0 0.0
        %2512 = vmatpush2.msra.mxu0 0.0
        %2513 = vmatprep.subr.mxu0 0.0
        %2514 = vmatpush2.msra.mxu0 0.0
        %2515 = vmatprep.subr.mxu0 0.0
        %2516 = vmatpush2.msra.mxu0 0.0
        %2517 = vmatprep.subr.mxu0 0.0
        %2518 = vmatpush2.msra.mxu0 0.0
        %2519 = vmatprep.subr.mxu0 0.0
        %2520 = vmatpush2.msra.mxu0 0.0
        %2521 = vmatprep.mubr.f32.mxu0 0.0
        %v2522 = vand.u32 %v2052, 4294901760
        %v2523 = vsub.f32 %v2052, %v2522
        %2524 = vmatmul.mubr.f32.gmra.mxu0 %v2523
        %v2525 = vpop.f32.mrf.mxu0
        %v2526 = vadd.f32 %v2389, %v2525
        %v2527 = vpop.f32.mrf.mxu0
        %v2528 = vadd.f32 %v2391, %v2527
        %2529 = vdwg.mxu0
        %v2530 = vand.u32 %v337, 4294901760
        %2531 = vmatprep.subr.mxu0 %v2530
        %v2532 = vand.u32 %v336, 4294901760
        %2533 = vmatpush1.msra.mxu0 %v2532
        %v2534 = vand.u32 %v333, 4294901760
        %2535 = vmatprep.subr.mxu0 %v2534
        %v2536 = vand.u32 %v332, 4294901760
        %2537 = vmatpush1.msra.mxu0 %v2536
        %v2538 = vand.u32 %v329, 4294901760
        %2539 = vmatprep.subr.mxu0 %v2538
        %v2540 = vand.u32 %v328, 4294901760
        %2541 = vmatpush1.msra.mxu0 %v2540
        %v2542 = vand.u32 %v325, 4294901760
        %2543 = vmatprep.subr.mxu0 %v2542
        %v2544 = vand.u32 %v324, 4294901760
        %2545 = vmatpush1.msra.mxu0 %v2544
        %v2546 = vand.u32 %v321, 4294901760
        %2547 = vmatprep.subr.mxu0 %v2546
        %v2548 = vand.u32 %v320, 4294901760
        %2549 = vmatpush1.msra.mxu0 %v2548
        %v2550 = vand.u32 %v317, 4294901760
        %2551 = vmatprep.subr.mxu0 %v2550
        %v2552 = vand.u32 %v316, 4294901760
        %2553 = vmatpush1.msra.mxu0 %v2552
        %v2554 = vand.u32 %v313, 4294901760
        %2555 = vmatprep.subr.mxu0 %v2554
        %v2556 = vand.u32 %v312, 4294901760
        %2557 = vmatpush1.msra.mxu0 %v2556
        %v2558 = vand.u32 %v309, 4294901760
        %2559 = vmatprep.subr.mxu0 %v2558
        %v2560 = vand.u32 %v308, 4294901760
        %2561 = vmatpush1.msra.mxu0 %v2560
        %v2562 = vand.u32 %v305, 4294901760
        %2563 = vmatprep.subr.mxu0 %v2562
        %v2564 = vand.u32 %v304, 4294901760
        %2565 = vmatpush1.msra.mxu0 %v2564
        %v2566 = vand.u32 %v301, 4294901760
        %2567 = vmatprep.subr.mxu0 %v2566
        %v2568 = vand.u32 %v300, 4294901760
        %2569 = vmatpush1.msra.mxu0 %v2568
        %v2570 = vand.u32 %v297, 4294901760
        %2571 = vmatprep.subr.mxu0 %v2570
        %v2572 = vand.u32 %v296, 4294901760
        %2573 = vmatpush1.msra.mxu0 %v2572
        %v2574 = vand.u32 %v293, 4294901760
        %2575 = vmatprep.subr.mxu0 %v2574
        %v2576 = vand.u32 %v292, 4294901760
        %2577 = vmatpush1.msra.mxu0 %v2576
        %v2578 = vand.u32 %v289, 4294901760
        %2579 = vmatprep.subr.mxu0 %v2578
        %v2580 = vand.u32 %v288, 4294901760
        %2581 = vmatpush1.msra.mxu0 %v2580
        %v2582 = vand.u32 %v285, 4294901760
        %2583 = vmatprep.subr.mxu0 %v2582
        %v2584 = vand.u32 %v284, 4294901760
        %2585 = vmatpush1.msra.mxu0 %v2584
        %v2586 = vand.u32 %v281, 4294901760
        %2587 = vmatprep.subr.mxu0 %v2586
        %v2588 = vand.u32 %v280, 4294901760
        %2589 = vmatpush1.msra.mxu0 %v2588
        %v2590 = vand.u32 %v277, 4294901760
        %2591 = vmatprep.subr.mxu0 %v2590
        %v2592 = vand.u32 %v276, 4294901760
        %2593 = vmatpush1.msra.mxu0 %v2592
        %2594 = vmatprep.subr.mxu0 0.0
        %2595 = vmatpush2.msra.mxu0 0.0
        %2596 = vmatprep.subr.mxu0 0.0
        %2597 = vmatpush2.msra.mxu0 0.0
        %2598 = vmatprep.subr.mxu0 0.0
        %2599 = vmatpush2.msra.mxu0 0.0
        %2600 = vmatprep.subr.mxu0 0.0
        %2601 = vmatpush2.msra.mxu0 0.0
        %2602 = vmatprep.subr.mxu0 0.0
        %2603 = vmatpush2.msra.mxu0 0.0
        %2604 = vmatprep.subr.mxu0 0.0
        %2605 = vmatpush2.msra.mxu0 0.0
        %2606 = vmatprep.subr.mxu0 0.0
        %2607 = vmatpush2.msra.mxu0 0.0
        %2608 = vmatprep.subr.mxu0 0.0
        %2609 = vmatpush2.msra.mxu0 0.0
        %2610 = vmatprep.subr.mxu0 0.0
        %2611 = vmatpush2.msra.mxu0 0.0
        %2612 = vmatprep.subr.mxu0 0.0
        %2613 = vmatpush2.msra.mxu0 0.0
        %2614 = vmatprep.subr.mxu0 0.0
        %2615 = vmatpush2.msra.mxu0 0.0
        %2616 = vmatprep.subr.mxu0 0.0
        %2617 = vmatpush2.msra.mxu0 0.0
        %2618 = vmatprep.subr.mxu0 0.0
        %2619 = vmatpush2.msra.mxu0 0.0
        %2620 = vmatprep.subr.mxu0 0.0
        %2621 = vmatpush2.msra.mxu0 0.0
        %2622 = vmatprep.subr.mxu0 0.0
        %2623 = vmatpush2.msra.mxu0 0.0
        %2624 = vmatprep.subr.mxu0 0.0
        %2625 = vmatpush2.msra.mxu0 0.0
        %2626 = vmatprep.mubr.f32.mxu0 0.0
        %v2627 = vand.u32 %v2052, 4294901760
        %v2628 = vsub.f32 %v2052, %v2627
        %v2629 = vand.u32 %v2628, 4294901760
        %2630 = vmatmul.mubr.f32.gmra.mxu0 %v2629
        %v2631 = vpop.f32.mrf.mxu0
        %v2632 = vadd.f32 %v2526, %v2631
        %v2633 = vpop.f32.mrf.mxu0
        %v2634 = vadd.f32 %v2528, %v2633
        %2635 = vdwg.mxu0
        %v2636 = vand.u32 %v337, 4294901760
        %v2637 = vsub.f32 %v337, %v2636
        %v2638 = vand.u32 %v2637, 4294901760
        %2639 = vmatprep.subr.mxu0 %v2638
        %v2640 = vand.u32 %v336, 4294901760
        %v2641 = vsub.f32 %v336, %v2640
        %v2642 = vand.u32 %v2641, 4294901760
        %2643 = vmatpush1.msra.mxu0 %v2642
        %v2644 = vand.u32 %v333, 4294901760
        %v2645 = vsub.f32 %v333, %v2644
        %v2646 = vand.u32 %v2645, 4294901760
        %2647 = vmatprep.subr.mxu0 %v2646
        %v2648 = vand.u32 %v332, 4294901760
        %v2649 = vsub.f32 %v332, %v2648
        %v2650 = vand.u32 %v2649, 4294901760
        %2651 = vmatpush1.msra.mxu0 %v2650
        %v2652 = vand.u32 %v329, 4294901760
        %v2653 = vsub.f32 %v329, %v2652
        %v2654 = vand.u32 %v2653, 4294901760
        %2655 = vmatprep.subr.mxu0 %v2654
        %v2656 = vand.u32 %v328, 4294901760
        %v2657 = vsub.f32 %v328, %v2656
        %v2658 = vand.u32 %v2657, 4294901760
        %2659 = vmatpush1.msra.mxu0 %v2658
        %v2660 = vand.u32 %v325, 4294901760
        %v2661 = vsub.f32 %v325, %v2660
        %v2662 = vand.u32 %v2661, 4294901760
        %2663 = vmatprep.subr.mxu0 %v2662
        %v2664 = vand.u32 %v324, 4294901760
        %v2665 = vsub.f32 %v324, %v2664
        %v2666 = vand.u32 %v2665, 4294901760
        %2667 = vmatpush1.msra.mxu0 %v2666
        %v2668 = vand.u32 %v321, 4294901760
        %v2669 = vsub.f32 %v321, %v2668
        %v2670 = vand.u32 %v2669, 4294901760
        %2671 = vmatprep.subr.mxu0 %v2670
        %v2672 = vand.u32 %v320, 4294901760
        %v2673 = vsub.f32 %v320, %v2672
        %v2674 = vand.u32 %v2673, 4294901760
        %2675 = vmatpush1.msra.mxu0 %v2674
        %v2676 = vand.u32 %v317, 4294901760
        %v2677 = vsub.f32 %v317, %v2676
        %v2678 = vand.u32 %v2677, 4294901760
        %2679 = vmatprep.subr.mxu0 %v2678
        %v2680 = vand.u32 %v316, 4294901760
        %v2681 = vsub.f32 %v316, %v2680
        %v2682 = vand.u32 %v2681, 4294901760
        %2683 = vmatpush1.msra.mxu0 %v2682
        %v2684 = vand.u32 %v313, 4294901760
        %v2685 = vsub.f32 %v313, %v2684
        %v2686 = vand.u32 %v2685, 4294901760
        %2687 = vmatprep.subr.mxu0 %v2686
        %v2688 = vand.u32 %v312, 4294901760
        %v2689 = vsub.f32 %v312, %v2688
        %v2690 = vand.u32 %v2689, 4294901760
        %2691 = vmatpush1.msra.mxu0 %v2690
        %v2692 = vand.u32 %v309, 4294901760
        %v2693 = vsub.f32 %v309, %v2692
        %v2694 = vand.u32 %v2693, 4294901760
        %2695 = vmatprep.subr.mxu0 %v2694
        %v2696 = vand.u32 %v308, 4294901760
        %v2697 = vsub.f32 %v308, %v2696
        %v2698 = vand.u32 %v2697, 4294901760
        %2699 = vmatpush1.msra.mxu0 %v2698
        %v2700 = vand.u32 %v305, 4294901760
        %v2701 = vsub.f32 %v305, %v2700
        %v2702 = vand.u32 %v2701, 4294901760
        %2703 = vmatprep.subr.mxu0 %v2702
        %v2704 = vand.u32 %v304, 4294901760
        %v2705 = vsub.f32 %v304, %v2704
        %v2706 = vand.u32 %v2705, 4294901760
        %2707 = vmatpush1.msra.mxu0 %v2706
        %v2708 = vand.u32 %v301, 4294901760
        %v2709 = vsub.f32 %v301, %v2708
        %v2710 = vand.u32 %v2709, 4294901760
        %2711 = vmatprep.subr.mxu0 %v2710
        %v2712 = vand.u32 %v300, 4294901760
        %v2713 = vsub.f32 %v300, %v2712
        %v2714 = vand.u32 %v2713, 4294901760
        %2715 = vmatpush1.msra.mxu0 %v2714
        %v2716 = vand.u32 %v297, 4294901760
        %v2717 = vsub.f32 %v297, %v2716
        %v2718 = vand.u32 %v2717, 4294901760
        %2719 = vmatprep.subr.mxu0 %v2718
        %v2720 = vand.u32 %v296, 4294901760
        %v2721 = vsub.f32 %v296, %v2720
        %v2722 = vand.u32 %v2721, 4294901760
        %2723 = vmatpush1.msra.mxu0 %v2722
        %v2724 = vand.u32 %v293, 4294901760
        %v2725 = vsub.f32 %v293, %v2724
        %v2726 = vand.u32 %v2725, 4294901760
        %2727 = vmatprep.subr.mxu0 %v2726
        %v2728 = vand.u32 %v292, 4294901760
        %v2729 = vsub.f32 %v292, %v2728
        %v2730 = vand.u32 %v2729, 4294901760
        %2731 = vmatpush1.msra.mxu0 %v2730
        %v2732 = vand.u32 %v289, 4294901760
        %v2733 = vsub.f32 %v289, %v2732
        %v2734 = vand.u32 %v2733, 4294901760
        %2735 = vmatprep.subr.mxu0 %v2734
        %v2736 = vand.u32 %v288, 4294901760
        %v2737 = vsub.f32 %v288, %v2736
        %v2738 = vand.u32 %v2737, 4294901760
        %2739 = vmatpush1.msra.mxu0 %v2738
        %v2740 = vand.u32 %v285, 4294901760
        %v2741 = vsub.f32 %v285, %v2740
        %v2742 = vand.u32 %v2741, 4294901760
        %2743 = vmatprep.subr.mxu0 %v2742
        %v2744 = vand.u32 %v284, 4294901760
        %v2745 = vsub.f32 %v284, %v2744
        %v2746 = vand.u32 %v2745, 4294901760
        %2747 = vmatpush1.msra.mxu0 %v2746
        %v2748 = vand.u32 %v281, 4294901760
        %v2749 = vsub.f32 %v281, %v2748
        %v2750 = vand.u32 %v2749, 4294901760
        %2751 = vmatprep.subr.mxu0 %v2750
        %v2752 = vand.u32 %v280, 4294901760
        %v2753 = vsub.f32 %v280, %v2752
        %v2754 = vand.u32 %v2753, 4294901760
        %2755 = vmatpush1.msra.mxu0 %v2754
        %v2756 = vand.u32 %v277, 4294901760
        %v2757 = vsub.f32 %v277, %v2756
        %v2758 = vand.u32 %v2757, 4294901760
        %2759 = vmatprep.subr.mxu0 %v2758
        %v2760 = vand.u32 %v276, 4294901760
        %v2761 = vsub.f32 %v276, %v2760
        %v2762 = vand.u32 %v2761, 4294901760
        %2763 = vmatpush1.msra.mxu0 %v2762
        %2764 = vmatprep.subr.mxu0 0.0
        %2765 = vmatpush2.msra.mxu0 0.0
        %2766 = vmatprep.subr.mxu0 0.0
        %2767 = vmatpush2.msra.mxu0 0.0
        %2768 = vmatprep.subr.mxu0 0.0
        %2769 = vmatpush2.msra.mxu0 0.0
        %2770 = vmatprep.subr.mxu0 0.0
        %2771 = vmatpush2.msra.mxu0 0.0
        %2772 = vmatprep.subr.mxu0 0.0
        %2773 = vmatpush2.msra.mxu0 0.0
        %2774 = vmatprep.subr.mxu0 0.0
        %2775 = vmatpush2.msra.mxu0 0.0
        %2776 = vmatprep.subr.mxu0 0.0
        %2777 = vmatpush2.msra.mxu0 0.0
        %2778 = vmatprep.subr.mxu0 0.0
        %2779 = vmatpush2.msra.mxu0 0.0
        %2780 = vmatprep.subr.mxu0 0.0
        %2781 = vmatpush2.msra.mxu0 0.0
        %2782 = vmatprep.subr.mxu0 0.0
        %2783 = vmatpush2.msra.mxu0 0.0
        %2784 = vmatprep.subr.mxu0 0.0
        %2785 = vmatpush2.msra.mxu0 0.0
        %2786 = vmatprep.subr.mxu0 0.0
        %2787 = vmatpush2.msra.mxu0 0.0
        %2788 = vmatprep.subr.mxu0 0.0
        %2789 = vmatpush2.msra.mxu0 0.0
        %2790 = vmatprep.subr.mxu0 0.0
        %2791 = vmatpush2.msra.mxu0 0.0
        %2792 = vmatprep.subr.mxu0 0.0
        %2793 = vmatpush2.msra.mxu0 0.0
        %2794 = vmatprep.subr.mxu0 0.0
        %2795 = vmatpush2.msra.mxu0 0.0
        %2796 = vmatprep.mubr.f32.mxu0 0.0
        %v2797 = vand.u32 %v2052, 4294901760
        %2798 = vmatmul.mubr.f32.gmra.mxu0 %v2797
        %v2799 = vpop.f32.mrf.mxu0
        %v2800 = vadd.f32 %v2632, %v2799
        %v2801 = vpop.f32.mrf.mxu0
        %v2802 = vadd.f32 %v2634, %v2801
        %2803 = vdwg.mxu0
        %v2804 = vand.u32 %v337, 4294901760
        %2805 = vmatprep.subr.mxu0 %v2804
        %v2806 = vand.u32 %v336, 4294901760
        %2807 = vmatpush1.msra.mxu0 %v2806
        %v2808 = vand.u32 %v333, 4294901760
        %2809 = vmatprep.subr.mxu0 %v2808
        %v2810 = vand.u32 %v332, 4294901760
        %2811 = vmatpush1.msra.mxu0 %v2810
        %v2812 = vand.u32 %v329, 4294901760
        %2813 = vmatprep.subr.mxu0 %v2812
        %v2814 = vand.u32 %v328, 4294901760
        %2815 = vmatpush1.msra.mxu0 %v2814
        %v2816 = vand.u32 %v325, 4294901760
        %2817 = vmatprep.subr.mxu0 %v2816
        %v2818 = vand.u32 %v324, 4294901760
        %2819 = vmatpush1.msra.mxu0 %v2818
        %v2820 = vand.u32 %v321, 4294901760
        %2821 = vmatprep.subr.mxu0 %v2820
        %v2822 = vand.u32 %v320, 4294901760
        %2823 = vmatpush1.msra.mxu0 %v2822
        %v2824 = vand.u32 %v317, 4294901760
        %2825 = vmatprep.subr.mxu0 %v2824
        %v2826 = vand.u32 %v316, 4294901760
        %2827 = vmatpush1.msra.mxu0 %v2826
        %v2828 = vand.u32 %v313, 4294901760
        %2829 = vmatprep.subr.mxu0 %v2828
        %v2830 = vand.u32 %v312, 4294901760
        %2831 = vmatpush1.msra.mxu0 %v2830
        %v2832 = vand.u32 %v309, 4294901760
        %2833 = vmatprep.subr.mxu0 %v2832
        %v2834 = vand.u32 %v308, 4294901760
        %2835 = vmatpush1.msra.mxu0 %v2834
        %v2836 = vand.u32 %v305, 4294901760
        %2837 = vmatprep.subr.mxu0 %v2836
        %v2838 = vand.u32 %v304, 4294901760
        %2839 = vmatpush1.msra.mxu0 %v2838
        %v2840 = vand.u32 %v301, 4294901760
        %2841 = vmatprep.subr.mxu0 %v2840
        %v2842 = vand.u32 %v300, 4294901760
        %2843 = vmatpush1.msra.mxu0 %v2842
        %v2844 = vand.u32 %v297, 4294901760
        %2845 = vmatprep.subr.mxu0 %v2844
        %v2846 = vand.u32 %v296, 4294901760
        %2847 = vmatpush1.msra.mxu0 %v2846
        %v2848 = vand.u32 %v293, 4294901760
        %2849 = vmatprep.subr.mxu0 %v2848
        %v2850 = vand.u32 %v292, 4294901760
        %2851 = vmatpush1.msra.mxu0 %v2850
        %v2852 = vand.u32 %v289, 4294901760
        %2853 = vmatprep.subr.mxu0 %v2852
        %v2854 = vand.u32 %v288, 4294901760
        %2855 = vmatpush1.msra.mxu0 %v2854
        %v2856 = vand.u32 %v285, 4294901760
        %2857 = vmatprep.subr.mxu0 %v2856
        %v2858 = vand.u32 %v284, 4294901760
        %2859 = vmatpush1.msra.mxu0 %v2858
        %v2860 = vand.u32 %v281, 4294901760
        %2861 = vmatprep.subr.mxu0 %v2860
        %v2862 = vand.u32 %v280, 4294901760
        %2863 = vmatpush1.msra.mxu0 %v2862
        %v2864 = vand.u32 %v277, 4294901760
        %2865 = vmatprep.subr.mxu0 %v2864
        %v2866 = vand.u32 %v276, 4294901760
        %2867 = vmatpush1.msra.mxu0 %v2866
        %2868 = vmatprep.subr.mxu0 0.0
        %2869 = vmatpush2.msra.mxu0 0.0
        %2870 = vmatprep.subr.mxu0 0.0
        %2871 = vmatpush2.msra.mxu0 0.0
        %2872 = vmatprep.subr.mxu0 0.0
        %2873 = vmatpush2.msra.mxu0 0.0
        %2874 = vmatprep.subr.mxu0 0.0
        %2875 = vmatpush2.msra.mxu0 0.0
        %2876 = vmatprep.subr.mxu0 0.0
        %2877 = vmatpush2.msra.mxu0 0.0
        %2878 = vmatprep.subr.mxu0 0.0
        %2879 = vmatpush2.msra.mxu0 0.0
        %2880 = vmatprep.subr.mxu0 0.0
        %2881 = vmatpush2.msra.mxu0 0.0
        %2882 = vmatprep.subr.mxu0 0.0
        %2883 = vmatpush2.msra.mxu0 0.0
        %2884 = vmatprep.subr.mxu0 0.0
        %2885 = vmatpush2.msra.mxu0 0.0
        %2886 = vmatprep.subr.mxu0 0.0
        %2887 = vmatpush2.msra.mxu0 0.0
        %2888 = vmatprep.subr.mxu0 0.0
        %2889 = vmatpush2.msra.mxu0 0.0
        %2890 = vmatprep.subr.mxu0 0.0
        %2891 = vmatpush2.msra.mxu0 0.0
        %2892 = vmatprep.subr.mxu0 0.0
        %2893 = vmatpush2.msra.mxu0 0.0
        %2894 = vmatprep.subr.mxu0 0.0
        %2895 = vmatpush2.msra.mxu0 0.0
        %2896 = vmatprep.subr.mxu0 0.0
        %2897 = vmatpush2.msra.mxu0 0.0
        %2898 = vmatprep.subr.mxu0 0.0
        %2899 = vmatpush2.msra.mxu0 0.0
        %2900 = vmatprep.mubr.f32.mxu0 0.0
        %v2901 = vand.u32 %v2052, 4294901760
        %2902 = vmatmul.mubr.f32.gmra.mxu0 %v2901
        %v2903 = vpop.f32.mrf.mxu0
        %v2904 = vadd.f32 %v2800, %v2903
        %v2905 = vpop.f32.mrf.mxu0
        %v2906 = vadd.f32 %v2802, %v2905
        %2907 = vdwg.mxu0
        %v2908 = vand.u32 %v339, 4294901760
        %2909 = vmatprep.subr.mxu0 %v2908
        %v2910 = vand.u32 %v338, 4294901760
        %2911 = vmatpush1.msra.mxu0 %v2910
        %v2912 = vand.u32 %v335, 4294901760
        %2913 = vmatprep.subr.mxu0 %v2912
        %v2914 = vand.u32 %v334, 4294901760
        %2915 = vmatpush1.msra.mxu0 %v2914
        %v2916 = vand.u32 %v331, 4294901760
        %2917 = vmatprep.subr.mxu0 %v2916
        %v2918 = vand.u32 %v330, 4294901760
        %2919 = vmatpush1.msra.mxu0 %v2918
        %v2920 = vand.u32 %v327, 4294901760
        %2921 = vmatprep.subr.mxu0 %v2920
        %v2922 = vand.u32 %v326, 4294901760
        %2923 = vmatpush1.msra.mxu0 %v2922
        %v2924 = vand.u32 %v323, 4294901760
        %2925 = vmatprep.subr.mxu0 %v2924
        %v2926 = vand.u32 %v322, 4294901760
        %2927 = vmatpush1.msra.mxu0 %v2926
        %v2928 = vand.u32 %v319, 4294901760
        %2929 = vmatprep.subr.mxu0 %v2928
        %v2930 = vand.u32 %v318, 4294901760
        %2931 = vmatpush1.msra.mxu0 %v2930
        %v2932 = vand.u32 %v315, 4294901760
        %2933 = vmatprep.subr.mxu0 %v2932
        %v2934 = vand.u32 %v314, 4294901760
        %2935 = vmatpush1.msra.mxu0 %v2934
        %v2936 = vand.u32 %v311, 4294901760
        %2937 = vmatprep.subr.mxu0 %v2936
        %v2938 = vand.u32 %v310, 4294901760
        %2939 = vmatpush1.msra.mxu0 %v2938
        %v2940 = vand.u32 %v307, 4294901760
        %2941 = vmatprep.subr.mxu0 %v2940
        %v2942 = vand.u32 %v306, 4294901760
        %2943 = vmatpush1.msra.mxu0 %v2942
        %v2944 = vand.u32 %v303, 4294901760
        %2945 = vmatprep.subr.mxu0 %v2944
        %v2946 = vand.u32 %v302, 4294901760
        %2947 = vmatpush1.msra.mxu0 %v2946
        %v2948 = vand.u32 %v299, 4294901760
        %2949 = vmatprep.subr.mxu0 %v2948
        %v2950 = vand.u32 %v298, 4294901760
        %2951 = vmatpush1.msra.mxu0 %v2950
        %v2952 = vand.u32 %v295, 4294901760
        %2953 = vmatprep.subr.mxu0 %v2952
        %v2954 = vand.u32 %v294, 4294901760
        %2955 = vmatpush1.msra.mxu0 %v2954
        %v2956 = vand.u32 %v291, 4294901760
        %2957 = vmatprep.subr.mxu0 %v2956
        %v2958 = vand.u32 %v290, 4294901760
        %2959 = vmatpush1.msra.mxu0 %v2958
        %v2960 = vand.u32 %v287, 4294901760
        %2961 = vmatprep.subr.mxu0 %v2960
        %v2962 = vand.u32 %v286, 4294901760
        %2963 = vmatpush1.msra.mxu0 %v2962
        %v2964 = vand.u32 %v283, 4294901760
        %2965 = vmatprep.subr.mxu0 %v2964
        %v2966 = vand.u32 %v282, 4294901760
        %2967 = vmatpush1.msra.mxu0 %v2966
        %v2968 = vand.u32 %v279, 4294901760
        %2969 = vmatprep.subr.mxu0 %v2968
        %v2970 = vand.u32 %v278, 4294901760
        %2971 = vmatpush1.msra.mxu0 %v2970
        %2972 = vmatprep.subr.mxu0 0.0
        %2973 = vmatpush2.msra.mxu0 0.0
        %2974 = vmatprep.subr.mxu0 0.0
        %2975 = vmatpush2.msra.mxu0 0.0
        %2976 = vmatprep.subr.mxu0 0.0
        %2977 = vmatpush2.msra.mxu0 0.0
        %2978 = vmatprep.subr.mxu0 0.0
        %2979 = vmatpush2.msra.mxu0 0.0
        %2980 = vmatprep.subr.mxu0 0.0
        %2981 = vmatpush2.msra.mxu0 0.0
        %2982 = vmatprep.subr.mxu0 0.0
        %2983 = vmatpush2.msra.mxu0 0.0
        %2984 = vmatprep.subr.mxu0 0.0
        %2985 = vmatpush2.msra.mxu0 0.0
        %2986 = vmatprep.subr.mxu0 0.0
        %2987 = vmatpush2.msra.mxu0 0.0
        %2988 = vmatprep.subr.mxu0 0.0
        %2989 = vmatpush2.msra.mxu0 0.0
        %2990 = vmatprep.subr.mxu0 0.0
        %2991 = vmatpush2.msra.mxu0 0.0
        %2992 = vmatprep.subr.mxu0 0.0
        %2993 = vmatpush2.msra.mxu0 0.0
        %2994 = vmatprep.subr.mxu0 0.0
        %2995 = vmatpush2.msra.mxu0 0.0
        %2996 = vmatprep.subr.mxu0 0.0
        %2997 = vmatpush2.msra.mxu0 0.0
        %2998 = vmatprep.subr.mxu0 0.0
        %2999 = vmatpush2.msra.mxu0 0.0
        %3000 = vmatprep.subr.mxu0 0.0
        %3001 = vmatpush2.msra.mxu0 0.0
        %3002 = vmatprep.subr.mxu0 0.0
        %3003 = vmatpush2.msra.mxu0 0.0
        %3004 = vmatprep.mubr.f32.mxu0 0.0
        %v3005 = vand.u32 %v2052, 4294901760
        %v3006 = vsub.f32 %v2052, %v3005
        %v3007 = vand.u32 %v3006, 4294901760
        %v3008 = vsub.f32 %v3006, %v3007
        %v3009 = vand.u32 %v3008, 4294901760
        %3010 = vmatmul.mubr.f32.gmra.mxu0 %v3009
        %v3011 = vpop.f32.mrf.mxu0
        %v3012 = vadd.f32 0.0, %v3011
        %v3013 = vpop.f32.mrf.mxu0
        %v3014 = vadd.f32 0.0, %v3013
        %3015 = vdwg.mxu0
        %v3016 = vand.u32 %v339, 4294901760
        %v3017 = vsub.f32 %v339, %v3016
        %v3018 = vand.u32 %v3017, 4294901760
        %v3019 = vsub.f32 %v3017, %v3018
        %v3020 = vand.u32 %v3019, 4294901760
        %3021 = vmatprep.subr.mxu0 %v3020
        %v3022 = vand.u32 %v338, 4294901760
        %v3023 = vsub.f32 %v338, %v3022
        %v3024 = vand.u32 %v3023, 4294901760
        %v3025 = vsub.f32 %v3023, %v3024
        %v3026 = vand.u32 %v3025, 4294901760
        %3027 = vmatpush1.msra.mxu0 %v3026
        %v3028 = vand.u32 %v335, 4294901760
        %v3029 = vsub.f32 %v335, %v3028
        %v3030 = vand.u32 %v3029, 4294901760
        %v3031 = vsub.f32 %v3029, %v3030
        %v3032 = vand.u32 %v3031, 4294901760
        %3033 = vmatprep.subr.mxu0 %v3032
        %v3034 = vand.u32 %v334, 4294901760
        %v3035 = vsub.f32 %v334, %v3034
        %v3036 = vand.u32 %v3035, 4294901760
        %v3037 = vsub.f32 %v3035, %v3036
        %v3038 = vand.u32 %v3037, 4294901760
        %3039 = vmatpush1.msra.mxu0 %v3038
        %v3040 = vand.u32 %v331, 4294901760
        %v3041 = vsub.f32 %v331, %v3040
        %v3042 = vand.u32 %v3041, 4294901760
        %v3043 = vsub.f32 %v3041, %v3042
        %v3044 = vand.u32 %v3043, 4294901760
        %3045 = vmatprep.subr.mxu0 %v3044
        %v3046 = vand.u32 %v330, 4294901760
        %v3047 = vsub.f32 %v330, %v3046
        %v3048 = vand.u32 %v3047, 4294901760
        %v3049 = vsub.f32 %v3047, %v3048
        %v3050 = vand.u32 %v3049, 4294901760
        %3051 = vmatpush1.msra.mxu0 %v3050
        %v3052 = vand.u32 %v327, 4294901760
        %v3053 = vsub.f32 %v327, %v3052
        %v3054 = vand.u32 %v3053, 4294901760
        %v3055 = vsub.f32 %v3053, %v3054
        %v3056 = vand.u32 %v3055, 4294901760
        %3057 = vmatprep.subr.mxu0 %v3056
        %v3058 = vand.u32 %v326, 4294901760
        %v3059 = vsub.f32 %v326, %v3058
        %v3060 = vand.u32 %v3059, 4294901760
        %v3061 = vsub.f32 %v3059, %v3060
        %v3062 = vand.u32 %v3061, 4294901760
        %3063 = vmatpush1.msra.mxu0 %v3062
        %v3064 = vand.u32 %v323, 4294901760
        %v3065 = vsub.f32 %v323, %v3064
        %v3066 = vand.u32 %v3065, 4294901760
        %v3067 = vsub.f32 %v3065, %v3066
        %v3068 = vand.u32 %v3067, 4294901760
        %3069 = vmatprep.subr.mxu0 %v3068
        %v3070 = vand.u32 %v322, 4294901760
        %v3071 = vsub.f32 %v322, %v3070
        %v3072 = vand.u32 %v3071, 4294901760
        %v3073 = vsub.f32 %v3071, %v3072
        %v3074 = vand.u32 %v3073, 4294901760
        %3075 = vmatpush1.msra.mxu0 %v3074
        %v3076 = vand.u32 %v319, 4294901760
        %v3077 = vsub.f32 %v319, %v3076
        %v3078 = vand.u32 %v3077, 4294901760
        %v3079 = vsub.f32 %v3077, %v3078
        %v3080 = vand.u32 %v3079, 4294901760
        %3081 = vmatprep.subr.mxu0 %v3080
        %v3082 = vand.u32 %v318, 4294901760
        %v3083 = vsub.f32 %v318, %v3082
        %v3084 = vand.u32 %v3083, 4294901760
        %v3085 = vsub.f32 %v3083, %v3084
        %v3086 = vand.u32 %v3085, 4294901760
        %3087 = vmatpush1.msra.mxu0 %v3086
        %v3088 = vand.u32 %v315, 4294901760
        %v3089 = vsub.f32 %v315, %v3088
        %v3090 = vand.u32 %v3089, 4294901760
        %v3091 = vsub.f32 %v3089, %v3090
        %v3092 = vand.u32 %v3091, 4294901760
        %3093 = vmatprep.subr.mxu0 %v3092
        %v3094 = vand.u32 %v314, 4294901760
        %v3095 = vsub.f32 %v314, %v3094
        %v3096 = vand.u32 %v3095, 4294901760
        %v3097 = vsub.f32 %v3095, %v3096
        %v3098 = vand.u32 %v3097, 4294901760
        %3099 = vmatpush1.msra.mxu0 %v3098
        %v3100 = vand.u32 %v311, 4294901760
        %v3101 = vsub.f32 %v311, %v3100
        %v3102 = vand.u32 %v3101, 4294901760
        %v3103 = vsub.f32 %v3101, %v3102
        %v3104 = vand.u32 %v3103, 4294901760
        %3105 = vmatprep.subr.mxu0 %v3104
        %v3106 = vand.u32 %v310, 4294901760
        %v3107 = vsub.f32 %v310, %v3106
        %v3108 = vand.u32 %v3107, 4294901760
        %v3109 = vsub.f32 %v3107, %v3108
        %v3110 = vand.u32 %v3109, 4294901760
        %3111 = vmatpush1.msra.mxu0 %v3110
        %v3112 = vand.u32 %v307, 4294901760
        %v3113 = vsub.f32 %v307, %v3112
        %v3114 = vand.u32 %v3113, 4294901760
        %v3115 = vsub.f32 %v3113, %v3114
        %v3116 = vand.u32 %v3115, 4294901760
        %3117 = vmatprep.subr.mxu0 %v3116
        %v3118 = vand.u32 %v306, 4294901760
        %v3119 = vsub.f32 %v306, %v3118
        %v3120 = vand.u32 %v3119, 4294901760
        %v3121 = vsub.f32 %v3119, %v3120
        %v3122 = vand.u32 %v3121, 4294901760
        %3123 = vmatpush1.msra.mxu0 %v3122
        %v3124 = vand.u32 %v303, 4294901760
        %v3125 = vsub.f32 %v303, %v3124
        %v3126 = vand.u32 %v3125, 4294901760
        %v3127 = vsub.f32 %v3125, %v3126
        %v3128 = vand.u32 %v3127, 4294901760
        %3129 = vmatprep.subr.mxu0 %v3128
        %v3130 = vand.u32 %v302, 4294901760
        %v3131 = vsub.f32 %v302, %v3130
        %v3132 = vand.u32 %v3131, 4294901760
        %v3133 = vsub.f32 %v3131, %v3132
        %v3134 = vand.u32 %v3133, 4294901760
        %3135 = vmatpush1.msra.mxu0 %v3134
        %v3136 = vand.u32 %v299, 4294901760
        %v3137 = vsub.f32 %v299, %v3136
        %v3138 = vand.u32 %v3137, 4294901760
        %v3139 = vsub.f32 %v3137, %v3138
        %v3140 = vand.u32 %v3139, 4294901760
        %3141 = vmatprep.subr.mxu0 %v3140
        %v3142 = vand.u32 %v298, 4294901760
        %v3143 = vsub.f32 %v298, %v3142
        %v3144 = vand.u32 %v3143, 4294901760
        %v3145 = vsub.f32 %v3143, %v3144
        %v3146 = vand.u32 %v3145, 4294901760
        %3147 = vmatpush1.msra.mxu0 %v3146
        %v3148 = vand.u32 %v295, 4294901760
        %v3149 = vsub.f32 %v295, %v3148
        %v3150 = vand.u32 %v3149, 4294901760
        %v3151 = vsub.f32 %v3149, %v3150
        %v3152 = vand.u32 %v3151, 4294901760
        %3153 = vmatprep.subr.mxu0 %v3152
        %v3154 = vand.u32 %v294, 4294901760
        %v3155 = vsub.f32 %v294, %v3154
        %v3156 = vand.u32 %v3155, 4294901760
        %v3157 = vsub.f32 %v3155, %v3156
        %v3158 = vand.u32 %v3157, 4294901760
        %3159 = vmatpush1.msra.mxu0 %v3158
        %v3160 = vand.u32 %v291, 4294901760
        %v3161 = vsub.f32 %v291, %v3160
        %v3162 = vand.u32 %v3161, 4294901760
        %v3163 = vsub.f32 %v3161, %v3162
        %v3164 = vand.u32 %v3163, 4294901760
        %3165 = vmatprep.subr.mxu0 %v3164
        %v3166 = vand.u32 %v290, 4294901760
        %v3167 = vsub.f32 %v290, %v3166
        %v3168 = vand.u32 %v3167, 4294901760
        %v3169 = vsub.f32 %v3167, %v3168
        %v3170 = vand.u32 %v3169, 4294901760
        %3171 = vmatpush1.msra.mxu0 %v3170
        %v3172 = vand.u32 %v287, 4294901760
        %v3173 = vsub.f32 %v287, %v3172
        %v3174 = vand.u32 %v3173, 4294901760
        %v3175 = vsub.f32 %v3173, %v3174
        %v3176 = vand.u32 %v3175, 4294901760
        %3177 = vmatprep.subr.mxu0 %v3176
        %v3178 = vand.u32 %v286, 4294901760
        %v3179 = vsub.f32 %v286, %v3178
        %v3180 = vand.u32 %v3179, 4294901760
        %v3181 = vsub.f32 %v3179, %v3180
        %v3182 = vand.u32 %v3181, 4294901760
        %3183 = vmatpush1.msra.mxu0 %v3182
        %v3184 = vand.u32 %v283, 4294901760
        %v3185 = vsub.f32 %v283, %v3184
        %v3186 = vand.u32 %v3185, 4294901760
        %v3187 = vsub.f32 %v3185, %v3186
        %v3188 = vand.u32 %v3187, 4294901760
        %3189 = vmatprep.subr.mxu0 %v3188
        %v3190 = vand.u32 %v282, 4294901760
        %v3191 = vsub.f32 %v282, %v3190
        %v3192 = vand.u32 %v3191, 4294901760
        %v3193 = vsub.f32 %v3191, %v3192
        %v3194 = vand.u32 %v3193, 4294901760
        %3195 = vmatpush1.msra.mxu0 %v3194
        %v3196 = vand.u32 %v279, 4294901760
        %v3197 = vsub.f32 %v279, %v3196
        %v3198 = vand.u32 %v3197, 4294901760
        %v3199 = vsub.f32 %v3197, %v3198
        %v3200 = vand.u32 %v3199, 4294901760
        %3201 = vmatprep.subr.mxu0 %v3200
        %v3202 = vand.u32 %v278, 4294901760
        %v3203 = vsub.f32 %v278, %v3202
        %v3204 = vand.u32 %v3203, 4294901760
        %v3205 = vsub.f32 %v3203, %v3204
        %v3206 = vand.u32 %v3205, 4294901760
        %3207 = vmatpush1.msra.mxu0 %v3206
        %3208 = vmatprep.subr.mxu0 0.0
        %3209 = vmatpush2.msra.mxu0 0.0
        %3210 = vmatprep.subr.mxu0 0.0
        %3211 = vmatpush2.msra.mxu0 0.0
        %3212 = vmatprep.subr.mxu0 0.0
        %3213 = vmatpush2.msra.mxu0 0.0
        %3214 = vmatprep.subr.mxu0 0.0
        %3215 = vmatpush2.msra.mxu0 0.0
        %3216 = vmatprep.subr.mxu0 0.0
        %3217 = vmatpush2.msra.mxu0 0.0
        %3218 = vmatprep.subr.mxu0 0.0
        %3219 = vmatpush2.msra.mxu0 0.0
        %3220 = vmatprep.subr.mxu0 0.0
        %3221 = vmatpush2.msra.mxu0 0.0
        %3222 = vmatprep.subr.mxu0 0.0
        %3223 = vmatpush2.msra.mxu0 0.0
        %3224 = vmatprep.subr.mxu0 0.0
        %3225 = vmatpush2.msra.mxu0 0.0
        %3226 = vmatprep.subr.mxu0 0.0
        %3227 = vmatpush2.msra.mxu0 0.0
        %3228 = vmatprep.subr.mxu0 0.0
        %3229 = vmatpush2.msra.mxu0 0.0
        %3230 = vmatprep.subr.mxu0 0.0
        %3231 = vmatpush2.msra.mxu0 0.0
        %3232 = vmatprep.subr.mxu0 0.0
        %3233 = vmatpush2.msra.mxu0 0.0
        %3234 = vmatprep.subr.mxu0 0.0
        %3235 = vmatpush2.msra.mxu0 0.0
        %3236 = vmatprep.subr.mxu0 0.0
        %3237 = vmatpush2.msra.mxu0 0.0
        %3238 = vmatprep.subr.mxu0 0.0
        %3239 = vmatpush2.msra.mxu0 0.0
        %3240 = vmatprep.mubr.f32.mxu0 0.0
        %v3241 = vand.u32 %v2052, 4294901760
        %3242 = vmatmul.mubr.f32.gmra.mxu0 %v3241
        %v3243 = vpop.f32.mrf.mxu0
        %v3244 = vadd.f32 %v3012, %v3243
        %v3245 = vpop.f32.mrf.mxu0
        %v3246 = vadd.f32 %v3014, %v3245
        %3247 = vdwg.mxu0
        %v3248 = vand.u32 %v339, 4294901760
        %v3249 = vsub.f32 %v339, %v3248
        %3250 = vmatprep.subr.mxu0 %v3249
        %v3251 = vand.u32 %v338, 4294901760
        %v3252 = vsub.f32 %v338, %v3251
        %3253 = vmatpush1.msra.mxu0 %v3252
        %v3254 = vand.u32 %v335, 4294901760
        %v3255 = vsub.f32 %v335, %v3254
        %3256 = vmatprep.subr.mxu0 %v3255
        %v3257 = vand.u32 %v334, 4294901760
        %v3258 = vsub.f32 %v334, %v3257
        %3259 = vmatpush1.msra.mxu0 %v3258
        %v3260 = vand.u32 %v331, 4294901760
        %v3261 = vsub.f32 %v331, %v3260
        %3262 = vmatprep.subr.mxu0 %v3261
        %v3263 = vand.u32 %v330, 4294901760
        %v3264 = vsub.f32 %v330, %v3263
        %3265 = vmatpush1.msra.mxu0 %v3264
        %v3266 = vand.u32 %v327, 4294901760
        %v3267 = vsub.f32 %v327, %v3266
        %3268 = vmatprep.subr.mxu0 %v3267
        %v3269 = vand.u32 %v326, 4294901760
        %v3270 = vsub.f32 %v326, %v3269
        %3271 = vmatpush1.msra.mxu0 %v3270
        %v3272 = vand.u32 %v323, 4294901760
        %v3273 = vsub.f32 %v323, %v3272
        %3274 = vmatprep.subr.mxu0 %v3273
        %v3275 = vand.u32 %v322, 4294901760
        %v3276 = vsub.f32 %v322, %v3275
        %3277 = vmatpush1.msra.mxu0 %v3276
        %v3278 = vand.u32 %v319, 4294901760
        %v3279 = vsub.f32 %v319, %v3278
        %3280 = vmatprep.subr.mxu0 %v3279
        %v3281 = vand.u32 %v318, 4294901760
        %v3282 = vsub.f32 %v318, %v3281
        %3283 = vmatpush1.msra.mxu0 %v3282
        %v3284 = vand.u32 %v315, 4294901760
        %v3285 = vsub.f32 %v315, %v3284
        %3286 = vmatprep.subr.mxu0 %v3285
        %v3287 = vand.u32 %v314, 4294901760
        %v3288 = vsub.f32 %v314, %v3287
        %3289 = vmatpush1.msra.mxu0 %v3288
        %v3290 = vand.u32 %v311, 4294901760
        %v3291 = vsub.f32 %v311, %v3290
        %3292 = vmatprep.subr.mxu0 %v3291
        %v3293 = vand.u32 %v310, 4294901760
        %v3294 = vsub.f32 %v310, %v3293
        %3295 = vmatpush1.msra.mxu0 %v3294
        %v3296 = vand.u32 %v307, 4294901760
        %v3297 = vsub.f32 %v307, %v3296
        %3298 = vmatprep.subr.mxu0 %v3297
        %v3299 = vand.u32 %v306, 4294901760
        %v3300 = vsub.f32 %v306, %v3299
        %3301 = vmatpush1.msra.mxu0 %v3300
        %v3302 = vand.u32 %v303, 4294901760
        %v3303 = vsub.f32 %v303, %v3302
        %3304 = vmatprep.subr.mxu0 %v3303
        %v3305 = vand.u32 %v302, 4294901760
        %v3306 = vsub.f32 %v302, %v3305
        %3307 = vmatpush1.msra.mxu0 %v3306
        %v3308 = vand.u32 %v299, 4294901760
        %v3309 = vsub.f32 %v299, %v3308
        %3310 = vmatprep.subr.mxu0 %v3309
        %v3311 = vand.u32 %v298, 4294901760
        %v3312 = vsub.f32 %v298, %v3311
        %3313 = vmatpush1.msra.mxu0 %v3312
        %v3314 = vand.u32 %v295, 4294901760
        %v3315 = vsub.f32 %v295, %v3314
        %3316 = vmatprep.subr.mxu0 %v3315
        %v3317 = vand.u32 %v294, 4294901760
        %v3318 = vsub.f32 %v294, %v3317
        %3319 = vmatpush1.msra.mxu0 %v3318
        %v3320 = vand.u32 %v291, 4294901760
        %v3321 = vsub.f32 %v291, %v3320
        %3322 = vmatprep.subr.mxu0 %v3321
        %v3323 = vand.u32 %v290, 4294901760
        %v3324 = vsub.f32 %v290, %v3323
        %3325 = vmatpush1.msra.mxu0 %v3324
        %v3326 = vand.u32 %v287, 4294901760
        %v3327 = vsub.f32 %v287, %v3326
        %3328 = vmatprep.subr.mxu0 %v3327
        %v3329 = vand.u32 %v286, 4294901760
        %v3330 = vsub.f32 %v286, %v3329
        %3331 = vmatpush1.msra.mxu0 %v3330
        %v3332 = vand.u32 %v283, 4294901760
        %v3333 = vsub.f32 %v283, %v3332
        %3334 = vmatprep.subr.mxu0 %v3333
        %v3335 = vand.u32 %v282, 4294901760
        %v3336 = vsub.f32 %v282, %v3335
        %3337 = vmatpush1.msra.mxu0 %v3336
        %v3338 = vand.u32 %v279, 4294901760
        %v3339 = vsub.f32 %v279, %v3338
        %3340 = vmatprep.subr.mxu0 %v3339
        %v3341 = vand.u32 %v278, 4294901760
        %v3342 = vsub.f32 %v278, %v3341
        %3343 = vmatpush1.msra.mxu0 %v3342
        %3344 = vmatprep.subr.mxu0 0.0
        %3345 = vmatpush2.msra.mxu0 0.0
        %3346 = vmatprep.subr.mxu0 0.0
        %3347 = vmatpush2.msra.mxu0 0.0
        %3348 = vmatprep.subr.mxu0 0.0
        %3349 = vmatpush2.msra.mxu0 0.0
        %3350 = vmatprep.subr.mxu0 0.0
        %3351 = vmatpush2.msra.mxu0 0.0
        %3352 = vmatprep.subr.mxu0 0.0
        %3353 = vmatpush2.msra.mxu0 0.0
        %3354 = vmatprep.subr.mxu0 0.0
        %3355 = vmatpush2.msra.mxu0 0.0
        %3356 = vmatprep.subr.mxu0 0.0
        %3357 = vmatpush2.msra.mxu0 0.0
        %3358 = vmatprep.subr.mxu0 0.0
        %3359 = vmatpush2.msra.mxu0 0.0
        %3360 = vmatprep.subr.mxu0 0.0
        %3361 = vmatpush2.msra.mxu0 0.0
        %3362 = vmatprep.subr.mxu0 0.0
        %3363 = vmatpush2.msra.mxu0 0.0
        %3364 = vmatprep.subr.mxu0 0.0
        %3365 = vmatpush2.msra.mxu0 0.0
        %3366 = vmatprep.subr.mxu0 0.0
        %3367 = vmatpush2.msra.mxu0 0.0
        %3368 = vmatprep.subr.mxu0 0.0
        %3369 = vmatpush2.msra.mxu0 0.0
        %3370 = vmatprep.subr.mxu0 0.0
        %3371 = vmatpush2.msra.mxu0 0.0
        %3372 = vmatprep.subr.mxu0 0.0
        %3373 = vmatpush2.msra.mxu0 0.0
        %3374 = vmatprep.subr.mxu0 0.0
        %3375 = vmatpush2.msra.mxu0 0.0
        %3376 = vmatprep.mubr.f32.mxu0 0.0
        %v3377 = vand.u32 %v2052, 4294901760
        %v3378 = vsub.f32 %v2052, %v3377
        %3379 = vmatmul.mubr.f32.gmra.mxu0 %v3378
        %v3380 = vpop.f32.mrf.mxu0
        %v3381 = vadd.f32 %v3244, %v3380
        %v3382 = vpop.f32.mrf.mxu0
        %v3383 = vadd.f32 %v3246, %v3382
        %3384 = vdwg.mxu0
        %v3385 = vand.u32 %v339, 4294901760
        %3386 = vmatprep.subr.mxu0 %v3385
        %v3387 = vand.u32 %v338, 4294901760
        %3388 = vmatpush1.msra.mxu0 %v3387
        %v3389 = vand.u32 %v335, 4294901760
        %3390 = vmatprep.subr.mxu0 %v3389
        %v3391 = vand.u32 %v334, 4294901760
        %3392 = vmatpush1.msra.mxu0 %v3391
        %v3393 = vand.u32 %v331, 4294901760
        %3394 = vmatprep.subr.mxu0 %v3393
        %v3395 = vand.u32 %v330, 4294901760
        %3396 = vmatpush1.msra.mxu0 %v3395
        %v3397 = vand.u32 %v327, 4294901760
        %3398 = vmatprep.subr.mxu0 %v3397
        %v3399 = vand.u32 %v326, 4294901760
        %3400 = vmatpush1.msra.mxu0 %v3399
        %v3401 = vand.u32 %v323, 4294901760
        %3402 = vmatprep.subr.mxu0 %v3401
        %v3403 = vand.u32 %v322, 4294901760
        %3404 = vmatpush1.msra.mxu0 %v3403
        %v3405 = vand.u32 %v319, 4294901760
        %3406 = vmatprep.subr.mxu0 %v3405
        %v3407 = vand.u32 %v318, 4294901760
        %3408 = vmatpush1.msra.mxu0 %v3407
        %v3409 = vand.u32 %v315, 4294901760
        %3410 = vmatprep.subr.mxu0 %v3409
        %v3411 = vand.u32 %v314, 4294901760
        %3412 = vmatpush1.msra.mxu0 %v3411
        %v3413 = vand.u32 %v311, 4294901760
        %3414 = vmatprep.subr.mxu0 %v3413
        %v3415 = vand.u32 %v310, 4294901760
        %3416 = vmatpush1.msra.mxu0 %v3415
        %v3417 = vand.u32 %v307, 4294901760
        %3418 = vmatprep.subr.mxu0 %v3417
        %v3419 = vand.u32 %v306, 4294901760
        %3420 = vmatpush1.msra.mxu0 %v3419
        %v3421 = vand.u32 %v303, 4294901760
        %3422 = vmatprep.subr.mxu0 %v3421
        %v3423 = vand.u32 %v302, 4294901760
        %3424 = vmatpush1.msra.mxu0 %v3423
        %v3425 = vand.u32 %v299, 4294901760
        %3426 = vmatprep.subr.mxu0 %v3425
        %v3427 = vand.u32 %v298, 4294901760
        %3428 = vmatpush1.msra.mxu0 %v3427
        %v3429 = vand.u32 %v295, 4294901760
        %3430 = vmatprep.subr.mxu0 %v3429
        %v3431 = vand.u32 %v294, 4294901760
        %3432 = vmatpush1.msra.mxu0 %v3431
        %v3433 = vand.u32 %v291, 4294901760
        %3434 = vmatprep.subr.mxu0 %v3433
        %v3435 = vand.u32 %v290, 4294901760
        %3436 = vmatpush1.msra.mxu0 %v3435
        %v3437 = vand.u32 %v287, 4294901760
        %3438 = vmatprep.subr.mxu0 %v3437
        %v3439 = vand.u32 %v286, 4294901760
        %3440 = vmatpush1.msra.mxu0 %v3439
        %v3441 = vand.u32 %v283, 4294901760
        %3442 = vmatprep.subr.mxu0 %v3441
        %v3443 = vand.u32 %v282, 4294901760
        %3444 = vmatpush1.msra.mxu0 %v3443
        %v3445 = vand.u32 %v279, 4294901760
        %3446 = vmatprep.subr.mxu0 %v3445
        %v3447 = vand.u32 %v278, 4294901760
        %3448 = vmatpush1.msra.mxu0 %v3447
        %3449 = vmatprep.subr.mxu0 0.0
        %3450 = vmatpush2.msra.mxu0 0.0
        %3451 = vmatprep.subr.mxu0 0.0
        %3452 = vmatpush2.msra.mxu0 0.0
        %3453 = vmatprep.subr.mxu0 0.0
        %3454 = vmatpush2.msra.mxu0 0.0
        %3455 = vmatprep.subr.mxu0 0.0
        %3456 = vmatpush2.msra.mxu0 0.0
        %3457 = vmatprep.subr.mxu0 0.0
        %3458 = vmatpush2.msra.mxu0 0.0
        %3459 = vmatprep.subr.mxu0 0.0
        %3460 = vmatpush2.msra.mxu0 0.0
        %3461 = vmatprep.subr.mxu0 0.0
        %3462 = vmatpush2.msra.mxu0 0.0
        %3463 = vmatprep.subr.mxu0 0.0
        %3464 = vmatpush2.msra.mxu0 0.0
        %3465 = vmatprep.subr.mxu0 0.0
        %3466 = vmatpush2.msra.mxu0 0.0
        %3467 = vmatprep.subr.mxu0 0.0
        %3468 = vmatpush2.msra.mxu0 0.0
        %3469 = vmatprep.subr.mxu0 0.0
        %3470 = vmatpush2.msra.mxu0 0.0
        %3471 = vmatprep.subr.mxu0 0.0
        %3472 = vmatpush2.msra.mxu0 0.0
        %3473 = vmatprep.subr.mxu0 0.0
        %3474 = vmatpush2.msra.mxu0 0.0
        %3475 = vmatprep.subr.mxu0 0.0
        %3476 = vmatpush2.msra.mxu0 0.0
        %3477 = vmatprep.subr.mxu0 0.0
        %3478 = vmatpush2.msra.mxu0 0.0
        %3479 = vmatprep.subr.mxu0 0.0
        %3480 = vmatpush2.msra.mxu0 0.0
        %3481 = vmatprep.mubr.f32.mxu0 0.0
        %v3482 = vand.u32 %v2052, 4294901760
        %v3483 = vsub.f32 %v2052, %v3482
        %v3484 = vand.u32 %v3483, 4294901760
        %3485 = vmatmul.mubr.f32.gmra.mxu0 %v3484
        %v3486 = vpop.f32.mrf.mxu0
        %v3487 = vadd.f32 %v3381, %v3486
        %v3488 = vpop.f32.mrf.mxu0
        %v3489 = vadd.f32 %v3383, %v3488
        %3490 = vdwg.mxu0
        %v3491 = vand.u32 %v339, 4294901760
        %v3492 = vsub.f32 %v339, %v3491
        %v3493 = vand.u32 %v3492, 4294901760
        %3494 = vmatprep.subr.mxu0 %v3493
        %v3495 = vand.u32 %v338, 4294901760
        %v3496 = vsub.f32 %v338, %v3495
        %v3497 = vand.u32 %v3496, 4294901760
        %3498 = vmatpush1.msra.mxu0 %v3497
        %v3499 = vand.u32 %v335, 4294901760
        %v3500 = vsub.f32 %v335, %v3499
        %v3501 = vand.u32 %v3500, 4294901760
        %3502 = vmatprep.subr.mxu0 %v3501
        %v3503 = vand.u32 %v334, 4294901760
        %v3504 = vsub.f32 %v334, %v3503
        %v3505 = vand.u32 %v3504, 4294901760
        %3506 = vmatpush1.msra.mxu0 %v3505
        %v3507 = vand.u32 %v331, 4294901760
        %v3508 = vsub.f32 %v331, %v3507
        %v3509 = vand.u32 %v3508, 4294901760
        %3510 = vmatprep.subr.mxu0 %v3509
        %v3511 = vand.u32 %v330, 4294901760
        %v3512 = vsub.f32 %v330, %v3511
        %v3513 = vand.u32 %v3512, 4294901760
        %3514 = vmatpush1.msra.mxu0 %v3513
        %v3515 = vand.u32 %v327, 4294901760
        %v3516 = vsub.f32 %v327, %v3515
        %v3517 = vand.u32 %v3516, 4294901760
        %3518 = vmatprep.subr.mxu0 %v3517
        %v3519 = vand.u32 %v326, 4294901760
        %v3520 = vsub.f32 %v326, %v3519
        %v3521 = vand.u32 %v3520, 4294901760
        %3522 = vmatpush1.msra.mxu0 %v3521
        %v3523 = vand.u32 %v323, 4294901760
        %v3524 = vsub.f32 %v323, %v3523
        %v3525 = vand.u32 %v3524, 4294901760
        %3526 = vmatprep.subr.mxu0 %v3525
        %v3527 = vand.u32 %v322, 4294901760
        %v3528 = vsub.f32 %v322, %v3527
        %v3529 = vand.u32 %v3528, 4294901760
        %3530 = vmatpush1.msra.mxu0 %v3529
        %v3531 = vand.u32 %v319, 4294901760
        %v3532 = vsub.f32 %v319, %v3531
        %v3533 = vand.u32 %v3532, 4294901760
        %3534 = vmatprep.subr.mxu0 %v3533
        %v3535 = vand.u32 %v318, 4294901760
        %v3536 = vsub.f32 %v318, %v3535
        %v3537 = vand.u32 %v3536, 4294901760
        %3538 = vmatpush1.msra.mxu0 %v3537
        %v3539 = vand.u32 %v315, 4294901760
        %v3540 = vsub.f32 %v315, %v3539
        %v3541 = vand.u32 %v3540, 4294901760
        %3542 = vmatprep.subr.mxu0 %v3541
        %v3543 = vand.u32 %v314, 4294901760
        %v3544 = vsub.f32 %v314, %v3543
        %v3545 = vand.u32 %v3544, 4294901760
        %3546 = vmatpush1.msra.mxu0 %v3545
        %v3547 = vand.u32 %v311, 4294901760
        %v3548 = vsub.f32 %v311, %v3547
        %v3549 = vand.u32 %v3548, 4294901760
        %3550 = vmatprep.subr.mxu0 %v3549
        %v3551 = vand.u32 %v310, 4294901760
        %v3552 = vsub.f32 %v310, %v3551
        %v3553 = vand.u32 %v3552, 4294901760
        %3554 = vmatpush1.msra.mxu0 %v3553
        %v3555 = vand.u32 %v307, 4294901760
        %v3556 = vsub.f32 %v307, %v3555
        %v3557 = vand.u32 %v3556, 4294901760
        %3558 = vmatprep.subr.mxu0 %v3557
        %v3559 = vand.u32 %v306, 4294901760
        %v3560 = vsub.f32 %v306, %v3559
        %v3561 = vand.u32 %v3560, 4294901760
        %3562 = vmatpush1.msra.mxu0 %v3561
        %v3563 = vand.u32 %v303, 4294901760
        %v3564 = vsub.f32 %v303, %v3563
        %v3565 = vand.u32 %v3564, 4294901760
        %3566 = vmatprep.subr.mxu0 %v3565
        %v3567 = vand.u32 %v302, 4294901760
        %v3568 = vsub.f32 %v302, %v3567
        %v3569 = vand.u32 %v3568, 4294901760
        %3570 = vmatpush1.msra.mxu0 %v3569
        %v3571 = vand.u32 %v299, 4294901760
        %v3572 = vsub.f32 %v299, %v3571
        %v3573 = vand.u32 %v3572, 4294901760
        %3574 = vmatprep.subr.mxu0 %v3573
        %v3575 = vand.u32 %v298, 4294901760
        %v3576 = vsub.f32 %v298, %v3575
        %v3577 = vand.u32 %v3576, 4294901760
        %3578 = vmatpush1.msra.mxu0 %v3577
        %v3579 = vand.u32 %v295, 4294901760
        %v3580 = vsub.f32 %v295, %v3579
        %v3581 = vand.u32 %v3580, 4294901760
        %3582 = vmatprep.subr.mxu0 %v3581
        %v3583 = vand.u32 %v294, 4294901760
        %v3584 = vsub.f32 %v294, %v3583
        %v3585 = vand.u32 %v3584, 4294901760
        %3586 = vmatpush1.msra.mxu0 %v3585
        %v3587 = vand.u32 %v291, 4294901760
        %v3588 = vsub.f32 %v291, %v3587
        %v3589 = vand.u32 %v3588, 4294901760
        %3590 = vmatprep.subr.mxu0 %v3589
        %v3591 = vand.u32 %v290, 4294901760
        %v3592 = vsub.f32 %v290, %v3591
        %v3593 = vand.u32 %v3592, 4294901760
        %3594 = vmatpush1.msra.mxu0 %v3593
        %v3595 = vand.u32 %v287, 4294901760
        %v3596 = vsub.f32 %v287, %v3595
        %v3597 = vand.u32 %v3596, 4294901760
        %3598 = vmatprep.subr.mxu0 %v3597
        %v3599 = vand.u32 %v286, 4294901760
        %v3600 = vsub.f32 %v286, %v3599
        %v3601 = vand.u32 %v3600, 4294901760
        %3602 = vmatpush1.msra.mxu0 %v3601
        %v3603 = vand.u32 %v283, 4294901760
        %v3604 = vsub.f32 %v283, %v3603
        %v3605 = vand.u32 %v3604, 4294901760
        %3606 = vmatprep.subr.mxu0 %v3605
        %v3607 = vand.u32 %v282, 4294901760
        %v3608 = vsub.f32 %v282, %v3607
        %v3609 = vand.u32 %v3608, 4294901760
        %3610 = vmatpush1.msra.mxu0 %v3609
        %v3611 = vand.u32 %v279, 4294901760
        %v3612 = vsub.f32 %v279, %v3611
        %v3613 = vand.u32 %v3612, 4294901760
        %3614 = vmatprep.subr.mxu0 %v3613
        %v3615 = vand.u32 %v278, 4294901760
        %v3616 = vsub.f32 %v278, %v3615
        %v3617 = vand.u32 %v3616, 4294901760
        %3618 = vmatpush1.msra.mxu0 %v3617
        %3619 = vmatprep.subr.mxu0 0.0
        %3620 = vmatpush2.msra.mxu0 0.0
        %3621 = vmatprep.subr.mxu0 0.0
        %3622 = vmatpush2.msra.mxu0 0.0
        %3623 = vmatprep.subr.mxu0 0.0
        %3624 = vmatpush2.msra.mxu0 0.0
        %3625 = vmatprep.subr.mxu0 0.0
        %3626 = vmatpush2.msra.mxu0 0.0
        %3627 = vmatprep.subr.mxu0 0.0
        %3628 = vmatpush2.msra.mxu0 0.0
        %3629 = vmatprep.subr.mxu0 0.0
        %3630 = vmatpush2.msra.mxu0 0.0
        %3631 = vmatprep.subr.mxu0 0.0
        %3632 = vmatpush2.msra.mxu0 0.0
        %3633 = vmatprep.subr.mxu0 0.0
        %3634 = vmatpush2.msra.mxu0 0.0
        %3635 = vmatprep.subr.mxu0 0.0
        %3636 = vmatpush2.msra.mxu0 0.0
        %3637 = vmatprep.subr.mxu0 0.0
        %3638 = vmatpush2.msra.mxu0 0.0
        %3639 = vmatprep.subr.mxu0 0.0
        %3640 = vmatpush2.msra.mxu0 0.0
        %3641 = vmatprep.subr.mxu0 0.0
        %3642 = vmatpush2.msra.mxu0 0.0
        %3643 = vmatprep.subr.mxu0 0.0
        %3644 = vmatpush2.msra.mxu0 0.0
        %3645 = vmatprep.subr.mxu0 0.0
        %3646 = vmatpush2.msra.mxu0 0.0
        %3647 = vmatprep.subr.mxu0 0.0
        %3648 = vmatpush2.msra.mxu0 0.0
        %3649 = vmatprep.subr.mxu0 0.0
        %3650 = vmatpush2.msra.mxu0 0.0
        %3651 = vmatprep.mubr.f32.mxu0 0.0
        %v3652 = vand.u32 %v2052, 4294901760
        %3653 = vmatmul.mubr.f32.gmra.mxu0 %v3652
        %v3654 = vpop.f32.mrf.mxu0
        %v3655 = vadd.f32 %v3487, %v3654
        %v3656 = vpop.f32.mrf.mxu0
        %v3657 = vadd.f32 %v3489, %v3656
        %3658 = vdwg.mxu0
        %v3659 = vand.u32 %v339, 4294901760
        %3660 = vmatprep.subr.mxu0 %v3659
        %v3661 = vand.u32 %v338, 4294901760
        %3662 = vmatpush1.msra.mxu0 %v3661
        %v3663 = vand.u32 %v335, 4294901760
        %3664 = vmatprep.subr.mxu0 %v3663
        %v3665 = vand.u32 %v334, 4294901760
        %3666 = vmatpush1.msra.mxu0 %v3665
        %v3667 = vand.u32 %v331, 4294901760
        %3668 = vmatprep.subr.mxu0 %v3667
        %v3669 = vand.u32 %v330, 4294901760
        %3670 = vmatpush1.msra.mxu0 %v3669
        %v3671 = vand.u32 %v327, 4294901760
        %3672 = vmatprep.subr.mxu0 %v3671
        %v3673 = vand.u32 %v326, 4294901760
        %3674 = vmatpush1.msra.mxu0 %v3673
        %v3675 = vand.u32 %v323, 4294901760
        %3676 = vmatprep.subr.mxu0 %v3675
        %v3677 = vand.u32 %v322, 4294901760
        %3678 = vmatpush1.msra.mxu0 %v3677
        %v3679 = vand.u32 %v319, 4294901760
        %3680 = vmatprep.subr.mxu0 %v3679
        %v3681 = vand.u32 %v318, 4294901760
        %3682 = vmatpush1.msra.mxu0 %v3681
        %v3683 = vand.u32 %v315, 4294901760
        %3684 = vmatprep.subr.mxu0 %v3683
        %v3685 = vand.u32 %v314, 4294901760
        %3686 = vmatpush1.msra.mxu0 %v3685
        %v3687 = vand.u32 %v311, 4294901760
        %3688 = vmatprep.subr.mxu0 %v3687
        %v3689 = vand.u32 %v310, 4294901760
        %3690 = vmatpush1.msra.mxu0 %v3689
        %v3691 = vand.u32 %v307, 4294901760
        %3692 = vmatprep.subr.mxu0 %v3691
        %v3693 = vand.u32 %v306, 4294901760
        %3694 = vmatpush1.msra.mxu0 %v3693
        %v3695 = vand.u32 %v303, 4294901760
        %3696 = vmatprep.subr.mxu0 %v3695
        %v3697 = vand.u32 %v302, 4294901760
        %3698 = vmatpush1.msra.mxu0 %v3697
        %v3699 = vand.u32 %v299, 4294901760
        %3700 = vmatprep.subr.mxu0 %v3699
        %v3701 = vand.u32 %v298, 4294901760
        %3702 = vmatpush1.msra.mxu0 %v3701
        %v3703 = vand.u32 %v295, 4294901760
        %3704 = vmatprep.subr.mxu0 %v3703
        %v3705 = vand.u32 %v294, 4294901760
        %3706 = vmatpush1.msra.mxu0 %v3705
        %v3707 = vand.u32 %v291, 4294901760
        %3708 = vmatprep.subr.mxu0 %v3707
        %v3709 = vand.u32 %v290, 4294901760
        %3710 = vmatpush1.msra.mxu0 %v3709
        %v3711 = vand.u32 %v287, 4294901760
        %3712 = vmatprep.subr.mxu0 %v3711
        %v3713 = vand.u32 %v286, 4294901760
        %3714 = vmatpush1.msra.mxu0 %v3713
        %v3715 = vand.u32 %v283, 4294901760
        %3716 = vmatprep.subr.mxu0 %v3715
        %v3717 = vand.u32 %v282, 4294901760
        %3718 = vmatpush1.msra.mxu0 %v3717
        %v3719 = vand.u32 %v279, 4294901760
        %3720 = vmatprep.subr.mxu0 %v3719
        %v3721 = vand.u32 %v278, 4294901760
        %3722 = vmatpush1.msra.mxu0 %v3721
        %3723 = vmatprep.subr.mxu0 0.0
        %3724 = vmatpush2.msra.mxu0 0.0
        %3725 = vmatprep.subr.mxu0 0.0
        %3726 = vmatpush2.msra.mxu0 0.0
        %3727 = vmatprep.subr.mxu0 0.0
        %3728 = vmatpush2.msra.mxu0 0.0
        %3729 = vmatprep.subr.mxu0 0.0
        %3730 = vmatpush2.msra.mxu0 0.0
        %3731 = vmatprep.subr.mxu0 0.0
        %3732 = vmatpush2.msra.mxu0 0.0
        %3733 = vmatprep.subr.mxu0 0.0
        %3734 = vmatpush2.msra.mxu0 0.0
        %3735 = vmatprep.subr.mxu0 0.0
        %3736 = vmatpush2.msra.mxu0 0.0
        %3737 = vmatprep.subr.mxu0 0.0
        %3738 = vmatpush2.msra.mxu0 0.0
        %3739 = vmatprep.subr.mxu0 0.0
        %3740 = vmatpush2.msra.mxu0 0.0
        %3741 = vmatprep.subr.mxu0 0.0
        %3742 = vmatpush2.msra.mxu0 0.0
        %3743 = vmatprep.subr.mxu0 0.0
        %3744 = vmatpush2.msra.mxu0 0.0
        %3745 = vmatprep.subr.mxu0 0.0
        %3746 = vmatpush2.msra.mxu0 0.0
        %3747 = vmatprep.subr.mxu0 0.0
        %3748 = vmatpush2.msra.mxu0 0.0
        %3749 = vmatprep.subr.mxu0 0.0
        %3750 = vmatpush2.msra.mxu0 0.0
        %3751 = vmatprep.subr.mxu0 0.0
        %3752 = vmatpush2.msra.mxu0 0.0
        %3753 = vmatprep.subr.mxu0 0.0
        %3754 = vmatpush2.msra.mxu0 0.0
        %3755 = vmatprep.mubr.f32.mxu0 0.0
        %v3756 = vand.u32 %v2052, 4294901760
        %3757 = vmatmul.mubr.f32.gmra.mxu0 %v3756
        %v3758 = vpop.f32.mrf.mxu0
        %v3759 = vadd.f32 %v3655, %v3758
        %v3760 = vpop.f32.mrf.mxu0
        %v3761 = vadd.f32 %v3657, %v3760
        %3762 = vdwg.mxu0
        %s3763 = scalar_lea.vmem %s238, 4 [#allocation2]
        %v3764 = vld [vmem:[%s3763] sm:$0x3]
        %v3765 = vand.u32 %v337, 4294901760
        %3766 = vmatprep.subr.mxu0 %v3765
        %v3767 = vand.u32 %v336, 4294901760
        %3768 = vmatpush1.msra.mxu0 %v3767
        %v3769 = vand.u32 %v333, 4294901760
        %3770 = vmatprep.subr.mxu0 %v3769
        %v3771 = vand.u32 %v332, 4294901760
        %3772 = vmatpush1.msra.mxu0 %v3771
        %v3773 = vand.u32 %v329, 4294901760
        %3774 = vmatprep.subr.mxu0 %v3773
        %v3775 = vand.u32 %v328, 4294901760
        %3776 = vmatpush1.msra.mxu0 %v3775
        %v3777 = vand.u32 %v325, 4294901760
        %3778 = vmatprep.subr.mxu0 %v3777
        %v3779 = vand.u32 %v324, 4294901760
        %3780 = vmatpush1.msra.mxu0 %v3779
        %v3781 = vand.u32 %v321, 4294901760
        %3782 = vmatprep.subr.mxu0 %v3781
        %v3783 = vand.u32 %v320, 4294901760
        %3784 = vmatpush1.msra.mxu0 %v3783
        %v3785 = vand.u32 %v317, 4294901760
        %3786 = vmatprep.subr.mxu0 %v3785
        %v3787 = vand.u32 %v316, 4294901760
        %3788 = vmatpush1.msra.mxu0 %v3787
        %v3789 = vand.u32 %v313, 4294901760
        %3790 = vmatprep.subr.mxu0 %v3789
        %v3791 = vand.u32 %v312, 4294901760
        %3792 = vmatpush1.msra.mxu0 %v3791
        %v3793 = vand.u32 %v309, 4294901760
        %3794 = vmatprep.subr.mxu0 %v3793
        %v3795 = vand.u32 %v308, 4294901760
        %3796 = vmatpush1.msra.mxu0 %v3795
        %v3797 = vand.u32 %v305, 4294901760
        %3798 = vmatprep.subr.mxu0 %v3797
        %v3799 = vand.u32 %v304, 4294901760
        %3800 = vmatpush1.msra.mxu0 %v3799
        %v3801 = vand.u32 %v301, 4294901760
        %3802 = vmatprep.subr.mxu0 %v3801
        %v3803 = vand.u32 %v300, 4294901760
        %3804 = vmatpush1.msra.mxu0 %v3803
        %v3805 = vand.u32 %v297, 4294901760
        %3806 = vmatprep.subr.mxu0 %v3805
        %v3807 = vand.u32 %v296, 4294901760
        %3808 = vmatpush1.msra.mxu0 %v3807
        %v3809 = vand.u32 %v293, 4294901760
        %3810 = vmatprep.subr.mxu0 %v3809
        %v3811 = vand.u32 %v292, 4294901760
        %3812 = vmatpush1.msra.mxu0 %v3811
        %v3813 = vand.u32 %v289, 4294901760
        %3814 = vmatprep.subr.mxu0 %v3813
        %v3815 = vand.u32 %v288, 4294901760
        %3816 = vmatpush1.msra.mxu0 %v3815
        %v3817 = vand.u32 %v285, 4294901760
        %3818 = vmatprep.subr.mxu0 %v3817
        %v3819 = vand.u32 %v284, 4294901760
        %3820 = vmatpush1.msra.mxu0 %v3819
        %v3821 = vand.u32 %v281, 4294901760
        %3822 = vmatprep.subr.mxu0 %v3821
        %v3823 = vand.u32 %v280, 4294901760
        %3824 = vmatpush1.msra.mxu0 %v3823
        %v3825 = vand.u32 %v277, 4294901760
        %3826 = vmatprep.subr.mxu0 %v3825
        %v3827 = vand.u32 %v276, 4294901760
        %3828 = vmatpush1.msra.mxu0 %v3827
        %3829 = vmatprep.subr.mxu0 0.0
        %3830 = vmatpush2.msra.mxu0 0.0
        %3831 = vmatprep.subr.mxu0 0.0
        %3832 = vmatpush2.msra.mxu0 0.0
        %3833 = vmatprep.subr.mxu0 0.0
        %3834 = vmatpush2.msra.mxu0 0.0
        %3835 = vmatprep.subr.mxu0 0.0
        %3836 = vmatpush2.msra.mxu0 0.0
        %3837 = vmatprep.subr.mxu0 0.0
        %3838 = vmatpush2.msra.mxu0 0.0
        %3839 = vmatprep.subr.mxu0 0.0
        %3840 = vmatpush2.msra.mxu0 0.0
        %3841 = vmatprep.subr.mxu0 0.0
        %3842 = vmatpush2.msra.mxu0 0.0
        %3843 = vmatprep.subr.mxu0 0.0
        %3844 = vmatpush2.msra.mxu0 0.0
        %3845 = vmatprep.subr.mxu0 0.0
        %3846 = vmatpush2.msra.mxu0 0.0
        %3847 = vmatprep.subr.mxu0 0.0
        %3848 = vmatpush2.msra.mxu0 0.0
        %3849 = vmatprep.subr.mxu0 0.0
        %3850 = vmatpush2.msra.mxu0 0.0
        %3851 = vmatprep.subr.mxu0 0.0
        %3852 = vmatpush2.msra.mxu0 0.0
        %3853 = vmatprep.subr.mxu0 0.0
        %3854 = vmatpush2.msra.mxu0 0.0
        %3855 = vmatprep.subr.mxu0 0.0
        %3856 = vmatpush2.msra.mxu0 0.0
        %3857 = vmatprep.subr.mxu0 0.0
        %3858 = vmatpush2.msra.mxu0 0.0
        %3859 = vmatprep.subr.mxu0 0.0
        %3860 = vmatpush2.msra.mxu0 0.0
        %3861 = vmatprep.mubr.f32.mxu0 0.0
        %v3862 = vand.u32 %v3764, 4294901760
        %v3863 = vsub.f32 %v3764, %v3862
        %v3864 = vand.u32 %v3863, 4294901760
        %v3865 = vsub.f32 %v3863, %v3864
        %v3866 = vand.u32 %v3865, 4294901760
        %3867 = vmatmul.mubr.f32.gmra.mxu0 %v3866
        %v3868 = vpop.f32.mrf.mxu0
        %v3869 = vadd.f32 0.0, %v3868
        %v3870 = vpop.f32.mrf.mxu0
        %v3871 = vadd.f32 0.0, %v3870
        %3872 = vdwg.mxu0
        %v3873 = vand.u32 %v337, 4294901760
        %v3874 = vsub.f32 %v337, %v3873
        %v3875 = vand.u32 %v3874, 4294901760
        %v3876 = vsub.f32 %v3874, %v3875
        %v3877 = vand.u32 %v3876, 4294901760
        %3878 = vmatprep.subr.mxu0 %v3877
        %v3879 = vand.u32 %v336, 4294901760
        %v3880 = vsub.f32 %v336, %v3879
        %v3881 = vand.u32 %v3880, 4294901760
        %v3882 = vsub.f32 %v3880, %v3881
        %v3883 = vand.u32 %v3882, 4294901760
        %3884 = vmatpush1.msra.mxu0 %v3883
        %v3885 = vand.u32 %v333, 4294901760
        %v3886 = vsub.f32 %v333, %v3885
        %v3887 = vand.u32 %v3886, 4294901760
        %v3888 = vsub.f32 %v3886, %v3887
        %v3889 = vand.u32 %v3888, 4294901760
        %3890 = vmatprep.subr.mxu0 %v3889
        %v3891 = vand.u32 %v332, 4294901760
        %v3892 = vsub.f32 %v332, %v3891
        %v3893 = vand.u32 %v3892, 4294901760
        %v3894 = vsub.f32 %v3892, %v3893
        %v3895 = vand.u32 %v3894, 4294901760
        %3896 = vmatpush1.msra.mxu0 %v3895
        %v3897 = vand.u32 %v329, 4294901760
        %v3898 = vsub.f32 %v329, %v3897
        %v3899 = vand.u32 %v3898, 4294901760
        %v3900 = vsub.f32 %v3898, %v3899
        %v3901 = vand.u32 %v3900, 4294901760
        %3902 = vmatprep.subr.mxu0 %v3901
        %v3903 = vand.u32 %v328, 4294901760
        %v3904 = vsub.f32 %v328, %v3903
        %v3905 = vand.u32 %v3904, 4294901760
        %v3906 = vsub.f32 %v3904, %v3905
        %v3907 = vand.u32 %v3906, 4294901760
        %3908 = vmatpush1.msra.mxu0 %v3907
        %v3909 = vand.u32 %v325, 4294901760
        %v3910 = vsub.f32 %v325, %v3909
        %v3911 = vand.u32 %v3910, 4294901760
        %v3912 = vsub.f32 %v3910, %v3911
        %v3913 = vand.u32 %v3912, 4294901760
        %3914 = vmatprep.subr.mxu0 %v3913
        %v3915 = vand.u32 %v324, 4294901760
        %v3916 = vsub.f32 %v324, %v3915
        %v3917 = vand.u32 %v3916, 4294901760
        %v3918 = vsub.f32 %v3916, %v3917
        %v3919 = vand.u32 %v3918, 4294901760
        %3920 = vmatpush1.msra.mxu0 %v3919
        %v3921 = vand.u32 %v321, 4294901760
        %v3922 = vsub.f32 %v321, %v3921
        %v3923 = vand.u32 %v3922, 4294901760
        %v3924 = vsub.f32 %v3922, %v3923
        %v3925 = vand.u32 %v3924, 4294901760
        %3926 = vmatprep.subr.mxu0 %v3925
        %v3927 = vand.u32 %v320, 4294901760
        %v3928 = vsub.f32 %v320, %v3927
        %v3929 = vand.u32 %v3928, 4294901760
        %v3930 = vsub.f32 %v3928, %v3929
        %v3931 = vand.u32 %v3930, 4294901760
        %3932 = vmatpush1.msra.mxu0 %v3931
        %v3933 = vand.u32 %v317, 4294901760
        %v3934 = vsub.f32 %v317, %v3933
        %v3935 = vand.u32 %v3934, 4294901760
        %v3936 = vsub.f32 %v3934, %v3935
        %v3937 = vand.u32 %v3936, 4294901760
        %3938 = vmatprep.subr.mxu0 %v3937
        %v3939 = vand.u32 %v316, 4294901760
        %v3940 = vsub.f32 %v316, %v3939
        %v3941 = vand.u32 %v3940, 4294901760
        %v3942 = vsub.f32 %v3940, %v3941
        %v3943 = vand.u32 %v3942, 4294901760
        %3944 = vmatpush1.msra.mxu0 %v3943
        %v3945 = vand.u32 %v313, 4294901760
        %v3946 = vsub.f32 %v313, %v3945
        %v3947 = vand.u32 %v3946, 4294901760
        %v3948 = vsub.f32 %v3946, %v3947
        %v3949 = vand.u32 %v3948, 4294901760
        %3950 = vmatprep.subr.mxu0 %v3949
        %v3951 = vand.u32 %v312, 4294901760
        %v3952 = vsub.f32 %v312, %v3951
        %v3953 = vand.u32 %v3952, 4294901760
        %v3954 = vsub.f32 %v3952, %v3953
        %v3955 = vand.u32 %v3954, 4294901760
        %3956 = vmatpush1.msra.mxu0 %v3955
        %v3957 = vand.u32 %v309, 4294901760
        %v3958 = vsub.f32 %v309, %v3957
        %v3959 = vand.u32 %v3958, 4294901760
        %v3960 = vsub.f32 %v3958, %v3959
        %v3961 = vand.u32 %v3960, 4294901760
        %3962 = vmatprep.subr.mxu0 %v3961
        %v3963 = vand.u32 %v308, 4294901760
        %v3964 = vsub.f32 %v308, %v3963
        %v3965 = vand.u32 %v3964, 4294901760
        %v3966 = vsub.f32 %v3964, %v3965
        %v3967 = vand.u32 %v3966, 4294901760
        %3968 = vmatpush1.msra.mxu0 %v3967
        %v3969 = vand.u32 %v305, 4294901760
        %v3970 = vsub.f32 %v305, %v3969
        %v3971 = vand.u32 %v3970, 4294901760
        %v3972 = vsub.f32 %v3970, %v3971
        %v3973 = vand.u32 %v3972, 4294901760
        %3974 = vmatprep.subr.mxu0 %v3973
        %v3975 = vand.u32 %v304, 4294901760
        %v3976 = vsub.f32 %v304, %v3975
        %v3977 = vand.u32 %v3976, 4294901760
        %v3978 = vsub.f32 %v3976, %v3977
        %v3979 = vand.u32 %v3978, 4294901760
        %3980 = vmatpush1.msra.mxu0 %v3979
        %v3981 = vand.u32 %v301, 4294901760
        %v3982 = vsub.f32 %v301, %v3981
        %v3983 = vand.u32 %v3982, 4294901760
        %v3984 = vsub.f32 %v3982, %v3983
        %v3985 = vand.u32 %v3984, 4294901760
        %3986 = vmatprep.subr.mxu0 %v3985
        %v3987 = vand.u32 %v300, 4294901760
        %v3988 = vsub.f32 %v300, %v3987
        %v3989 = vand.u32 %v3988, 4294901760
        %v3990 = vsub.f32 %v3988, %v3989
        %v3991 = vand.u32 %v3990, 4294901760
        %3992 = vmatpush1.msra.mxu0 %v3991
        %v3993 = vand.u32 %v297, 4294901760
        %v3994 = vsub.f32 %v297, %v3993
        %v3995 = vand.u32 %v3994, 4294901760
        %v3996 = vsub.f32 %v3994, %v3995
        %v3997 = vand.u32 %v3996, 4294901760
        %3998 = vmatprep.subr.mxu0 %v3997
        %v3999 = vand.u32 %v296, 4294901760
        %v4000 = vsub.f32 %v296, %v3999
        %v4001 = vand.u32 %v4000, 4294901760
        %v4002 = vsub.f32 %v4000, %v4001
        %v4003 = vand.u32 %v4002, 4294901760
        %4004 = vmatpush1.msra.mxu0 %v4003
        %v4005 = vand.u32 %v293, 4294901760
        %v4006 = vsub.f32 %v293, %v4005
        %v4007 = vand.u32 %v4006, 4294901760
        %v4008 = vsub.f32 %v4006, %v4007
        %v4009 = vand.u32 %v4008, 4294901760
        %4010 = vmatprep.subr.mxu0 %v4009
        %v4011 = vand.u32 %v292, 4294901760
        %v4012 = vsub.f32 %v292, %v4011
        %v4013 = vand.u32 %v4012, 4294901760
        %v4014 = vsub.f32 %v4012, %v4013
        %v4015 = vand.u32 %v4014, 4294901760
        %4016 = vmatpush1.msra.mxu0 %v4015
        %v4017 = vand.u32 %v289, 4294901760
        %v4018 = vsub.f32 %v289, %v4017
        %v4019 = vand.u32 %v4018, 4294901760
        %v4020 = vsub.f32 %v4018, %v4019
        %v4021 = vand.u32 %v4020, 4294901760
        %4022 = vmatprep.subr.mxu0 %v4021
        %v4023 = vand.u32 %v288, 4294901760
        %v4024 = vsub.f32 %v288, %v4023
        %v4025 = vand.u32 %v4024, 4294901760
        %v4026 = vsub.f32 %v4024, %v4025
        %v4027 = vand.u32 %v4026, 4294901760
        %4028 = vmatpush1.msra.mxu0 %v4027
        %v4029 = vand.u32 %v285, 4294901760
        %v4030 = vsub.f32 %v285, %v4029
        %v4031 = vand.u32 %v4030, 4294901760
        %v4032 = vsub.f32 %v4030, %v4031
        %v4033 = vand.u32 %v4032, 4294901760
        %4034 = vmatprep.subr.mxu0 %v4033
        %v4035 = vand.u32 %v284, 4294901760
        %v4036 = vsub.f32 %v284, %v4035
        %v4037 = vand.u32 %v4036, 4294901760
        %v4038 = vsub.f32 %v4036, %v4037
        %v4039 = vand.u32 %v4038, 4294901760
        %4040 = vmatpush1.msra.mxu0 %v4039
        %v4041 = vand.u32 %v281, 4294901760
        %v4042 = vsub.f32 %v281, %v4041
        %v4043 = vand.u32 %v4042, 4294901760
        %v4044 = vsub.f32 %v4042, %v4043
        %v4045 = vand.u32 %v4044, 4294901760
        %4046 = vmatprep.subr.mxu0 %v4045
        %v4047 = vand.u32 %v280, 4294901760
        %v4048 = vsub.f32 %v280, %v4047
        %v4049 = vand.u32 %v4048, 4294901760
        %v4050 = vsub.f32 %v4048, %v4049
        %v4051 = vand.u32 %v4050, 4294901760
        %4052 = vmatpush1.msra.mxu0 %v4051
        %v4053 = vand.u32 %v277, 4294901760
        %v4054 = vsub.f32 %v277, %v4053
        %v4055 = vand.u32 %v4054, 4294901760
        %v4056 = vsub.f32 %v4054, %v4055
        %v4057 = vand.u32 %v4056, 4294901760
        %4058 = vmatprep.subr.mxu0 %v4057
        %v4059 = vand.u32 %v276, 4294901760
        %v4060 = vsub.f32 %v276, %v4059
        %v4061 = vand.u32 %v4060, 4294901760
        %v4062 = vsub.f32 %v4060, %v4061
        %v4063 = vand.u32 %v4062, 4294901760
        %4064 = vmatpush1.msra.mxu0 %v4063
        %4065 = vmatprep.subr.mxu0 0.0
        %4066 = vmatpush2.msra.mxu0 0.0
        %4067 = vmatprep.subr.mxu0 0.0
        %4068 = vmatpush2.msra.mxu0 0.0
        %4069 = vmatprep.subr.mxu0 0.0
        %4070 = vmatpush2.msra.mxu0 0.0
        %4071 = vmatprep.subr.mxu0 0.0
        %4072 = vmatpush2.msra.mxu0 0.0
        %4073 = vmatprep.subr.mxu0 0.0
        %4074 = vmatpush2.msra.mxu0 0.0
        %4075 = vmatprep.subr.mxu0 0.0
        %4076 = vmatpush2.msra.mxu0 0.0
        %4077 = vmatprep.subr.mxu0 0.0
        %4078 = vmatpush2.msra.mxu0 0.0
        %4079 = vmatprep.subr.mxu0 0.0
        %4080 = vmatpush2.msra.mxu0 0.0
        %4081 = vmatprep.subr.mxu0 0.0
        %4082 = vmatpush2.msra.mxu0 0.0
        %4083 = vmatprep.subr.mxu0 0.0
        %4084 = vmatpush2.msra.mxu0 0.0
        %4085 = vmatprep.subr.mxu0 0.0
        %4086 = vmatpush2.msra.mxu0 0.0
        %4087 = vmatprep.subr.mxu0 0.0
        %4088 = vmatpush2.msra.mxu0 0.0
        %4089 = vmatprep.subr.mxu0 0.0
        %4090 = vmatpush2.msra.mxu0 0.0
        %4091 = vmatprep.subr.mxu0 0.0
        %4092 = vmatpush2.msra.mxu0 0.0
        %4093 = vmatprep.subr.mxu0 0.0
        %4094 = vmatpush2.msra.mxu0 0.0
        %4095 = vmatprep.subr.mxu0 0.0
        %4096 = vmatpush2.msra.mxu0 0.0
        %4097 = vmatprep.mubr.f32.mxu0 0.0
        %v4098 = vand.u32 %v3764, 4294901760
        %4099 = vmatmul.mubr.f32.gmra.mxu0 %v4098
        %v4100 = vpop.f32.mrf.mxu0
        %v4101 = vadd.f32 %v3869, %v4100
        %v4102 = vpop.f32.mrf.mxu0
        %v4103 = vadd.f32 %v3871, %v4102
        %4104 = vdwg.mxu0
        %v4105 = vand.u32 %v337, 4294901760
        %v4106 = vsub.f32 %v337, %v4105
        %4107 = vmatprep.subr.mxu0 %v4106
        %v4108 = vand.u32 %v336, 4294901760
        %v4109 = vsub.f32 %v336, %v4108
        %4110 = vmatpush1.msra.mxu0 %v4109
        %v4111 = vand.u32 %v333, 4294901760
        %v4112 = vsub.f32 %v333, %v4111
        %4113 = vmatprep.subr.mxu0 %v4112
        %v4114 = vand.u32 %v332, 4294901760
        %v4115 = vsub.f32 %v332, %v4114
        %4116 = vmatpush1.msra.mxu0 %v4115
        %v4117 = vand.u32 %v329, 4294901760
        %v4118 = vsub.f32 %v329, %v4117
        %4119 = vmatprep.subr.mxu0 %v4118
        %v4120 = vand.u32 %v328, 4294901760
        %v4121 = vsub.f32 %v328, %v4120
        %4122 = vmatpush1.msra.mxu0 %v4121
        %v4123 = vand.u32 %v325, 4294901760
        %v4124 = vsub.f32 %v325, %v4123
        %4125 = vmatprep.subr.mxu0 %v4124
        %v4126 = vand.u32 %v324, 4294901760
        %v4127 = vsub.f32 %v324, %v4126
        %4128 = vmatpush1.msra.mxu0 %v4127
        %v4129 = vand.u32 %v321, 4294901760
        %v4130 = vsub.f32 %v321, %v4129
        %4131 = vmatprep.subr.mxu0 %v4130
        %v4132 = vand.u32 %v320, 4294901760
        %v4133 = vsub.f32 %v320, %v4132
        %4134 = vmatpush1.msra.mxu0 %v4133
        %v4135 = vand.u32 %v317, 4294901760
        %v4136 = vsub.f32 %v317, %v4135
        %4137 = vmatprep.subr.mxu0 %v4136
        %v4138 = vand.u32 %v316, 4294901760
        %v4139 = vsub.f32 %v316, %v4138
        %4140 = vmatpush1.msra.mxu0 %v4139
        %v4141 = vand.u32 %v313, 4294901760
        %v4142 = vsub.f32 %v313, %v4141
        %4143 = vmatprep.subr.mxu0 %v4142
        %v4144 = vand.u32 %v312, 4294901760
        %v4145 = vsub.f32 %v312, %v4144
        %4146 = vmatpush1.msra.mxu0 %v4145
        %v4147 = vand.u32 %v309, 4294901760
        %v4148 = vsub.f32 %v309, %v4147
        %4149 = vmatprep.subr.mxu0 %v4148
        %v4150 = vand.u32 %v308, 4294901760
        %v4151 = vsub.f32 %v308, %v4150
        %4152 = vmatpush1.msra.mxu0 %v4151
        %v4153 = vand.u32 %v305, 4294901760
        %v4154 = vsub.f32 %v305, %v4153
        %4155 = vmatprep.subr.mxu0 %v4154
        %v4156 = vand.u32 %v304, 4294901760
        %v4157 = vsub.f32 %v304, %v4156
        %4158 = vmatpush1.msra.mxu0 %v4157
        %v4159 = vand.u32 %v301, 4294901760
        %v4160 = vsub.f32 %v301, %v4159
        %4161 = vmatprep.subr.mxu0 %v4160
        %v4162 = vand.u32 %v300, 4294901760
        %v4163 = vsub.f32 %v300, %v4162
        %4164 = vmatpush1.msra.mxu0 %v4163
        %v4165 = vand.u32 %v297, 4294901760
        %v4166 = vsub.f32 %v297, %v4165
        %4167 = vmatprep.subr.mxu0 %v4166
        %v4168 = vand.u32 %v296, 4294901760
        %v4169 = vsub.f32 %v296, %v4168
        %4170 = vmatpush1.msra.mxu0 %v4169
        %v4171 = vand.u32 %v293, 4294901760
        %v4172 = vsub.f32 %v293, %v4171
        %4173 = vmatprep.subr.mxu0 %v4172
        %v4174 = vand.u32 %v292, 4294901760
        %v4175 = vsub.f32 %v292, %v4174
        %4176 = vmatpush1.msra.mxu0 %v4175
        %v4177 = vand.u32 %v289, 4294901760
        %v4178 = vsub.f32 %v289, %v4177
        %4179 = vmatprep.subr.mxu0 %v4178
        %v4180 = vand.u32 %v288, 4294901760
        %v4181 = vsub.f32 %v288, %v4180
        %4182 = vmatpush1.msra.mxu0 %v4181
        %v4183 = vand.u32 %v285, 4294901760
        %v4184 = vsub.f32 %v285, %v4183
        %4185 = vmatprep.subr.mxu0 %v4184
        %v4186 = vand.u32 %v284, 4294901760
        %v4187 = vsub.f32 %v284, %v4186
        %4188 = vmatpush1.msra.mxu0 %v4187
        %v4189 = vand.u32 %v281, 4294901760
        %v4190 = vsub.f32 %v281, %v4189
        %4191 = vmatprep.subr.mxu0 %v4190
        %v4192 = vand.u32 %v280, 4294901760
        %v4193 = vsub.f32 %v280, %v4192
        %4194 = vmatpush1.msra.mxu0 %v4193
        %v4195 = vand.u32 %v277, 4294901760
        %v4196 = vsub.f32 %v277, %v4195
        %4197 = vmatprep.subr.mxu0 %v4196
        %v4198 = vand.u32 %v276, 4294901760
        %v4199 = vsub.f32 %v276, %v4198
        %4200 = vmatpush1.msra.mxu0 %v4199
        %4201 = vmatprep.subr.mxu0 0.0
        %4202 = vmatpush2.msra.mxu0 0.0
        %4203 = vmatprep.subr.mxu0 0.0
        %4204 = vmatpush2.msra.mxu0 0.0
        %4205 = vmatprep.subr.mxu0 0.0
        %4206 = vmatpush2.msra.mxu0 0.0
        %4207 = vmatprep.subr.mxu0 0.0
        %4208 = vmatpush2.msra.mxu0 0.0
        %4209 = vmatprep.subr.mxu0 0.0
        %4210 = vmatpush2.msra.mxu0 0.0
        %4211 = vmatprep.subr.mxu0 0.0
        %4212 = vmatpush2.msra.mxu0 0.0
        %4213 = vmatprep.subr.mxu0 0.0
        %4214 = vmatpush2.msra.mxu0 0.0
        %4215 = vmatprep.subr.mxu0 0.0
        %4216 = vmatpush2.msra.mxu0 0.0
        %4217 = vmatprep.subr.mxu0 0.0
        %4218 = vmatpush2.msra.mxu0 0.0
        %4219 = vmatprep.subr.mxu0 0.0
        %4220 = vmatpush2.msra.mxu0 0.0
        %4221 = vmatprep.subr.mxu0 0.0
        %4222 = vmatpush2.msra.mxu0 0.0
        %4223 = vmatprep.subr.mxu0 0.0
        %4224 = vmatpush2.msra.mxu0 0.0
        %4225 = vmatprep.subr.mxu0 0.0
        %4226 = vmatpush2.msra.mxu0 0.0
        %4227 = vmatprep.subr.mxu0 0.0
        %4228 = vmatpush2.msra.mxu0 0.0
        %4229 = vmatprep.subr.mxu0 0.0
        %4230 = vmatpush2.msra.mxu0 0.0
        %4231 = vmatprep.subr.mxu0 0.0
        %4232 = vmatpush2.msra.mxu0 0.0
        %4233 = vmatprep.mubr.f32.mxu0 0.0
        %v4234 = vand.u32 %v3764, 4294901760
        %v4235 = vsub.f32 %v3764, %v4234
        %4236 = vmatmul.mubr.f32.gmra.mxu0 %v4235
        %v4237 = vpop.f32.mrf.mxu0
        %v4238 = vadd.f32 %v4101, %v4237
        %v4239 = vpop.f32.mrf.mxu0
        %v4240 = vadd.f32 %v4103, %v4239
        %4241 = vdwg.mxu0
        %v4242 = vand.u32 %v337, 4294901760
        %4243 = vmatprep.subr.mxu0 %v4242
        %v4244 = vand.u32 %v336, 4294901760
        %4245 = vmatpush1.msra.mxu0 %v4244
        %v4246 = vand.u32 %v333, 4294901760
        %4247 = vmatprep.subr.mxu0 %v4246
        %v4248 = vand.u32 %v332, 4294901760
        %4249 = vmatpush1.msra.mxu0 %v4248
        %v4250 = vand.u32 %v329, 4294901760
        %4251 = vmatprep.subr.mxu0 %v4250
        %v4252 = vand.u32 %v328, 4294901760
        %4253 = vmatpush1.msra.mxu0 %v4252
        %v4254 = vand.u32 %v325, 4294901760
        %4255 = vmatprep.subr.mxu0 %v4254
        %v4256 = vand.u32 %v324, 4294901760
        %4257 = vmatpush1.msra.mxu0 %v4256
        %v4258 = vand.u32 %v321, 4294901760
        %4259 = vmatprep.subr.mxu0 %v4258
        %v4260 = vand.u32 %v320, 4294901760
        %4261 = vmatpush1.msra.mxu0 %v4260
        %v4262 = vand.u32 %v317, 4294901760
        %4263 = vmatprep.subr.mxu0 %v4262
        %v4264 = vand.u32 %v316, 4294901760
        %4265 = vmatpush1.msra.mxu0 %v4264
        %v4266 = vand.u32 %v313, 4294901760
        %4267 = vmatprep.subr.mxu0 %v4266
        %v4268 = vand.u32 %v312, 4294901760
        %4269 = vmatpush1.msra.mxu0 %v4268
        %v4270 = vand.u32 %v309, 4294901760
        %4271 = vmatprep.subr.mxu0 %v4270
        %v4272 = vand.u32 %v308, 4294901760
        %4273 = vmatpush1.msra.mxu0 %v4272
        %v4274 = vand.u32 %v305, 4294901760
        %4275 = vmatprep.subr.mxu0 %v4274
        %v4276 = vand.u32 %v304, 4294901760
        %4277 = vmatpush1.msra.mxu0 %v4276
        %v4278 = vand.u32 %v301, 4294901760
        %4279 = vmatprep.subr.mxu0 %v4278
        %v4280 = vand.u32 %v300, 4294901760
        %4281 = vmatpush1.msra.mxu0 %v4280
        %v4282 = vand.u32 %v297, 4294901760
        %4283 = vmatprep.subr.mxu0 %v4282
        %v4284 = vand.u32 %v296, 4294901760
        %4285 = vmatpush1.msra.mxu0 %v4284
        %v4286 = vand.u32 %v293, 4294901760
        %4287 = vmatprep.subr.mxu0 %v4286
        %v4288 = vand.u32 %v292, 4294901760
        %4289 = vmatpush1.msra.mxu0 %v4288
        %v4290 = vand.u32 %v289, 4294901760
        %4291 = vmatprep.subr.mxu0 %v4290
        %v4292 = vand.u32 %v288, 4294901760
        %4293 = vmatpush1.msra.mxu0 %v4292
        %v4294 = vand.u32 %v285, 4294901760
        %4295 = vmatprep.subr.mxu0 %v4294
        %v4296 = vand.u32 %v284, 4294901760
        %4297 = vmatpush1.msra.mxu0 %v4296
        %v4298 = vand.u32 %v281, 4294901760
        %4299 = vmatprep.subr.mxu0 %v4298
        %v4300 = vand.u32 %v280, 4294901760
        %4301 = vmatpush1.msra.mxu0 %v4300
        %v4302 = vand.u32 %v277, 4294901760
        %4303 = vmatprep.subr.mxu0 %v4302
        %v4304 = vand.u32 %v276, 4294901760
        %4305 = vmatpush1.msra.mxu0 %v4304
        %4306 = vmatprep.subr.mxu0 0.0
        %4307 = vmatpush2.msra.mxu0 0.0
        %4308 = vmatprep.subr.mxu0 0.0
        %4309 = vmatpush2.msra.mxu0 0.0
        %4310 = vmatprep.subr.mxu0 0.0
        %4311 = vmatpush2.msra.mxu0 0.0
        %4312 = vmatprep.subr.mxu0 0.0
        %4313 = vmatpush2.msra.mxu0 0.0
        %4314 = vmatprep.subr.mxu0 0.0
        %4315 = vmatpush2.msra.mxu0 0.0
        %4316 = vmatprep.subr.mxu0 0.0
        %4317 = vmatpush2.msra.mxu0 0.0
        %4318 = vmatprep.subr.mxu0 0.0
        %4319 = vmatpush2.msra.mxu0 0.0
        %4320 = vmatprep.subr.mxu0 0.0
        %4321 = vmatpush2.msra.mxu0 0.0
        %4322 = vmatprep.subr.mxu0 0.0
        %4323 = vmatpush2.msra.mxu0 0.0
        %4324 = vmatprep.subr.mxu0 0.0
        %4325 = vmatpush2.msra.mxu0 0.0
        %4326 = vmatprep.subr.mxu0 0.0
        %4327 = vmatpush2.msra.mxu0 0.0
        %4328 = vmatprep.subr.mxu0 0.0
        %4329 = vmatpush2.msra.mxu0 0.0
        %4330 = vmatprep.subr.mxu0 0.0
        %4331 = vmatpush2.msra.mxu0 0.0
        %4332 = vmatprep.subr.mxu0 0.0
        %4333 = vmatpush2.msra.mxu0 0.0
        %4334 = vmatprep.subr.mxu0 0.0
        %4335 = vmatpush2.msra.mxu0 0.0
        %4336 = vmatprep.subr.mxu0 0.0
        %4337 = vmatpush2.msra.mxu0 0.0
        %4338 = vmatprep.mubr.f32.mxu0 0.0
        %v4339 = vand.u32 %v3764, 4294901760
        %v4340 = vsub.f32 %v3764, %v4339
        %v4341 = vand.u32 %v4340, 4294901760
        %4342 = vmatmul.mubr.f32.gmra.mxu0 %v4341
        %v4343 = vpop.f32.mrf.mxu0
        %v4344 = vadd.f32 %v4238, %v4343
        %v4345 = vpop.f32.mrf.mxu0
        %v4346 = vadd.f32 %v4240, %v4345
        %4347 = vdwg.mxu0
        %v4348 = vand.u32 %v337, 4294901760
        %v4349 = vsub.f32 %v337, %v4348
        %v4350 = vand.u32 %v4349, 4294901760
        %4351 = vmatprep.subr.mxu0 %v4350
        %v4352 = vand.u32 %v336, 4294901760
        %v4353 = vsub.f32 %v336, %v4352
        %v4354 = vand.u32 %v4353, 4294901760
        %4355 = vmatpush1.msra.mxu0 %v4354
        %v4356 = vand.u32 %v333, 4294901760
        %v4357 = vsub.f32 %v333, %v4356
        %v4358 = vand.u32 %v4357, 4294901760
        %4359 = vmatprep.subr.mxu0 %v4358
        %v4360 = vand.u32 %v332, 4294901760
        %v4361 = vsub.f32 %v332, %v4360
        %v4362 = vand.u32 %v4361, 4294901760
        %4363 = vmatpush1.msra.mxu0 %v4362
        %v4364 = vand.u32 %v329, 4294901760
        %v4365 = vsub.f32 %v329, %v4364
        %v4366 = vand.u32 %v4365, 4294901760
        %4367 = vmatprep.subr.mxu0 %v4366
        %v4368 = vand.u32 %v328, 4294901760
        %v4369 = vsub.f32 %v328, %v4368
        %v4370 = vand.u32 %v4369, 4294901760
        %4371 = vmatpush1.msra.mxu0 %v4370
        %v4372 = vand.u32 %v325, 4294901760
        %v4373 = vsub.f32 %v325, %v4372
        %v4374 = vand.u32 %v4373, 4294901760
        %4375 = vmatprep.subr.mxu0 %v4374
        %v4376 = vand.u32 %v324, 4294901760
        %v4377 = vsub.f32 %v324, %v4376
        %v4378 = vand.u32 %v4377, 4294901760
        %4379 = vmatpush1.msra.mxu0 %v4378
        %v4380 = vand.u32 %v321, 4294901760
        %v4381 = vsub.f32 %v321, %v4380
        %v4382 = vand.u32 %v4381, 4294901760
        %4383 = vmatprep.subr.mxu0 %v4382
        %v4384 = vand.u32 %v320, 4294901760
        %v4385 = vsub.f32 %v320, %v4384
        %v4386 = vand.u32 %v4385, 4294901760
        %4387 = vmatpush1.msra.mxu0 %v4386
        %v4388 = vand.u32 %v317, 4294901760
        %v4389 = vsub.f32 %v317, %v4388
        %v4390 = vand.u32 %v4389, 4294901760
        %4391 = vmatprep.subr.mxu0 %v4390
        %v4392 = vand.u32 %v316, 4294901760
        %v4393 = vsub.f32 %v316, %v4392
        %v4394 = vand.u32 %v4393, 4294901760
        %4395 = vmatpush1.msra.mxu0 %v4394
        %v4396 = vand.u32 %v313, 4294901760
        %v4397 = vsub.f32 %v313, %v4396
        %v4398 = vand.u32 %v4397, 4294901760
        %4399 = vmatprep.subr.mxu0 %v4398
        %v4400 = vand.u32 %v312, 4294901760
        %v4401 = vsub.f32 %v312, %v4400
        %v4402 = vand.u32 %v4401, 4294901760
        %4403 = vmatpush1.msra.mxu0 %v4402
        %v4404 = vand.u32 %v309, 4294901760
        %v4405 = vsub.f32 %v309, %v4404
        %v4406 = vand.u32 %v4405, 4294901760
        %4407 = vmatprep.subr.mxu0 %v4406
        %v4408 = vand.u32 %v308, 4294901760
        %v4409 = vsub.f32 %v308, %v4408
        %v4410 = vand.u32 %v4409, 4294901760
        %4411 = vmatpush1.msra.mxu0 %v4410
        %v4412 = vand.u32 %v305, 4294901760
        %v4413 = vsub.f32 %v305, %v4412
        %v4414 = vand.u32 %v4413, 4294901760
        %4415 = vmatprep.subr.mxu0 %v4414
        %v4416 = vand.u32 %v304, 4294901760
        %v4417 = vsub.f32 %v304, %v4416
        %v4418 = vand.u32 %v4417, 4294901760
        %4419 = vmatpush1.msra.mxu0 %v4418
        %v4420 = vand.u32 %v301, 4294901760
        %v4421 = vsub.f32 %v301, %v4420
        %v4422 = vand.u32 %v4421, 4294901760
        %4423 = vmatprep.subr.mxu0 %v4422
        %v4424 = vand.u32 %v300, 4294901760
        %v4425 = vsub.f32 %v300, %v4424
        %v4426 = vand.u32 %v4425, 4294901760
        %4427 = vmatpush1.msra.mxu0 %v4426
        %v4428 = vand.u32 %v297, 4294901760
        %v4429 = vsub.f32 %v297, %v4428
        %v4430 = vand.u32 %v4429, 4294901760
        %4431 = vmatprep.subr.mxu0 %v4430
        %v4432 = vand.u32 %v296, 4294901760
        %v4433 = vsub.f32 %v296, %v4432
        %v4434 = vand.u32 %v4433, 4294901760
        %4435 = vmatpush1.msra.mxu0 %v4434
        %v4436 = vand.u32 %v293, 4294901760
        %v4437 = vsub.f32 %v293, %v4436
        %v4438 = vand.u32 %v4437, 4294901760
        %4439 = vmatprep.subr.mxu0 %v4438
        %v4440 = vand.u32 %v292, 4294901760
        %v4441 = vsub.f32 %v292, %v4440
        %v4442 = vand.u32 %v4441, 4294901760
        %4443 = vmatpush1.msra.mxu0 %v4442
        %v4444 = vand.u32 %v289, 4294901760
        %v4445 = vsub.f32 %v289, %v4444
        %v4446 = vand.u32 %v4445, 4294901760
        %4447 = vmatprep.subr.mxu0 %v4446
        %v4448 = vand.u32 %v288, 4294901760
        %v4449 = vsub.f32 %v288, %v4448
        %v4450 = vand.u32 %v4449, 4294901760
        %4451 = vmatpush1.msra.mxu0 %v4450
        %v4452 = vand.u32 %v285, 4294901760
        %v4453 = vsub.f32 %v285, %v4452
        %v4454 = vand.u32 %v4453, 4294901760
        %4455 = vmatprep.subr.mxu0 %v4454
        %v4456 = vand.u32 %v284, 4294901760
        %v4457 = vsub.f32 %v284, %v4456
        %v4458 = vand.u32 %v4457, 4294901760
        %4459 = vmatpush1.msra.mxu0 %v4458
        %v4460 = vand.u32 %v281, 4294901760
        %v4461 = vsub.f32 %v281, %v4460
        %v4462 = vand.u32 %v4461, 4294901760
        %4463 = vmatprep.subr.mxu0 %v4462
        %v4464 = vand.u32 %v280, 4294901760
        %v4465 = vsub.f32 %v280, %v4464
        %v4466 = vand.u32 %v4465, 4294901760
        %4467 = vmatpush1.msra.mxu0 %v4466
        %v4468 = vand.u32 %v277, 4294901760
        %v4469 = vsub.f32 %v277, %v4468
        %v4470 = vand.u32 %v4469, 4294901760
        %4471 = vmatprep.subr.mxu0 %v4470
        %v4472 = vand.u32 %v276, 4294901760
        %v4473 = vsub.f32 %v276, %v4472
        %v4474 = vand.u32 %v4473, 4294901760
        %4475 = vmatpush1.msra.mxu0 %v4474
        %4476 = vmatprep.subr.mxu0 0.0
        %4477 = vmatpush2.msra.mxu0 0.0
        %4478 = vmatprep.subr.mxu0 0.0
        %4479 = vmatpush2.msra.mxu0 0.0
        %4480 = vmatprep.subr.mxu0 0.0
        %4481 = vmatpush2.msra.mxu0 0.0
        %4482 = vmatprep.subr.mxu0 0.0
        %4483 = vmatpush2.msra.mxu0 0.0
        %4484 = vmatprep.subr.mxu0 0.0
        %4485 = vmatpush2.msra.mxu0 0.0
        %4486 = vmatprep.subr.mxu0 0.0
        %4487 = vmatpush2.msra.mxu0 0.0
        %4488 = vmatprep.subr.mxu0 0.0
        %4489 = vmatpush2.msra.mxu0 0.0
        %4490 = vmatprep.subr.mxu0 0.0
        %4491 = vmatpush2.msra.mxu0 0.0
        %4492 = vmatprep.subr.mxu0 0.0
        %4493 = vmatpush2.msra.mxu0 0.0
        %4494 = vmatprep.subr.mxu0 0.0
        %4495 = vmatpush2.msra.mxu0 0.0
        %4496 = vmatprep.subr.mxu0 0.0
        %4497 = vmatpush2.msra.mxu0 0.0
        %4498 = vmatprep.subr.mxu0 0.0
        %4499 = vmatpush2.msra.mxu0 0.0
        %4500 = vmatprep.subr.mxu0 0.0
        %4501 = vmatpush2.msra.mxu0 0.0
        %4502 = vmatprep.subr.mxu0 0.0
        %4503 = vmatpush2.msra.mxu0 0.0
        %4504 = vmatprep.subr.mxu0 0.0
        %4505 = vmatpush2.msra.mxu0 0.0
        %4506 = vmatprep.subr.mxu0 0.0
        %4507 = vmatpush2.msra.mxu0 0.0
        %4508 = vmatprep.mubr.f32.mxu0 0.0
        %v4509 = vand.u32 %v3764, 4294901760
        %4510 = vmatmul.mubr.f32.gmra.mxu0 %v4509
        %v4511 = vpop.f32.mrf.mxu0
        %v4512 = vadd.f32 %v4344, %v4511
        %v4513 = vpop.f32.mrf.mxu0
        %v4514 = vadd.f32 %v4346, %v4513
        %4515 = vdwg.mxu0
        %v4516 = vand.u32 %v337, 4294901760
        %4517 = vmatprep.subr.mxu0 %v4516
        %v4518 = vand.u32 %v336, 4294901760
        %4519 = vmatpush1.msra.mxu0 %v4518
        %v4520 = vand.u32 %v333, 4294901760
        %4521 = vmatprep.subr.mxu0 %v4520
        %v4522 = vand.u32 %v332, 4294901760
        %4523 = vmatpush1.msra.mxu0 %v4522
        %v4524 = vand.u32 %v329, 4294901760
        %4525 = vmatprep.subr.mxu0 %v4524
        %v4526 = vand.u32 %v328, 4294901760
        %4527 = vmatpush1.msra.mxu0 %v4526
        %v4528 = vand.u32 %v325, 4294901760
        %4529 = vmatprep.subr.mxu0 %v4528
        %v4530 = vand.u32 %v324, 4294901760
        %4531 = vmatpush1.msra.mxu0 %v4530
        %v4532 = vand.u32 %v321, 4294901760
        %4533 = vmatprep.subr.mxu0 %v4532
        %v4534 = vand.u32 %v320, 4294901760
        %4535 = vmatpush1.msra.mxu0 %v4534
        %v4536 = vand.u32 %v317, 4294901760
        %4537 = vmatprep.subr.mxu0 %v4536
        %v4538 = vand.u32 %v316, 4294901760
        %4539 = vmatpush1.msra.mxu0 %v4538
        %v4540 = vand.u32 %v313, 4294901760
        %4541 = vmatprep.subr.mxu0 %v4540
        %v4542 = vand.u32 %v312, 4294901760
        %4543 = vmatpush1.msra.mxu0 %v4542
        %v4544 = vand.u32 %v309, 4294901760
        %4545 = vmatprep.subr.mxu0 %v4544
        %v4546 = vand.u32 %v308, 4294901760
        %4547 = vmatpush1.msra.mxu0 %v4546
        %v4548 = vand.u32 %v305, 4294901760
        %4549 = vmatprep.subr.mxu0 %v4548
        %v4550 = vand.u32 %v304, 4294901760
        %4551 = vmatpush1.msra.mxu0 %v4550
        %v4552 = vand.u32 %v301, 4294901760
        %4553 = vmatprep.subr.mxu0 %v4552
        %v4554 = vand.u32 %v300, 4294901760
        %4555 = vmatpush1.msra.mxu0 %v4554
        %v4556 = vand.u32 %v297, 4294901760
        %4557 = vmatprep.subr.mxu0 %v4556
        %v4558 = vand.u32 %v296, 4294901760
        %4559 = vmatpush1.msra.mxu0 %v4558
        %v4560 = vand.u32 %v293, 4294901760
        %4561 = vmatprep.subr.mxu0 %v4560
        %v4562 = vand.u32 %v292, 4294901760
        %4563 = vmatpush1.msra.mxu0 %v4562
        %v4564 = vand.u32 %v289, 4294901760
        %4565 = vmatprep.subr.mxu0 %v4564
        %v4566 = vand.u32 %v288, 4294901760
        %4567 = vmatpush1.msra.mxu0 %v4566
        %v4568 = vand.u32 %v285, 4294901760
        %4569 = vmatprep.subr.mxu0 %v4568
        %v4570 = vand.u32 %v284, 4294901760
        %4571 = vmatpush1.msra.mxu0 %v4570
        %v4572 = vand.u32 %v281, 4294901760
        %4573 = vmatprep.subr.mxu0 %v4572
        %v4574 = vand.u32 %v280, 4294901760
        %4575 = vmatpush1.msra.mxu0 %v4574
        %v4576 = vand.u32 %v277, 4294901760
        %4577 = vmatprep.subr.mxu0 %v4576
        %v4578 = vand.u32 %v276, 4294901760
        %4579 = vmatpush1.msra.mxu0 %v4578
        %4580 = vmatprep.subr.mxu0 0.0
        %4581 = vmatpush2.msra.mxu0 0.0
        %4582 = vmatprep.subr.mxu0 0.0
        %4583 = vmatpush2.msra.mxu0 0.0
        %4584 = vmatprep.subr.mxu0 0.0
        %4585 = vmatpush2.msra.mxu0 0.0
        %4586 = vmatprep.subr.mxu0 0.0
        %4587 = vmatpush2.msra.mxu0 0.0
        %4588 = vmatprep.subr.mxu0 0.0
        %4589 = vmatpush2.msra.mxu0 0.0
        %4590 = vmatprep.subr.mxu0 0.0
        %4591 = vmatpush2.msra.mxu0 0.0
        %4592 = vmatprep.subr.mxu0 0.0
        %4593 = vmatpush2.msra.mxu0 0.0
        %4594 = vmatprep.subr.mxu0 0.0
        %4595 = vmatpush2.msra.mxu0 0.0
        %4596 = vmatprep.subr.mxu0 0.0
        %4597 = vmatpush2.msra.mxu0 0.0
        %4598 = vmatprep.subr.mxu0 0.0
        %4599 = vmatpush2.msra.mxu0 0.0
        %4600 = vmatprep.subr.mxu0 0.0
        %4601 = vmatpush2.msra.mxu0 0.0
        %4602 = vmatprep.subr.mxu0 0.0
        %4603 = vmatpush2.msra.mxu0 0.0
        %4604 = vmatprep.subr.mxu0 0.0
        %4605 = vmatpush2.msra.mxu0 0.0
        %4606 = vmatprep.subr.mxu0 0.0
        %4607 = vmatpush2.msra.mxu0 0.0
        %4608 = vmatprep.subr.mxu0 0.0
        %4609 = vmatpush2.msra.mxu0 0.0
        %4610 = vmatprep.subr.mxu0 0.0
        %4611 = vmatpush2.msra.mxu0 0.0
        %4612 = vmatprep.mubr.f32.mxu0 0.0
        %v4613 = vand.u32 %v3764, 4294901760
        %4614 = vmatmul.mubr.f32.gmra.mxu0 %v4613
        %v4615 = vpop.f32.mrf.mxu0
        %v4616 = vadd.f32 %v4512, %v4615
        %v4617 = vpop.f32.mrf.mxu0
        %v4618 = vadd.f32 %v4514, %v4617
        %4619 = vdwg.mxu0
        %v4620 = vand.u32 %v339, 4294901760
        %4621 = vmatprep.subr.mxu0 %v4620
        %v4622 = vand.u32 %v338, 4294901760
        %4623 = vmatpush1.msra.mxu0 %v4622
        %v4624 = vand.u32 %v335, 4294901760
        %4625 = vmatprep.subr.mxu0 %v4624
        %v4626 = vand.u32 %v334, 4294901760
        %4627 = vmatpush1.msra.mxu0 %v4626
        %v4628 = vand.u32 %v331, 4294901760
        %4629 = vmatprep.subr.mxu0 %v4628
        %v4630 = vand.u32 %v330, 4294901760
        %4631 = vmatpush1.msra.mxu0 %v4630
        %v4632 = vand.u32 %v327, 4294901760
        %4633 = vmatprep.subr.mxu0 %v4632
        %v4634 = vand.u32 %v326, 4294901760
        %4635 = vmatpush1.msra.mxu0 %v4634
        %v4636 = vand.u32 %v323, 4294901760
        %4637 = vmatprep.subr.mxu0 %v4636
        %v4638 = vand.u32 %v322, 4294901760
        %4639 = vmatpush1.msra.mxu0 %v4638
        %v4640 = vand.u32 %v319, 4294901760
        %4641 = vmatprep.subr.mxu0 %v4640
        %v4642 = vand.u32 %v318, 4294901760
        %4643 = vmatpush1.msra.mxu0 %v4642
        %v4644 = vand.u32 %v315, 4294901760
        %4645 = vmatprep.subr.mxu0 %v4644
        %v4646 = vand.u32 %v314, 4294901760
        %4647 = vmatpush1.msra.mxu0 %v4646
        %v4648 = vand.u32 %v311, 4294901760
        %4649 = vmatprep.subr.mxu0 %v4648
        %v4650 = vand.u32 %v310, 4294901760
        %4651 = vmatpush1.msra.mxu0 %v4650
        %v4652 = vand.u32 %v307, 4294901760
        %4653 = vmatprep.subr.mxu0 %v4652
        %v4654 = vand.u32 %v306, 4294901760
        %4655 = vmatpush1.msra.mxu0 %v4654
        %v4656 = vand.u32 %v303, 4294901760
        %4657 = vmatprep.subr.mxu0 %v4656
        %v4658 = vand.u32 %v302, 4294901760
        %4659 = vmatpush1.msra.mxu0 %v4658
        %v4660 = vand.u32 %v299, 4294901760
        %4661 = vmatprep.subr.mxu0 %v4660
        %v4662 = vand.u32 %v298, 4294901760
        %4663 = vmatpush1.msra.mxu0 %v4662
        %v4664 = vand.u32 %v295, 4294901760
        %4665 = vmatprep.subr.mxu0 %v4664
        %v4666 = vand.u32 %v294, 4294901760
        %4667 = vmatpush1.msra.mxu0 %v4666
        %v4668 = vand.u32 %v291, 4294901760
        %4669 = vmatprep.subr.mxu0 %v4668
        %v4670 = vand.u32 %v290, 4294901760
        %4671 = vmatpush1.msra.mxu0 %v4670
        %v4672 = vand.u32 %v287, 4294901760
        %4673 = vmatprep.subr.mxu0 %v4672
        %v4674 = vand.u32 %v286, 4294901760
        %4675 = vmatpush1.msra.mxu0 %v4674
        %v4676 = vand.u32 %v283, 4294901760
        %4677 = vmatprep.subr.mxu0 %v4676
        %v4678 = vand.u32 %v282, 4294901760
        %4679 = vmatpush1.msra.mxu0 %v4678
        %v4680 = vand.u32 %v279, 4294901760
        %4681 = vmatprep.subr.mxu0 %v4680
        %v4682 = vand.u32 %v278, 4294901760
        %4683 = vmatpush1.msra.mxu0 %v4682
        %4684 = vmatprep.subr.mxu0 0.0
        %4685 = vmatpush2.msra.mxu0 0.0
        %4686 = vmatprep.subr.mxu0 0.0
        %4687 = vmatpush2.msra.mxu0 0.0
        %4688 = vmatprep.subr.mxu0 0.0
        %4689 = vmatpush2.msra.mxu0 0.0
        %4690 = vmatprep.subr.mxu0 0.0
        %4691 = vmatpush2.msra.mxu0 0.0
        %4692 = vmatprep.subr.mxu0 0.0
        %4693 = vmatpush2.msra.mxu0 0.0
        %4694 = vmatprep.subr.mxu0 0.0
        %4695 = vmatpush2.msra.mxu0 0.0
        %4696 = vmatprep.subr.mxu0 0.0
        %4697 = vmatpush2.msra.mxu0 0.0
        %4698 = vmatprep.subr.mxu0 0.0
        %4699 = vmatpush2.msra.mxu0 0.0
        %4700 = vmatprep.subr.mxu0 0.0
        %4701 = vmatpush2.msra.mxu0 0.0
        %4702 = vmatprep.subr.mxu0 0.0
        %4703 = vmatpush2.msra.mxu0 0.0
        %4704 = vmatprep.subr.mxu0 0.0
        %4705 = vmatpush2.msra.mxu0 0.0
        %4706 = vmatprep.subr.mxu0 0.0
        %4707 = vmatpush2.msra.mxu0 0.0
        %4708 = vmatprep.subr.mxu0 0.0
        %4709 = vmatpush2.msra.mxu0 0.0
        %4710 = vmatprep.subr.mxu0 0.0
        %4711 = vmatpush2.msra.mxu0 0.0
        %4712 = vmatprep.subr.mxu0 0.0
        %4713 = vmatpush2.msra.mxu0 0.0
        %4714 = vmatprep.subr.mxu0 0.0
        %4715 = vmatpush2.msra.mxu0 0.0
        %4716 = vmatprep.mubr.f32.mxu0 0.0
        %v4717 = vand.u32 %v3764, 4294901760
        %v4718 = vsub.f32 %v3764, %v4717
        %v4719 = vand.u32 %v4718, 4294901760
        %v4720 = vsub.f32 %v4718, %v4719
        %v4721 = vand.u32 %v4720, 4294901760
        %4722 = vmatmul.mubr.f32.gmra.mxu0 %v4721
        %v4723 = vpop.f32.mrf.mxu0
        %v4724 = vadd.f32 0.0, %v4723
        %v4725 = vpop.f32.mrf.mxu0
        %v4726 = vadd.f32 0.0, %v4725
        %4727 = vdwg.mxu0
        %v4728 = vand.u32 %v339, 4294901760
        %v4729 = vsub.f32 %v339, %v4728
        %v4730 = vand.u32 %v4729, 4294901760
        %v4731 = vsub.f32 %v4729, %v4730
        %v4732 = vand.u32 %v4731, 4294901760
        %4733 = vmatprep.subr.mxu0 %v4732
        %v4734 = vand.u32 %v338, 4294901760
        %v4735 = vsub.f32 %v338, %v4734
        %v4736 = vand.u32 %v4735, 4294901760
        %v4737 = vsub.f32 %v4735, %v4736
        %v4738 = vand.u32 %v4737, 4294901760
        %4739 = vmatpush1.msra.mxu0 %v4738
        %v4740 = vand.u32 %v335, 4294901760
        %v4741 = vsub.f32 %v335, %v4740
        %v4742 = vand.u32 %v4741, 4294901760
        %v4743 = vsub.f32 %v4741, %v4742
        %v4744 = vand.u32 %v4743, 4294901760
        %4745 = vmatprep.subr.mxu0 %v4744
        %v4746 = vand.u32 %v334, 4294901760
        %v4747 = vsub.f32 %v334, %v4746
        %v4748 = vand.u32 %v4747, 4294901760
        %v4749 = vsub.f32 %v4747, %v4748
        %v4750 = vand.u32 %v4749, 4294901760
        %4751 = vmatpush1.msra.mxu0 %v4750
        %v4752 = vand.u32 %v331, 4294901760
        %v4753 = vsub.f32 %v331, %v4752
        %v4754 = vand.u32 %v4753, 4294901760
        %v4755 = vsub.f32 %v4753, %v4754
        %v4756 = vand.u32 %v4755, 4294901760
        %4757 = vmatprep.subr.mxu0 %v4756
        %v4758 = vand.u32 %v330, 4294901760
        %v4759 = vsub.f32 %v330, %v4758
        %v4760 = vand.u32 %v4759, 4294901760
        %v4761 = vsub.f32 %v4759, %v4760
        %v4762 = vand.u32 %v4761, 4294901760
        %4763 = vmatpush1.msra.mxu0 %v4762
        %v4764 = vand.u32 %v327, 4294901760
        %v4765 = vsub.f32 %v327, %v4764
        %v4766 = vand.u32 %v4765, 4294901760
        %v4767 = vsub.f32 %v4765, %v4766
        %v4768 = vand.u32 %v4767, 4294901760
        %4769 = vmatprep.subr.mxu0 %v4768
        %v4770 = vand.u32 %v326, 4294901760
        %v4771 = vsub.f32 %v326, %v4770
        %v4772 = vand.u32 %v4771, 4294901760
        %v4773 = vsub.f32 %v4771, %v4772
        %v4774 = vand.u32 %v4773, 4294901760
        %4775 = vmatpush1.msra.mxu0 %v4774
        %v4776 = vand.u32 %v323, 4294901760
        %v4777 = vsub.f32 %v323, %v4776
        %v4778 = vand.u32 %v4777, 4294901760
        %v4779 = vsub.f32 %v4777, %v4778
        %v4780 = vand.u32 %v4779, 4294901760
        %4781 = vmatprep.subr.mxu0 %v4780
        %v4782 = vand.u32 %v322, 4294901760
        %v4783 = vsub.f32 %v322, %v4782
        %v4784 = vand.u32 %v4783, 4294901760
        %v4785 = vsub.f32 %v4783, %v4784
        %v4786 = vand.u32 %v4785, 4294901760
        %4787 = vmatpush1.msra.mxu0 %v4786
        %v4788 = vand.u32 %v319, 4294901760
        %v4789 = vsub.f32 %v319, %v4788
        %v4790 = vand.u32 %v4789, 4294901760
        %v4791 = vsub.f32 %v4789, %v4790
        %v4792 = vand.u32 %v4791, 4294901760
        %4793 = vmatprep.subr.mxu0 %v4792
        %v4794 = vand.u32 %v318, 4294901760
        %v4795 = vsub.f32 %v318, %v4794
        %v4796 = vand.u32 %v4795, 4294901760
        %v4797 = vsub.f32 %v4795, %v4796
        %v4798 = vand.u32 %v4797, 4294901760
        %4799 = vmatpush1.msra.mxu0 %v4798
        %v4800 = vand.u32 %v315, 4294901760
        %v4801 = vsub.f32 %v315, %v4800
        %v4802 = vand.u32 %v4801, 4294901760
        %v4803 = vsub.f32 %v4801, %v4802
        %v4804 = vand.u32 %v4803, 4294901760
        %4805 = vmatprep.subr.mxu0 %v4804
        %v4806 = vand.u32 %v314, 4294901760
        %v4807 = vsub.f32 %v314, %v4806
        %v4808 = vand.u32 %v4807, 4294901760
        %v4809 = vsub.f32 %v4807, %v4808
        %v4810 = vand.u32 %v4809, 4294901760
        %4811 = vmatpush1.msra.mxu0 %v4810
        %v4812 = vand.u32 %v311, 4294901760
        %v4813 = vsub.f32 %v311, %v4812
        %v4814 = vand.u32 %v4813, 4294901760
        %v4815 = vsub.f32 %v4813, %v4814
        %v4816 = vand.u32 %v4815, 4294901760
        %4817 = vmatprep.subr.mxu0 %v4816
        %v4818 = vand.u32 %v310, 4294901760
        %v4819 = vsub.f32 %v310, %v4818
        %v4820 = vand.u32 %v4819, 4294901760
        %v4821 = vsub.f32 %v4819, %v4820
        %v4822 = vand.u32 %v4821, 4294901760
        %4823 = vmatpush1.msra.mxu0 %v4822
        %v4824 = vand.u32 %v307, 4294901760
        %v4825 = vsub.f32 %v307, %v4824
        %v4826 = vand.u32 %v4825, 4294901760
        %v4827 = vsub.f32 %v4825, %v4826
        %v4828 = vand.u32 %v4827, 4294901760
        %4829 = vmatprep.subr.mxu0 %v4828
        %v4830 = vand.u32 %v306, 4294901760
        %v4831 = vsub.f32 %v306, %v4830
        %v4832 = vand.u32 %v4831, 4294901760
        %v4833 = vsub.f32 %v4831, %v4832
        %v4834 = vand.u32 %v4833, 4294901760
        %4835 = vmatpush1.msra.mxu0 %v4834
        %v4836 = vand.u32 %v303, 4294901760
        %v4837 = vsub.f32 %v303, %v4836
        %v4838 = vand.u32 %v4837, 4294901760
        %v4839 = vsub.f32 %v4837, %v4838
        %v4840 = vand.u32 %v4839, 4294901760
        %4841 = vmatprep.subr.mxu0 %v4840
        %v4842 = vand.u32 %v302, 4294901760
        %v4843 = vsub.f32 %v302, %v4842
        %v4844 = vand.u32 %v4843, 4294901760
        %v4845 = vsub.f32 %v4843, %v4844
        %v4846 = vand.u32 %v4845, 4294901760
        %4847 = vmatpush1.msra.mxu0 %v4846
        %v4848 = vand.u32 %v299, 4294901760
        %v4849 = vsub.f32 %v299, %v4848
        %v4850 = vand.u32 %v4849, 4294901760
        %v4851 = vsub.f32 %v4849, %v4850
        %v4852 = vand.u32 %v4851, 4294901760
        %4853 = vmatprep.subr.mxu0 %v4852
        %v4854 = vand.u32 %v298, 4294901760
        %v4855 = vsub.f32 %v298, %v4854
        %v4856 = vand.u32 %v4855, 4294901760
        %v4857 = vsub.f32 %v4855, %v4856
        %v4858 = vand.u32 %v4857, 4294901760
        %4859 = vmatpush1.msra.mxu0 %v4858
        %v4860 = vand.u32 %v295, 4294901760
        %v4861 = vsub.f32 %v295, %v4860
        %v4862 = vand.u32 %v4861, 4294901760
        %v4863 = vsub.f32 %v4861, %v4862
        %v4864 = vand.u32 %v4863, 4294901760
        %4865 = vmatprep.subr.mxu0 %v4864
        %v4866 = vand.u32 %v294, 4294901760
        %v4867 = vsub.f32 %v294, %v4866
        %v4868 = vand.u32 %v4867, 4294901760
        %v4869 = vsub.f32 %v4867, %v4868
        %v4870 = vand.u32 %v4869, 4294901760
        %4871 = vmatpush1.msra.mxu0 %v4870
        %v4872 = vand.u32 %v291, 4294901760
        %v4873 = vsub.f32 %v291, %v4872
        %v4874 = vand.u32 %v4873, 4294901760
        %v4875 = vsub.f32 %v4873, %v4874
        %v4876 = vand.u32 %v4875, 4294901760
        %4877 = vmatprep.subr.mxu0 %v4876
        %v4878 = vand.u32 %v290, 4294901760
        %v4879 = vsub.f32 %v290, %v4878
        %v4880 = vand.u32 %v4879, 4294901760
        %v4881 = vsub.f32 %v4879, %v4880
        %v4882 = vand.u32 %v4881, 4294901760
        %4883 = vmatpush1.msra.mxu0 %v4882
        %v4884 = vand.u32 %v287, 4294901760
        %v4885 = vsub.f32 %v287, %v4884
        %v4886 = vand.u32 %v4885, 4294901760
        %v4887 = vsub.f32 %v4885, %v4886
        %v4888 = vand.u32 %v4887, 4294901760
        %4889 = vmatprep.subr.mxu0 %v4888
        %v4890 = vand.u32 %v286, 4294901760
        %v4891 = vsub.f32 %v286, %v4890
        %v4892 = vand.u32 %v4891, 4294901760
        %v4893 = vsub.f32 %v4891, %v4892
        %v4894 = vand.u32 %v4893, 4294901760
        %4895 = vmatpush1.msra.mxu0 %v4894
        %v4896 = vand.u32 %v283, 4294901760
        %v4897 = vsub.f32 %v283, %v4896
        %v4898 = vand.u32 %v4897, 4294901760
        %v4899 = vsub.f32 %v4897, %v4898
        %v4900 = vand.u32 %v4899, 4294901760
        %4901 = vmatprep.subr.mxu0 %v4900
        %v4902 = vand.u32 %v282, 4294901760
        %v4903 = vsub.f32 %v282, %v4902
        %v4904 = vand.u32 %v4903, 4294901760
        %v4905 = vsub.f32 %v4903, %v4904
        %v4906 = vand.u32 %v4905, 4294901760
        %4907 = vmatpush1.msra.mxu0 %v4906
        %v4908 = vand.u32 %v279, 4294901760
        %v4909 = vsub.f32 %v279, %v4908
        %v4910 = vand.u32 %v4909, 4294901760
        %v4911 = vsub.f32 %v4909, %v4910
        %v4912 = vand.u32 %v4911, 4294901760
        %4913 = vmatprep.subr.mxu0 %v4912
        %v4914 = vand.u32 %v278, 4294901760
        %v4915 = vsub.f32 %v278, %v4914
        %v4916 = vand.u32 %v4915, 4294901760
        %v4917 = vsub.f32 %v4915, %v4916
        %v4918 = vand.u32 %v4917, 4294901760
        %4919 = vmatpush1.msra.mxu0 %v4918
        %4920 = vmatprep.subr.mxu0 0.0
        %4921 = vmatpush2.msra.mxu0 0.0
        %4922 = vmatprep.subr.mxu0 0.0
        %4923 = vmatpush2.msra.mxu0 0.0
        %4924 = vmatprep.subr.mxu0 0.0
        %4925 = vmatpush2.msra.mxu0 0.0
        %4926 = vmatprep.subr.mxu0 0.0
        %4927 = vmatpush2.msra.mxu0 0.0
        %4928 = vmatprep.subr.mxu0 0.0
        %4929 = vmatpush2.msra.mxu0 0.0
        %4930 = vmatprep.subr.mxu0 0.0
        %4931 = vmatpush2.msra.mxu0 0.0
        %4932 = vmatprep.subr.mxu0 0.0
        %4933 = vmatpush2.msra.mxu0 0.0
        %4934 = vmatprep.subr.mxu0 0.0
        %4935 = vmatpush2.msra.mxu0 0.0
        %4936 = vmatprep.subr.mxu0 0.0
        %4937 = vmatpush2.msra.mxu0 0.0
        %4938 = vmatprep.subr.mxu0 0.0
        %4939 = vmatpush2.msra.mxu0 0.0
        %4940 = vmatprep.subr.mxu0 0.0
        %4941 = vmatpush2.msra.mxu0 0.0
        %4942 = vmatprep.subr.mxu0 0.0
        %4943 = vmatpush2.msra.mxu0 0.0
        %4944 = vmatprep.subr.mxu0 0.0
        %4945 = vmatpush2.msra.mxu0 0.0
        %4946 = vmatprep.subr.mxu0 0.0
        %4947 = vmatpush2.msra.mxu0 0.0
        %4948 = vmatprep.subr.mxu0 0.0
        %4949 = vmatpush2.msra.mxu0 0.0
        %4950 = vmatprep.subr.mxu0 0.0
        %4951 = vmatpush2.msra.mxu0 0.0
        %4952 = vmatprep.mubr.f32.mxu0 0.0
        %v4953 = vand.u32 %v3764, 4294901760
        %4954 = vmatmul.mubr.f32.gmra.mxu0 %v4953
        %v4955 = vpop.f32.mrf.mxu0
        %v4956 = vadd.f32 %v4724, %v4955
        %v4957 = vpop.f32.mrf.mxu0
        %v4958 = vadd.f32 %v4726, %v4957
        %4959 = vdwg.mxu0
        %v4960 = vand.u32 %v339, 4294901760
        %v4961 = vsub.f32 %v339, %v4960
        %4962 = vmatprep.subr.mxu0 %v4961
        %v4963 = vand.u32 %v338, 4294901760
        %v4964 = vsub.f32 %v338, %v4963
        %4965 = vmatpush1.msra.mxu0 %v4964
        %v4966 = vand.u32 %v335, 4294901760
        %v4967 = vsub.f32 %v335, %v4966
        %4968 = vmatprep.subr.mxu0 %v4967
        %v4969 = vand.u32 %v334, 4294901760
        %v4970 = vsub.f32 %v334, %v4969
        %4971 = vmatpush1.msra.mxu0 %v4970
        %v4972 = vand.u32 %v331, 4294901760
        %v4973 = vsub.f32 %v331, %v4972
        %4974 = vmatprep.subr.mxu0 %v4973
        %v4975 = vand.u32 %v330, 4294901760
        %v4976 = vsub.f32 %v330, %v4975
        %4977 = vmatpush1.msra.mxu0 %v4976
        %v4978 = vand.u32 %v327, 4294901760
        %v4979 = vsub.f32 %v327, %v4978
        %4980 = vmatprep.subr.mxu0 %v4979
        %v4981 = vand.u32 %v326, 4294901760
        %v4982 = vsub.f32 %v326, %v4981
        %4983 = vmatpush1.msra.mxu0 %v4982
        %v4984 = vand.u32 %v323, 4294901760
        %v4985 = vsub.f32 %v323, %v4984
        %4986 = vmatprep.subr.mxu0 %v4985
        %v4987 = vand.u32 %v322, 4294901760
        %v4988 = vsub.f32 %v322, %v4987
        %4989 = vmatpush1.msra.mxu0 %v4988
        %v4990 = vand.u32 %v319, 4294901760
        %v4991 = vsub.f32 %v319, %v4990
        %4992 = vmatprep.subr.mxu0 %v4991
        %v4993 = vand.u32 %v318, 4294901760
        %v4994 = vsub.f32 %v318, %v4993
        %4995 = vmatpush1.msra.mxu0 %v4994
        %v4996 = vand.u32 %v315, 4294901760
        %v4997 = vsub.f32 %v315, %v4996
        %4998 = vmatprep.subr.mxu0 %v4997
        %v4999 = vand.u32 %v314, 4294901760
        %v5000 = vsub.f32 %v314, %v4999
        %5001 = vmatpush1.msra.mxu0 %v5000
        %v5002 = vand.u32 %v311, 4294901760
        %v5003 = vsub.f32 %v311, %v5002
        %5004 = vmatprep.subr.mxu0 %v5003
        %v5005 = vand.u32 %v310, 4294901760
        %v5006 = vsub.f32 %v310, %v5005
        %5007 = vmatpush1.msra.mxu0 %v5006
        %v5008 = vand.u32 %v307, 4294901760
        %v5009 = vsub.f32 %v307, %v5008
        %5010 = vmatprep.subr.mxu0 %v5009
        %v5011 = vand.u32 %v306, 4294901760
        %v5012 = vsub.f32 %v306, %v5011
        %5013 = vmatpush1.msra.mxu0 %v5012
        %v5014 = vand.u32 %v303, 4294901760
        %v5015 = vsub.f32 %v303, %v5014
        %5016 = vmatprep.subr.mxu0 %v5015
        %v5017 = vand.u32 %v302, 4294901760
        %v5018 = vsub.f32 %v302, %v5017
        %5019 = vmatpush1.msra.mxu0 %v5018
        %v5020 = vand.u32 %v299, 4294901760
        %v5021 = vsub.f32 %v299, %v5020
        %5022 = vmatprep.subr.mxu0 %v5021
        %v5023 = vand.u32 %v298, 4294901760
        %v5024 = vsub.f32 %v298, %v5023
        %5025 = vmatpush1.msra.mxu0 %v5024
        %v5026 = vand.u32 %v295, 4294901760
        %v5027 = vsub.f32 %v295, %v5026
        %5028 = vmatprep.subr.mxu0 %v5027
        %v5029 = vand.u32 %v294, 4294901760
        %v5030 = vsub.f32 %v294, %v5029
        %5031 = vmatpush1.msra.mxu0 %v5030
        %v5032 = vand.u32 %v291, 4294901760
        %v5033 = vsub.f32 %v291, %v5032
        %5034 = vmatprep.subr.mxu0 %v5033
        %v5035 = vand.u32 %v290, 4294901760
        %v5036 = vsub.f32 %v290, %v5035
        %5037 = vmatpush1.msra.mxu0 %v5036
        %v5038 = vand.u32 %v287, 4294901760
        %v5039 = vsub.f32 %v287, %v5038
        %5040 = vmatprep.subr.mxu0 %v5039
        %v5041 = vand.u32 %v286, 4294901760
        %v5042 = vsub.f32 %v286, %v5041
        %5043 = vmatpush1.msra.mxu0 %v5042
        %v5044 = vand.u32 %v283, 4294901760
        %v5045 = vsub.f32 %v283, %v5044
        %5046 = vmatprep.subr.mxu0 %v5045
        %v5047 = vand.u32 %v282, 4294901760
        %v5048 = vsub.f32 %v282, %v5047
        %5049 = vmatpush1.msra.mxu0 %v5048
        %v5050 = vand.u32 %v279, 4294901760
        %v5051 = vsub.f32 %v279, %v5050
        %5052 = vmatprep.subr.mxu0 %v5051
        %v5053 = vand.u32 %v278, 4294901760
        %v5054 = vsub.f32 %v278, %v5053
        %5055 = vmatpush1.msra.mxu0 %v5054
        %5056 = vmatprep.subr.mxu0 0.0
        %5057 = vmatpush2.msra.mxu0 0.0
        %5058 = vmatprep.subr.mxu0 0.0
        %5059 = vmatpush2.msra.mxu0 0.0
        %5060 = vmatprep.subr.mxu0 0.0
        %5061 = vmatpush2.msra.mxu0 0.0
        %5062 = vmatprep.subr.mxu0 0.0
        %5063 = vmatpush2.msra.mxu0 0.0
        %5064 = vmatprep.subr.mxu0 0.0
        %5065 = vmatpush2.msra.mxu0 0.0
        %5066 = vmatprep.subr.mxu0 0.0
        %5067 = vmatpush2.msra.mxu0 0.0
        %5068 = vmatprep.subr.mxu0 0.0
        %5069 = vmatpush2.msra.mxu0 0.0
        %5070 = vmatprep.subr.mxu0 0.0
        %5071 = vmatpush2.msra.mxu0 0.0
        %5072 = vmatprep.subr.mxu0 0.0
        %5073 = vmatpush2.msra.mxu0 0.0
        %5074 = vmatprep.subr.mxu0 0.0
        %5075 = vmatpush2.msra.mxu0 0.0
        %5076 = vmatprep.subr.mxu0 0.0
        %5077 = vmatpush2.msra.mxu0 0.0
        %5078 = vmatprep.subr.mxu0 0.0
        %5079 = vmatpush2.msra.mxu0 0.0
        %5080 = vmatprep.subr.mxu0 0.0
        %5081 = vmatpush2.msra.mxu0 0.0
        %5082 = vmatprep.subr.mxu0 0.0
        %5083 = vmatpush2.msra.mxu0 0.0
        %5084 = vmatprep.subr.mxu0 0.0
        %5085 = vmatpush2.msra.mxu0 0.0
        %5086 = vmatprep.subr.mxu0 0.0
        %5087 = vmatpush2.msra.mxu0 0.0
        %5088 = vmatprep.mubr.f32.mxu0 0.0
        %v5089 = vand.u32 %v3764, 4294901760
        %v5090 = vsub.f32 %v3764, %v5089
        %5091 = vmatmul.mubr.f32.gmra.mxu0 %v5090
        %v5092 = vpop.f32.mrf.mxu0
        %v5093 = vadd.f32 %v4956, %v5092
        %v5094 = vpop.f32.mrf.mxu0
        %v5095 = vadd.f32 %v4958, %v5094
        %5096 = vdwg.mxu0
        %v5097 = vand.u32 %v339, 4294901760
        %5098 = vmatprep.subr.mxu0 %v5097
        %v5099 = vand.u32 %v338, 4294901760
        %5100 = vmatpush1.msra.mxu0 %v5099
        %v5101 = vand.u32 %v335, 4294901760
        %5102 = vmatprep.subr.mxu0 %v5101
        %v5103 = vand.u32 %v334, 4294901760
        %5104 = vmatpush1.msra.mxu0 %v5103
        %v5105 = vand.u32 %v331, 4294901760
        %5106 = vmatprep.subr.mxu0 %v5105
        %v5107 = vand.u32 %v330, 4294901760
        %5108 = vmatpush1.msra.mxu0 %v5107
        %v5109 = vand.u32 %v327, 4294901760
        %5110 = vmatprep.subr.mxu0 %v5109
        %v5111 = vand.u32 %v326, 4294901760
        %5112 = vmatpush1.msra.mxu0 %v5111
        %v5113 = vand.u32 %v323, 4294901760
        %5114 = vmatprep.subr.mxu0 %v5113
        %v5115 = vand.u32 %v322, 4294901760
        %5116 = vmatpush1.msra.mxu0 %v5115
        %v5117 = vand.u32 %v319, 4294901760
        %5118 = vmatprep.subr.mxu0 %v5117
        %v5119 = vand.u32 %v318, 4294901760
        %5120 = vmatpush1.msra.mxu0 %v5119
        %v5121 = vand.u32 %v315, 4294901760
        %5122 = vmatprep.subr.mxu0 %v5121
        %v5123 = vand.u32 %v314, 4294901760
        %5124 = vmatpush1.msra.mxu0 %v5123
        %v5125 = vand.u32 %v311, 4294901760
        %5126 = vmatprep.subr.mxu0 %v5125
        %v5127 = vand.u32 %v310, 4294901760
        %5128 = vmatpush1.msra.mxu0 %v5127
        %v5129 = vand.u32 %v307, 4294901760
        %5130 = vmatprep.subr.mxu0 %v5129
        %v5131 = vand.u32 %v306, 4294901760
        %5132 = vmatpush1.msra.mxu0 %v5131
        %v5133 = vand.u32 %v303, 4294901760
        %5134 = vmatprep.subr.mxu0 %v5133
        %v5135 = vand.u32 %v302, 4294901760
        %5136 = vmatpush1.msra.mxu0 %v5135
        %v5137 = vand.u32 %v299, 4294901760
        %5138 = vmatprep.subr.mxu0 %v5137
        %v5139 = vand.u32 %v298, 4294901760
        %5140 = vmatpush1.msra.mxu0 %v5139
        %v5141 = vand.u32 %v295, 4294901760
        %5142 = vmatprep.subr.mxu0 %v5141
        %v5143 = vand.u32 %v294, 4294901760
        %5144 = vmatpush1.msra.mxu0 %v5143
        %v5145 = vand.u32 %v291, 4294901760
        %5146 = vmatprep.subr.mxu0 %v5145
        %v5147 = vand.u32 %v290, 4294901760
        %5148 = vmatpush1.msra.mxu0 %v5147
        %v5149 = vand.u32 %v287, 4294901760
        %5150 = vmatprep.subr.mxu0 %v5149
        %v5151 = vand.u32 %v286, 4294901760
        %5152 = vmatpush1.msra.mxu0 %v5151
        %v5153 = vand.u32 %v283, 4294901760
        %5154 = vmatprep.subr.mxu0 %v5153
        %v5155 = vand.u32 %v282, 4294901760
        %5156 = vmatpush1.msra.mxu0 %v5155
        %v5157 = vand.u32 %v279, 4294901760
        %5158 = vmatprep.subr.mxu0 %v5157
        %v5159 = vand.u32 %v278, 4294901760
        %5160 = vmatpush1.msra.mxu0 %v5159
        %5161 = vmatprep.subr.mxu0 0.0
        %5162 = vmatpush2.msra.mxu0 0.0
        %5163 = vmatprep.subr.mxu0 0.0
        %5164 = vmatpush2.msra.mxu0 0.0
        %5165 = vmatprep.subr.mxu0 0.0
        %5166 = vmatpush2.msra.mxu0 0.0
        %5167 = vmatprep.subr.mxu0 0.0
        %5168 = vmatpush2.msra.mxu0 0.0
        %5169 = vmatprep.subr.mxu0 0.0
        %5170 = vmatpush2.msra.mxu0 0.0
        %5171 = vmatprep.subr.mxu0 0.0
        %5172 = vmatpush2.msra.mxu0 0.0
        %5173 = vmatprep.subr.mxu0 0.0
        %5174 = vmatpush2.msra.mxu0 0.0
        %5175 = vmatprep.subr.mxu0 0.0
        %5176 = vmatpush2.msra.mxu0 0.0
        %5177 = vmatprep.subr.mxu0 0.0
        %5178 = vmatpush2.msra.mxu0 0.0
        %5179 = vmatprep.subr.mxu0 0.0
        %5180 = vmatpush2.msra.mxu0 0.0
        %5181 = vmatprep.subr.mxu0 0.0
        %5182 = vmatpush2.msra.mxu0 0.0
        %5183 = vmatprep.subr.mxu0 0.0
        %5184 = vmatpush2.msra.mxu0 0.0
        %5185 = vmatprep.subr.mxu0 0.0
        %5186 = vmatpush2.msra.mxu0 0.0
        %5187 = vmatprep.subr.mxu0 0.0
        %5188 = vmatpush2.msra.mxu0 0.0
        %5189 = vmatprep.subr.mxu0 0.0
        %5190 = vmatpush2.msra.mxu0 0.0
        %5191 = vmatprep.subr.mxu0 0.0
        %5192 = vmatpush2.msra.mxu0 0.0
        %5193 = vmatprep.mubr.f32.mxu0 0.0
        %v5194 = vand.u32 %v3764, 4294901760
        %v5195 = vsub.f32 %v3764, %v5194
        %v5196 = vand.u32 %v5195, 4294901760
        %5197 = vmatmul.mubr.f32.gmra.mxu0 %v5196
        %v5198 = vpop.f32.mrf.mxu0
        %v5199 = vadd.f32 %v5093, %v5198
        %v5200 = vpop.f32.mrf.mxu0
        %v5201 = vadd.f32 %v5095, %v5200
        %5202 = vdwg.mxu0
        %v5203 = vand.u32 %v339, 4294901760
        %v5204 = vsub.f32 %v339, %v5203
        %v5205 = vand.u32 %v5204, 4294901760
        %5206 = vmatprep.subr.mxu0 %v5205
        %v5207 = vand.u32 %v338, 4294901760
        %v5208 = vsub.f32 %v338, %v5207
        %v5209 = vand.u32 %v5208, 4294901760
        %5210 = vmatpush1.msra.mxu0 %v5209
        %v5211 = vand.u32 %v335, 4294901760
        %v5212 = vsub.f32 %v335, %v5211
        %v5213 = vand.u32 %v5212, 4294901760
        %5214 = vmatprep.subr.mxu0 %v5213
        %v5215 = vand.u32 %v334, 4294901760
        %v5216 = vsub.f32 %v334, %v5215
        %v5217 = vand.u32 %v5216, 4294901760
        %5218 = vmatpush1.msra.mxu0 %v5217
        %v5219 = vand.u32 %v331, 4294901760
        %v5220 = vsub.f32 %v331, %v5219
        %v5221 = vand.u32 %v5220, 4294901760
        %5222 = vmatprep.subr.mxu0 %v5221
        %v5223 = vand.u32 %v330, 4294901760
        %v5224 = vsub.f32 %v330, %v5223
        %v5225 = vand.u32 %v5224, 4294901760
        %5226 = vmatpush1.msra.mxu0 %v5225
        %v5227 = vand.u32 %v327, 4294901760
        %v5228 = vsub.f32 %v327, %v5227
        %v5229 = vand.u32 %v5228, 4294901760
        %5230 = vmatprep.subr.mxu0 %v5229
        %v5231 = vand.u32 %v326, 4294901760
        %v5232 = vsub.f32 %v326, %v5231
        %v5233 = vand.u32 %v5232, 4294901760
        %5234 = vmatpush1.msra.mxu0 %v5233
        %v5235 = vand.u32 %v323, 4294901760
        %v5236 = vsub.f32 %v323, %v5235
        %v5237 = vand.u32 %v5236, 4294901760
        %5238 = vmatprep.subr.mxu0 %v5237
        %v5239 = vand.u32 %v322, 4294901760
        %v5240 = vsub.f32 %v322, %v5239
        %v5241 = vand.u32 %v5240, 4294901760
        %5242 = vmatpush1.msra.mxu0 %v5241
        %v5243 = vand.u32 %v319, 4294901760
        %v5244 = vsub.f32 %v319, %v5243
        %v5245 = vand.u32 %v5244, 4294901760
        %5246 = vmatprep.subr.mxu0 %v5245
        %v5247 = vand.u32 %v318, 4294901760
        %v5248 = vsub.f32 %v318, %v5247
        %v5249 = vand.u32 %v5248, 4294901760
        %5250 = vmatpush1.msra.mxu0 %v5249
        %v5251 = vand.u32 %v315, 4294901760
        %v5252 = vsub.f32 %v315, %v5251
        %v5253 = vand.u32 %v5252, 4294901760
        %5254 = vmatprep.subr.mxu0 %v5253
        %v5255 = vand.u32 %v314, 4294901760
        %v5256 = vsub.f32 %v314, %v5255
        %v5257 = vand.u32 %v5256, 4294901760
        %5258 = vmatpush1.msra.mxu0 %v5257
        %v5259 = vand.u32 %v311, 4294901760
        %v5260 = vsub.f32 %v311, %v5259
        %v5261 = vand.u32 %v5260, 4294901760
        %5262 = vmatprep.subr.mxu0 %v5261
        %v5263 = vand.u32 %v310, 4294901760
        %v5264 = vsub.f32 %v310, %v5263
        %v5265 = vand.u32 %v5264, 4294901760
        %5266 = vmatpush1.msra.mxu0 %v5265
        %v5267 = vand.u32 %v307, 4294901760
        %v5268 = vsub.f32 %v307, %v5267
        %v5269 = vand.u32 %v5268, 4294901760
        %5270 = vmatprep.subr.mxu0 %v5269
        %v5271 = vand.u32 %v306, 4294901760
        %v5272 = vsub.f32 %v306, %v5271
        %v5273 = vand.u32 %v5272, 4294901760
        %5274 = vmatpush1.msra.mxu0 %v5273
        %v5275 = vand.u32 %v303, 4294901760
        %v5276 = vsub.f32 %v303, %v5275
        %v5277 = vand.u32 %v5276, 4294901760
        %5278 = vmatprep.subr.mxu0 %v5277
        %v5279 = vand.u32 %v302, 4294901760
        %v5280 = vsub.f32 %v302, %v5279
        %v5281 = vand.u32 %v5280, 4294901760
        %5282 = vmatpush1.msra.mxu0 %v5281
        %v5283 = vand.u32 %v299, 4294901760
        %v5284 = vsub.f32 %v299, %v5283
        %v5285 = vand.u32 %v5284, 4294901760
        %5286 = vmatprep.subr.mxu0 %v5285
        %v5287 = vand.u32 %v298, 4294901760
        %v5288 = vsub.f32 %v298, %v5287
        %v5289 = vand.u32 %v5288, 4294901760
        %5290 = vmatpush1.msra.mxu0 %v5289
        %v5291 = vand.u32 %v295, 4294901760
        %v5292 = vsub.f32 %v295, %v5291
        %v5293 = vand.u32 %v5292, 4294901760
        %5294 = vmatprep.subr.mxu0 %v5293
        %v5295 = vand.u32 %v294, 4294901760
        %v5296 = vsub.f32 %v294, %v5295
        %v5297 = vand.u32 %v5296, 4294901760
        %5298 = vmatpush1.msra.mxu0 %v5297
        %v5299 = vand.u32 %v291, 4294901760
        %v5300 = vsub.f32 %v291, %v5299
        %v5301 = vand.u32 %v5300, 4294901760
        %5302 = vmatprep.subr.mxu0 %v5301
        %v5303 = vand.u32 %v290, 4294901760
        %v5304 = vsub.f32 %v290, %v5303
        %v5305 = vand.u32 %v5304, 4294901760
        %5306 = vmatpush1.msra.mxu0 %v5305
        %v5307 = vand.u32 %v287, 4294901760
        %v5308 = vsub.f32 %v287, %v5307
        %v5309 = vand.u32 %v5308, 4294901760
        %5310 = vmatprep.subr.mxu0 %v5309
        %v5311 = vand.u32 %v286, 4294901760
        %v5312 = vsub.f32 %v286, %v5311
        %v5313 = vand.u32 %v5312, 4294901760
        %5314 = vmatpush1.msra.mxu0 %v5313
        %v5315 = vand.u32 %v283, 4294901760
        %v5316 = vsub.f32 %v283, %v5315
        %v5317 = vand.u32 %v5316, 4294901760
        %5318 = vmatprep.subr.mxu0 %v5317
        %v5319 = vand.u32 %v282, 4294901760
        %v5320 = vsub.f32 %v282, %v5319
        %v5321 = vand.u32 %v5320, 4294901760
        %5322 = vmatpush1.msra.mxu0 %v5321
        %v5323 = vand.u32 %v279, 4294901760
        %v5324 = vsub.f32 %v279, %v5323
        %v5325 = vand.u32 %v5324, 4294901760
        %5326 = vmatprep.subr.mxu0 %v5325
        %v5327 = vand.u32 %v278, 4294901760
        %v5328 = vsub.f32 %v278, %v5327
        %v5329 = vand.u32 %v5328, 4294901760
        %5330 = vmatpush1.msra.mxu0 %v5329
        %5331 = vmatprep.subr.mxu0 0.0
        %5332 = vmatpush2.msra.mxu0 0.0
        %5333 = vmatprep.subr.mxu0 0.0
        %5334 = vmatpush2.msra.mxu0 0.0
        %5335 = vmatprep.subr.mxu0 0.0
        %5336 = vmatpush2.msra.mxu0 0.0
        %5337 = vmatprep.subr.mxu0 0.0
        %5338 = vmatpush2.msra.mxu0 0.0
        %5339 = vmatprep.subr.mxu0 0.0
        %5340 = vmatpush2.msra.mxu0 0.0
        %5341 = vmatprep.subr.mxu0 0.0
        %5342 = vmatpush2.msra.mxu0 0.0
        %5343 = vmatprep.subr.mxu0 0.0
        %5344 = vmatpush2.msra.mxu0 0.0
        %5345 = vmatprep.subr.mxu0 0.0
        %5346 = vmatpush2.msra.mxu0 0.0
        %5347 = vmatprep.subr.mxu0 0.0
        %5348 = vmatpush2.msra.mxu0 0.0
        %5349 = vmatprep.subr.mxu0 0.0
        %5350 = vmatpush2.msra.mxu0 0.0
        %5351 = vmatprep.subr.mxu0 0.0
        %5352 = vmatpush2.msra.mxu0 0.0
        %5353 = vmatprep.subr.mxu0 0.0
        %5354 = vmatpush2.msra.mxu0 0.0
        %5355 = vmatprep.subr.mxu0 0.0
        %5356 = vmatpush2.msra.mxu0 0.0
        %5357 = vmatprep.subr.mxu0 0.0
        %5358 = vmatpush2.msra.mxu0 0.0
        %5359 = vmatprep.subr.mxu0 0.0
        %5360 = vmatpush2.msra.mxu0 0.0
        %5361 = vmatprep.subr.mxu0 0.0
        %5362 = vmatpush2.msra.mxu0 0.0
        %5363 = vmatprep.mubr.f32.mxu0 0.0
        %v5364 = vand.u32 %v3764, 4294901760
        %5365 = vmatmul.mubr.f32.gmra.mxu0 %v5364
        %v5366 = vpop.f32.mrf.mxu0
        %v5367 = vadd.f32 %v5199, %v5366
        %v5368 = vpop.f32.mrf.mxu0
        %v5369 = vadd.f32 %v5201, %v5368
        %5370 = vdwg.mxu0
        %v5371 = vand.u32 %v339, 4294901760
        %5372 = vmatprep.subr.mxu0 %v5371
        %v5373 = vand.u32 %v338, 4294901760
        %5374 = vmatpush1.msra.mxu0 %v5373
        %v5375 = vand.u32 %v335, 4294901760
        %5376 = vmatprep.subr.mxu0 %v5375
        %v5377 = vand.u32 %v334, 4294901760
        %5378 = vmatpush1.msra.mxu0 %v5377
        %v5379 = vand.u32 %v331, 4294901760
        %5380 = vmatprep.subr.mxu0 %v5379
        %v5381 = vand.u32 %v330, 4294901760
        %5382 = vmatpush1.msra.mxu0 %v5381
        %v5383 = vand.u32 %v327, 4294901760
        %5384 = vmatprep.subr.mxu0 %v5383
        %v5385 = vand.u32 %v326, 4294901760
        %5386 = vmatpush1.msra.mxu0 %v5385
        %v5387 = vand.u32 %v323, 4294901760
        %5388 = vmatprep.subr.mxu0 %v5387
        %v5389 = vand.u32 %v322, 4294901760
        %5390 = vmatpush1.msra.mxu0 %v5389
        %v5391 = vand.u32 %v319, 4294901760
        %5392 = vmatprep.subr.mxu0 %v5391
        %v5393 = vand.u32 %v318, 4294901760
        %5394 = vmatpush1.msra.mxu0 %v5393
        %v5395 = vand.u32 %v315, 4294901760
        %5396 = vmatprep.subr.mxu0 %v5395
        %v5397 = vand.u32 %v314, 4294901760
        %5398 = vmatpush1.msra.mxu0 %v5397
        %v5399 = vand.u32 %v311, 4294901760
        %5400 = vmatprep.subr.mxu0 %v5399
        %v5401 = vand.u32 %v310, 4294901760
        %5402 = vmatpush1.msra.mxu0 %v5401
        %v5403 = vand.u32 %v307, 4294901760
        %5404 = vmatprep.subr.mxu0 %v5403
        %v5405 = vand.u32 %v306, 4294901760
        %5406 = vmatpush1.msra.mxu0 %v5405
        %v5407 = vand.u32 %v303, 4294901760
        %5408 = vmatprep.subr.mxu0 %v5407
        %v5409 = vand.u32 %v302, 4294901760
        %5410 = vmatpush1.msra.mxu0 %v5409
        %v5411 = vand.u32 %v299, 4294901760
        %5412 = vmatprep.subr.mxu0 %v5411
        %v5413 = vand.u32 %v298, 4294901760
        %5414 = vmatpush1.msra.mxu0 %v5413
        %v5415 = vand.u32 %v295, 4294901760
        %5416 = vmatprep.subr.mxu0 %v5415
        %v5417 = vand.u32 %v294, 4294901760
        %5418 = vmatpush1.msra.mxu0 %v5417
        %v5419 = vand.u32 %v291, 4294901760
        %5420 = vmatprep.subr.mxu0 %v5419
        %v5421 = vand.u32 %v290, 4294901760
        %5422 = vmatpush1.msra.mxu0 %v5421
        %v5423 = vand.u32 %v287, 4294901760
        %5424 = vmatprep.subr.mxu0 %v5423
        %v5425 = vand.u32 %v286, 4294901760
        %5426 = vmatpush1.msra.mxu0 %v5425
        %v5427 = vand.u32 %v283, 4294901760
        %5428 = vmatprep.subr.mxu0 %v5427
        %v5429 = vand.u32 %v282, 4294901760
        %5430 = vmatpush1.msra.mxu0 %v5429
        %v5431 = vand.u32 %v279, 4294901760
        %5432 = vmatprep.subr.mxu0 %v5431
        %v5433 = vand.u32 %v278, 4294901760
        %5434 = vmatpush1.msra.mxu0 %v5433
        %5435 = vmatprep.subr.mxu0 0.0
        %5436 = vmatpush2.msra.mxu0 0.0
        %5437 = vmatprep.subr.mxu0 0.0
        %5438 = vmatpush2.msra.mxu0 0.0
        %5439 = vmatprep.subr.mxu0 0.0
        %5440 = vmatpush2.msra.mxu0 0.0
        %5441 = vmatprep.subr.mxu0 0.0
        %5442 = vmatpush2.msra.mxu0 0.0
        %5443 = vmatprep.subr.mxu0 0.0
        %5444 = vmatpush2.msra.mxu0 0.0
        %5445 = vmatprep.subr.mxu0 0.0
        %5446 = vmatpush2.msra.mxu0 0.0
        %5447 = vmatprep.subr.mxu0 0.0
        %5448 = vmatpush2.msra.mxu0 0.0
        %5449 = vmatprep.subr.mxu0 0.0
        %5450 = vmatpush2.msra.mxu0 0.0
        %5451 = vmatprep.subr.mxu0 0.0
        %5452 = vmatpush2.msra.mxu0 0.0
        %5453 = vmatprep.subr.mxu0 0.0
        %5454 = vmatpush2.msra.mxu0 0.0
        %5455 = vmatprep.subr.mxu0 0.0
        %5456 = vmatpush2.msra.mxu0 0.0
        %5457 = vmatprep.subr.mxu0 0.0
        %5458 = vmatpush2.msra.mxu0 0.0
        %5459 = vmatprep.subr.mxu0 0.0
        %5460 = vmatpush2.msra.mxu0 0.0
        %5461 = vmatprep.subr.mxu0 0.0
        %5462 = vmatpush2.msra.mxu0 0.0
        %5463 = vmatprep.subr.mxu0 0.0
        %5464 = vmatpush2.msra.mxu0 0.0
        %5465 = vmatprep.subr.mxu0 0.0
        %5466 = vmatpush2.msra.mxu0 0.0
        %5467 = vmatprep.mubr.f32.mxu0 0.0
        %v5468 = vand.u32 %v3764, 4294901760
        %5469 = vmatmul.mubr.f32.gmra.mxu0 %v5468
        %v5470 = vpop.f32.mrf.mxu0
        %v5471 = vadd.f32 %v5367, %v5470
        %v5472 = vpop.f32.mrf.mxu0
        %v5473 = vadd.f32 %v5369, %v5472
        %5474 = vdwg.mxu0
        %s5475 = scalar_lea.vmem %s238, 6 [#allocation2]
        %v5476 = vld [vmem:[%s5475] sm:$0x3]
        %v5477 = vand.u32 %v337, 4294901760
        %5478 = vmatprep.subr.mxu0 %v5477
        %v5479 = vand.u32 %v336, 4294901760
        %5480 = vmatpush1.msra.mxu0 %v5479
        %v5481 = vand.u32 %v333, 4294901760
        %5482 = vmatprep.subr.mxu0 %v5481
        %v5483 = vand.u32 %v332, 4294901760
        %5484 = vmatpush1.msra.mxu0 %v5483
        %v5485 = vand.u32 %v329, 4294901760
        %5486 = vmatprep.subr.mxu0 %v5485
        %v5487 = vand.u32 %v328, 4294901760
        %5488 = vmatpush1.msra.mxu0 %v5487
        %v5489 = vand.u32 %v325, 4294901760
        %5490 = vmatprep.subr.mxu0 %v5489
        %v5491 = vand.u32 %v324, 4294901760
        %5492 = vmatpush1.msra.mxu0 %v5491
        %v5493 = vand.u32 %v321, 4294901760
        %5494 = vmatprep.subr.mxu0 %v5493
        %v5495 = vand.u32 %v320, 4294901760
        %5496 = vmatpush1.msra.mxu0 %v5495
        %v5497 = vand.u32 %v317, 4294901760
        %5498 = vmatprep.subr.mxu0 %v5497
        %v5499 = vand.u32 %v316, 4294901760
        %5500 = vmatpush1.msra.mxu0 %v5499
        %v5501 = vand.u32 %v313, 4294901760
        %5502 = vmatprep.subr.mxu0 %v5501
        %v5503 = vand.u32 %v312, 4294901760
        %5504 = vmatpush1.msra.mxu0 %v5503
        %v5505 = vand.u32 %v309, 4294901760
        %5506 = vmatprep.subr.mxu0 %v5505
        %v5507 = vand.u32 %v308, 4294901760
        %5508 = vmatpush1.msra.mxu0 %v5507
        %v5509 = vand.u32 %v305, 4294901760
        %5510 = vmatprep.subr.mxu0 %v5509
        %v5511 = vand.u32 %v304, 4294901760
        %5512 = vmatpush1.msra.mxu0 %v5511
        %v5513 = vand.u32 %v301, 4294901760
        %5514 = vmatprep.subr.mxu0 %v5513
        %v5515 = vand.u32 %v300, 4294901760
        %5516 = vmatpush1.msra.mxu0 %v5515
        %v5517 = vand.u32 %v297, 4294901760
        %5518 = vmatprep.subr.mxu0 %v5517
        %v5519 = vand.u32 %v296, 4294901760
        %5520 = vmatpush1.msra.mxu0 %v5519
        %v5521 = vand.u32 %v293, 4294901760
        %5522 = vmatprep.subr.mxu0 %v5521
        %v5523 = vand.u32 %v292, 4294901760
        %5524 = vmatpush1.msra.mxu0 %v5523
        %v5525 = vand.u32 %v289, 4294901760
        %5526 = vmatprep.subr.mxu0 %v5525
        %v5527 = vand.u32 %v288, 4294901760
        %5528 = vmatpush1.msra.mxu0 %v5527
        %v5529 = vand.u32 %v285, 4294901760
        %5530 = vmatprep.subr.mxu0 %v5529
        %v5531 = vand.u32 %v284, 4294901760
        %5532 = vmatpush1.msra.mxu0 %v5531
        %v5533 = vand.u32 %v281, 4294901760
        %5534 = vmatprep.subr.mxu0 %v5533
        %v5535 = vand.u32 %v280, 4294901760
        %5536 = vmatpush1.msra.mxu0 %v5535
        %v5537 = vand.u32 %v277, 4294901760
        %5538 = vmatprep.subr.mxu0 %v5537
        %v5539 = vand.u32 %v276, 4294901760
        %5540 = vmatpush1.msra.mxu0 %v5539
        %5541 = vmatprep.subr.mxu0 0.0
        %5542 = vmatpush2.msra.mxu0 0.0
        %5543 = vmatprep.subr.mxu0 0.0
        %5544 = vmatpush2.msra.mxu0 0.0
        %5545 = vmatprep.subr.mxu0 0.0
        %5546 = vmatpush2.msra.mxu0 0.0
        %5547 = vmatprep.subr.mxu0 0.0
        %5548 = vmatpush2.msra.mxu0 0.0
        %5549 = vmatprep.subr.mxu0 0.0
        %5550 = vmatpush2.msra.mxu0 0.0
        %5551 = vmatprep.subr.mxu0 0.0
        %5552 = vmatpush2.msra.mxu0 0.0
        %5553 = vmatprep.subr.mxu0 0.0
        %5554 = vmatpush2.msra.mxu0 0.0
        %5555 = vmatprep.subr.mxu0 0.0
        %5556 = vmatpush2.msra.mxu0 0.0
        %5557 = vmatprep.subr.mxu0 0.0
        %5558 = vmatpush2.msra.mxu0 0.0
        %5559 = vmatprep.subr.mxu0 0.0
        %5560 = vmatpush2.msra.mxu0 0.0
        %5561 = vmatprep.subr.mxu0 0.0
        %5562 = vmatpush2.msra.mxu0 0.0
        %5563 = vmatprep.subr.mxu0 0.0
        %5564 = vmatpush2.msra.mxu0 0.0
        %5565 = vmatprep.subr.mxu0 0.0
        %5566 = vmatpush2.msra.mxu0 0.0
        %5567 = vmatprep.subr.mxu0 0.0
        %5568 = vmatpush2.msra.mxu0 0.0
        %5569 = vmatprep.subr.mxu0 0.0
        %5570 = vmatpush2.msra.mxu0 0.0
        %5571 = vmatprep.subr.mxu0 0.0
        %5572 = vmatpush2.msra.mxu0 0.0
        %5573 = vmatprep.mubr.f32.mxu0 0.0
        %v5574 = vand.u32 %v5476, 4294901760
        %v5575 = vsub.f32 %v5476, %v5574
        %v5576 = vand.u32 %v5575, 4294901760
        %v5577 = vsub.f32 %v5575, %v5576
        %v5578 = vand.u32 %v5577, 4294901760
        %5579 = vmatmul.mubr.f32.gmra.mxu0 %v5578
        %v5580 = vpop.f32.mrf.mxu0
        %v5581 = vadd.f32 0.0, %v5580
        %v5582 = vpop.f32.mrf.mxu0
        %v5583 = vadd.f32 0.0, %v5582
        %5584 = vdwg.mxu0
        %v5585 = vand.u32 %v337, 4294901760
        %v5586 = vsub.f32 %v337, %v5585
        %v5587 = vand.u32 %v5586, 4294901760
        %v5588 = vsub.f32 %v5586, %v5587
        %v5589 = vand.u32 %v5588, 4294901760
        %5590 = vmatprep.subr.mxu0 %v5589
        %v5591 = vand.u32 %v336, 4294901760
        %v5592 = vsub.f32 %v336, %v5591
        %v5593 = vand.u32 %v5592, 4294901760
        %v5594 = vsub.f32 %v5592, %v5593
        %v5595 = vand.u32 %v5594, 4294901760
        %5596 = vmatpush1.msra.mxu0 %v5595
        %v5597 = vand.u32 %v333, 4294901760
        %v5598 = vsub.f32 %v333, %v5597
        %v5599 = vand.u32 %v5598, 4294901760
        %v5600 = vsub.f32 %v5598, %v5599
        %v5601 = vand.u32 %v5600, 4294901760
        %5602 = vmatprep.subr.mxu0 %v5601
        %v5603 = vand.u32 %v332, 4294901760
        %v5604 = vsub.f32 %v332, %v5603
        %v5605 = vand.u32 %v5604, 4294901760
        %v5606 = vsub.f32 %v5604, %v5605
        %v5607 = vand.u32 %v5606, 4294901760
        %5608 = vmatpush1.msra.mxu0 %v5607
        %v5609 = vand.u32 %v329, 4294901760
        %v5610 = vsub.f32 %v329, %v5609
        %v5611 = vand.u32 %v5610, 4294901760
        %v5612 = vsub.f32 %v5610, %v5611
        %v5613 = vand.u32 %v5612, 4294901760
        %5614 = vmatprep.subr.mxu0 %v5613
        %v5615 = vand.u32 %v328, 4294901760
        %v5616 = vsub.f32 %v328, %v5615
        %v5617 = vand.u32 %v5616, 4294901760
        %v5618 = vsub.f32 %v5616, %v5617
        %v5619 = vand.u32 %v5618, 4294901760
        %5620 = vmatpush1.msra.mxu0 %v5619
        %v5621 = vand.u32 %v325, 4294901760
        %v5622 = vsub.f32 %v325, %v5621
        %v5623 = vand.u32 %v5622, 4294901760
        %v5624 = vsub.f32 %v5622, %v5623
        %v5625 = vand.u32 %v5624, 4294901760
        %5626 = vmatprep.subr.mxu0 %v5625
        %v5627 = vand.u32 %v324, 4294901760
        %v5628 = vsub.f32 %v324, %v5627
        %v5629 = vand.u32 %v5628, 4294901760
        %v5630 = vsub.f32 %v5628, %v5629
        %v5631 = vand.u32 %v5630, 4294901760
        %5632 = vmatpush1.msra.mxu0 %v5631
        %v5633 = vand.u32 %v321, 4294901760
        %v5634 = vsub.f32 %v321, %v5633
        %v5635 = vand.u32 %v5634, 4294901760
        %v5636 = vsub.f32 %v5634, %v5635
        %v5637 = vand.u32 %v5636, 4294901760
        %5638 = vmatprep.subr.mxu0 %v5637
        %v5639 = vand.u32 %v320, 4294901760
        %v5640 = vsub.f32 %v320, %v5639
        %v5641 = vand.u32 %v5640, 4294901760
        %v5642 = vsub.f32 %v5640, %v5641
        %v5643 = vand.u32 %v5642, 4294901760
        %5644 = vmatpush1.msra.mxu0 %v5643
        %v5645 = vand.u32 %v317, 4294901760
        %v5646 = vsub.f32 %v317, %v5645
        %v5647 = vand.u32 %v5646, 4294901760
        %v5648 = vsub.f32 %v5646, %v5647
        %v5649 = vand.u32 %v5648, 4294901760
        %5650 = vmatprep.subr.mxu0 %v5649
        %v5651 = vand.u32 %v316, 4294901760
        %v5652 = vsub.f32 %v316, %v5651
        %v5653 = vand.u32 %v5652, 4294901760
        %v5654 = vsub.f32 %v5652, %v5653
        %v5655 = vand.u32 %v5654, 4294901760
        %5656 = vmatpush1.msra.mxu0 %v5655
        %v5657 = vand.u32 %v313, 4294901760
        %v5658 = vsub.f32 %v313, %v5657
        %v5659 = vand.u32 %v5658, 4294901760
        %v5660 = vsub.f32 %v5658, %v5659
        %v5661 = vand.u32 %v5660, 4294901760
        %5662 = vmatprep.subr.mxu0 %v5661
        %v5663 = vand.u32 %v312, 4294901760
        %v5664 = vsub.f32 %v312, %v5663
        %v5665 = vand.u32 %v5664, 4294901760
        %v5666 = vsub.f32 %v5664, %v5665
        %v5667 = vand.u32 %v5666, 4294901760
        %5668 = vmatpush1.msra.mxu0 %v5667
        %v5669 = vand.u32 %v309, 4294901760
        %v5670 = vsub.f32 %v309, %v5669
        %v5671 = vand.u32 %v5670, 4294901760
        %v5672 = vsub.f32 %v5670, %v5671
        %v5673 = vand.u32 %v5672, 4294901760
        %5674 = vmatprep.subr.mxu0 %v5673
        %v5675 = vand.u32 %v308, 4294901760
        %v5676 = vsub.f32 %v308, %v5675
        %v5677 = vand.u32 %v5676, 4294901760
        %v5678 = vsub.f32 %v5676, %v5677
        %v5679 = vand.u32 %v5678, 4294901760
        %5680 = vmatpush1.msra.mxu0 %v5679
        %v5681 = vand.u32 %v305, 4294901760
        %v5682 = vsub.f32 %v305, %v5681
        %v5683 = vand.u32 %v5682, 4294901760
        %v5684 = vsub.f32 %v5682, %v5683
        %v5685 = vand.u32 %v5684, 4294901760
        %5686 = vmatprep.subr.mxu0 %v5685
        %v5687 = vand.u32 %v304, 4294901760
        %v5688 = vsub.f32 %v304, %v5687
        %v5689 = vand.u32 %v5688, 4294901760
        %v5690 = vsub.f32 %v5688, %v5689
        %v5691 = vand.u32 %v5690, 4294901760
        %5692 = vmatpush1.msra.mxu0 %v5691
        %v5693 = vand.u32 %v301, 4294901760
        %v5694 = vsub.f32 %v301, %v5693
        %v5695 = vand.u32 %v5694, 4294901760
        %v5696 = vsub.f32 %v5694, %v5695
        %v5697 = vand.u32 %v5696, 4294901760
        %5698 = vmatprep.subr.mxu0 %v5697
        %v5699 = vand.u32 %v300, 4294901760
        %v5700 = vsub.f32 %v300, %v5699
        %v5701 = vand.u32 %v5700, 4294901760
        %v5702 = vsub.f32 %v5700, %v5701
        %v5703 = vand.u32 %v5702, 4294901760
        %5704 = vmatpush1.msra.mxu0 %v5703
        %v5705 = vand.u32 %v297, 4294901760
        %v5706 = vsub.f32 %v297, %v5705
        %v5707 = vand.u32 %v5706, 4294901760
        %v5708 = vsub.f32 %v5706, %v5707
        %v5709 = vand.u32 %v5708, 4294901760
        %5710 = vmatprep.subr.mxu0 %v5709
        %v5711 = vand.u32 %v296, 4294901760
        %v5712 = vsub.f32 %v296, %v5711
        %v5713 = vand.u32 %v5712, 4294901760
        %v5714 = vsub.f32 %v5712, %v5713
        %v5715 = vand.u32 %v5714, 4294901760
        %5716 = vmatpush1.msra.mxu0 %v5715
        %v5717 = vand.u32 %v293, 4294901760
        %v5718 = vsub.f32 %v293, %v5717
        %v5719 = vand.u32 %v5718, 4294901760
        %v5720 = vsub.f32 %v5718, %v5719
        %v5721 = vand.u32 %v5720, 4294901760
        %5722 = vmatprep.subr.mxu0 %v5721
        %v5723 = vand.u32 %v292, 4294901760
        %v5724 = vsub.f32 %v292, %v5723
        %v5725 = vand.u32 %v5724, 4294901760
        %v5726 = vsub.f32 %v5724, %v5725
        %v5727 = vand.u32 %v5726, 4294901760
        %5728 = vmatpush1.msra.mxu0 %v5727
        %v5729 = vand.u32 %v289, 4294901760
        %v5730 = vsub.f32 %v289, %v5729
        %v5731 = vand.u32 %v5730, 4294901760
        %v5732 = vsub.f32 %v5730, %v5731
        %v5733 = vand.u32 %v5732, 4294901760
        %5734 = vmatprep.subr.mxu0 %v5733
        %v5735 = vand.u32 %v288, 4294901760
        %v5736 = vsub.f32 %v288, %v5735
        %v5737 = vand.u32 %v5736, 4294901760
        %v5738 = vsub.f32 %v5736, %v5737
        %v5739 = vand.u32 %v5738, 4294901760
        %5740 = vmatpush1.msra.mxu0 %v5739
        %v5741 = vand.u32 %v285, 4294901760
        %v5742 = vsub.f32 %v285, %v5741
        %v5743 = vand.u32 %v5742, 4294901760
        %v5744 = vsub.f32 %v5742, %v5743
        %v5745 = vand.u32 %v5744, 4294901760
        %5746 = vmatprep.subr.mxu0 %v5745
        %v5747 = vand.u32 %v284, 4294901760
        %v5748 = vsub.f32 %v284, %v5747
        %v5749 = vand.u32 %v5748, 4294901760
        %v5750 = vsub.f32 %v5748, %v5749
        %v5751 = vand.u32 %v5750, 4294901760
        %5752 = vmatpush1.msra.mxu0 %v5751
        %v5753 = vand.u32 %v281, 4294901760
        %v5754 = vsub.f32 %v281, %v5753
        %v5755 = vand.u32 %v5754, 4294901760
        %v5756 = vsub.f32 %v5754, %v5755
        %v5757 = vand.u32 %v5756, 4294901760
        %5758 = vmatprep.subr.mxu0 %v5757
        %v5759 = vand.u32 %v280, 4294901760
        %v5760 = vsub.f32 %v280, %v5759
        %v5761 = vand.u32 %v5760, 4294901760
        %v5762 = vsub.f32 %v5760, %v5761
        %v5763 = vand.u32 %v5762, 4294901760
        %5764 = vmatpush1.msra.mxu0 %v5763
        %v5765 = vand.u32 %v277, 4294901760
        %v5766 = vsub.f32 %v277, %v5765
        %v5767 = vand.u32 %v5766, 4294901760
        %v5768 = vsub.f32 %v5766, %v5767
        %v5769 = vand.u32 %v5768, 4294901760
        %5770 = vmatprep.subr.mxu0 %v5769
        %v5771 = vand.u32 %v276, 4294901760
        %v5772 = vsub.f32 %v276, %v5771
        %v5773 = vand.u32 %v5772, 4294901760
        %v5774 = vsub.f32 %v5772, %v5773
        %v5775 = vand.u32 %v5774, 4294901760
        %5776 = vmatpush1.msra.mxu0 %v5775
        %5777 = vmatprep.subr.mxu0 0.0
        %5778 = vmatpush2.msra.mxu0 0.0
        %5779 = vmatprep.subr.mxu0 0.0
        %5780 = vmatpush2.msra.mxu0 0.0
        %5781 = vmatprep.subr.mxu0 0.0
        %5782 = vmatpush2.msra.mxu0 0.0
        %5783 = vmatprep.subr.mxu0 0.0
        %5784 = vmatpush2.msra.mxu0 0.0
        %5785 = vmatprep.subr.mxu0 0.0
        %5786 = vmatpush2.msra.mxu0 0.0
        %5787 = vmatprep.subr.mxu0 0.0
        %5788 = vmatpush2.msra.mxu0 0.0
        %5789 = vmatprep.subr.mxu0 0.0
        %5790 = vmatpush2.msra.mxu0 0.0
        %5791 = vmatprep.subr.mxu0 0.0
        %5792 = vmatpush2.msra.mxu0 0.0
        %5793 = vmatprep.subr.mxu0 0.0
        %5794 = vmatpush2.msra.mxu0 0.0
        %5795 = vmatprep.subr.mxu0 0.0
        %5796 = vmatpush2.msra.mxu0 0.0
        %5797 = vmatprep.subr.mxu0 0.0
        %5798 = vmatpush2.msra.mxu0 0.0
        %5799 = vmatprep.subr.mxu0 0.0
        %5800 = vmatpush2.msra.mxu0 0.0
        %5801 = vmatprep.subr.mxu0 0.0
        %5802 = vmatpush2.msra.mxu0 0.0
        %5803 = vmatprep.subr.mxu0 0.0
        %5804 = vmatpush2.msra.mxu0 0.0
        %5805 = vmatprep.subr.mxu0 0.0
        %5806 = vmatpush2.msra.mxu0 0.0
        %5807 = vmatprep.subr.mxu0 0.0
        %5808 = vmatpush2.msra.mxu0 0.0
        %5809 = vmatprep.mubr.f32.mxu0 0.0
        %v5810 = vand.u32 %v5476, 4294901760
        %5811 = vmatmul.mubr.f32.gmra.mxu0 %v5810
        %v5812 = vpop.f32.mrf.mxu0
        %v5813 = vadd.f32 %v5581, %v5812
        %v5814 = vpop.f32.mrf.mxu0
        %v5815 = vadd.f32 %v5583, %v5814
        %5816 = vdwg.mxu0
        %v5817 = vand.u32 %v337, 4294901760
        %v5818 = vsub.f32 %v337, %v5817
        %5819 = vmatprep.subr.mxu0 %v5818
        %v5820 = vand.u32 %v336, 4294901760
        %v5821 = vsub.f32 %v336, %v5820
        %5822 = vmatpush1.msra.mxu0 %v5821
        %v5823 = vand.u32 %v333, 4294901760
        %v5824 = vsub.f32 %v333, %v5823
        %5825 = vmatprep.subr.mxu0 %v5824
        %v5826 = vand.u32 %v332, 4294901760
        %v5827 = vsub.f32 %v332, %v5826
        %5828 = vmatpush1.msra.mxu0 %v5827
        %v5829 = vand.u32 %v329, 4294901760
        %v5830 = vsub.f32 %v329, %v5829
        %5831 = vmatprep.subr.mxu0 %v5830
        %v5832 = vand.u32 %v328, 4294901760
        %v5833 = vsub.f32 %v328, %v5832
        %5834 = vmatpush1.msra.mxu0 %v5833
        %v5835 = vand.u32 %v325, 4294901760
        %v5836 = vsub.f32 %v325, %v5835
        %5837 = vmatprep.subr.mxu0 %v5836
        %v5838 = vand.u32 %v324, 4294901760
        %v5839 = vsub.f32 %v324, %v5838
        %5840 = vmatpush1.msra.mxu0 %v5839
        %v5841 = vand.u32 %v321, 4294901760
        %v5842 = vsub.f32 %v321, %v5841
        %5843 = vmatprep.subr.mxu0 %v5842
        %v5844 = vand.u32 %v320, 4294901760
        %v5845 = vsub.f32 %v320, %v5844
        %5846 = vmatpush1.msra.mxu0 %v5845
        %v5847 = vand.u32 %v317, 4294901760
        %v5848 = vsub.f32 %v317, %v5847
        %5849 = vmatprep.subr.mxu0 %v5848
        %v5850 = vand.u32 %v316, 4294901760
        %v5851 = vsub.f32 %v316, %v5850
        %5852 = vmatpush1.msra.mxu0 %v5851
        %v5853 = vand.u32 %v313, 4294901760
        %v5854 = vsub.f32 %v313, %v5853
        %5855 = vmatprep.subr.mxu0 %v5854
        %v5856 = vand.u32 %v312, 4294901760
        %v5857 = vsub.f32 %v312, %v5856
        %5858 = vmatpush1.msra.mxu0 %v5857
        %v5859 = vand.u32 %v309, 4294901760
        %v5860 = vsub.f32 %v309, %v5859
        %5861 = vmatprep.subr.mxu0 %v5860
        %v5862 = vand.u32 %v308, 4294901760
        %v5863 = vsub.f32 %v308, %v5862
        %5864 = vmatpush1.msra.mxu0 %v5863
        %v5865 = vand.u32 %v305, 4294901760
        %v5866 = vsub.f32 %v305, %v5865
        %5867 = vmatprep.subr.mxu0 %v5866
        %v5868 = vand.u32 %v304, 4294901760
        %v5869 = vsub.f32 %v304, %v5868
        %5870 = vmatpush1.msra.mxu0 %v5869
        %v5871 = vand.u32 %v301, 4294901760
        %v5872 = vsub.f32 %v301, %v5871
        %5873 = vmatprep.subr.mxu0 %v5872
        %v5874 = vand.u32 %v300, 4294901760
        %v5875 = vsub.f32 %v300, %v5874
        %5876 = vmatpush1.msra.mxu0 %v5875
        %v5877 = vand.u32 %v297, 4294901760
        %v5878 = vsub.f32 %v297, %v5877
        %5879 = vmatprep.subr.mxu0 %v5878
        %v5880 = vand.u32 %v296, 4294901760
        %v5881 = vsub.f32 %v296, %v5880
        %5882 = vmatpush1.msra.mxu0 %v5881
        %v5883 = vand.u32 %v293, 4294901760
        %v5884 = vsub.f32 %v293, %v5883
        %5885 = vmatprep.subr.mxu0 %v5884
        %v5886 = vand.u32 %v292, 4294901760
        %v5887 = vsub.f32 %v292, %v5886
        %5888 = vmatpush1.msra.mxu0 %v5887
        %v5889 = vand.u32 %v289, 4294901760
        %v5890 = vsub.f32 %v289, %v5889
        %5891 = vmatprep.subr.mxu0 %v5890
        %v5892 = vand.u32 %v288, 4294901760
        %v5893 = vsub.f32 %v288, %v5892
        %5894 = vmatpush1.msra.mxu0 %v5893
        %v5895 = vand.u32 %v285, 4294901760
        %v5896 = vsub.f32 %v285, %v5895
        %5897 = vmatprep.subr.mxu0 %v5896
        %v5898 = vand.u32 %v284, 4294901760
        %v5899 = vsub.f32 %v284, %v5898
        %5900 = vmatpush1.msra.mxu0 %v5899
        %v5901 = vand.u32 %v281, 4294901760
        %v5902 = vsub.f32 %v281, %v5901
        %5903 = vmatprep.subr.mxu0 %v5902
        %v5904 = vand.u32 %v280, 4294901760
        %v5905 = vsub.f32 %v280, %v5904
        %5906 = vmatpush1.msra.mxu0 %v5905
        %v5907 = vand.u32 %v277, 4294901760
        %v5908 = vsub.f32 %v277, %v5907
        %5909 = vmatprep.subr.mxu0 %v5908
        %v5910 = vand.u32 %v276, 4294901760
        %v5911 = vsub.f32 %v276, %v5910
        %5912 = vmatpush1.msra.mxu0 %v5911
        %5913 = vmatprep.subr.mxu0 0.0
        %5914 = vmatpush2.msra.mxu0 0.0
        %5915 = vmatprep.subr.mxu0 0.0
        %5916 = vmatpush2.msra.mxu0 0.0
        %5917 = vmatprep.subr.mxu0 0.0
        %5918 = vmatpush2.msra.mxu0 0.0
        %5919 = vmatprep.subr.mxu0 0.0
        %5920 = vmatpush2.msra.mxu0 0.0
        %5921 = vmatprep.subr.mxu0 0.0
        %5922 = vmatpush2.msra.mxu0 0.0
        %5923 = vmatprep.subr.mxu0 0.0
        %5924 = vmatpush2.msra.mxu0 0.0
        %5925 = vmatprep.subr.mxu0 0.0
        %5926 = vmatpush2.msra.mxu0 0.0
        %5927 = vmatprep.subr.mxu0 0.0
        %5928 = vmatpush2.msra.mxu0 0.0
        %5929 = vmatprep.subr.mxu0 0.0
        %5930 = vmatpush2.msra.mxu0 0.0
        %5931 = vmatprep.subr.mxu0 0.0
        %5932 = vmatpush2.msra.mxu0 0.0
        %5933 = vmatprep.subr.mxu0 0.0
        %5934 = vmatpush2.msra.mxu0 0.0
        %5935 = vmatprep.subr.mxu0 0.0
        %5936 = vmatpush2.msra.mxu0 0.0
        %5937 = vmatprep.subr.mxu0 0.0
        %5938 = vmatpush2.msra.mxu0 0.0
        %5939 = vmatprep.subr.mxu0 0.0
        %5940 = vmatpush2.msra.mxu0 0.0
        %5941 = vmatprep.subr.mxu0 0.0
        %5942 = vmatpush2.msra.mxu0 0.0
        %5943 = vmatprep.subr.mxu0 0.0
        %5944 = vmatpush2.msra.mxu0 0.0
        %5945 = vmatprep.mubr.f32.mxu0 0.0
        %v5946 = vand.u32 %v5476, 4294901760
        %v5947 = vsub.f32 %v5476, %v5946
        %5948 = vmatmul.mubr.f32.gmra.mxu0 %v5947
        %v5949 = vpop.f32.mrf.mxu0
        %v5950 = vadd.f32 %v5813, %v5949
        %v5951 = vpop.f32.mrf.mxu0
        %v5952 = vadd.f32 %v5815, %v5951
        %5953 = vdwg.mxu0
        %v5954 = vand.u32 %v337, 4294901760
        %5955 = vmatprep.subr.mxu0 %v5954
        %v5956 = vand.u32 %v336, 4294901760
        %5957 = vmatpush1.msra.mxu0 %v5956
        %v5958 = vand.u32 %v333, 4294901760
        %5959 = vmatprep.subr.mxu0 %v5958
        %v5960 = vand.u32 %v332, 4294901760
        %5961 = vmatpush1.msra.mxu0 %v5960
        %v5962 = vand.u32 %v329, 4294901760
        %5963 = vmatprep.subr.mxu0 %v5962
        %v5964 = vand.u32 %v328, 4294901760
        %5965 = vmatpush1.msra.mxu0 %v5964
        %v5966 = vand.u32 %v325, 4294901760
        %5967 = vmatprep.subr.mxu0 %v5966
        %v5968 = vand.u32 %v324, 4294901760
        %5969 = vmatpush1.msra.mxu0 %v5968
        %v5970 = vand.u32 %v321, 4294901760
        %5971 = vmatprep.subr.mxu0 %v5970
        %v5972 = vand.u32 %v320, 4294901760
        %5973 = vmatpush1.msra.mxu0 %v5972
        %v5974 = vand.u32 %v317, 4294901760
        %5975 = vmatprep.subr.mxu0 %v5974
        %v5976 = vand.u32 %v316, 4294901760
        %5977 = vmatpush1.msra.mxu0 %v5976
        %v5978 = vand.u32 %v313, 4294901760
        %5979 = vmatprep.subr.mxu0 %v5978
        %v5980 = vand.u32 %v312, 4294901760
        %5981 = vmatpush1.msra.mxu0 %v5980
        %v5982 = vand.u32 %v309, 4294901760
        %5983 = vmatprep.subr.mxu0 %v5982
        %v5984 = vand.u32 %v308, 4294901760
        %5985 = vmatpush1.msra.mxu0 %v5984
        %v5986 = vand.u32 %v305, 4294901760
        %5987 = vmatprep.subr.mxu0 %v5986
        %v5988 = vand.u32 %v304, 4294901760
        %5989 = vmatpush1.msra.mxu0 %v5988
        %v5990 = vand.u32 %v301, 4294901760
        %5991 = vmatprep.subr.mxu0 %v5990
        %v5992 = vand.u32 %v300, 4294901760
        %5993 = vmatpush1.msra.mxu0 %v5992
        %v5994 = vand.u32 %v297, 4294901760
        %5995 = vmatprep.subr.mxu0 %v5994
        %v5996 = vand.u32 %v296, 4294901760
        %5997 = vmatpush1.msra.mxu0 %v5996
        %v5998 = vand.u32 %v293, 4294901760
        %5999 = vmatprep.subr.mxu0 %v5998
        %v6000 = vand.u32 %v292, 4294901760
        %6001 = vmatpush1.msra.mxu0 %v6000
        %v6002 = vand.u32 %v289, 4294901760
        %6003 = vmatprep.subr.mxu0 %v6002
        %v6004 = vand.u32 %v288, 4294901760
        %6005 = vmatpush1.msra.mxu0 %v6004
        %v6006 = vand.u32 %v285, 4294901760
        %6007 = vmatprep.subr.mxu0 %v6006
        %v6008 = vand.u32 %v284, 4294901760
        %6009 = vmatpush1.msra.mxu0 %v6008
        %v6010 = vand.u32 %v281, 4294901760
        %6011 = vmatprep.subr.mxu0 %v6010
        %v6012 = vand.u32 %v280, 4294901760
        %6013 = vmatpush1.msra.mxu0 %v6012
        %v6014 = vand.u32 %v277, 4294901760
        %6015 = vmatprep.subr.mxu0 %v6014
        %v6016 = vand.u32 %v276, 4294901760
        %6017 = vmatpush1.msra.mxu0 %v6016
        %6018 = vmatprep.subr.mxu0 0.0
        %6019 = vmatpush2.msra.mxu0 0.0
        %6020 = vmatprep.subr.mxu0 0.0
        %6021 = vmatpush2.msra.mxu0 0.0
        %6022 = vmatprep.subr.mxu0 0.0
        %6023 = vmatpush2.msra.mxu0 0.0
        %6024 = vmatprep.subr.mxu0 0.0
        %6025 = vmatpush2.msra.mxu0 0.0
        %6026 = vmatprep.subr.mxu0 0.0
        %6027 = vmatpush2.msra.mxu0 0.0
        %6028 = vmatprep.subr.mxu0 0.0
        %6029 = vmatpush2.msra.mxu0 0.0
        %6030 = vmatprep.subr.mxu0 0.0
        %6031 = vmatpush2.msra.mxu0 0.0
        %6032 = vmatprep.subr.mxu0 0.0
        %6033 = vmatpush2.msra.mxu0 0.0
        %6034 = vmatprep.subr.mxu0 0.0
        %6035 = vmatpush2.msra.mxu0 0.0
        %6036 = vmatprep.subr.mxu0 0.0
        %6037 = vmatpush2.msra.mxu0 0.0
        %6038 = vmatprep.subr.mxu0 0.0
        %6039 = vmatpush2.msra.mxu0 0.0
        %6040 = vmatprep.subr.mxu0 0.0
        %6041 = vmatpush2.msra.mxu0 0.0
        %6042 = vmatprep.subr.mxu0 0.0
        %6043 = vmatpush2.msra.mxu0 0.0
        %6044 = vmatprep.subr.mxu0 0.0
        %6045 = vmatpush2.msra.mxu0 0.0
        %6046 = vmatprep.subr.mxu0 0.0
        %6047 = vmatpush2.msra.mxu0 0.0
        %6048 = vmatprep.subr.mxu0 0.0
        %6049 = vmatpush2.msra.mxu0 0.0
        %6050 = vmatprep.mubr.f32.mxu0 0.0
        %v6051 = vand.u32 %v5476, 4294901760
        %v6052 = vsub.f32 %v5476, %v6051
        %v6053 = vand.u32 %v6052, 4294901760
        %6054 = vmatmul.mubr.f32.gmra.mxu0 %v6053
        %v6055 = vpop.f32.mrf.mxu0
        %v6056 = vadd.f32 %v5950, %v6055
        %v6057 = vpop.f32.mrf.mxu0
        %v6058 = vadd.f32 %v5952, %v6057
        %6059 = vdwg.mxu0
        %v6060 = vand.u32 %v337, 4294901760
        %v6061 = vsub.f32 %v337, %v6060
        %v6062 = vand.u32 %v6061, 4294901760
        %6063 = vmatprep.subr.mxu0 %v6062
        %v6064 = vand.u32 %v336, 4294901760
        %v6065 = vsub.f32 %v336, %v6064
        %v6066 = vand.u32 %v6065, 4294901760
        %6067 = vmatpush1.msra.mxu0 %v6066
        %v6068 = vand.u32 %v333, 4294901760
        %v6069 = vsub.f32 %v333, %v6068
        %v6070 = vand.u32 %v6069, 4294901760
        %6071 = vmatprep.subr.mxu0 %v6070
        %v6072 = vand.u32 %v332, 4294901760
        %v6073 = vsub.f32 %v332, %v6072
        %v6074 = vand.u32 %v6073, 4294901760
        %6075 = vmatpush1.msra.mxu0 %v6074
        %v6076 = vand.u32 %v329, 4294901760
        %v6077 = vsub.f32 %v329, %v6076
        %v6078 = vand.u32 %v6077, 4294901760
        %6079 = vmatprep.subr.mxu0 %v6078
        %v6080 = vand.u32 %v328, 4294901760
        %v6081 = vsub.f32 %v328, %v6080
        %v6082 = vand.u32 %v6081, 4294901760
        %6083 = vmatpush1.msra.mxu0 %v6082
        %v6084 = vand.u32 %v325, 4294901760
        %v6085 = vsub.f32 %v325, %v6084
        %v6086 = vand.u32 %v6085, 4294901760
        %6087 = vmatprep.subr.mxu0 %v6086
        %v6088 = vand.u32 %v324, 4294901760
        %v6089 = vsub.f32 %v324, %v6088
        %v6090 = vand.u32 %v6089, 4294901760
        %6091 = vmatpush1.msra.mxu0 %v6090
        %v6092 = vand.u32 %v321, 4294901760
        %v6093 = vsub.f32 %v321, %v6092
        %v6094 = vand.u32 %v6093, 4294901760
        %6095 = vmatprep.subr.mxu0 %v6094
        %v6096 = vand.u32 %v320, 4294901760
        %v6097 = vsub.f32 %v320, %v6096
        %v6098 = vand.u32 %v6097, 4294901760
        %6099 = vmatpush1.msra.mxu0 %v6098
        %v6100 = vand.u32 %v317, 4294901760
        %v6101 = vsub.f32 %v317, %v6100
        %v6102 = vand.u32 %v6101, 4294901760
        %6103 = vmatprep.subr.mxu0 %v6102
        %v6104 = vand.u32 %v316, 4294901760
        %v6105 = vsub.f32 %v316, %v6104
        %v6106 = vand.u32 %v6105, 4294901760
        %6107 = vmatpush1.msra.mxu0 %v6106
        %v6108 = vand.u32 %v313, 4294901760
        %v6109 = vsub.f32 %v313, %v6108
        %v6110 = vand.u32 %v6109, 4294901760
        %6111 = vmatprep.subr.mxu0 %v6110
        %v6112 = vand.u32 %v312, 4294901760
        %v6113 = vsub.f32 %v312, %v6112
        %v6114 = vand.u32 %v6113, 4294901760
        %6115 = vmatpush1.msra.mxu0 %v6114
        %v6116 = vand.u32 %v309, 4294901760
        %v6117 = vsub.f32 %v309, %v6116
        %v6118 = vand.u32 %v6117, 4294901760
        %6119 = vmatprep.subr.mxu0 %v6118
        %v6120 = vand.u32 %v308, 4294901760
        %v6121 = vsub.f32 %v308, %v6120
        %v6122 = vand.u32 %v6121, 4294901760
        %6123 = vmatpush1.msra.mxu0 %v6122
        %v6124 = vand.u32 %v305, 4294901760
        %v6125 = vsub.f32 %v305, %v6124
        %v6126 = vand.u32 %v6125, 4294901760
        %6127 = vmatprep.subr.mxu0 %v6126
        %v6128 = vand.u32 %v304, 4294901760
        %v6129 = vsub.f32 %v304, %v6128
        %v6130 = vand.u32 %v6129, 4294901760
        %6131 = vmatpush1.msra.mxu0 %v6130
        %v6132 = vand.u32 %v301, 4294901760
        %v6133 = vsub.f32 %v301, %v6132
        %v6134 = vand.u32 %v6133, 4294901760
        %6135 = vmatprep.subr.mxu0 %v6134
        %v6136 = vand.u32 %v300, 4294901760
        %v6137 = vsub.f32 %v300, %v6136
        %v6138 = vand.u32 %v6137, 4294901760
        %6139 = vmatpush1.msra.mxu0 %v6138
        %v6140 = vand.u32 %v297, 4294901760
        %v6141 = vsub.f32 %v297, %v6140
        %v6142 = vand.u32 %v6141, 4294901760
        %6143 = vmatprep.subr.mxu0 %v6142
        %v6144 = vand.u32 %v296, 4294901760
        %v6145 = vsub.f32 %v296, %v6144
        %v6146 = vand.u32 %v6145, 4294901760
        %6147 = vmatpush1.msra.mxu0 %v6146
        %v6148 = vand.u32 %v293, 4294901760
        %v6149 = vsub.f32 %v293, %v6148
        %v6150 = vand.u32 %v6149, 4294901760
        %6151 = vmatprep.subr.mxu0 %v6150
        %v6152 = vand.u32 %v292, 4294901760
        %v6153 = vsub.f32 %v292, %v6152
        %v6154 = vand.u32 %v6153, 4294901760
        %6155 = vmatpush1.msra.mxu0 %v6154
        %v6156 = vand.u32 %v289, 4294901760
        %v6157 = vsub.f32 %v289, %v6156
        %v6158 = vand.u32 %v6157, 4294901760
        %6159 = vmatprep.subr.mxu0 %v6158
        %v6160 = vand.u32 %v288, 4294901760
        %v6161 = vsub.f32 %v288, %v6160
        %v6162 = vand.u32 %v6161, 4294901760
        %6163 = vmatpush1.msra.mxu0 %v6162
        %v6164 = vand.u32 %v285, 4294901760
        %v6165 = vsub.f32 %v285, %v6164
        %v6166 = vand.u32 %v6165, 4294901760
        %6167 = vmatprep.subr.mxu0 %v6166
        %v6168 = vand.u32 %v284, 4294901760
        %v6169 = vsub.f32 %v284, %v6168
        %v6170 = vand.u32 %v6169, 4294901760
        %6171 = vmatpush1.msra.mxu0 %v6170
        %v6172 = vand.u32 %v281, 4294901760
        %v6173 = vsub.f32 %v281, %v6172
        %v6174 = vand.u32 %v6173, 4294901760
        %6175 = vmatprep.subr.mxu0 %v6174
        %v6176 = vand.u32 %v280, 4294901760
        %v6177 = vsub.f32 %v280, %v6176
        %v6178 = vand.u32 %v6177, 4294901760
        %6179 = vmatpush1.msra.mxu0 %v6178
        %v6180 = vand.u32 %v277, 4294901760
        %v6181 = vsub.f32 %v277, %v6180
        %v6182 = vand.u32 %v6181, 4294901760
        %6183 = vmatprep.subr.mxu0 %v6182
        %v6184 = vand.u32 %v276, 4294901760
        %v6185 = vsub.f32 %v276, %v6184
        %v6186 = vand.u32 %v6185, 4294901760
        %6187 = vmatpush1.msra.mxu0 %v6186
        %6188 = vmatprep.subr.mxu0 0.0
        %6189 = vmatpush2.msra.mxu0 0.0
        %6190 = vmatprep.subr.mxu0 0.0
        %6191 = vmatpush2.msra.mxu0 0.0
        %6192 = vmatprep.subr.mxu0 0.0
        %6193 = vmatpush2.msra.mxu0 0.0
        %6194 = vmatprep.subr.mxu0 0.0
        %6195 = vmatpush2.msra.mxu0 0.0
        %6196 = vmatprep.subr.mxu0 0.0
        %6197 = vmatpush2.msra.mxu0 0.0
        %6198 = vmatprep.subr.mxu0 0.0
        %6199 = vmatpush2.msra.mxu0 0.0
        %6200 = vmatprep.subr.mxu0 0.0
        %6201 = vmatpush2.msra.mxu0 0.0
        %6202 = vmatprep.subr.mxu0 0.0
        %6203 = vmatpush2.msra.mxu0 0.0
        %6204 = vmatprep.subr.mxu0 0.0
        %6205 = vmatpush2.msra.mxu0 0.0
        %6206 = vmatprep.subr.mxu0 0.0
        %6207 = vmatpush2.msra.mxu0 0.0
        %6208 = vmatprep.subr.mxu0 0.0
        %6209 = vmatpush2.msra.mxu0 0.0
        %6210 = vmatprep.subr.mxu0 0.0
        %6211 = vmatpush2.msra.mxu0 0.0
        %6212 = vmatprep.subr.mxu0 0.0
        %6213 = vmatpush2.msra.mxu0 0.0
        %6214 = vmatprep.subr.mxu0 0.0
        %6215 = vmatpush2.msra.mxu0 0.0
        %6216 = vmatprep.subr.mxu0 0.0
        %6217 = vmatpush2.msra.mxu0 0.0
        %6218 = vmatprep.subr.mxu0 0.0
        %6219 = vmatpush2.msra.mxu0 0.0
        %6220 = vmatprep.mubr.f32.mxu0 0.0
        %v6221 = vand.u32 %v5476, 4294901760
        %6222 = vmatmul.mubr.f32.gmra.mxu0 %v6221
        %v6223 = vpop.f32.mrf.mxu0
        %v6224 = vadd.f32 %v6056, %v6223
        %v6225 = vpop.f32.mrf.mxu0
        %v6226 = vadd.f32 %v6058, %v6225
        %6227 = vdwg.mxu0
        %v6228 = vand.u32 %v337, 4294901760
        %6229 = vmatprep.subr.mxu0 %v6228
        %v6230 = vand.u32 %v336, 4294901760
        %6231 = vmatpush1.msra.mxu0 %v6230
        %v6232 = vand.u32 %v333, 4294901760
        %6233 = vmatprep.subr.mxu0 %v6232
        %v6234 = vand.u32 %v332, 4294901760
        %6235 = vmatpush1.msra.mxu0 %v6234
        %v6236 = vand.u32 %v329, 4294901760
        %6237 = vmatprep.subr.mxu0 %v6236
        %v6238 = vand.u32 %v328, 4294901760
        %6239 = vmatpush1.msra.mxu0 %v6238
        %v6240 = vand.u32 %v325, 4294901760
        %6241 = vmatprep.subr.mxu0 %v6240
        %v6242 = vand.u32 %v324, 4294901760
        %6243 = vmatpush1.msra.mxu0 %v6242
        %v6244 = vand.u32 %v321, 4294901760
        %6245 = vmatprep.subr.mxu0 %v6244
        %v6246 = vand.u32 %v320, 4294901760
        %6247 = vmatpush1.msra.mxu0 %v6246
        %v6248 = vand.u32 %v317, 4294901760
        %6249 = vmatprep.subr.mxu0 %v6248
        %v6250 = vand.u32 %v316, 4294901760
        %6251 = vmatpush1.msra.mxu0 %v6250
        %v6252 = vand.u32 %v313, 4294901760
        %6253 = vmatprep.subr.mxu0 %v6252
        %v6254 = vand.u32 %v312, 4294901760
        %6255 = vmatpush1.msra.mxu0 %v6254
        %v6256 = vand.u32 %v309, 4294901760
        %6257 = vmatprep.subr.mxu0 %v6256
        %v6258 = vand.u32 %v308, 4294901760
        %6259 = vmatpush1.msra.mxu0 %v6258
        %v6260 = vand.u32 %v305, 4294901760
        %6261 = vmatprep.subr.mxu0 %v6260
        %v6262 = vand.u32 %v304, 4294901760
        %6263 = vmatpush1.msra.mxu0 %v6262
        %v6264 = vand.u32 %v301, 4294901760
        %6265 = vmatprep.subr.mxu0 %v6264
        %v6266 = vand.u32 %v300, 4294901760
        %6267 = vmatpush1.msra.mxu0 %v6266
        %v6268 = vand.u32 %v297, 4294901760
        %6269 = vmatprep.subr.mxu0 %v6268
        %v6270 = vand.u32 %v296, 4294901760
        %6271 = vmatpush1.msra.mxu0 %v6270
        %v6272 = vand.u32 %v293, 4294901760
        %6273 = vmatprep.subr.mxu0 %v6272
        %v6274 = vand.u32 %v292, 4294901760
        %6275 = vmatpush1.msra.mxu0 %v6274
        %v6276 = vand.u32 %v289, 4294901760
        %6277 = vmatprep.subr.mxu0 %v6276
        %v6278 = vand.u32 %v288, 4294901760
        %6279 = vmatpush1.msra.mxu0 %v6278
        %v6280 = vand.u32 %v285, 4294901760
        %6281 = vmatprep.subr.mxu0 %v6280
        %v6282 = vand.u32 %v284, 4294901760
        %6283 = vmatpush1.msra.mxu0 %v6282
        %v6284 = vand.u32 %v281, 4294901760
        %6285 = vmatprep.subr.mxu0 %v6284
        %v6286 = vand.u32 %v280, 4294901760
        %6287 = vmatpush1.msra.mxu0 %v6286
        %v6288 = vand.u32 %v277, 4294901760
        %6289 = vmatprep.subr.mxu0 %v6288
        %v6290 = vand.u32 %v276, 4294901760
        %6291 = vmatpush1.msra.mxu0 %v6290
        %6292 = vmatprep.subr.mxu0 0.0
        %6293 = vmatpush2.msra.mxu0 0.0
        %6294 = vmatprep.subr.mxu0 0.0
        %6295 = vmatpush2.msra.mxu0 0.0
        %6296 = vmatprep.subr.mxu0 0.0
        %6297 = vmatpush2.msra.mxu0 0.0
        %6298 = vmatprep.subr.mxu0 0.0
        %6299 = vmatpush2.msra.mxu0 0.0
        %6300 = vmatprep.subr.mxu0 0.0
        %6301 = vmatpush2.msra.mxu0 0.0
        %6302 = vmatprep.subr.mxu0 0.0
        %6303 = vmatpush2.msra.mxu0 0.0
        %6304 = vmatprep.subr.mxu0 0.0
        %6305 = vmatpush2.msra.mxu0 0.0
        %6306 = vmatprep.subr.mxu0 0.0
        %6307 = vmatpush2.msra.mxu0 0.0
        %6308 = vmatprep.subr.mxu0 0.0
        %6309 = vmatpush2.msra.mxu0 0.0
        %6310 = vmatprep.subr.mxu0 0.0
        %6311 = vmatpush2.msra.mxu0 0.0
        %6312 = vmatprep.subr.mxu0 0.0
        %6313 = vmatpush2.msra.mxu0 0.0
        %6314 = vmatprep.subr.mxu0 0.0
        %6315 = vmatpush2.msra.mxu0 0.0
        %6316 = vmatprep.subr.mxu0 0.0
        %6317 = vmatpush2.msra.mxu0 0.0
        %6318 = vmatprep.subr.mxu0 0.0
        %6319 = vmatpush2.msra.mxu0 0.0
        %6320 = vmatprep.subr.mxu0 0.0
        %6321 = vmatpush2.msra.mxu0 0.0
        %6322 = vmatprep.subr.mxu0 0.0
        %6323 = vmatpush2.msra.mxu0 0.0
        %6324 = vmatprep.mubr.f32.mxu0 0.0
        %v6325 = vand.u32 %v5476, 4294901760
        %6326 = vmatmul.mubr.f32.gmra.mxu0 %v6325
        %v6327 = vpop.f32.mrf.mxu0
        %v6328 = vadd.f32 %v6224, %v6327
        %v6329 = vpop.f32.mrf.mxu0
        %v6330 = vadd.f32 %v6226, %v6329
        %6331 = vdwg.mxu0
        %v6332 = vand.u32 %v339, 4294901760
        %6333 = vmatprep.subr.mxu0 %v6332
        %v6334 = vand.u32 %v338, 4294901760
        %6335 = vmatpush1.msra.mxu0 %v6334
        %v6336 = vand.u32 %v335, 4294901760
        %6337 = vmatprep.subr.mxu0 %v6336
        %v6338 = vand.u32 %v334, 4294901760
        %6339 = vmatpush1.msra.mxu0 %v6338
        %v6340 = vand.u32 %v331, 4294901760
        %6341 = vmatprep.subr.mxu0 %v6340
        %v6342 = vand.u32 %v330, 4294901760
        %6343 = vmatpush1.msra.mxu0 %v6342
        %v6344 = vand.u32 %v327, 4294901760
        %6345 = vmatprep.subr.mxu0 %v6344
        %v6346 = vand.u32 %v326, 4294901760
        %6347 = vmatpush1.msra.mxu0 %v6346
        %v6348 = vand.u32 %v323, 4294901760
        %6349 = vmatprep.subr.mxu0 %v6348
        %v6350 = vand.u32 %v322, 4294901760
        %6351 = vmatpush1.msra.mxu0 %v6350
        %v6352 = vand.u32 %v319, 4294901760
        %6353 = vmatprep.subr.mxu0 %v6352
        %v6354 = vand.u32 %v318, 4294901760
        %6355 = vmatpush1.msra.mxu0 %v6354
        %v6356 = vand.u32 %v315, 4294901760
        %6357 = vmatprep.subr.mxu0 %v6356
        %v6358 = vand.u32 %v314, 4294901760
        %6359 = vmatpush1.msra.mxu0 %v6358
        %v6360 = vand.u32 %v311, 4294901760
        %6361 = vmatprep.subr.mxu0 %v6360
        %v6362 = vand.u32 %v310, 4294901760
        %6363 = vmatpush1.msra.mxu0 %v6362
        %v6364 = vand.u32 %v307, 4294901760
        %6365 = vmatprep.subr.mxu0 %v6364
        %v6366 = vand.u32 %v306, 4294901760
        %6367 = vmatpush1.msra.mxu0 %v6366
        %v6368 = vand.u32 %v303, 4294901760
        %6369 = vmatprep.subr.mxu0 %v6368
        %v6370 = vand.u32 %v302, 4294901760
        %6371 = vmatpush1.msra.mxu0 %v6370
        %v6372 = vand.u32 %v299, 4294901760
        %6373 = vmatprep.subr.mxu0 %v6372
        %v6374 = vand.u32 %v298, 4294901760
        %6375 = vmatpush1.msra.mxu0 %v6374
        %v6376 = vand.u32 %v295, 4294901760
        %6377 = vmatprep.subr.mxu0 %v6376
        %v6378 = vand.u32 %v294, 4294901760
        %6379 = vmatpush1.msra.mxu0 %v6378
        %v6380 = vand.u32 %v291, 4294901760
        %6381 = vmatprep.subr.mxu0 %v6380
        %v6382 = vand.u32 %v290, 4294901760
        %6383 = vmatpush1.msra.mxu0 %v6382
        %v6384 = vand.u32 %v287, 4294901760
        %6385 = vmatprep.subr.mxu0 %v6384
        %v6386 = vand.u32 %v286, 4294901760
        %6387 = vmatpush1.msra.mxu0 %v6386
        %v6388 = vand.u32 %v283, 4294901760
        %6389 = vmatprep.subr.mxu0 %v6388
        %v6390 = vand.u32 %v282, 4294901760
        %6391 = vmatpush1.msra.mxu0 %v6390
        %v6392 = vand.u32 %v279, 4294901760
        %6393 = vmatprep.subr.mxu0 %v6392
        %v6394 = vand.u32 %v278, 4294901760
        %6395 = vmatpush1.msra.mxu0 %v6394
        %6396 = vmatprep.subr.mxu0 0.0
        %6397 = vmatpush2.msra.mxu0 0.0
        %6398 = vmatprep.subr.mxu0 0.0
        %6399 = vmatpush2.msra.mxu0 0.0
        %6400 = vmatprep.subr.mxu0 0.0
        %6401 = vmatpush2.msra.mxu0 0.0
        %6402 = vmatprep.subr.mxu0 0.0
        %6403 = vmatpush2.msra.mxu0 0.0
        %6404 = vmatprep.subr.mxu0 0.0
        %6405 = vmatpush2.msra.mxu0 0.0
        %6406 = vmatprep.subr.mxu0 0.0
        %6407 = vmatpush2.msra.mxu0 0.0
        %6408 = vmatprep.subr.mxu0 0.0
        %6409 = vmatpush2.msra.mxu0 0.0
        %6410 = vmatprep.subr.mxu0 0.0
        %6411 = vmatpush2.msra.mxu0 0.0
        %6412 = vmatprep.subr.mxu0 0.0
        %6413 = vmatpush2.msra.mxu0 0.0
        %6414 = vmatprep.subr.mxu0 0.0
        %6415 = vmatpush2.msra.mxu0 0.0
        %6416 = vmatprep.subr.mxu0 0.0
        %6417 = vmatpush2.msra.mxu0 0.0
        %6418 = vmatprep.subr.mxu0 0.0
        %6419 = vmatpush2.msra.mxu0 0.0
        %6420 = vmatprep.subr.mxu0 0.0
        %6421 = vmatpush2.msra.mxu0 0.0
        %6422 = vmatprep.subr.mxu0 0.0
        %6423 = vmatpush2.msra.mxu0 0.0
        %6424 = vmatprep.subr.mxu0 0.0
        %6425 = vmatpush2.msra.mxu0 0.0
        %6426 = vmatprep.subr.mxu0 0.0
        %6427 = vmatpush2.msra.mxu0 0.0
        %6428 = vmatprep.mubr.f32.mxu0 0.0
        %v6429 = vand.u32 %v5476, 4294901760
        %v6430 = vsub.f32 %v5476, %v6429
        %v6431 = vand.u32 %v6430, 4294901760
        %v6432 = vsub.f32 %v6430, %v6431
        %v6433 = vand.u32 %v6432, 4294901760
        %6434 = vmatmul.mubr.f32.gmra.mxu0 %v6433
        %v6435 = vpop.f32.mrf.mxu0
        %v6436 = vadd.f32 0.0, %v6435
        %v6437 = vpop.f32.mrf.mxu0
        %v6438 = vadd.f32 0.0, %v6437
        %6439 = vdwg.mxu0
        %v6440 = vand.u32 %v339, 4294901760
        %v6441 = vsub.f32 %v339, %v6440
        %v6442 = vand.u32 %v6441, 4294901760
        %v6443 = vsub.f32 %v6441, %v6442
        %v6444 = vand.u32 %v6443, 4294901760
        %6445 = vmatprep.subr.mxu0 %v6444
        %v6446 = vand.u32 %v338, 4294901760
        %v6447 = vsub.f32 %v338, %v6446
        %v6448 = vand.u32 %v6447, 4294901760
        %v6449 = vsub.f32 %v6447, %v6448
        %v6450 = vand.u32 %v6449, 4294901760
        %6451 = vmatpush1.msra.mxu0 %v6450
        %v6452 = vand.u32 %v335, 4294901760
        %v6453 = vsub.f32 %v335, %v6452
        %v6454 = vand.u32 %v6453, 4294901760
        %v6455 = vsub.f32 %v6453, %v6454
        %v6456 = vand.u32 %v6455, 4294901760
        %6457 = vmatprep.subr.mxu0 %v6456
        %v6458 = vand.u32 %v334, 4294901760
        %v6459 = vsub.f32 %v334, %v6458
        %v6460 = vand.u32 %v6459, 4294901760
        %v6461 = vsub.f32 %v6459, %v6460
        %v6462 = vand.u32 %v6461, 4294901760
        %6463 = vmatpush1.msra.mxu0 %v6462
        %v6464 = vand.u32 %v331, 4294901760
        %v6465 = vsub.f32 %v331, %v6464
        %v6466 = vand.u32 %v6465, 4294901760
        %v6467 = vsub.f32 %v6465, %v6466
        %v6468 = vand.u32 %v6467, 4294901760
        %6469 = vmatprep.subr.mxu0 %v6468
        %v6470 = vand.u32 %v330, 4294901760
        %v6471 = vsub.f32 %v330, %v6470
        %v6472 = vand.u32 %v6471, 4294901760
        %v6473 = vsub.f32 %v6471, %v6472
        %v6474 = vand.u32 %v6473, 4294901760
        %6475 = vmatpush1.msra.mxu0 %v6474
        %v6476 = vand.u32 %v327, 4294901760
        %v6477 = vsub.f32 %v327, %v6476
        %v6478 = vand.u32 %v6477, 4294901760
        %v6479 = vsub.f32 %v6477, %v6478
        %v6480 = vand.u32 %v6479, 4294901760
        %6481 = vmatprep.subr.mxu0 %v6480
        %v6482 = vand.u32 %v326, 4294901760
        %v6483 = vsub.f32 %v326, %v6482
        %v6484 = vand.u32 %v6483, 4294901760
        %v6485 = vsub.f32 %v6483, %v6484
        %v6486 = vand.u32 %v6485, 4294901760
        %6487 = vmatpush1.msra.mxu0 %v6486
        %v6488 = vand.u32 %v323, 4294901760
        %v6489 = vsub.f32 %v323, %v6488
        %v6490 = vand.u32 %v6489, 4294901760
        %v6491 = vsub.f32 %v6489, %v6490
        %v6492 = vand.u32 %v6491, 4294901760
        %6493 = vmatprep.subr.mxu0 %v6492
        %v6494 = vand.u32 %v322, 4294901760
        %v6495 = vsub.f32 %v322, %v6494
        %v6496 = vand.u32 %v6495, 4294901760
        %v6497 = vsub.f32 %v6495, %v6496
        %v6498 = vand.u32 %v6497, 4294901760
        %6499 = vmatpush1.msra.mxu0 %v6498
        %v6500 = vand.u32 %v319, 4294901760
        %v6501 = vsub.f32 %v319, %v6500
        %v6502 = vand.u32 %v6501, 4294901760
        %v6503 = vsub.f32 %v6501, %v6502
        %v6504 = vand.u32 %v6503, 4294901760
        %6505 = vmatprep.subr.mxu0 %v6504
        %v6506 = vand.u32 %v318, 4294901760
        %v6507 = vsub.f32 %v318, %v6506
        %v6508 = vand.u32 %v6507, 4294901760
        %v6509 = vsub.f32 %v6507, %v6508
        %v6510 = vand.u32 %v6509, 4294901760
        %6511 = vmatpush1.msra.mxu0 %v6510
        %v6512 = vand.u32 %v315, 4294901760
        %v6513 = vsub.f32 %v315, %v6512
        %v6514 = vand.u32 %v6513, 4294901760
        %v6515 = vsub.f32 %v6513, %v6514
        %v6516 = vand.u32 %v6515, 4294901760
        %6517 = vmatprep.subr.mxu0 %v6516
        %v6518 = vand.u32 %v314, 4294901760
        %v6519 = vsub.f32 %v314, %v6518
        %v6520 = vand.u32 %v6519, 4294901760
        %v6521 = vsub.f32 %v6519, %v6520
        %v6522 = vand.u32 %v6521, 4294901760
        %6523 = vmatpush1.msra.mxu0 %v6522
        %v6524 = vand.u32 %v311, 4294901760
        %v6525 = vsub.f32 %v311, %v6524
        %v6526 = vand.u32 %v6525, 4294901760
        %v6527 = vsub.f32 %v6525, %v6526
        %v6528 = vand.u32 %v6527, 4294901760
        %6529 = vmatprep.subr.mxu0 %v6528
        %v6530 = vand.u32 %v310, 4294901760
        %v6531 = vsub.f32 %v310, %v6530
        %v6532 = vand.u32 %v6531, 4294901760
        %v6533 = vsub.f32 %v6531, %v6532
        %v6534 = vand.u32 %v6533, 4294901760
        %6535 = vmatpush1.msra.mxu0 %v6534
        %v6536 = vand.u32 %v307, 4294901760
        %v6537 = vsub.f32 %v307, %v6536
        %v6538 = vand.u32 %v6537, 4294901760
        %v6539 = vsub.f32 %v6537, %v6538
        %v6540 = vand.u32 %v6539, 4294901760
        %6541 = vmatprep.subr.mxu0 %v6540
        %v6542 = vand.u32 %v306, 4294901760
        %v6543 = vsub.f32 %v306, %v6542
        %v6544 = vand.u32 %v6543, 4294901760
        %v6545 = vsub.f32 %v6543, %v6544
        %v6546 = vand.u32 %v6545, 4294901760
        %6547 = vmatpush1.msra.mxu0 %v6546
        %v6548 = vand.u32 %v303, 4294901760
        %v6549 = vsub.f32 %v303, %v6548
        %v6550 = vand.u32 %v6549, 4294901760
        %v6551 = vsub.f32 %v6549, %v6550
        %v6552 = vand.u32 %v6551, 4294901760
        %6553 = vmatprep.subr.mxu0 %v6552
        %v6554 = vand.u32 %v302, 4294901760
        %v6555 = vsub.f32 %v302, %v6554
        %v6556 = vand.u32 %v6555, 4294901760
        %v6557 = vsub.f32 %v6555, %v6556
        %v6558 = vand.u32 %v6557, 4294901760
        %6559 = vmatpush1.msra.mxu0 %v6558
        %v6560 = vand.u32 %v299, 4294901760
        %v6561 = vsub.f32 %v299, %v6560
        %v6562 = vand.u32 %v6561, 4294901760
        %v6563 = vsub.f32 %v6561, %v6562
        %v6564 = vand.u32 %v6563, 4294901760
        %6565 = vmatprep.subr.mxu0 %v6564
        %v6566 = vand.u32 %v298, 4294901760
        %v6567 = vsub.f32 %v298, %v6566
        %v6568 = vand.u32 %v6567, 4294901760
        %v6569 = vsub.f32 %v6567, %v6568
        %v6570 = vand.u32 %v6569, 4294901760
        %6571 = vmatpush1.msra.mxu0 %v6570
        %v6572 = vand.u32 %v295, 4294901760
        %v6573 = vsub.f32 %v295, %v6572
        %v6574 = vand.u32 %v6573, 4294901760
        %v6575 = vsub.f32 %v6573, %v6574
        %v6576 = vand.u32 %v6575, 4294901760
        %6577 = vmatprep.subr.mxu0 %v6576
        %v6578 = vand.u32 %v294, 4294901760
        %v6579 = vsub.f32 %v294, %v6578
        %v6580 = vand.u32 %v6579, 4294901760
        %v6581 = vsub.f32 %v6579, %v6580
        %v6582 = vand.u32 %v6581, 4294901760
        %6583 = vmatpush1.msra.mxu0 %v6582
        %v6584 = vand.u32 %v291, 4294901760
        %v6585 = vsub.f32 %v291, %v6584
        %v6586 = vand.u32 %v6585, 4294901760
        %v6587 = vsub.f32 %v6585, %v6586
        %v6588 = vand.u32 %v6587, 4294901760
        %6589 = vmatprep.subr.mxu0 %v6588
        %v6590 = vand.u32 %v290, 4294901760
        %v6591 = vsub.f32 %v290, %v6590
        %v6592 = vand.u32 %v6591, 4294901760
        %v6593 = vsub.f32 %v6591, %v6592
        %v6594 = vand.u32 %v6593, 4294901760
        %6595 = vmatpush1.msra.mxu0 %v6594
        %v6596 = vand.u32 %v287, 4294901760
        %v6597 = vsub.f32 %v287, %v6596
        %v6598 = vand.u32 %v6597, 4294901760
        %v6599 = vsub.f32 %v6597, %v6598
        %v6600 = vand.u32 %v6599, 4294901760
        %6601 = vmatprep.subr.mxu0 %v6600
        %v6602 = vand.u32 %v286, 4294901760
        %v6603 = vsub.f32 %v286, %v6602
        %v6604 = vand.u32 %v6603, 4294901760
        %v6605 = vsub.f32 %v6603, %v6604
        %v6606 = vand.u32 %v6605, 4294901760
        %6607 = vmatpush1.msra.mxu0 %v6606
        %v6608 = vand.u32 %v283, 4294901760
        %v6609 = vsub.f32 %v283, %v6608
        %v6610 = vand.u32 %v6609, 4294901760
        %v6611 = vsub.f32 %v6609, %v6610
        %v6612 = vand.u32 %v6611, 4294901760
        %6613 = vmatprep.subr.mxu0 %v6612
        %v6614 = vand.u32 %v282, 4294901760
        %v6615 = vsub.f32 %v282, %v6614
        %v6616 = vand.u32 %v6615, 4294901760
        %v6617 = vsub.f32 %v6615, %v6616
        %v6618 = vand.u32 %v6617, 4294901760
        %6619 = vmatpush1.msra.mxu0 %v6618
        %v6620 = vand.u32 %v279, 4294901760
        %v6621 = vsub.f32 %v279, %v6620
        %v6622 = vand.u32 %v6621, 4294901760
        %v6623 = vsub.f32 %v6621, %v6622
        %v6624 = vand.u32 %v6623, 4294901760
        %6625 = vmatprep.subr.mxu0 %v6624
        %v6626 = vand.u32 %v278, 4294901760
        %v6627 = vsub.f32 %v278, %v6626
        %v6628 = vand.u32 %v6627, 4294901760
        %v6629 = vsub.f32 %v6627, %v6628
        %v6630 = vand.u32 %v6629, 4294901760
        %6631 = vmatpush1.msra.mxu0 %v6630
        %6632 = vmatprep.subr.mxu0 0.0
        %6633 = vmatpush2.msra.mxu0 0.0
        %6634 = vmatprep.subr.mxu0 0.0
        %6635 = vmatpush2.msra.mxu0 0.0
        %6636 = vmatprep.subr.mxu0 0.0
        %6637 = vmatpush2.msra.mxu0 0.0
        %6638 = vmatprep.subr.mxu0 0.0
        %6639 = vmatpush2.msra.mxu0 0.0
        %6640 = vmatprep.subr.mxu0 0.0
        %6641 = vmatpush2.msra.mxu0 0.0
        %6642 = vmatprep.subr.mxu0 0.0
        %6643 = vmatpush2.msra.mxu0 0.0
        %6644 = vmatprep.subr.mxu0 0.0
        %6645 = vmatpush2.msra.mxu0 0.0
        %6646 = vmatprep.subr.mxu0 0.0
        %6647 = vmatpush2.msra.mxu0 0.0
        %6648 = vmatprep.subr.mxu0 0.0
        %6649 = vmatpush2.msra.mxu0 0.0
        %6650 = vmatprep.subr.mxu0 0.0
        %6651 = vmatpush2.msra.mxu0 0.0
        %6652 = vmatprep.subr.mxu0 0.0
        %6653 = vmatpush2.msra.mxu0 0.0
        %6654 = vmatprep.subr.mxu0 0.0
        %6655 = vmatpush2.msra.mxu0 0.0
        %6656 = vmatprep.subr.mxu0 0.0
        %6657 = vmatpush2.msra.mxu0 0.0
        %6658 = vmatprep.subr.mxu0 0.0
        %6659 = vmatpush2.msra.mxu0 0.0
        %6660 = vmatprep.subr.mxu0 0.0
        %6661 = vmatpush2.msra.mxu0 0.0
        %6662 = vmatprep.subr.mxu0 0.0
        %6663 = vmatpush2.msra.mxu0 0.0
        %6664 = vmatprep.mubr.f32.mxu0 0.0
        %v6665 = vand.u32 %v5476, 4294901760
        %6666 = vmatmul.mubr.f32.gmra.mxu0 %v6665
        %v6667 = vpop.f32.mrf.mxu0
        %v6668 = vadd.f32 %v6436, %v6667
        %v6669 = vpop.f32.mrf.mxu0
        %v6670 = vadd.f32 %v6438, %v6669
        %6671 = vdwg.mxu0
        %v6672 = vand.u32 %v339, 4294901760
        %v6673 = vsub.f32 %v339, %v6672
        %6674 = vmatprep.subr.mxu0 %v6673
        %v6675 = vand.u32 %v338, 4294901760
        %v6676 = vsub.f32 %v338, %v6675
        %6677 = vmatpush1.msra.mxu0 %v6676
        %v6678 = vand.u32 %v335, 4294901760
        %v6679 = vsub.f32 %v335, %v6678
        %6680 = vmatprep.subr.mxu0 %v6679
        %v6681 = vand.u32 %v334, 4294901760
        %v6682 = vsub.f32 %v334, %v6681
        %6683 = vmatpush1.msra.mxu0 %v6682
        %v6684 = vand.u32 %v331, 4294901760
        %v6685 = vsub.f32 %v331, %v6684
        %6686 = vmatprep.subr.mxu0 %v6685
        %v6687 = vand.u32 %v330, 4294901760
        %v6688 = vsub.f32 %v330, %v6687
        %6689 = vmatpush1.msra.mxu0 %v6688
        %v6690 = vand.u32 %v327, 4294901760
        %v6691 = vsub.f32 %v327, %v6690
        %6692 = vmatprep.subr.mxu0 %v6691
        %v6693 = vand.u32 %v326, 4294901760
        %v6694 = vsub.f32 %v326, %v6693
        %6695 = vmatpush1.msra.mxu0 %v6694
        %v6696 = vand.u32 %v323, 4294901760
        %v6697 = vsub.f32 %v323, %v6696
        %6698 = vmatprep.subr.mxu0 %v6697
        %v6699 = vand.u32 %v322, 4294901760
        %v6700 = vsub.f32 %v322, %v6699
        %6701 = vmatpush1.msra.mxu0 %v6700
        %v6702 = vand.u32 %v319, 4294901760
        %v6703 = vsub.f32 %v319, %v6702
        %6704 = vmatprep.subr.mxu0 %v6703
        %v6705 = vand.u32 %v318, 4294901760
        %v6706 = vsub.f32 %v318, %v6705
        %6707 = vmatpush1.msra.mxu0 %v6706
        %v6708 = vand.u32 %v315, 4294901760
        %v6709 = vsub.f32 %v315, %v6708
        %6710 = vmatprep.subr.mxu0 %v6709
        %v6711 = vand.u32 %v314, 4294901760
        %v6712 = vsub.f32 %v314, %v6711
        %6713 = vmatpush1.msra.mxu0 %v6712
        %v6714 = vand.u32 %v311, 4294901760
        %v6715 = vsub.f32 %v311, %v6714
        %6716 = vmatprep.subr.mxu0 %v6715
        %v6717 = vand.u32 %v310, 4294901760
        %v6718 = vsub.f32 %v310, %v6717
        %6719 = vmatpush1.msra.mxu0 %v6718
        %v6720 = vand.u32 %v307, 4294901760
        %v6721 = vsub.f32 %v307, %v6720
        %6722 = vmatprep.subr.mxu0 %v6721
        %v6723 = vand.u32 %v306, 4294901760
        %v6724 = vsub.f32 %v306, %v6723
        %6725 = vmatpush1.msra.mxu0 %v6724
        %v6726 = vand.u32 %v303, 4294901760
        %v6727 = vsub.f32 %v303, %v6726
        %6728 = vmatprep.subr.mxu0 %v6727
        %v6729 = vand.u32 %v302, 4294901760
        %v6730 = vsub.f32 %v302, %v6729
        %6731 = vmatpush1.msra.mxu0 %v6730
        %v6732 = vand.u32 %v299, 4294901760
        %v6733 = vsub.f32 %v299, %v6732
        %6734 = vmatprep.subr.mxu0 %v6733
        %v6735 = vand.u32 %v298, 4294901760
        %v6736 = vsub.f32 %v298, %v6735
        %6737 = vmatpush1.msra.mxu0 %v6736
        %v6738 = vand.u32 %v295, 4294901760
        %v6739 = vsub.f32 %v295, %v6738
        %6740 = vmatprep.subr.mxu0 %v6739
        %v6741 = vand.u32 %v294, 4294901760
        %v6742 = vsub.f32 %v294, %v6741
        %6743 = vmatpush1.msra.mxu0 %v6742
        %v6744 = vand.u32 %v291, 4294901760
        %v6745 = vsub.f32 %v291, %v6744
        %6746 = vmatprep.subr.mxu0 %v6745
        %v6747 = vand.u32 %v290, 4294901760
        %v6748 = vsub.f32 %v290, %v6747
        %6749 = vmatpush1.msra.mxu0 %v6748
        %v6750 = vand.u32 %v287, 4294901760
        %v6751 = vsub.f32 %v287, %v6750
        %6752 = vmatprep.subr.mxu0 %v6751
        %v6753 = vand.u32 %v286, 4294901760
        %v6754 = vsub.f32 %v286, %v6753
        %6755 = vmatpush1.msra.mxu0 %v6754
        %v6756 = vand.u32 %v283, 4294901760
        %v6757 = vsub.f32 %v283, %v6756
        %6758 = vmatprep.subr.mxu0 %v6757
        %v6759 = vand.u32 %v282, 4294901760
        %v6760 = vsub.f32 %v282, %v6759
        %6761 = vmatpush1.msra.mxu0 %v6760
        %v6762 = vand.u32 %v279, 4294901760
        %v6763 = vsub.f32 %v279, %v6762
        %6764 = vmatprep.subr.mxu0 %v6763
        %v6765 = vand.u32 %v278, 4294901760
        %v6766 = vsub.f32 %v278, %v6765
        %6767 = vmatpush1.msra.mxu0 %v6766
        %6768 = vmatprep.subr.mxu0 0.0
        %6769 = vmatpush2.msra.mxu0 0.0
        %6770 = vmatprep.subr.mxu0 0.0
        %6771 = vmatpush2.msra.mxu0 0.0
        %6772 = vmatprep.subr.mxu0 0.0
        %6773 = vmatpush2.msra.mxu0 0.0
        %6774 = vmatprep.subr.mxu0 0.0
        %6775 = vmatpush2.msra.mxu0 0.0
        %6776 = vmatprep.subr.mxu0 0.0
        %6777 = vmatpush2.msra.mxu0 0.0
        %6778 = vmatprep.subr.mxu0 0.0
        %6779 = vmatpush2.msra.mxu0 0.0
        %6780 = vmatprep.subr.mxu0 0.0
        %6781 = vmatpush2.msra.mxu0 0.0
        %6782 = vmatprep.subr.mxu0 0.0
        %6783 = vmatpush2.msra.mxu0 0.0
        %6784 = vmatprep.subr.mxu0 0.0
        %6785 = vmatpush2.msra.mxu0 0.0
        %6786 = vmatprep.subr.mxu0 0.0
        %6787 = vmatpush2.msra.mxu0 0.0
        %6788 = vmatprep.subr.mxu0 0.0
        %6789 = vmatpush2.msra.mxu0 0.0
        %6790 = vmatprep.subr.mxu0 0.0
        %6791 = vmatpush2.msra.mxu0 0.0
        %6792 = vmatprep.subr.mxu0 0.0
        %6793 = vmatpush2.msra.mxu0 0.0
        %6794 = vmatprep.subr.mxu0 0.0
        %6795 = vmatpush2.msra.mxu0 0.0
        %6796 = vmatprep.subr.mxu0 0.0
        %6797 = vmatpush2.msra.mxu0 0.0
        %6798 = vmatprep.subr.mxu0 0.0
        %6799 = vmatpush2.msra.mxu0 0.0
        %6800 = vmatprep.mubr.f32.mxu0 0.0
        %v6801 = vand.u32 %v5476, 4294901760
        %v6802 = vsub.f32 %v5476, %v6801
        %6803 = vmatmul.mubr.f32.gmra.mxu0 %v6802
        %v6804 = vpop.f32.mrf.mxu0
        %v6805 = vadd.f32 %v6668, %v6804
        %v6806 = vpop.f32.mrf.mxu0
        %v6807 = vadd.f32 %v6670, %v6806
        %6808 = vdwg.mxu0
        %v6809 = vand.u32 %v339, 4294901760
        %6810 = vmatprep.subr.mxu0 %v6809
        %v6811 = vand.u32 %v338, 4294901760
        %6812 = vmatpush1.msra.mxu0 %v6811
        %v6813 = vand.u32 %v335, 4294901760
        %6814 = vmatprep.subr.mxu0 %v6813
        %v6815 = vand.u32 %v334, 4294901760
        %6816 = vmatpush1.msra.mxu0 %v6815
        %v6817 = vand.u32 %v331, 4294901760
        %6818 = vmatprep.subr.mxu0 %v6817
        %v6819 = vand.u32 %v330, 4294901760
        %6820 = vmatpush1.msra.mxu0 %v6819
        %v6821 = vand.u32 %v327, 4294901760
        %6822 = vmatprep.subr.mxu0 %v6821
        %v6823 = vand.u32 %v326, 4294901760
        %6824 = vmatpush1.msra.mxu0 %v6823
        %v6825 = vand.u32 %v323, 4294901760
        %6826 = vmatprep.subr.mxu0 %v6825
        %v6827 = vand.u32 %v322, 4294901760
        %6828 = vmatpush1.msra.mxu0 %v6827
        %v6829 = vand.u32 %v319, 4294901760
        %6830 = vmatprep.subr.mxu0 %v6829
        %v6831 = vand.u32 %v318, 4294901760
        %6832 = vmatpush1.msra.mxu0 %v6831
        %v6833 = vand.u32 %v315, 4294901760
        %6834 = vmatprep.subr.mxu0 %v6833
        %v6835 = vand.u32 %v314, 4294901760
        %6836 = vmatpush1.msra.mxu0 %v6835
        %v6837 = vand.u32 %v311, 4294901760
        %6838 = vmatprep.subr.mxu0 %v6837
        %v6839 = vand.u32 %v310, 4294901760
        %6840 = vmatpush1.msra.mxu0 %v6839
        %v6841 = vand.u32 %v307, 4294901760
        %6842 = vmatprep.subr.mxu0 %v6841
        %v6843 = vand.u32 %v306, 4294901760
        %6844 = vmatpush1.msra.mxu0 %v6843
        %v6845 = vand.u32 %v303, 4294901760
        %6846 = vmatprep.subr.mxu0 %v6845
        %v6847 = vand.u32 %v302, 4294901760
        %6848 = vmatpush1.msra.mxu0 %v6847
        %v6849 = vand.u32 %v299, 4294901760
        %6850 = vmatprep.subr.mxu0 %v6849
        %v6851 = vand.u32 %v298, 4294901760
        %6852 = vmatpush1.msra.mxu0 %v6851
        %v6853 = vand.u32 %v295, 4294901760
        %6854 = vmatprep.subr.mxu0 %v6853
        %v6855 = vand.u32 %v294, 4294901760
        %6856 = vmatpush1.msra.mxu0 %v6855
        %v6857 = vand.u32 %v291, 4294901760
        %6858 = vmatprep.subr.mxu0 %v6857
        %v6859 = vand.u32 %v290, 4294901760
        %6860 = vmatpush1.msra.mxu0 %v6859
        %v6861 = vand.u32 %v287, 4294901760
        %6862 = vmatprep.subr.mxu0 %v6861
        %v6863 = vand.u32 %v286, 4294901760
        %6864 = vmatpush1.msra.mxu0 %v6863
        %v6865 = vand.u32 %v283, 4294901760
        %6866 = vmatprep.subr.mxu0 %v6865
        %v6867 = vand.u32 %v282, 4294901760
        %6868 = vmatpush1.msra.mxu0 %v6867
        %v6869 = vand.u32 %v279, 4294901760
        %6870 = vmatprep.subr.mxu0 %v6869
        %v6871 = vand.u32 %v278, 4294901760
        %6872 = vmatpush1.msra.mxu0 %v6871
        %6873 = vmatprep.subr.mxu0 0.0
        %6874 = vmatpush2.msra.mxu0 0.0
        %6875 = vmatprep.subr.mxu0 0.0
        %6876 = vmatpush2.msra.mxu0 0.0
        %6877 = vmatprep.subr.mxu0 0.0
        %6878 = vmatpush2.msra.mxu0 0.0
        %6879 = vmatprep.subr.mxu0 0.0
        %6880 = vmatpush2.msra.mxu0 0.0
        %6881 = vmatprep.subr.mxu0 0.0
        %6882 = vmatpush2.msra.mxu0 0.0
        %6883 = vmatprep.subr.mxu0 0.0
        %6884 = vmatpush2.msra.mxu0 0.0
        %6885 = vmatprep.subr.mxu0 0.0
        %6886 = vmatpush2.msra.mxu0 0.0
        %6887 = vmatprep.subr.mxu0 0.0
        %6888 = vmatpush2.msra.mxu0 0.0
        %6889 = vmatprep.subr.mxu0 0.0
        %6890 = vmatpush2.msra.mxu0 0.0
        %6891 = vmatprep.subr.mxu0 0.0
        %6892 = vmatpush2.msra.mxu0 0.0
        %6893 = vmatprep.subr.mxu0 0.0
        %6894 = vmatpush2.msra.mxu0 0.0
        %6895 = vmatprep.subr.mxu0 0.0
        %6896 = vmatpush2.msra.mxu0 0.0
        %6897 = vmatprep.subr.mxu0 0.0
        %6898 = vmatpush2.msra.mxu0 0.0
        %6899 = vmatprep.subr.mxu0 0.0
        %6900 = vmatpush2.msra.mxu0 0.0
        %6901 = vmatprep.subr.mxu0 0.0
        %6902 = vmatpush2.msra.mxu0 0.0
        %6903 = vmatprep.subr.mxu0 0.0
        %6904 = vmatpush2.msra.mxu0 0.0
        %6905 = vmatprep.mubr.f32.mxu0 0.0
        %v6906 = vand.u32 %v5476, 4294901760
        %v6907 = vsub.f32 %v5476, %v6906
        %v6908 = vand.u32 %v6907, 4294901760
        %6909 = vmatmul.mubr.f32.gmra.mxu0 %v6908
        %v6910 = vpop.f32.mrf.mxu0
        %v6911 = vadd.f32 %v6805, %v6910
        %v6912 = vpop.f32.mrf.mxu0
        %v6913 = vadd.f32 %v6807, %v6912
        %6914 = vdwg.mxu0
        %v6915 = vand.u32 %v339, 4294901760
        %v6916 = vsub.f32 %v339, %v6915
        %v6917 = vand.u32 %v6916, 4294901760
        %6918 = vmatprep.subr.mxu0 %v6917
        %v6919 = vand.u32 %v338, 4294901760
        %v6920 = vsub.f32 %v338, %v6919
        %v6921 = vand.u32 %v6920, 4294901760
        %6922 = vmatpush1.msra.mxu0 %v6921
        %v6923 = vand.u32 %v335, 4294901760
        %v6924 = vsub.f32 %v335, %v6923
        %v6925 = vand.u32 %v6924, 4294901760
        %6926 = vmatprep.subr.mxu0 %v6925
        %v6927 = vand.u32 %v334, 4294901760
        %v6928 = vsub.f32 %v334, %v6927
        %v6929 = vand.u32 %v6928, 4294901760
        %6930 = vmatpush1.msra.mxu0 %v6929
        %v6931 = vand.u32 %v331, 4294901760
        %v6932 = vsub.f32 %v331, %v6931
        %v6933 = vand.u32 %v6932, 4294901760
        %6934 = vmatprep.subr.mxu0 %v6933
        %v6935 = vand.u32 %v330, 4294901760
        %v6936 = vsub.f32 %v330, %v6935
        %v6937 = vand.u32 %v6936, 4294901760
        %6938 = vmatpush1.msra.mxu0 %v6937
        %v6939 = vand.u32 %v327, 4294901760
        %v6940 = vsub.f32 %v327, %v6939
        %v6941 = vand.u32 %v6940, 4294901760
        %6942 = vmatprep.subr.mxu0 %v6941
        %v6943 = vand.u32 %v326, 4294901760
        %v6944 = vsub.f32 %v326, %v6943
        %v6945 = vand.u32 %v6944, 4294901760
        %6946 = vmatpush1.msra.mxu0 %v6945
        %v6947 = vand.u32 %v323, 4294901760
        %v6948 = vsub.f32 %v323, %v6947
        %v6949 = vand.u32 %v6948, 4294901760
        %6950 = vmatprep.subr.mxu0 %v6949
        %v6951 = vand.u32 %v322, 4294901760
        %v6952 = vsub.f32 %v322, %v6951
        %v6953 = vand.u32 %v6952, 4294901760
        %6954 = vmatpush1.msra.mxu0 %v6953
        %v6955 = vand.u32 %v319, 4294901760
        %v6956 = vsub.f32 %v319, %v6955
        %v6957 = vand.u32 %v6956, 4294901760
        %6958 = vmatprep.subr.mxu0 %v6957
        %v6959 = vand.u32 %v318, 4294901760
        %v6960 = vsub.f32 %v318, %v6959
        %v6961 = vand.u32 %v6960, 4294901760
        %6962 = vmatpush1.msra.mxu0 %v6961
        %v6963 = vand.u32 %v315, 4294901760
        %v6964 = vsub.f32 %v315, %v6963
        %v6965 = vand.u32 %v6964, 4294901760
        %6966 = vmatprep.subr.mxu0 %v6965
        %v6967 = vand.u32 %v314, 4294901760
        %v6968 = vsub.f32 %v314, %v6967
        %v6969 = vand.u32 %v6968, 4294901760
        %6970 = vmatpush1.msra.mxu0 %v6969
        %v6971 = vand.u32 %v311, 4294901760
        %v6972 = vsub.f32 %v311, %v6971
        %v6973 = vand.u32 %v6972, 4294901760
        %6974 = vmatprep.subr.mxu0 %v6973
        %v6975 = vand.u32 %v310, 4294901760
        %v6976 = vsub.f32 %v310, %v6975
        %v6977 = vand.u32 %v6976, 4294901760
        %6978 = vmatpush1.msra.mxu0 %v6977
        %v6979 = vand.u32 %v307, 4294901760
        %v6980 = vsub.f32 %v307, %v6979
        %v6981 = vand.u32 %v6980, 4294901760
        %6982 = vmatprep.subr.mxu0 %v6981
        %v6983 = vand.u32 %v306, 4294901760
        %v6984 = vsub.f32 %v306, %v6983
        %v6985 = vand.u32 %v6984, 4294901760
        %6986 = vmatpush1.msra.mxu0 %v6985
        %v6987 = vand.u32 %v303, 4294901760
        %v6988 = vsub.f32 %v303, %v6987
        %v6989 = vand.u32 %v6988, 4294901760
        %6990 = vmatprep.subr.mxu0 %v6989
        %v6991 = vand.u32 %v302, 4294901760
        %v6992 = vsub.f32 %v302, %v6991
        %v6993 = vand.u32 %v6992, 4294901760
        %6994 = vmatpush1.msra.mxu0 %v6993
        %v6995 = vand.u32 %v299, 4294901760
        %v6996 = vsub.f32 %v299, %v6995
        %v6997 = vand.u32 %v6996, 4294901760
        %6998 = vmatprep.subr.mxu0 %v6997
        %v6999 = vand.u32 %v298, 4294901760
        %v7000 = vsub.f32 %v298, %v6999
        %v7001 = vand.u32 %v7000, 4294901760
        %7002 = vmatpush1.msra.mxu0 %v7001
        %v7003 = vand.u32 %v295, 4294901760
        %v7004 = vsub.f32 %v295, %v7003
        %v7005 = vand.u32 %v7004, 4294901760
        %7006 = vmatprep.subr.mxu0 %v7005
        %v7007 = vand.u32 %v294, 4294901760
        %v7008 = vsub.f32 %v294, %v7007
        %v7009 = vand.u32 %v7008, 4294901760
        %7010 = vmatpush1.msra.mxu0 %v7009
        %v7011 = vand.u32 %v291, 4294901760
        %v7012 = vsub.f32 %v291, %v7011
        %v7013 = vand.u32 %v7012, 4294901760
        %7014 = vmatprep.subr.mxu0 %v7013
        %v7015 = vand.u32 %v290, 4294901760
        %v7016 = vsub.f32 %v290, %v7015
        %v7017 = vand.u32 %v7016, 4294901760
        %7018 = vmatpush1.msra.mxu0 %v7017
        %v7019 = vand.u32 %v287, 4294901760
        %v7020 = vsub.f32 %v287, %v7019
        %v7021 = vand.u32 %v7020, 4294901760
        %7022 = vmatprep.subr.mxu0 %v7021
        %v7023 = vand.u32 %v286, 4294901760
        %v7024 = vsub.f32 %v286, %v7023
        %v7025 = vand.u32 %v7024, 4294901760
        %7026 = vmatpush1.msra.mxu0 %v7025
        %v7027 = vand.u32 %v283, 4294901760
        %v7028 = vsub.f32 %v283, %v7027
        %v7029 = vand.u32 %v7028, 4294901760
        %7030 = vmatprep.subr.mxu0 %v7029
        %v7031 = vand.u32 %v282, 4294901760
        %v7032 = vsub.f32 %v282, %v7031
        %v7033 = vand.u32 %v7032, 4294901760
        %7034 = vmatpush1.msra.mxu0 %v7033
        %v7035 = vand.u32 %v279, 4294901760
        %v7036 = vsub.f32 %v279, %v7035
        %v7037 = vand.u32 %v7036, 4294901760
        %7038 = vmatprep.subr.mxu0 %v7037
        %v7039 = vand.u32 %v278, 4294901760
        %v7040 = vsub.f32 %v278, %v7039
        %v7041 = vand.u32 %v7040, 4294901760
        %7042 = vmatpush1.msra.mxu0 %v7041
        %7043 = vmatprep.subr.mxu0 0.0
        %7044 = vmatpush2.msra.mxu0 0.0
        %7045 = vmatprep.subr.mxu0 0.0
        %7046 = vmatpush2.msra.mxu0 0.0
        %7047 = vmatprep.subr.mxu0 0.0
        %7048 = vmatpush2.msra.mxu0 0.0
        %7049 = vmatprep.subr.mxu0 0.0
        %7050 = vmatpush2.msra.mxu0 0.0
        %7051 = vmatprep.subr.mxu0 0.0
        %7052 = vmatpush2.msra.mxu0 0.0
        %7053 = vmatprep.subr.mxu0 0.0
        %7054 = vmatpush2.msra.mxu0 0.0
        %7055 = vmatprep.subr.mxu0 0.0
        %7056 = vmatpush2.msra.mxu0 0.0
        %7057 = vmatprep.subr.mxu0 0.0
        %7058 = vmatpush2.msra.mxu0 0.0
        %7059 = vmatprep.subr.mxu0 0.0
        %7060 = vmatpush2.msra.mxu0 0.0
        %7061 = vmatprep.subr.mxu0 0.0
        %7062 = vmatpush2.msra.mxu0 0.0
        %7063 = vmatprep.subr.mxu0 0.0
        %7064 = vmatpush2.msra.mxu0 0.0
        %7065 = vmatprep.subr.mxu0 0.0
        %7066 = vmatpush2.msra.mxu0 0.0
        %7067 = vmatprep.subr.mxu0 0.0
        %7068 = vmatpush2.msra.mxu0 0.0
        %7069 = vmatprep.subr.mxu0 0.0
        %7070 = vmatpush2.msra.mxu0 0.0
        %7071 = vmatprep.subr.mxu0 0.0
        %7072 = vmatpush2.msra.mxu0 0.0
        %7073 = vmatprep.subr.mxu0 0.0
        %7074 = vmatpush2.msra.mxu0 0.0
        %7075 = vmatprep.mubr.f32.mxu0 0.0
        %v7076 = vand.u32 %v5476, 4294901760
        %7077 = vmatmul.mubr.f32.gmra.mxu0 %v7076
        %v7078 = vpop.f32.mrf.mxu0
        %v7079 = vadd.f32 %v6911, %v7078
        %v7080 = vpop.f32.mrf.mxu0
        %v7081 = vadd.f32 %v6913, %v7080
        %7082 = vdwg.mxu0
        %v7083 = vand.u32 %v339, 4294901760
        %7084 = vmatprep.subr.mxu0 %v7083
        %v7085 = vand.u32 %v338, 4294901760
        %7086 = vmatpush1.msra.mxu0 %v7085
        %v7087 = vand.u32 %v335, 4294901760
        %7088 = vmatprep.subr.mxu0 %v7087
        %v7089 = vand.u32 %v334, 4294901760
        %7090 = vmatpush1.msra.mxu0 %v7089
        %v7091 = vand.u32 %v331, 4294901760
        %7092 = vmatprep.subr.mxu0 %v7091
        %v7093 = vand.u32 %v330, 4294901760
        %7094 = vmatpush1.msra.mxu0 %v7093
        %v7095 = vand.u32 %v327, 4294901760
        %7096 = vmatprep.subr.mxu0 %v7095
        %v7097 = vand.u32 %v326, 4294901760
        %7098 = vmatpush1.msra.mxu0 %v7097
        %v7099 = vand.u32 %v323, 4294901760
        %7100 = vmatprep.subr.mxu0 %v7099
        %v7101 = vand.u32 %v322, 4294901760
        %7102 = vmatpush1.msra.mxu0 %v7101
        %v7103 = vand.u32 %v319, 4294901760
        %7104 = vmatprep.subr.mxu0 %v7103
        %v7105 = vand.u32 %v318, 4294901760
        %7106 = vmatpush1.msra.mxu0 %v7105
        %v7107 = vand.u32 %v315, 4294901760
        %7108 = vmatprep.subr.mxu0 %v7107
        %v7109 = vand.u32 %v314, 4294901760
        %7110 = vmatpush1.msra.mxu0 %v7109
        %v7111 = vand.u32 %v311, 4294901760
        %7112 = vmatprep.subr.mxu0 %v7111
        %v7113 = vand.u32 %v310, 4294901760
        %7114 = vmatpush1.msra.mxu0 %v7113
        %v7115 = vand.u32 %v307, 4294901760
        %7116 = vmatprep.subr.mxu0 %v7115
        %v7117 = vand.u32 %v306, 4294901760
        %7118 = vmatpush1.msra.mxu0 %v7117
        %v7119 = vand.u32 %v303, 4294901760
        %7120 = vmatprep.subr.mxu0 %v7119
        %v7121 = vand.u32 %v302, 4294901760
        %7122 = vmatpush1.msra.mxu0 %v7121
        %v7123 = vand.u32 %v299, 4294901760
        %7124 = vmatprep.subr.mxu0 %v7123
        %v7125 = vand.u32 %v298, 4294901760
        %7126 = vmatpush1.msra.mxu0 %v7125
        %v7127 = vand.u32 %v295, 4294901760
        %7128 = vmatprep.subr.mxu0 %v7127
        %v7129 = vand.u32 %v294, 4294901760
        %7130 = vmatpush1.msra.mxu0 %v7129
        %v7131 = vand.u32 %v291, 4294901760
        %7132 = vmatprep.subr.mxu0 %v7131
        %v7133 = vand.u32 %v290, 4294901760
        %7134 = vmatpush1.msra.mxu0 %v7133
        %v7135 = vand.u32 %v287, 4294901760
        %7136 = vmatprep.subr.mxu0 %v7135
        %v7137 = vand.u32 %v286, 4294901760
        %7138 = vmatpush1.msra.mxu0 %v7137
        %v7139 = vand.u32 %v283, 4294901760
        %7140 = vmatprep.subr.mxu0 %v7139
        %v7141 = vand.u32 %v282, 4294901760
        %7142 = vmatpush1.msra.mxu0 %v7141
        %v7143 = vand.u32 %v279, 4294901760
        %7144 = vmatprep.subr.mxu0 %v7143
        %v7145 = vand.u32 %v278, 4294901760
        %7146 = vmatpush1.msra.mxu0 %v7145
        %7147 = vmatprep.subr.mxu0 0.0
        %7148 = vmatpush2.msra.mxu0 0.0
        %7149 = vmatprep.subr.mxu0 0.0
        %7150 = vmatpush2.msra.mxu0 0.0
        %7151 = vmatprep.subr.mxu0 0.0
        %7152 = vmatpush2.msra.mxu0 0.0
        %7153 = vmatprep.subr.mxu0 0.0
        %7154 = vmatpush2.msra.mxu0 0.0
        %7155 = vmatprep.subr.mxu0 0.0
        %7156 = vmatpush2.msra.mxu0 0.0
        %7157 = vmatprep.subr.mxu0 0.0
        %7158 = vmatpush2.msra.mxu0 0.0
        %7159 = vmatprep.subr.mxu0 0.0
        %7160 = vmatpush2.msra.mxu0 0.0
        %7161 = vmatprep.subr.mxu0 0.0
        %7162 = vmatpush2.msra.mxu0 0.0
        %7163 = vmatprep.subr.mxu0 0.0
        %7164 = vmatpush2.msra.mxu0 0.0
        %7165 = vmatprep.subr.mxu0 0.0
        %7166 = vmatpush2.msra.mxu0 0.0
        %7167 = vmatprep.subr.mxu0 0.0
        %7168 = vmatpush2.msra.mxu0 0.0
        %7169 = vmatprep.subr.mxu0 0.0
        %7170 = vmatpush2.msra.mxu0 0.0
        %7171 = vmatprep.subr.mxu0 0.0
        %7172 = vmatpush2.msra.mxu0 0.0
        %7173 = vmatprep.subr.mxu0 0.0
        %7174 = vmatpush2.msra.mxu0 0.0
        %7175 = vmatprep.subr.mxu0 0.0
        %7176 = vmatpush2.msra.mxu0 0.0
        %7177 = vmatprep.subr.mxu0 0.0
        %7178 = vmatpush2.msra.mxu0 0.0
        %7179 = vmatprep.mubr.f32.mxu0 0.0
        %v7180 = vand.u32 %v5476, 4294901760
        %7181 = vmatmul.mubr.f32.gmra.mxu0 %v7180
        %v7182 = vpop.f32.mrf.mxu0
        %v7183 = vadd.f32 %v7079, %v7182
        %v7184 = vpop.f32.mrf.mxu0
        %v7185 = vadd.f32 %v7081, %v7184
        %7186 = vdwg.mxu0
        %v7187 = vld [vmem:[#allocation8] sm:$0xf]
        %v7189 = vlaneseq
        %v7190 = vshrl.u32 %v7189, 7
        %v7191 = vsub.s32 0, %v7190
        %v7192 = vrot.slane %v7187, %v7191
        %v7193 = vlaneseq
        %v7194 = vshrl.u32 %v7193, 7
        %v7195 = vsub.s32 1, %v7194
        %v7196 = vrot.slane %v7187, %v7195
        %v7197 = vlaneseq
        %v7198 = vshrl.u32 %v7197, 7
        %v7199 = vsub.s32 2, %v7198
        %v7200 = vrot.slane %v7187, %v7199
        %v7201 = vlaneseq
        %v7202 = vshrl.u32 %v7201, 7
        %v7203 = vsub.s32 3, %v7202
        %v7204 = vrot.slane %v7187, %v7203
        %v7209 = vmul.f32 %v1192, %v7192
        %v7210 = vmul.f32 %v1194, %v7196
        %v7211 = vmul.f32 %v2047, %v7200
        %v7212 = vmul.f32 %v2049, %v7204
        %s7213 = sld [smem:[#allocation9]]
        %v7214 = vstv %s7213
        %v7215 = vadd.f32 %v7209, %v7214
        %v7216 = vadd.f32 %v7210, %v7214
        %v7217 = vadd.f32 %v7211, %v7214
        %v7218 = vadd.f32 %v7212, %v7214
        %s7219 = scalar_lea.vmem [#allocation8], 32
        %v7220 = vld [vmem:[%s7219] sm:$0xf]
        %v7222 = vlaneseq
        %v7223 = vshrl.u32 %v7222, 7
        %v7224 = vsub.s32 0, %v7223
        %v7225 = vrot.slane %v7220, %v7224
        %v7226 = vlaneseq
        %v7227 = vshrl.u32 %v7226, 7
        %v7228 = vsub.s32 1, %v7227
        %v7229 = vrot.slane %v7220, %v7228
        %v7230 = vlaneseq
        %v7231 = vshrl.u32 %v7230, 7
        %v7232 = vsub.s32 2, %v7231
        %v7233 = vrot.slane %v7220, %v7232
        %v7234 = vlaneseq
        %v7235 = vshrl.u32 %v7234, 7
        %v7236 = vsub.s32 3, %v7235
        %v7237 = vrot.slane %v7220, %v7236
        %v7242 = vmul.f32 %v2904, %v7225
        %v7243 = vmul.f32 %v2906, %v7229
        %v7244 = vmul.f32 %v3759, %v7233
        %v7245 = vmul.f32 %v3761, %v7237
        %v7246 = vadd.f32 %v7215, %v7242
        %v7247 = vadd.f32 %v7216, %v7243
        %v7248 = vadd.f32 %v7217, %v7244
        %v7249 = vadd.f32 %v7218, %v7245
        %s7250 = scalar_lea.vmem [#allocation8], 64
        %v7251 = vld [vmem:[%s7250] sm:$0xf]
        %v7253 = vlaneseq
        %v7254 = vshrl.u32 %v7253, 7
        %v7255 = vsub.s32 0, %v7254
        %v7256 = vrot.slane %v7251, %v7255
        %v7257 = vlaneseq
        %v7258 = vshrl.u32 %v7257, 7
        %v7259 = vsub.s32 1, %v7258
        %v7260 = vrot.slane %v7251, %v7259
        %v7261 = vlaneseq
        %v7262 = vshrl.u32 %v7261, 7
        %v7263 = vsub.s32 2, %v7262
        %v7264 = vrot.slane %v7251, %v7263
        %v7265 = vlaneseq
        %v7266 = vshrl.u32 %v7265, 7
        %v7267 = vsub.s32 3, %v7266
        %v7268 = vrot.slane %v7251, %v7267
        %v7273 = vmul.f32 %v4616, %v7256
        %v7274 = vmul.f32 %v4618, %v7260
        %v7275 = vmul.f32 %v5471, %v7264
        %v7276 = vmul.f32 %v5473, %v7268
        %v7277 = vadd.f32 %v7246, %v7273
        %v7278 = vadd.f32 %v7247, %v7274
        %v7279 = vadd.f32 %v7248, %v7275
        %v7280 = vadd.f32 %v7249, %v7276
        %s7281 = scalar_lea.vmem [#allocation8], 96
        %v7282 = vld [vmem:[%s7281] sm:$0xf]
        %v7284 = vlaneseq
        %v7285 = vshrl.u32 %v7284, 7
        %v7286 = vsub.s32 0, %v7285
        %v7287 = vrot.slane %v7282, %v7286
        %v7288 = vlaneseq
        %v7289 = vshrl.u32 %v7288, 7
        %v7290 = vsub.s32 1, %v7289
        %v7291 = vrot.slane %v7282, %v7290
        %v7292 = vlaneseq
        %v7293 = vshrl.u32 %v7292, 7
        %v7294 = vsub.s32 2, %v7293
        %v7295 = vrot.slane %v7282, %v7294
        %v7296 = vlaneseq
        %v7297 = vshrl.u32 %v7296, 7
        %v7298 = vsub.s32 3, %v7297
        %v7299 = vrot.slane %v7282, %v7298
        %v7304 = vmul.f32 %v6328, %v7287
        %v7305 = vmul.f32 %v6330, %v7291
        %v7306 = vmul.f32 %v7183, %v7295
        %v7307 = vmul.f32 %v7185, %v7299
        %v7308 = vadd.f32 %v7277, %v7304
        %v7309 = vadd.f32 %v7278, %v7305
        %v7310 = vadd.f32 %v7279, %v7306
        %v7311 = vadd.f32 %v7280, %v7307
        %v7316 = vcombine.low %v7308, %v7309
        %v7317 = vcombine.low %v7310, %v7311
        %v7319 = vunpack.c.l.s4 1983009808
        %v7320 = vunpack.c.0.s8 %v7319
        %v7321 = vlaneseq
        %v7322 = vshrl.u32 %v7321, 7
        %v7323 = vsub.s32 %v7320, %v7322
        %v7324 = vrot.slane %v7316, %v7323
        %v7326 = vunpack.c.l.s4 1983009808
        %v7327 = vunpack.c.0.s8 %v7326
        %v7328 = vlaneseq
        %v7329 = vshrl.u32 %v7328, 7
        %v7330 = vsub.s32 %v7327, %v7329
        %v7331 = vrot.slane %v7317, %v7330
        %v7332 = vcombine.low %v7324, %v7331
        %7334 = vst [vmem:[%s275] sm:$0xff] %v7332
        %s7335 = scalar_lea.vmem [#allocation8], 4
        %v7336 = vld [vmem:[%s7335] sm:$0xf]
        %v7338 = vlaneseq
        %v7339 = vshrl.u32 %v7338, 7
        %v7340 = vsub.s32 0, %v7339
        %v7341 = vrot.slane %v7336, %v7340
        %v7342 = vlaneseq
        %v7343 = vshrl.u32 %v7342, 7
        %v7344 = vsub.s32 1, %v7343
        %v7345 = vrot.slane %v7336, %v7344
        %v7346 = vlaneseq
        %v7347 = vshrl.u32 %v7346, 7
        %v7348 = vsub.s32 2, %v7347
        %v7349 = vrot.slane %v7336, %v7348
        %v7350 = vlaneseq
        %v7351 = vshrl.u32 %v7350, 7
        %v7352 = vsub.s32 3, %v7351
        %v7353 = vrot.slane %v7336, %v7352
        %v7358 = vmul.f32 %v1192, %v7341
        %v7359 = vmul.f32 %v1194, %v7345
        %v7360 = vmul.f32 %v2047, %v7349
        %v7361 = vmul.f32 %v2049, %v7353
        %s7362 = sld [smem:[#allocation9 + $0x1]]
        %v7363 = vstv %s7362
        %v7364 = vadd.f32 %v7358, %v7363
        %v7365 = vadd.f32 %v7359, %v7363
        %v7366 = vadd.f32 %v7360, %v7363
        %v7367 = vadd.f32 %v7361, %v7363
        %s7368 = scalar_lea.vmem [#allocation8], 36
        %v7369 = vld [vmem:[%s7368] sm:$0xf]
        %v7371 = vlaneseq
        %v7372 = vshrl.u32 %v7371, 7
        %v7373 = vsub.s32 0, %v7372
        %v7374 = vrot.slane %v7369, %v7373
        %v7375 = vlaneseq
        %v7376 = vshrl.u32 %v7375, 7
        %v7377 = vsub.s32 1, %v7376
        %v7378 = vrot.slane %v7369, %v7377
        %v7379 = vlaneseq
        %v7380 = vshrl.u32 %v7379, 7
        %v7381 = vsub.s32 2, %v7380
        %v7382 = vrot.slane %v7369, %v7381
        %v7383 = vlaneseq
        %v7384 = vshrl.u32 %v7383, 7
        %v7385 = vsub.s32 3, %v7384
        %v7386 = vrot.slane %v7369, %v7385
        %v7391 = vmul.f32 %v2904, %v7374
        %v7392 = vmul.f32 %v2906, %v7378
        %v7393 = vmul.f32 %v3759, %v7382
        %v7394 = vmul.f32 %v3761, %v7386
        %v7395 = vadd.f32 %v7364, %v7391
        %v7396 = vadd.f32 %v7365, %v7392
        %v7397 = vadd.f32 %v7366, %v7393
        %v7398 = vadd.f32 %v7367, %v7394
        %s7399 = scalar_lea.vmem [#allocation8], 68
        %v7400 = vld [vmem:[%s7399] sm:$0xf]
        %v7402 = vlaneseq
        %v7403 = vshrl.u32 %v7402, 7
        %v7404 = vsub.s32 0, %v7403
        %v7405 = vrot.slane %v7400, %v7404
        %v7406 = vlaneseq
        %v7407 = vshrl.u32 %v7406, 7
        %v7408 = vsub.s32 1, %v7407
        %v7409 = vrot.slane %v7400, %v7408
        %v7410 = vlaneseq
        %v7411 = vshrl.u32 %v7410, 7
        %v7412 = vsub.s32 2, %v7411
        %v7413 = vrot.slane %v7400, %v7412
        %v7414 = vlaneseq
        %v7415 = vshrl.u32 %v7414, 7
        %v7416 = vsub.s32 3, %v7415
        %v7417 = vrot.slane %v7400, %v7416
        %v7422 = vmul.f32 %v4616, %v7405
        %v7423 = vmul.f32 %v4618, %v7409
        %v7424 = vmul.f32 %v5471, %v7413
        %v7425 = vmul.f32 %v5473, %v7417
        %v7426 = vadd.f32 %v7395, %v7422
        %v7427 = vadd.f32 %v7396, %v7423
        %v7428 = vadd.f32 %v7397, %v7424
        %v7429 = vadd.f32 %v7398, %v7425
        %s7430 = scalar_lea.vmem [#allocation8], 100
        %v7431 = vld [vmem:[%s7430] sm:$0xf]
        %v7433 = vlaneseq
        %v7434 = vshrl.u32 %v7433, 7
        %v7435 = vsub.s32 0, %v7434
        %v7436 = vrot.slane %v7431, %v7435
        %v7437 = vlaneseq
        %v7438 = vshrl.u32 %v7437, 7
        %v7439 = vsub.s32 1, %v7438
        %v7440 = vrot.slane %v7431, %v7439
        %v7441 = vlaneseq
        %v7442 = vshrl.u32 %v7441, 7
        %v7443 = vsub.s32 2, %v7442
        %v7444 = vrot.slane %v7431, %v7443
        %v7445 = vlaneseq
        %v7446 = vshrl.u32 %v7445, 7
        %v7447 = vsub.s32 3, %v7446
        %v7448 = vrot.slane %v7431, %v7447
        %v7453 = vmul.f32 %v6328, %v7436
        %v7454 = vmul.f32 %v6330, %v7440
        %v7455 = vmul.f32 %v7183, %v7444
        %v7456 = vmul.f32 %v7185, %v7448
        %v7457 = vadd.f32 %v7426, %v7453
        %v7458 = vadd.f32 %v7427, %v7454
        %v7459 = vadd.f32 %v7428, %v7455
        %v7460 = vadd.f32 %v7429, %v7456
        %v7465 = vcombine.low %v7457, %v7458
        %v7466 = vcombine.low %v7459, %v7460
        %v7468 = vunpack.c.l.s4 1983009808
        %v7469 = vunpack.c.0.s8 %v7468
        %v7470 = vlaneseq
        %v7471 = vshrl.u32 %v7470, 7
        %v7472 = vsub.s32 %v7469, %v7471
        %v7473 = vrot.slane %v7465, %v7472
        %v7475 = vunpack.c.l.s4 1983009808
        %v7476 = vunpack.c.0.s8 %v7475
        %v7477 = vlaneseq
        %v7478 = vshrl.u32 %v7477, 7
        %v7479 = vsub.s32 %v7476, %v7478
        %v7480 = vrot.slane %v7466, %v7479
        %v7481 = vcombine.low %v7473, %v7480
        %s7483 = scalar_lea.vmem %s275, 8 [#allocation10]
        %7484 = vst [vmem:[%s7483] sm:$0xff] %v7481
        %s7485 = scalar_lea.vmem [#allocation8], 8
        %v7486 = vld [vmem:[%s7485] sm:$0xf]
        %v7488 = vlaneseq
        %v7489 = vshrl.u32 %v7488, 7
        %v7490 = vsub.s32 0, %v7489
        %v7491 = vrot.slane %v7486, %v7490
        %v7492 = vlaneseq
        %v7493 = vshrl.u32 %v7492, 7
        %v7494 = vsub.s32 1, %v7493
        %v7495 = vrot.slane %v7486, %v7494
        %v7496 = vlaneseq
        %v7497 = vshrl.u32 %v7496, 7
        %v7498 = vsub.s32 2, %v7497
        %v7499 = vrot.slane %v7486, %v7498
        %v7500 = vlaneseq
        %v7501 = vshrl.u32 %v7500, 7
        %v7502 = vsub.s32 3, %v7501
        %v7503 = vrot.slane %v7486, %v7502
        %v7508 = vmul.f32 %v1192, %v7491
        %v7509 = vmul.f32 %v1194, %v7495
        %v7510 = vmul.f32 %v2047, %v7499
        %v7511 = vmul.f32 %v2049, %v7503
        %s7512 = sld [smem:[#allocation9 + $0x2]]
        %v7513 = vstv %s7512
        %v7514 = vadd.f32 %v7508, %v7513
        %v7515 = vadd.f32 %v7509, %v7513
        %v7516 = vadd.f32 %v7510, %v7513
        %v7517 = vadd.f32 %v7511, %v7513
        %s7518 = scalar_lea.vmem [#allocation8], 40
        %v7519 = vld [vmem:[%s7518] sm:$0xf]
        %v7521 = vlaneseq
        %v7522 = vshrl.u32 %v7521, 7
        %v7523 = vsub.s32 0, %v7522
        %v7524 = vrot.slane %v7519, %v7523
        %v7525 = vlaneseq
        %v7526 = vshrl.u32 %v7525, 7
        %v7527 = vsub.s32 1, %v7526
        %v7528 = vrot.slane %v7519, %v7527
        %v7529 = vlaneseq
        %v7530 = vshrl.u32 %v7529, 7
        %v7531 = vsub.s32 2, %v7530
        %v7532 = vrot.slane %v7519, %v7531
        %v7533 = vlaneseq
        %v7534 = vshrl.u32 %v7533, 7
        %v7535 = vsub.s32 3, %v7534
        %v7536 = vrot.slane %v7519, %v7535
        %v7541 = vmul.f32 %v2904, %v7524
        %v7542 = vmul.f32 %v2906, %v7528
        %v7543 = vmul.f32 %v3759, %v7532
        %v7544 = vmul.f32 %v3761, %v7536
        %v7545 = vadd.f32 %v7514, %v7541
        %v7546 = vadd.f32 %v7515, %v7542
        %v7547 = vadd.f32 %v7516, %v7543
        %v7548 = vadd.f32 %v7517, %v7544
        %s7549 = scalar_lea.vmem [#allocation8], 72
        %v7550 = vld [vmem:[%s7549] sm:$0xf]
        %v7552 = vlaneseq
        %v7553 = vshrl.u32 %v7552, 7
        %v7554 = vsub.s32 0, %v7553
        %v7555 = vrot.slane %v7550, %v7554
        %v7556 = vlaneseq
        %v7557 = vshrl.u32 %v7556, 7
        %v7558 = vsub.s32 1, %v7557
        %v7559 = vrot.slane %v7550, %v7558
        %v7560 = vlaneseq
        %v7561 = vshrl.u32 %v7560, 7
        %v7562 = vsub.s32 2, %v7561
        %v7563 = vrot.slane %v7550, %v7562
        %v7564 = vlaneseq
        %v7565 = vshrl.u32 %v7564, 7
        %v7566 = vsub.s32 3, %v7565
        %v7567 = vrot.slane %v7550, %v7566
        %v7572 = vmul.f32 %v4616, %v7555
        %v7573 = vmul.f32 %v4618, %v7559
        %v7574 = vmul.f32 %v5471, %v7563
        %v7575 = vmul.f32 %v5473, %v7567
        %v7576 = vadd.f32 %v7545, %v7572
        %v7577 = vadd.f32 %v7546, %v7573
        %v7578 = vadd.f32 %v7547, %v7574
        %v7579 = vadd.f32 %v7548, %v7575
        %s7580 = scalar_lea.vmem [#allocation8], 104
        %v7581 = vld [vmem:[%s7580] sm:$0xf]
        %v7583 = vlaneseq
        %v7584 = vshrl.u32 %v7583, 7
        %v7585 = vsub.s32 0, %v7584
        %v7586 = vrot.slane %v7581, %v7585
        %v7587 = vlaneseq
        %v7588 = vshrl.u32 %v7587, 7
        %v7589 = vsub.s32 1, %v7588
        %v7590 = vrot.slane %v7581, %v7589
        %v7591 = vlaneseq
        %v7592 = vshrl.u32 %v7591, 7
        %v7593 = vsub.s32 2, %v7592
        %v7594 = vrot.slane %v7581, %v7593
        %v7595 = vlaneseq
        %v7596 = vshrl.u32 %v7595, 7
        %v7597 = vsub.s32 3, %v7596
        %v7598 = vrot.slane %v7581, %v7597
        %v7603 = vmul.f32 %v6328, %v7586
        %v7604 = vmul.f32 %v6330, %v7590
        %v7605 = vmul.f32 %v7183, %v7594
        %v7606 = vmul.f32 %v7185, %v7598
        %v7607 = vadd.f32 %v7576, %v7603
        %v7608 = vadd.f32 %v7577, %v7604
        %v7609 = vadd.f32 %v7578, %v7605
        %v7610 = vadd.f32 %v7579, %v7606
        %v7615 = vcombine.low %v7607, %v7608
        %v7616 = vcombine.low %v7609, %v7610
        %v7618 = vunpack.c.l.s4 1983009808
        %v7619 = vunpack.c.0.s8 %v7618
        %v7620 = vlaneseq
        %v7621 = vshrl.u32 %v7620, 7
        %v7622 = vsub.s32 %v7619, %v7621
        %v7623 = vrot.slane %v7615, %v7622
        %v7625 = vunpack.c.l.s4 1983009808
        %v7626 = vunpack.c.0.s8 %v7625
        %v7627 = vlaneseq
        %v7628 = vshrl.u32 %v7627, 7
        %v7629 = vsub.s32 %v7626, %v7628
        %v7630 = vrot.slane %v7616, %v7629
        %v7631 = vcombine.low %v7623, %v7630
        %s7633 = scalar_lea.vmem %s275, 16 [#allocation10]
        %7634 = vst [vmem:[%s7633] sm:$0xff] %v7631
        %s7635 = scalar_lea.vmem [#allocation8], 12
        %v7636 = vld [vmem:[%s7635] sm:$0xf]
        %v7638 = vlaneseq
        %v7639 = vshrl.u32 %v7638, 7
        %v7640 = vsub.s32 0, %v7639
        %v7641 = vrot.slane %v7636, %v7640
        %v7642 = vlaneseq
        %v7643 = vshrl.u32 %v7642, 7
        %v7644 = vsub.s32 1, %v7643
        %v7645 = vrot.slane %v7636, %v7644
        %v7646 = vlaneseq
        %v7647 = vshrl.u32 %v7646, 7
        %v7648 = vsub.s32 2, %v7647
        %v7649 = vrot.slane %v7636, %v7648
        %v7650 = vlaneseq
        %v7651 = vshrl.u32 %v7650, 7
        %v7652 = vsub.s32 3, %v7651
        %v7653 = vrot.slane %v7636, %v7652
        %v7658 = vmul.f32 %v1192, %v7641
        %v7659 = vmul.f32 %v1194, %v7645
        %v7660 = vmul.f32 %v2047, %v7649
        %v7661 = vmul.f32 %v2049, %v7653
        %s7662 = sld [smem:[#allocation9 + $0x3]]
        %v7663 = vstv %s7662
        %v7664 = vadd.f32 %v7658, %v7663
        %v7665 = vadd.f32 %v7659, %v7663
        %v7666 = vadd.f32 %v7660, %v7663
        %v7667 = vadd.f32 %v7661, %v7663
        %s7668 = scalar_lea.vmem [#allocation8], 44
        %v7669 = vld [vmem:[%s7668] sm:$0xf]
        %v7671 = vlaneseq
        %v7672 = vshrl.u32 %v7671, 7
        %v7673 = vsub.s32 0, %v7672
        %v7674 = vrot.slane %v7669, %v7673
        %v7675 = vlaneseq
        %v7676 = vshrl.u32 %v7675, 7
        %v7677 = vsub.s32 1, %v7676
        %v7678 = vrot.slane %v7669, %v7677
        %v7679 = vlaneseq
        %v7680 = vshrl.u32 %v7679, 7
        %v7681 = vsub.s32 2, %v7680
        %v7682 = vrot.slane %v7669, %v7681
        %v7683 = vlaneseq
        %v7684 = vshrl.u32 %v7683, 7
        %v7685 = vsub.s32 3, %v7684
        %v7686 = vrot.slane %v7669, %v7685
        %v7691 = vmul.f32 %v2904, %v7674
        %v7692 = vmul.f32 %v2906, %v7678
        %v7693 = vmul.f32 %v3759, %v7682
        %v7694 = vmul.f32 %v3761, %v7686
        %v7695 = vadd.f32 %v7664, %v7691
        %v7696 = vadd.f32 %v7665, %v7692
        %v7697 = vadd.f32 %v7666, %v7693
        %v7698 = vadd.f32 %v7667, %v7694
        %s7699 = scalar_lea.vmem [#allocation8], 76
        %v7700 = vld [vmem:[%s7699] sm:$0xf]
        %v7702 = vlaneseq
        %v7703 = vshrl.u32 %v7702, 7
        %v7704 = vsub.s32 0, %v7703
        %v7705 = vrot.slane %v7700, %v7704
        %v7706 = vlaneseq
        %v7707 = vshrl.u32 %v7706, 7
        %v7708 = vsub.s32 1, %v7707
        %v7709 = vrot.slane %v7700, %v7708
        %v7710 = vlaneseq
        %v7711 = vshrl.u32 %v7710, 7
        %v7712 = vsub.s32 2, %v7711
        %v7713 = vrot.slane %v7700, %v7712
        %v7714 = vlaneseq
        %v7715 = vshrl.u32 %v7714, 7
        %v7716 = vsub.s32 3, %v7715
        %v7717 = vrot.slane %v7700, %v7716
        %v7722 = vmul.f32 %v4616, %v7705
        %v7723 = vmul.f32 %v4618, %v7709
        %v7724 = vmul.f32 %v5471, %v7713
        %v7725 = vmul.f32 %v5473, %v7717
        %v7726 = vadd.f32 %v7695, %v7722
        %v7727 = vadd.f32 %v7696, %v7723
        %v7728 = vadd.f32 %v7697, %v7724
        %v7729 = vadd.f32 %v7698, %v7725
        %s7730 = scalar_lea.vmem [#allocation8], 108
        %v7731 = vld [vmem:[%s7730] sm:$0xf]
        %v7733 = vlaneseq
        %v7734 = vshrl.u32 %v7733, 7
        %v7735 = vsub.s32 0, %v7734
        %v7736 = vrot.slane %v7731, %v7735
        %v7737 = vlaneseq
        %v7738 = vshrl.u32 %v7737, 7
        %v7739 = vsub.s32 1, %v7738
        %v7740 = vrot.slane %v7731, %v7739
        %v7741 = vlaneseq
        %v7742 = vshrl.u32 %v7741, 7
        %v7743 = vsub.s32 2, %v7742
        %v7744 = vrot.slane %v7731, %v7743
        %v7745 = vlaneseq
        %v7746 = vshrl.u32 %v7745, 7
        %v7747 = vsub.s32 3, %v7746
        %v7748 = vrot.slane %v7731, %v7747
        %v7753 = vmul.f32 %v6328, %v7736
        %v7754 = vmul.f32 %v6330, %v7740
        %v7755 = vmul.f32 %v7183, %v7744
        %v7756 = vmul.f32 %v7185, %v7748
        %v7757 = vadd.f32 %v7726, %v7753
        %v7758 = vadd.f32 %v7727, %v7754
        %v7759 = vadd.f32 %v7728, %v7755
        %v7760 = vadd.f32 %v7729, %v7756
        %v7765 = vcombine.low %v7757, %v7758
        %v7766 = vcombine.low %v7759, %v7760
        %v7768 = vunpack.c.l.s4 1983009808
        %v7769 = vunpack.c.0.s8 %v7768
        %v7770 = vlaneseq
        %v7771 = vshrl.u32 %v7770, 7
        %v7772 = vsub.s32 %v7769, %v7771
        %v7773 = vrot.slane %v7765, %v7772
        %v7775 = vunpack.c.l.s4 1983009808
        %v7776 = vunpack.c.0.s8 %v7775
        %v7777 = vlaneseq
        %v7778 = vshrl.u32 %v7777, 7
        %v7779 = vsub.s32 %v7776, %v7778
        %v7780 = vrot.slane %v7766, %v7779
        %v7781 = vcombine.low %v7773, %v7780
        %s7783 = scalar_lea.vmem %s275, 24 [#allocation10]
        %7784 = vst [vmem:[%s7783] sm:$0xff] %v7781
        %s7785 = scalar_lea.vmem [#allocation8], 16
        %v7786 = vld [vmem:[%s7785] sm:$0xf]
        %v7788 = vlaneseq
        %v7789 = vshrl.u32 %v7788, 7
        %v7790 = vsub.s32 0, %v7789
        %v7791 = vrot.slane %v7786, %v7790
        %v7792 = vlaneseq
        %v7793 = vshrl.u32 %v7792, 7
        %v7794 = vsub.s32 1, %v7793
        %v7795 = vrot.slane %v7786, %v7794
        %v7796 = vlaneseq
        %v7797 = vshrl.u32 %v7796, 7
        %v7798 = vsub.s32 2, %v7797
        %v7799 = vrot.slane %v7786, %v7798
        %v7800 = vlaneseq
        %v7801 = vshrl.u32 %v7800, 7
        %v7802 = vsub.s32 3, %v7801
        %v7803 = vrot.slane %v7786, %v7802
        %v7808 = vmul.f32 %v1192, %v7791
        %v7809 = vmul.f32 %v1194, %v7795
        %v7810 = vmul.f32 %v2047, %v7799
        %v7811 = vmul.f32 %v2049, %v7803
        %s7812 = sld [smem:[#allocation9 + $0x4]]
        %v7813 = vstv %s7812
        %v7814 = vadd.f32 %v7808, %v7813
        %v7815 = vadd.f32 %v7809, %v7813
        %v7816 = vadd.f32 %v7810, %v7813
        %v7817 = vadd.f32 %v7811, %v7813
        %s7818 = scalar_lea.vmem [#allocation8], 48
        %v7819 = vld [vmem:[%s7818] sm:$0xf]
        %v7821 = vlaneseq
        %v7822 = vshrl.u32 %v7821, 7
        %v7823 = vsub.s32 0, %v7822
        %v7824 = vrot.slane %v7819, %v7823
        %v7825 = vlaneseq
        %v7826 = vshrl.u32 %v7825, 7
        %v7827 = vsub.s32 1, %v7826
        %v7828 = vrot.slane %v7819, %v7827
        %v7829 = vlaneseq
        %v7830 = vshrl.u32 %v7829, 7
        %v7831 = vsub.s32 2, %v7830
        %v7832 = vrot.slane %v7819, %v7831
        %v7833 = vlaneseq
        %v7834 = vshrl.u32 %v7833, 7
        %v7835 = vsub.s32 3, %v7834
        %v7836 = vrot.slane %v7819, %v7835
        %v7841 = vmul.f32 %v2904, %v7824
        %v7842 = vmul.f32 %v2906, %v7828
        %v7843 = vmul.f32 %v3759, %v7832
        %v7844 = vmul.f32 %v3761, %v7836
        %v7845 = vadd.f32 %v7814, %v7841
        %v7846 = vadd.f32 %v7815, %v7842
        %v7847 = vadd.f32 %v7816, %v7843
        %v7848 = vadd.f32 %v7817, %v7844
        %s7849 = scalar_lea.vmem [#allocation8], 80
        %v7850 = vld [vmem:[%s7849] sm:$0xf]
        %v7852 = vlaneseq
        %v7853 = vshrl.u32 %v7852, 7
        %v7854 = vsub.s32 0, %v7853
        %v7855 = vrot.slane %v7850, %v7854
        %v7856 = vlaneseq
        %v7857 = vshrl.u32 %v7856, 7
        %v7858 = vsub.s32 1, %v7857
        %v7859 = vrot.slane %v7850, %v7858
        %v7860 = vlaneseq
        %v7861 = vshrl.u32 %v7860, 7
        %v7862 = vsub.s32 2, %v7861
        %v7863 = vrot.slane %v7850, %v7862
        %v7864 = vlaneseq
        %v7865 = vshrl.u32 %v7864, 7
        %v7866 = vsub.s32 3, %v7865
        %v7867 = vrot.slane %v7850, %v7866
        %v7872 = vmul.f32 %v4616, %v7855
        %v7873 = vmul.f32 %v4618, %v7859
        %v7874 = vmul.f32 %v5471, %v7863
        %v7875 = vmul.f32 %v5473, %v7867
        %v7876 = vadd.f32 %v7845, %v7872
        %v7877 = vadd.f32 %v7846, %v7873
        %v7878 = vadd.f32 %v7847, %v7874
        %v7879 = vadd.f32 %v7848, %v7875
        %s7880 = scalar_lea.vmem [#allocation8], 112
        %v7881 = vld [vmem:[%s7880] sm:$0xf]
        %v7883 = vlaneseq
        %v7884 = vshrl.u32 %v7883, 7
        %v7885 = vsub.s32 0, %v7884
        %v7886 = vrot.slane %v7881, %v7885
        %v7887 = vlaneseq
        %v7888 = vshrl.u32 %v7887, 7
        %v7889 = vsub.s32 1, %v7888
        %v7890 = vrot.slane %v7881, %v7889
        %v7891 = vlaneseq
        %v7892 = vshrl.u32 %v7891, 7
        %v7893 = vsub.s32 2, %v7892
        %v7894 = vrot.slane %v7881, %v7893
        %v7895 = vlaneseq
        %v7896 = vshrl.u32 %v7895, 7
        %v7897 = vsub.s32 3, %v7896
        %v7898 = vrot.slane %v7881, %v7897
        %v7903 = vmul.f32 %v6328, %v7886
        %v7904 = vmul.f32 %v6330, %v7890
        %v7905 = vmul.f32 %v7183, %v7894
        %v7906 = vmul.f32 %v7185, %v7898
        %v7907 = vadd.f32 %v7876, %v7903
        %v7908 = vadd.f32 %v7877, %v7904
        %v7909 = vadd.f32 %v7878, %v7905
        %v7910 = vadd.f32 %v7879, %v7906
        %v7915 = vcombine.low %v7907, %v7908
        %v7916 = vcombine.low %v7909, %v7910
        %v7918 = vunpack.c.l.s4 1983009808
        %v7919 = vunpack.c.0.s8 %v7918
        %v7920 = vlaneseq
        %v7921 = vshrl.u32 %v7920, 7
        %v7922 = vsub.s32 %v7919, %v7921
        %v7923 = vrot.slane %v7915, %v7922
        %v7925 = vunpack.c.l.s4 1983009808
        %v7926 = vunpack.c.0.s8 %v7925
        %v7927 = vlaneseq
        %v7928 = vshrl.u32 %v7927, 7
        %v7929 = vsub.s32 %v7926, %v7928
        %v7930 = vrot.slane %v7916, %v7929
        %v7931 = vcombine.low %v7923, %v7930
        %s7933 = scalar_lea.vmem %s275, 32 [#allocation10]
        %7934 = vst [vmem:[%s7933] sm:$0xff] %v7931
        %s7935 = scalar_lea.vmem [#allocation8], 20
        %v7936 = vld [vmem:[%s7935] sm:$0xf]
        %v7938 = vlaneseq
        %v7939 = vshrl.u32 %v7938, 7
        %v7940 = vsub.s32 0, %v7939
        %v7941 = vrot.slane %v7936, %v7940
        %v7942 = vlaneseq
        %v7943 = vshrl.u32 %v7942, 7
        %v7944 = vsub.s32 1, %v7943
        %v7945 = vrot.slane %v7936, %v7944
        %v7946 = vlaneseq
        %v7947 = vshrl.u32 %v7946, 7
        %v7948 = vsub.s32 2, %v7947
        %v7949 = vrot.slane %v7936, %v7948
        %v7950 = vlaneseq
        %v7951 = vshrl.u32 %v7950, 7
        %v7952 = vsub.s32 3, %v7951
        %v7953 = vrot.slane %v7936, %v7952
        %v7958 = vmul.f32 %v1192, %v7941
        %v7959 = vmul.f32 %v1194, %v7945
        %v7960 = vmul.f32 %v2047, %v7949
        %v7961 = vmul.f32 %v2049, %v7953
        %s7962 = sld [smem:[#allocation9 + $0x5]]
        %v7963 = vstv %s7962
        %v7964 = vadd.f32 %v7958, %v7963
        %v7965 = vadd.f32 %v7959, %v7963
        %v7966 = vadd.f32 %v7960, %v7963
        %v7967 = vadd.f32 %v7961, %v7963
        %s7968 = scalar_lea.vmem [#allocation8], 52
        %v7969 = vld [vmem:[%s7968] sm:$0xf]
        %v7971 = vlaneseq
        %v7972 = vshrl.u32 %v7971, 7
        %v7973 = vsub.s32 0, %v7972
        %v7974 = vrot.slane %v7969, %v7973
        %v7975 = vlaneseq
        %v7976 = vshrl.u32 %v7975, 7
        %v7977 = vsub.s32 1, %v7976
        %v7978 = vrot.slane %v7969, %v7977
        %v7979 = vlaneseq
        %v7980 = vshrl.u32 %v7979, 7
        %v7981 = vsub.s32 2, %v7980
        %v7982 = vrot.slane %v7969, %v7981
        %v7983 = vlaneseq
        %v7984 = vshrl.u32 %v7983, 7
        %v7985 = vsub.s32 3, %v7984
        %v7986 = vrot.slane %v7969, %v7985
        %v7991 = vmul.f32 %v2904, %v7974
        %v7992 = vmul.f32 %v2906, %v7978
        %v7993 = vmul.f32 %v3759, %v7982
        %v7994 = vmul.f32 %v3761, %v7986
        %v7995 = vadd.f32 %v7964, %v7991
        %v7996 = vadd.f32 %v7965, %v7992
        %v7997 = vadd.f32 %v7966, %v7993
        %v7998 = vadd.f32 %v7967, %v7994
        %s7999 = scalar_lea.vmem [#allocation8], 84
        %v8000 = vld [vmem:[%s7999] sm:$0xf]
        %v8002 = vlaneseq
        %v8003 = vshrl.u32 %v8002, 7
        %v8004 = vsub.s32 0, %v8003
        %v8005 = vrot.slane %v8000, %v8004
        %v8006 = vlaneseq
        %v8007 = vshrl.u32 %v8006, 7
        %v8008 = vsub.s32 1, %v8007
        %v8009 = vrot.slane %v8000, %v8008
        %v8010 = vlaneseq
        %v8011 = vshrl.u32 %v8010, 7
        %v8012 = vsub.s32 2, %v8011
        %v8013 = vrot.slane %v8000, %v8012
        %v8014 = vlaneseq
        %v8015 = vshrl.u32 %v8014, 7
        %v8016 = vsub.s32 3, %v8015
        %v8017 = vrot.slane %v8000, %v8016
        %v8022 = vmul.f32 %v4616, %v8005
        %v8023 = vmul.f32 %v4618, %v8009
        %v8024 = vmul.f32 %v5471, %v8013
        %v8025 = vmul.f32 %v5473, %v8017
        %v8026 = vadd.f32 %v7995, %v8022
        %v8027 = vadd.f32 %v7996, %v8023
        %v8028 = vadd.f32 %v7997, %v8024
        %v8029 = vadd.f32 %v7998, %v8025
        %s8030 = scalar_lea.vmem [#allocation8], 116
        %v8031 = vld [vmem:[%s8030] sm:$0xf]
        %v8033 = vlaneseq
        %v8034 = vshrl.u32 %v8033, 7
        %v8035 = vsub.s32 0, %v8034
        %v8036 = vrot.slane %v8031, %v8035
        %v8037 = vlaneseq
        %v8038 = vshrl.u32 %v8037, 7
        %v8039 = vsub.s32 1, %v8038
        %v8040 = vrot.slane %v8031, %v8039
        %v8041 = vlaneseq
        %v8042 = vshrl.u32 %v8041, 7
        %v8043 = vsub.s32 2, %v8042
        %v8044 = vrot.slane %v8031, %v8043
        %v8045 = vlaneseq
        %v8046 = vshrl.u32 %v8045, 7
        %v8047 = vsub.s32 3, %v8046
        %v8048 = vrot.slane %v8031, %v8047
        %v8053 = vmul.f32 %v6328, %v8036
        %v8054 = vmul.f32 %v6330, %v8040
        %v8055 = vmul.f32 %v7183, %v8044
        %v8056 = vmul.f32 %v7185, %v8048
        %v8057 = vadd.f32 %v8026, %v8053
        %v8058 = vadd.f32 %v8027, %v8054
        %v8059 = vadd.f32 %v8028, %v8055
        %v8060 = vadd.f32 %v8029, %v8056
        %v8065 = vcombine.low %v8057, %v8058
        %v8066 = vcombine.low %v8059, %v8060
        %v8068 = vunpack.c.l.s4 1983009808
        %v8069 = vunpack.c.0.s8 %v8068
        %v8070 = vlaneseq
        %v8071 = vshrl.u32 %v8070, 7
        %v8072 = vsub.s32 %v8069, %v8071
        %v8073 = vrot.slane %v8065, %v8072
        %v8075 = vunpack.c.l.s4 1983009808
        %v8076 = vunpack.c.0.s8 %v8075
        %v8077 = vlaneseq
        %v8078 = vshrl.u32 %v8077, 7
        %v8079 = vsub.s32 %v8076, %v8078
        %v8080 = vrot.slane %v8066, %v8079
        %v8081 = vcombine.low %v8073, %v8080
        %s8083 = scalar_lea.vmem %s275, 40 [#allocation10]
        %8084 = vst [vmem:[%s8083] sm:$0xff] %v8081
        %s8085 = scalar_lea.vmem [#allocation8], 24
        %v8086 = vld [vmem:[%s8085] sm:$0xf]
        %v8088 = vlaneseq
        %v8089 = vshrl.u32 %v8088, 7
        %v8090 = vsub.s32 0, %v8089
        %v8091 = vrot.slane %v8086, %v8090
        %v8092 = vlaneseq
        %v8093 = vshrl.u32 %v8092, 7
        %v8094 = vsub.s32 1, %v8093
        %v8095 = vrot.slane %v8086, %v8094
        %v8096 = vlaneseq
        %v8097 = vshrl.u32 %v8096, 7
        %v8098 = vsub.s32 2, %v8097
        %v8099 = vrot.slane %v8086, %v8098
        %v8100 = vlaneseq
        %v8101 = vshrl.u32 %v8100, 7
        %v8102 = vsub.s32 3, %v8101
        %v8103 = vrot.slane %v8086, %v8102
        %v8108 = vmul.f32 %v1192, %v8091
        %v8109 = vmul.f32 %v1194, %v8095
        %v8110 = vmul.f32 %v2047, %v8099
        %v8111 = vmul.f32 %v2049, %v8103
        %s8112 = sld [smem:[#allocation9 + $0x6]]
        %v8113 = vstv %s8112
        %v8114 = vadd.f32 %v8108, %v8113
        %v8115 = vadd.f32 %v8109, %v8113
        %v8116 = vadd.f32 %v8110, %v8113
        %v8117 = vadd.f32 %v8111, %v8113
        %s8118 = scalar_lea.vmem [#allocation8], 56
        %v8119 = vld [vmem:[%s8118] sm:$0xf]
        %v8121 = vlaneseq
        %v8122 = vshrl.u32 %v8121, 7
        %v8123 = vsub.s32 0, %v8122
        %v8124 = vrot.slane %v8119, %v8123
        %v8125 = vlaneseq
        %v8126 = vshrl.u32 %v8125, 7
        %v8127 = vsub.s32 1, %v8126
        %v8128 = vrot.slane %v8119, %v8127
        %v8129 = vlaneseq
        %v8130 = vshrl.u32 %v8129, 7
        %v8131 = vsub.s32 2, %v8130
        %v8132 = vrot.slane %v8119, %v8131
        %v8133 = vlaneseq
        %v8134 = vshrl.u32 %v8133, 7
        %v8135 = vsub.s32 3, %v8134
        %v8136 = vrot.slane %v8119, %v8135
        %v8141 = vmul.f32 %v2904, %v8124
        %v8142 = vmul.f32 %v2906, %v8128
        %v8143 = vmul.f32 %v3759, %v8132
        %v8144 = vmul.f32 %v3761, %v8136
        %v8145 = vadd.f32 %v8114, %v8141
        %v8146 = vadd.f32 %v8115, %v8142
        %v8147 = vadd.f32 %v8116, %v8143
        %v8148 = vadd.f32 %v8117, %v8144
        %s8149 = scalar_lea.vmem [#allocation8], 88
        %v8150 = vld [vmem:[%s8149] sm:$0xf]
        %v8152 = vlaneseq
        %v8153 = vshrl.u32 %v8152, 7
        %v8154 = vsub.s32 0, %v8153
        %v8155 = vrot.slane %v8150, %v8154
        %v8156 = vlaneseq
        %v8157 = vshrl.u32 %v8156, 7
        %v8158 = vsub.s32 1, %v8157
        %v8159 = vrot.slane %v8150, %v8158
        %v8160 = vlaneseq
        %v8161 = vshrl.u32 %v8160, 7
        %v8162 = vsub.s32 2, %v8161
        %v8163 = vrot.slane %v8150, %v8162
        %v8164 = vlaneseq
        %v8165 = vshrl.u32 %v8164, 7
        %v8166 = vsub.s32 3, %v8165
        %v8167 = vrot.slane %v8150, %v8166
        %v8172 = vmul.f32 %v4616, %v8155
        %v8173 = vmul.f32 %v4618, %v8159
        %v8174 = vmul.f32 %v5471, %v8163
        %v8175 = vmul.f32 %v5473, %v8167
        %v8176 = vadd.f32 %v8145, %v8172
        %v8177 = vadd.f32 %v8146, %v8173
        %v8178 = vadd.f32 %v8147, %v8174
        %v8179 = vadd.f32 %v8148, %v8175
        %s8180 = scalar_lea.vmem [#allocation8], 120
        %v8181 = vld [vmem:[%s8180] sm:$0xf]
        %v8183 = vlaneseq
        %v8184 = vshrl.u32 %v8183, 7
        %v8185 = vsub.s32 0, %v8184
        %v8186 = vrot.slane %v8181, %v8185
        %v8187 = vlaneseq
        %v8188 = vshrl.u32 %v8187, 7
        %v8189 = vsub.s32 1, %v8188
        %v8190 = vrot.slane %v8181, %v8189
        %v8191 = vlaneseq
        %v8192 = vshrl.u32 %v8191, 7
        %v8193 = vsub.s32 2, %v8192
        %v8194 = vrot.slane %v8181, %v8193
        %v8195 = vlaneseq
        %v8196 = vshrl.u32 %v8195, 7
        %v8197 = vsub.s32 3, %v8196
        %v8198 = vrot.slane %v8181, %v8197
        %v8203 = vmul.f32 %v6328, %v8186
        %v8204 = vmul.f32 %v6330, %v8190
        %v8205 = vmul.f32 %v7183, %v8194
        %v8206 = vmul.f32 %v7185, %v8198
        %v8207 = vadd.f32 %v8176, %v8203
        %v8208 = vadd.f32 %v8177, %v8204
        %v8209 = vadd.f32 %v8178, %v8205
        %v8210 = vadd.f32 %v8179, %v8206
        %v8215 = vcombine.low %v8207, %v8208
        %v8216 = vcombine.low %v8209, %v8210
        %v8218 = vunpack.c.l.s4 1983009808
        %v8219 = vunpack.c.0.s8 %v8218
        %v8220 = vlaneseq
        %v8221 = vshrl.u32 %v8220, 7
        %v8222 = vsub.s32 %v8219, %v8221
        %v8223 = vrot.slane %v8215, %v8222
        %v8225 = vunpack.c.l.s4 1983009808
        %v8226 = vunpack.c.0.s8 %v8225
        %v8227 = vlaneseq
        %v8228 = vshrl.u32 %v8227, 7
        %v8229 = vsub.s32 %v8226, %v8228
        %v8230 = vrot.slane %v8216, %v8229
        %v8231 = vcombine.low %v8223, %v8230
        %s8233 = scalar_lea.vmem %s275, 48 [#allocation10]
        %8234 = vst [vmem:[%s8233] sm:$0xff] %v8231
        %s8235 = scalar_lea.vmem [#allocation8], 28
        %v8236 = vld [vmem:[%s8235] sm:$0xf]
        %v8238 = vlaneseq
        %v8239 = vshrl.u32 %v8238, 7
        %v8240 = vsub.s32 0, %v8239
        %v8241 = vrot.slane %v8236, %v8240
        %v8242 = vlaneseq
        %v8243 = vshrl.u32 %v8242, 7
        %v8244 = vsub.s32 1, %v8243
        %v8245 = vrot.slane %v8236, %v8244
        %v8246 = vlaneseq
        %v8247 = vshrl.u32 %v8246, 7
        %v8248 = vsub.s32 2, %v8247
        %v8249 = vrot.slane %v8236, %v8248
        %v8250 = vlaneseq
        %v8251 = vshrl.u32 %v8250, 7
        %v8252 = vsub.s32 3, %v8251
        %v8253 = vrot.slane %v8236, %v8252
        %v8258 = vmul.f32 %v1192, %v8241
        %v8259 = vmul.f32 %v1194, %v8245
        %v8260 = vmul.f32 %v2047, %v8249
        %v8261 = vmul.f32 %v2049, %v8253
        %s8262 = sld [smem:[#allocation9 + $0x7]]
        %v8263 = vstv %s8262
        %v8264 = vadd.f32 %v8258, %v8263
        %v8265 = vadd.f32 %v8259, %v8263
        %v8266 = vadd.f32 %v8260, %v8263
        %v8267 = vadd.f32 %v8261, %v8263
        %s8268 = scalar_lea.vmem [#allocation8], 60
        %v8269 = vld [vmem:[%s8268] sm:$0xf]
        %v8271 = vlaneseq
        %v8272 = vshrl.u32 %v8271, 7
        %v8273 = vsub.s32 0, %v8272
        %v8274 = vrot.slane %v8269, %v8273
        %v8275 = vlaneseq
        %v8276 = vshrl.u32 %v8275, 7
        %v8277 = vsub.s32 1, %v8276
        %v8278 = vrot.slane %v8269, %v8277
        %v8279 = vlaneseq
        %v8280 = vshrl.u32 %v8279, 7
        %v8281 = vsub.s32 2, %v8280
        %v8282 = vrot.slane %v8269, %v8281
        %v8283 = vlaneseq
        %v8284 = vshrl.u32 %v8283, 7
        %v8285 = vsub.s32 3, %v8284
        %v8286 = vrot.slane %v8269, %v8285
        %v8291 = vmul.f32 %v2904, %v8274
        %v8292 = vmul.f32 %v2906, %v8278
        %v8293 = vmul.f32 %v3759, %v8282
        %v8294 = vmul.f32 %v3761, %v8286
        %v8295 = vadd.f32 %v8264, %v8291
        %v8296 = vadd.f32 %v8265, %v8292
        %v8297 = vadd.f32 %v8266, %v8293
        %v8298 = vadd.f32 %v8267, %v8294
        %s8299 = scalar_lea.vmem [#allocation8], 92
        %v8300 = vld [vmem:[%s8299] sm:$0xf]
        %v8302 = vlaneseq
        %v8303 = vshrl.u32 %v8302, 7
        %v8304 = vsub.s32 0, %v8303
        %v8305 = vrot.slane %v8300, %v8304
        %v8306 = vlaneseq
        %v8307 = vshrl.u32 %v8306, 7
        %v8308 = vsub.s32 1, %v8307
        %v8309 = vrot.slane %v8300, %v8308
        %v8310 = vlaneseq
        %v8311 = vshrl.u32 %v8310, 7
        %v8312 = vsub.s32 2, %v8311
        %v8313 = vrot.slane %v8300, %v8312
        %v8314 = vlaneseq
        %v8315 = vshrl.u32 %v8314, 7
        %v8316 = vsub.s32 3, %v8315
        %v8317 = vrot.slane %v8300, %v8316
        %v8322 = vmul.f32 %v4616, %v8305
        %v8323 = vmul.f32 %v4618, %v8309
        %v8324 = vmul.f32 %v5471, %v8313
        %v8325 = vmul.f32 %v5473, %v8317
        %v8326 = vadd.f32 %v8295, %v8322
        %v8327 = vadd.f32 %v8296, %v8323
        %v8328 = vadd.f32 %v8297, %v8324
        %v8329 = vadd.f32 %v8298, %v8325
        %s8330 = scalar_lea.vmem [#allocation8], 124
        %v8331 = vld [vmem:[%s8330] sm:$0xf]
        %v8333 = vlaneseq
        %v8334 = vshrl.u32 %v8333, 7
        %v8335 = vsub.s32 0, %v8334
        %v8336 = vrot.slane %v8331, %v8335
        %v8337 = vlaneseq
        %v8338 = vshrl.u32 %v8337, 7
        %v8339 = vsub.s32 1, %v8338
        %v8340 = vrot.slane %v8331, %v8339
        %v8341 = vlaneseq
        %v8342 = vshrl.u32 %v8341, 7
        %v8343 = vsub.s32 2, %v8342
        %v8344 = vrot.slane %v8331, %v8343
        %v8345 = vlaneseq
        %v8346 = vshrl.u32 %v8345, 7
        %v8347 = vsub.s32 3, %v8346
        %v8348 = vrot.slane %v8331, %v8347
        %v8353 = vmul.f32 %v6328, %v8336
        %v8354 = vmul.f32 %v6330, %v8340
        %v8355 = vmul.f32 %v7183, %v8344
        %v8356 = vmul.f32 %v7185, %v8348
        %v8357 = vadd.f32 %v8326, %v8353
        %v8358 = vadd.f32 %v8327, %v8354
        %v8359 = vadd.f32 %v8328, %v8355
        %v8360 = vadd.f32 %v8329, %v8356
        %v8365 = vcombine.low %v8357, %v8358
        %v8366 = vcombine.low %v8359, %v8360
        %v8368 = vunpack.c.l.s4 1983009808
        %v8369 = vunpack.c.0.s8 %v8368
        %v8370 = vlaneseq
        %v8371 = vshrl.u32 %v8370, 7
        %v8372 = vsub.s32 %v8369, %v8371
        %v8373 = vrot.slane %v8365, %v8372
        %v8375 = vunpack.c.l.s4 1983009808
        %v8376 = vunpack.c.0.s8 %v8375
        %v8377 = vlaneseq
        %v8378 = vshrl.u32 %v8377, 7
        %v8379 = vsub.s32 %v8376, %v8378
        %v8380 = vrot.slane %v8366, %v8379
        %v8381 = vcombine.low %v8373, %v8380
        %s8383 = scalar_lea.vmem %s275, 56 [#allocation10]
        %8384 = vst [vmem:[%s8383] sm:$0xff] %v8381
        %s8385 = sand.u32 %s136, 1
        %s8386 = scalar_lea.sflag [#allocation4], %s8385
        %s8387 = sand.u32 %s136, 1
        %s8388 = smul.addr %s8387, 64
        %s8389 = scalar_lea.vmem [#allocation10], %s8388
        // Predicated region
        $region53: #{tpu_custom_call.1} parent=35 // pred_check
          %p8390 = pneg %p146
        $region54: #{tpu_custom_call.1} parent=35 // pred_check_branch
          %8392 = sbr.rel (%p8390) target = $region56
        $region55: #{tpu_custom_call.1} parent=35 // pred_region
          %s8394 = ssub.s32 1024, 1024
          %8395 = vsyncadd %s8386, %s8394
          %s8396 = smul.addr %s28, 4
          %s8397 = smul.addr %s27, 32
          %s8398 = sadd.s32 %s8396, %s8397
          %s8399 = smul.addr %s8398, 32
          %s8400 = scalar_lea.hbm %s4, %s8399
          %s8401 = sshll.u32 %s8389, 4
          %s8402 = int_to_ptr.vmem [resolvable:$true] %s8401
          %8407 = dma.vmem_to_hbm [thread:$0]  %s8402, 1024, %s8400, %s8386, 128, 128, 8
        $region56: #{tpu_custom_call.1} parent=35 // pred_fallthru
          _
      $region36: #{tpu_custom_call.1} parent=5 // pred_fallthru
        _
      %p8408 = scmp.le.s32.totalorder 2, %s18
      // Predicated region
      $region57: #{tpu_custom_call.1} parent=5 // pred_check
        %p8409 = pneg %p8408
      $region58: #{tpu_custom_call.1} parent=5 // pred_check_branch
        %8411 = sbr.rel (%p8409) target = $region60
      $region59: #{tpu_custom_call.1} parent=5 // pred_region
        %s8412 = ssub.s32 %s18, 2
        // Predicated region
        $region61: #{tpu_custom_call.1} parent=59 // pred_check
          %p8413 = pneg %p152
        $region62: #{tpu_custom_call.1} parent=59 // pred_check_branch
          %8415 = sbr.rel (%p8413) target = $region64
        $region63: #{tpu_custom_call.1} parent=59 // pred_region
          %s8416 = sand.u32 %s137, 1
          %s8417 = scalar_lea.sflag [#allocation4], %s8416
          %s8418 = sand.u32 %s137, 1
          %s8419 = smul.addr %s8418, 64
          %s8420 = scalar_lea.vmem [#allocation10], %s8419
          %8421 = dma.done %s8417, 1024
        $region64: #{tpu_custom_call.1} parent=59 // pred_fallthru
          _
      $region60: #{tpu_custom_call.1} parent=5 // pred_fallthru
        _
    $region6: #{tpu_custom_call.1} parent=1 // loop_footer
      %s22 = sadd.s32 1, %s18
    $region7: #{tpu_custom_call.1} parent=1 // loop_footer_branch
      %17 = sbr.rel target = $region3
    $region8: #{tpu_custom_call.1} parent=1 // loop_exit
      _
    %8422 = vsyncpa [#allocation3], 1
    %s8423 = scalar_lea.sflag [#allocation3], 1
    %8424 = vsyncpa %s8423, 1
    %8425 = vsyncpa [#allocation7], 1
    %8426 = vsyncpa [#allocation4], 1
    %s8427 = scalar_lea.sflag [#allocation4], 1
    %8428 = vsyncpa %s8427, 1
    %8429 = vsyncpa [#allocation5], 1
    %s8430 = scalar_lea.sflag [#allocation5], 1
    %8431 = vsyncpa %s8430, 1

</llo_original>
